<compile_context>
chip_gen: v6e
topology: v6e:2x2x1
jax: 0.10.0
libtpu: 0.0.40
codegen_flags: <defaults>
</compile_context>

<pallas_src>
import functools

import jax
import jax.numpy as jnp
from jax import lax
from jax.experimental import pallas as pl
from jax.experimental.pallas import tpu as pltpu

_LANE = 128


def _round_up(x, m):
    return ((x + m - 1) // m) * m


def _vmem_limit_bytes():
    """Generation-aware scoped-VMEM limit (~45% of physical, capped at 56 MiB)."""
    try:
        cap = int(pltpu.get_tpu_info().vmem_capacity_bytes)
    except Exception:
        cap = 64 << 20  # conservative (v7x-sized) fallback
    return max(16 << 20, min(int(cap * 0.45), 56 << 20))


def _is_v5e():
    try:
        kind = jax.devices()[0].device_kind.lower()
        return ('v5e' in kind) or ('v5 lite' in kind) or ('v5litepod' in kind)
    except Exception:
        return False


# ----------------------------------------------------------------------------
# Pallas kernels
# ----------------------------------------------------------------------------
def _conv3x3_bias_relu_kernel(x_ref, w_ref, b_ref, m_ref, o_ref, *, wp):
    """Fused 3x3 conv + bias + ReLU + pad-ring zeroing for ONE image.

    x_ref: (R, Cp)       bf16, R = Hp*Wp flattened (h-major, w-minor) rows of a
                         zero-ringed image (valid at h,w in [2,H+2) x [2,W+2)).
    w_ref: (3, 3*Cp, TN) bf16 -- tap kw -> (kh*Cp + ci, co) matrix.
    b_ref: (1, TN)       f32.
    m_ref: (R, 1)        f32, 1.0 on valid rows/cols, 0.0 on the pad ring.
    o_ref: (R, TN)       bf16.
    """
    lhs = x_ref[...]
    r = lhs.shape[0]
    # kh taps: +-Wp row shifts of the LHS, stacked along lanes -> K = 3*Cp.
    # (shift in f32 -- sublane rotation of packed bf16 is avoided for lowering
    # safety -- then cast back to bf16 for the MXU.)
    lhs32 = lhs.astype(jnp.float32)
    up = pltpu.roll(lhs32, wp, 0).astype(jnp.bfloat16)        # kh = 0 copy
    dn = pltpu.roll(lhs32, r - wp, 0).astype(jnp.bfloat16)    # kh = 2 copy
    big = jnp.concatenate([up, lhs, dn], axis=-1)             # (R, 3*Cp)
    # kw taps: 3 MXU matmuls combined with +-1 row rolls of the f32 results.
    d0 = jnp.dot(big, w_ref[0], preferred_element_type=jnp.float32)
    d1 = jnp.dot(big, w_ref[1], preferred_element_type=jnp.float32)
    d2 = jnp.dot(big, w_ref[2], preferred_element_type=jnp.float32)
    acc = pltpu.roll(d0, 1, 0) + d1 + pltpu.roll(d2, r - 1, 0)
    # Epilogue: bias + ReLU, then zero the pad ring (this also kills all roll
    # wrap-around garbage, which only ever lands on pad rows/columns).
    y = jnp.maximum(acc + b_ref[...], 0.0) * m_ref[...]
    o_ref[...] = y.astype(o_ref.dtype)


def _maxpool2x2_pair_kernel(x_ref, o_ref):
    """2x2 / stride-2 max pool over pre-paired rows.

    x_ref: (HP2, 2, WP2, 2*Cp) -- H-pair is the size-2 dim, W-pair lives in the
           two lane halves (pure free reshape of the padded layout).
    o_ref: (HP2, WP2, Cp)
    """
    cp = o_ref.shape[-1]
    x = x_ref[...]
    m = jnp.maximum(x[:, 0], x[:, 1])                      # reduce over H pair
    o_ref[...] = jnp.maximum(m[..., :cp], m[..., cp:])     # reduce over W pair


# ----------------------------------------------------------------------------
# Padded-layout helpers
# ----------------------------------------------------------------------------
# Internal activation format: (N, Hp, Wp, Cp) bf16 where
#   Hp = round_up(H+3, 8), Wp = round_up(W+3, 8), Cp = round_up(C, 128),
#   valid data at [:, 2:H+2, 2:W+2, :C], everything else exactly zero.
# The 2-row/col lead pad keeps stride-2 pooling windows pair-aligned; the
# >=1 tail pad is the 3x3 conv's zero ring.

def nchw_to_padded(x_nchw):
    N, C, H, W = x_nchw.shape
    Hp = _round_up(H + 3, 8)
    Wp = _round_up(W + 3, 8)
    Cp = _round_up(C, _LANE)
    a = jnp.transpose(x_nchw, (0, 2, 3, 1)).astype(jnp.float32)
    a = jnp.pad(a, ((0, 0), (2, Hp - H - 2), (2, Wp - W - 2), (0, Cp - C)))
    return (a.astype(jnp.bfloat16), H, W, C)


def padded_to_nchw(act):
    a, H, W, C = act
    v = a[:, 2:H + 2, 2:W + 2, :C]
    return jnp.transpose(v, (0, 3, 1, 2)).astype(jnp.float32)


# ----------------------------------------------------------------------------
# Wrappers
# ----------------------------------------------------------------------------
def conv3x3_relu(act, w, b):
    """act: padded-layout activation; w: (3,3,Cin,Cout) HWIO f32; b: (Cout,)."""
    a, H, W, C = act
    N, Hp, Wp, Cp = a.shape
    Cin, Cout = w.shape[2], w.shape[3]
    assert Cin == C and Cp >= Cin
    assert Hp >= H + 3 and Wp >= W + 3          # zero ring present
    assert Hp % 8 == 0 and Wp % 8 == 0          # lane/sublane friendly
    R = Hp * Wp                                  # whole-image block rows
    assert R % Wp == 0 and R % 16 == 0          # roll-wrap + bf16 packing safe

    Cout_p = _round_up(Cout, _LANE)
    TN = 256 if (Cout_p % 256 == 0 and not _is_v5e()) else 128

    # Weights: (kh,kw,ci,co) -> (kw, kh*Cp+ci, co), zero-padded, bf16 for the MXU.
    wk = jnp.pad(w, ((0, 0), (0, 0), (0, Cp - Cin), (0, Cout_p - Cout)))
    wk = jnp.transpose(wk, (1, 0, 2, 3)).reshape(3, 3 * Cp, Cout_p)
    wk = wk.astype(jnp.bfloat16)
    bp = jnp.pad(b, (0, Cout_p - Cout)).reshape(1, Cout_p).astype(jnp.float32)

    # Valid-region mask (re-establishes the exact zero ring in the epilogue).
    hh = jnp.arange(Hp)
    ww = jnp.arange(Wp)
    mask = (((hh >= 2) & (hh < H + 2))[:, None]
            & ((ww >= 2) & (ww < W + 2))[None, :]).astype(jnp.float32)
    mask = mask.reshape(R, 1)

    xs = a.reshape(N * R, Cp)   # free reshape: rows of whole images

    vmem_limit = _vmem_limit_bytes()
    est = (2 * (R * Cp * 2) + 2 * (R * TN * 2) + 2 * (3 * 3 * Cp * TN * 2)
           + R * (4 * Cp + 4 * Cp + 3 * 4 * TN))
    if est > int(0.8 * vmem_limit):
        # TODO(synk): row-tile large images (halo blocks) instead of whole-image blocks.
        raise ValueError(f"image too large for whole-image conv blocks ({est} bytes)")

    grid = (N, Cout_p // TN)
    cost = pl.CostEstimate(
        flops=2 * 9 * N * R * Cp * Cout_p,
        transcendentals=0,
        bytes_accessed=int(xs.size * 2 + wk.size * 2 + N * R * Cout_p * 2
                           + mask.size * 4),
    )

    out = pl.pallas_call(
        functools.partial(_conv3x3_bias_relu_kernel, wp=Wp),
        out_shape=jax.ShapeDtypeStruct((N * R, Cout_p), jnp.bfloat16),
        grid=grid,
        in_specs=[
            pl.BlockSpec((R, Cp), lambda n, j: (n, 0)),          # one image / block
            pl.BlockSpec((3, 3 * Cp, TN), lambda n, j: (0, 0, j)),  # weights
            pl.BlockSpec((1, TN), lambda n, j: (0, j)),             # bias
            pl.BlockSpec((R, 1), lambda n, j: (0, 0)),              # mask (resident)
        ],
        out_specs=pl.BlockSpec((R, TN), lambda n, j: (n, j)),
        compiler_params=pltpu.CompilerParams(
            dimension_semantics=("parallel", "parallel"),
            vmem_limit_bytes=vmem_limit),
        cost_estimate=cost,
    )(xs, wk, bp, mask)

    a_out = out.reshape(N, Hp, Wp, Cout_p)
    return (a_out, H, W, Cout)


def maxpool2x2(act, ceil_mode=False):
    """kernel=2, stride=2 pool on the padded layout (PyTorch floor/ceil modes).

    Ceil-mode partial windows pick up the zero ring instead of -inf, which is
    equivalent because all pooled activations are post-ReLU (>= 0).
    """
    a, H, W, C = act
    N, Hp, Wp, Cp = a.shape
    Ho = (H + 1) // 2 if ceil_mode else H // 2
    Wo = (W + 1) // 2 if ceil_mode else W // 2
    HP2, WP2 = Hp // 2, Wp // 2
    assert Ho + 1 <= HP2 and Wo + 1 <= WP2

    # Free reshape: (N,Hp,Wp,Cp) -> (N*HP2, 2, WP2, 2*Cp) (H pair in a size-2
    # dim, W pair in the two lane halves).
    xr = a.reshape(N * HP2, 2, WP2, 2 * Cp)

    out = pl.pallas_call(
        _maxpool2x2_pair_kernel,
        out_shape=jax.ShapeDtypeStruct((N * HP2, WP2, Cp), jnp.bfloat16),
        grid=(N,),
        in_specs=[pl.BlockSpec((HP2, 2, WP2, 2 * Cp), lambda n: (n, 0, 0, 0))],
        out_specs=pl.BlockSpec((HP2, WP2, Cp), lambda n: (n, 0, 0)),
        compiler_params=pltpu.CompilerParams(
            dimension_semantics=("parallel",),
            vmem_limit_bytes=_vmem_limit_bytes()),
    )(xr)

    # Window (i, j) lives at pair (i+1, j+1); keep the valid windows and
    # re-ring (single small pad -- pool output is 4x smaller than its input).
    pooled = out.reshape(N, HP2, WP2, Cp)[:, 1:1 + Ho, 1:1 + Wo, :]
    Hop = _round_up(Ho + 3, 8)
    Wop = _round_up(Wo + 3, 8)
    a_out = jnp.pad(pooled, ((0, 0), (2, Hop - Ho - 2), (2, Wop - Wo - 2), (0, 0)))
    return (a_out, Ho, Wo, C)


# ----------------------------------------------------------------------------
# VGGBackbone: config, deterministic init, forward
# ----------------------------------------------------------------------------
CFG = {
    'batch_norm': 0,
    'url': '',
    'cfg': ['8', '8', 'M', '16', 'M', '16', 'C', '32', 'M', '32'],
}
IN_CHANNELS = 3


def init_params(key, cfg, in_channels):
    """pretrained=False init: kaiming_normal(fan_out, relu) weights, zero bias."""
    params = []
    cin = in_channels
    for v in cfg['cfg']:
        if v in ('M', 'C'):
            continue
        cout = int(v)
        key, kw = jax.random.split(key)
        fan_out = cout * 3 * 3
        std = (2.0 / fan_out) ** 0.5
        w = jax.random.normal(kw, (3, 3, cin, cout), jnp.float32) * std  # HWIO
        b = jnp.zeros((cout,), jnp.float32)
        params.append((w, b))
        cin = cout
    return params


def vgg_backbone_forward(x_nchw, params, cfg):
    """Returns (conv4_x, x), both NCHW f32, matching the PyTorch module."""
    act = nchw_to_padded(x_nchw)
    pi = 0
    num_pool = 0
    conv4 = None
    for v in cfg['cfg']:
        if v in ('M', 'C'):
            num_pool += 1
            if num_pool == 4:
                conv4 = act  # captured BEFORE the 4th pool (x.clone() in torch)
            act = maxpool2x2(act, ceil_mode=(v == 'C'))
        else:
            w, b = params[pi]
            pi += 1
            act = conv3x3_relu(act, w, b)
    return padded_to_nchw(conv4), padded_to_nchw(act)


# ----------------------------------------------------------------------------
# Pure-JAX reference (bf16 MXU math + bf16 inter-layer storage, like the kernels)
# ----------------------------------------------------------------------------
def _ref_conv3x3_relu(x, w, b):
    y = lax.conv_general_dilated(
        x.astype(jnp.bfloat16), w.astype(jnp.bfloat16),
        window_strides=(1, 1), padding='SAME',
        dimension_numbers=('NHWC', 'HWIO', 'NHWC'),
        preferred_element_type=jnp.float32)
    return jnp.maximum(y + b, 0.0).astype(jnp.bfloat16)


def _ref_maxpool2x2(x, ceil_mode=False):
    N, H, W, C = x.shape
    if ceil_mode:
        x = jnp.pad(x, ((0, 0), (0, H % 2), (0, W % 2), (0, 0)),
                    constant_values=-jnp.inf)
    else:
        x = x[:, :2 * (H // 2), :2 * (W // 2), :]
    N, H, W, C = x.shape
    return jnp.max(x.reshape(N, H // 2, 2, W // 2, 2, C), axis=(2, 4))


def ref_forward(x_nchw, params, cfg):
    x = jnp.transpose(x_nchw, (0, 2, 3, 1)).astype(jnp.bfloat16)
    pi = 0
    num_pool = 0
    conv4_x = None
    for v in cfg['cfg']:
        if v in ('M', 'C'):
            num_pool += 1
            if num_pool == 4:
                conv4_x = x
            x = _ref_maxpool2x2(x, ceil_mode=(v == 'C'))
        else:
            w, b = params[pi]
            pi += 1
            x = _ref_conv3x3_relu(x, w, b)
    return (jnp.transpose(conv4_x, (0, 3, 1, 2)).astype(jnp.float32),
            jnp.transpose(x, (0, 3, 1, 2)).astype(jnp.float32))


# ----------------------------------------------------------------------------
if __name__ == "__main__":
    key = jax.random.PRNGKey(0)
    k_in, k_params = jax.random.split(key)

    # Small input: N=2, C=3, H=W=20 (NCHW, like the PyTorch module).
    # 20x20 exercises the ceil-mode ('C') pooling path (5 -> 3).
    x = jax.random.normal(k_in, (2, IN_CHANNELS, 20, 20), jnp.float32)
    params = init_params(k_params, CFG, IN_CHANNELS)

    fwd = jax.jit(functools.partial(vgg_backbone_forward, cfg=CFG))
    conv4_x, x_out = fwd(x, params)
    jax.block_until_ready((conv4_x, x_out))

    # Sanity check against the pure-JAX reference.
    conv4_ref, x_ref_ = ref_forward(x, params, CFG)
    assert conv4_x.shape == conv4_ref.shape and x_out.shape == x_ref_.shape
    assert jnp.allclose(conv4_x, conv4_ref, rtol=3e-2, atol=3e-3), "conv4_x mismatch"
    assert jnp.allclose(x_out, x_ref_, rtol=3e-2, atol=3e-3), "final x mismatch"

    print("KERNEL_OK")
</pallas_src>

<mosaic_0001>
module attributes {stable_mosaic.version = 11 : i64} {
  func.func @_conv3x3_bias_relu_kernel(%arg0: i32, %arg1: i32, %arg2: memref<576x128xbf16, #tpu.memory_space<vmem>>, %arg3: memref<3x384x128xbf16, #tpu.memory_space<vmem>>, %arg4: memref<1x128xf32, #tpu.memory_space<vmem>>, %arg5: memref<576x1xf32, #tpu.memory_space<vmem>>, %arg6: memref<576x128xbf16, #tpu.memory_space<vmem>>) attributes {dimension_semantics = [#tpu.dimension_semantics<parallel>, #tpu.dimension_semantics<parallel>], iteration_bounds = array<i64: 2, 1>, scalar_prefetch = 0 : i64, scratch_operands = 0 : i64, tpu.core_type = #tpu.core_type<tc>, window_params = [{transform_indices = @transform_0, window_bounds = array<i64: 576, 128>}, {transform_indices = @transform_1, window_bounds = array<i64: 3, 384, 128>}, {transform_indices = @transform_2, window_bounds = array<i64: 1, 128>}, {pipeline_mode = #tpu.pipeline_mode<synchronous>, transform_indices = @transform_3, window_bounds = array<i64: 576, 1>}, {transform_indices = @transform_4, window_bounds = array<i64: 576, 128>}]} {
    %c0 = arith.constant 0 : index
    %c0_0 = arith.constant 0 : index
    %0 = vector.load %arg2[%c0, %c0_0] : memref<576x128xbf16, #tpu.memory_space<vmem>>, vector<576x128xbf16>
    %1 = arith.extf %0 : vector<576x128xbf16> to vector<576x128xf32>
    %c24_i32 = arith.constant 24 : i32
    %2 = tpu.dynamic_rotate %1 by %c24_i32 dim 0 : vector<576x128xf32>, i32 -> vector<576x128xf32>
    %3 = arith.truncf %2 : vector<576x128xf32> to vector<576x128xbf16>
    %c552_i32 = arith.constant 552 : i32
    %4 = tpu.dynamic_rotate %1 by %c552_i32 dim 0 : vector<576x128xf32>, i32 -> vector<576x128xf32>
    %5 = arith.truncf %4 : vector<576x128xf32> to vector<576x128xbf16>
    %6 = tpu.concatenate %3, %0, %5 in 1 : vector<576x128xbf16>, vector<576x128xbf16>, vector<576x128xbf16> -> vector<576x384xbf16>
    %c0_1 = arith.constant 0 : index
    %c0_2 = arith.constant 0 : index
    %c0_3 = arith.constant 0 : index
    %7 = vector.load %arg3[%c0_1, %c0_2, %c0_3] : memref<3x384x128xbf16, #tpu.memory_space<vmem>>, vector<1x384x128xbf16>
    %8 = vector.shape_cast %7 : vector<1x384x128xbf16> to vector<384x128xbf16>
    %cst = arith.constant dense<0.000000e+00> : vector<576x128xf32>
    %9 = tpu.matmul %6, %8, %cst {dimension_numbers = #tpu.dot_dimension_numbers<[1], [0], [0], [1], [0, 0, 1, 1], [], []>} : vector<576x384xbf16>, vector<384x128xbf16>, vector<576x128xf32> -> vector<576x128xf32>
    %c1 = arith.constant 1 : index
    %c0_4 = arith.constant 0 : index
    %c0_5 = arith.constant 0 : index
    %10 = vector.load %arg3[%c1, %c0_4, %c0_5] : memref<3x384x128xbf16, #tpu.memory_space<vmem>>, vector<1x384x128xbf16>
    %11 = vector.shape_cast %10 : vector<1x384x128xbf16> to vector<384x128xbf16>
    %cst_6 = arith.constant dense<0.000000e+00> : vector<576x128xf32>
    %12 = tpu.matmul %6, %11, %cst_6 {dimension_numbers = #tpu.dot_dimension_numbers<[1], [0], [0], [1], [0, 0, 1, 1], [], []>} : vector<576x384xbf16>, vector<384x128xbf16>, vector<576x128xf32> -> vector<576x128xf32>
    %c2 = arith.constant 2 : index
    %c0_7 = arith.constant 0 : index
    %c0_8 = arith.constant 0 : index
    %13 = vector.load %arg3[%c2, %c0_7, %c0_8] : memref<3x384x128xbf16, #tpu.memory_space<vmem>>, vector<1x384x128xbf16>
    %14 = vector.shape_cast %13 : vector<1x384x128xbf16> to vector<384x128xbf16>
    %cst_9 = arith.constant dense<0.000000e+00> : vector<576x128xf32>
    %15 = tpu.matmul %6, %14, %cst_9 {dimension_numbers = #tpu.dot_dimension_numbers<[1], [0], [0], [1], [0, 0, 1, 1], [], []>} : vector<576x384xbf16>, vector<384x128xbf16>, vector<576x128xf32> -> vector<576x128xf32>
    %c1_i32 = arith.constant 1 : i32
    %16 = tpu.dynamic_rotate %9 by %c1_i32 dim 0 : vector<576x128xf32>, i32 -> vector<576x128xf32>
    %17 = arith.addf %16, %12 : vector<576x128xf32>
    %c575_i32 = arith.constant 575 : i32
    %18 = tpu.dynamic_rotate %15 by %c575_i32 dim 0 : vector<576x128xf32>, i32 -> vector<576x128xf32>
    %19 = arith.addf %17, %18 : vector<576x128xf32>
    %c0_10 = arith.constant 0 : index
    %c0_11 = arith.constant 0 : index
    %20 = vector.load %arg4[%c0_10, %c0_11] : memref<1x128xf32, #tpu.memory_space<vmem>>, vector<1x128xf32>
    %21 = vector.broadcast %20 : vector<1x128xf32> to vector<576x128xf32>
    %22 = arith.addf %19, %21 : vector<576x128xf32>
    %cst_12 = arith.constant 0.000000e+00 : f32
    %23 = vector.broadcast %cst_12 : f32 to vector<576x128xf32>
    %24 = arith.maximumf %22, %23 : vector<576x128xf32>
    %c0_13 = arith.constant 0 : index
    %c0_14 = arith.constant 0 : index
    %25 = vector.load %arg5[%c0_13, %c0_14] : memref<576x1xf32, #tpu.memory_space<vmem>>, vector<576x1xf32>
    %26 = vector.broadcast %25 : vector<576x1xf32> to vector<576x128xf32>
    %27 = arith.mulf %24, %26 : vector<576x128xf32>
    %28 = arith.truncf %27 : vector<576x128xf32> to vector<576x128xbf16>
    %c0_15 = arith.constant 0 : index
    %c0_16 = arith.constant 0 : index
    %29 = vector.load %arg6[%c0_15, %c0_16] : memref<576x128xbf16, #tpu.memory_space<vmem>>, vector<576x128xbf16>
    tpu.vector_store %arg6[%c0_15, %c0_16], %28 {strides = array<i32>} : memref<576x128xbf16, #tpu.memory_space<vmem>>, vector<576x128xbf16>,
    return
  }
  func.func @transform_0(%arg0: i32, %arg1: i32) -> (i32, i32) {
    %c0_i32 = arith.constant 0 : i32
    %c0_i32_0 = arith.constant 0 : i32
    return %arg0, %c0_i32 : i32, i32
  }
  func.func @transform_1(%arg0: i32, %arg1: i32) -> (i32, i32, i32) {
    %c0_i32 = arith.constant 0 : i32
    %c0_i32_0 = arith.constant 0 : i32
    %c0_i32_1 = arith.constant 0 : i32
    return %c0_i32, %c0_i32_0, %arg1 : i32, i32, i32
  }
  func.func @transform_2(%arg0: i32, %arg1: i32) -> (i32, i32) {
    %c0_i32 = arith.constant 0 : i32
    %c0_i32_0 = arith.constant 0 : i32
    return %c0_i32, %arg1 : i32, i32
  }
  func.func @transform_3(%arg0: i32, %arg1: i32) -> (i32, i32) {
    %c0_i32 = arith.constant 0 : i32
    %c0_i32_0 = arith.constant 0 : i32
    %c0_i32_1 = arith.constant 0 : i32
    return %c0_i32, %c0_i32_0 : i32, i32
  }
  func.func @transform_4(%arg0: i32, %arg1: i32) -> (i32, i32) {
    %c0_i32 = arith.constant 0 : i32
    return %arg0, %arg1 : i32, i32
  }
}

module attributes {stable_mosaic.version = 11 : i64} {
  func.func @_maxpool2x2_pair_kernel(%arg0: i32, %arg1: memref<12x2x12x256xbf16, #tpu.memory_space<vmem>>, %arg2: memref<12x12x128xbf16, #tpu.memory_space<vmem>>) attributes {dimension_semantics = [#tpu.dimension_semantics<parallel>], iteration_bounds = array<i64: 2>, scalar_prefetch = 0 : i64, scratch_operands = 0 : i64, tpu.core_type = #tpu.core_type<tc>, window_params = [{transform_indices = @transform_0, window_bounds = array<i64: 12, 2, 12, 256>}, {transform_indices = @transform_1, window_bounds = array<i64: 12, 12, 128>}]} {
    %c0 = arith.constant 0 : index
    %c0_0 = arith.constant 0 : index
    %c0_1 = arith.constant 0 : index
    %c0_2 = arith.constant 0 : index
    %0 = vector.load %arg1[%c0, %c0_0, %c0_1, %c0_2] : memref<12x2x12x256xbf16, #tpu.memory_space<vmem>>, vector<12x2x12x256xbf16>
    %1 = vector.extract_strided_slice %0 {offsets = [0, 0, 0, 0], sizes = [12, 1, 12, 256], strides = [1, 1, 1, 1]} : vector<12x2x12x256xbf16> to vector<12x1x12x256xbf16>
    %2 = vector.shape_cast %1 : vector<12x1x12x256xbf16> to vector<12x12x256xbf16>
    %3 = vector.extract_strided_slice %0 {offsets = [0, 1, 0, 0], sizes = [12, 1, 12, 256], strides = [1, 1, 1, 1]} : vector<12x2x12x256xbf16> to vector<12x1x12x256xbf16>
    %4 = vector.shape_cast %3 : vector<12x1x12x256xbf16> to vector<12x12x256xbf16>
    %5 = arith.maximumf %2, %4 : vector<12x12x256xbf16>
    %6 = vector.extract_strided_slice %5 {offsets = [0, 0, 0], sizes = [12, 12, 128], strides = [1, 1, 1]} : vector<12x12x256xbf16> to vector<12x12x128xbf16>
    %7 = vector.extract_strided_slice %5 {offsets = [0, 0, 128], sizes = [12, 12, 128], strides = [1, 1, 1]} : vector<12x12x256xbf16> to vector<12x12x128xbf16>
    %8 = arith.maximumf %6, %7 : vector<12x12x128xbf16>
    %c0_3 = arith.constant 0 : index
    %c0_4 = arith.constant 0 : index
    %c0_5 = arith.constant 0 : index
    %9 = vector.load %arg2[%c0_3, %c0_4, %c0_5] : memref<12x12x128xbf16, #tpu.memory_space<vmem>>, vector<12x12x128xbf16>
    tpu.vector_store %arg2[%c0_3, %c0_4, %c0_5], %8 {strides = array<i32>} : memref<12x12x128xbf16, #tpu.memory_space<vmem>>, vector<12x12x128xbf16>,
    return
  }
  func.func @transform_0(%arg0: i32) -> (i32, i32, i32, i32) {
    %c0_i32 = arith.constant 0 : i32
    %c0_i32_0 = arith.constant 0 : i32
    %c0_i32_1 = arith.constant 0 : i32
    %c0_i32_2 = arith.constant 0 : i32
    return %arg0, %c0_i32, %c0_i32_0, %c0_i32_1 : i32, i32, i32, i32
  }
  func.func @transform_1(%arg0: i32) -> (i32, i32, i32) {
    %c0_i32 = arith.constant 0 : i32
    %c0_i32_0 = arith.constant 0 : i32
    %c0_i32_1 = arith.constant 0 : i32
    return %arg0, %c0_i32, %c0_i32_0 : i32, i32, i32
  }
}

module attributes {stable_mosaic.version = 11 : i64} {
  func.func @_maxpool2x2_pair_kernel(%arg0: i32, %arg1: memref<8x2x8x256xbf16, #tpu.memory_space<vmem>>, %arg2: memref<8x8x128xbf16, #tpu.memory_space<vmem>>) attributes {dimension_semantics = [#tpu.dimension_semantics<parallel>], iteration_bounds = array<i64: 2>, scalar_prefetch = 0 : i64, scratch_operands = 0 : i64, tpu.core_type = #tpu.core_type<tc>, window_params = [{transform_indices = @transform_0, window_bounds = array<i64: 8, 2, 8, 256>}, {transform_indices = @transform_1, window_bounds = array<i64: 8, 8, 128>}]} {
    %c0 = arith.constant 0 : index
    %c0_0 = arith.constant 0 : index
    %c0_1 = arith.constant 0 : index
    %c0_2 = arith.constant 0 : index
    %0 = vector.load %arg1[%c0, %c0_0, %c0_1, %c0_2] : memref<8x2x8x256xbf16, #tpu.memory_space<vmem>>, vector<8x2x8x256xbf16>
    %1 = vector.extract_strided_slice %0 {offsets = [0, 0, 0, 0], sizes = [8, 1, 8, 256], strides = [1, 1, 1, 1]} : vector<8x2x8x256xbf16> to vector<8x1x8x256xbf16>
    %2 = vector.shape_cast %1 : vector<8x1x8x256xbf16> to vector<8x8x256xbf16>
    %3 = vector.extract_strided_slice %0 {offsets = [0, 1, 0, 0], sizes = [8, 1, 8, 256], strides = [1, 1, 1, 1]} : vector<8x2x8x256xbf16> to vector<8x1x8x256xbf16>
    %4 = vector.shape_cast %3 : vector<8x1x8x256xbf16> to vector<8x8x256xbf16>
    %5 = arith.maximumf %2, %4 : vector<8x8x256xbf16>
    %6 = vector.extract_strided_slice %5 {offsets = [0, 0, 0], sizes = [8, 8, 128], strides = [1, 1, 1]} : vector<8x8x256xbf16> to vector<8x8x128xbf16>
    %7 = vector.extract_strided_slice %5 {offsets = [0, 0, 128], sizes = [8, 8, 128], strides = [1, 1, 1]} : vector<8x8x256xbf16> to vector<8x8x128xbf16>
    %8 = arith.maximumf %6, %7 : vector<8x8x128xbf16>
    %c0_3 = arith.constant 0 : index
    %c0_4 = arith.constant 0 : index
    %c0_5 = arith.constant 0 : index
    %9 = vector.load %arg2[%c0_3, %c0_4, %c0_5] : memref<8x8x128xbf16, #tpu.memory_space<vmem>>, vector<8x8x128xbf16>
    tpu.vector_store %arg2[%c0_3, %c0_4, %c0_5], %8 {strides = array<i32>} : memref<8x8x128xbf16, #tpu.memory_space<vmem>>, vector<8x8x128xbf16>,
    return
  }
  func.func @transform_0(%arg0: i32) -> (i32, i32, i32, i32) {
    %c0_i32 = arith.constant 0 : i32
    %c0_i32_0 = arith.constant 0 : i32
    %c0_i32_1 = arith.constant 0 : i32
    %c0_i32_2 = arith.constant 0 : i32
    return %arg0, %c0_i32, %c0_i32_0, %c0_i32_1 : i32, i32, i32, i32
  }
  func.func @transform_1(%arg0: i32) -> (i32, i32, i32) {
    %c0_i32 = arith.constant 0 : i32
    %c0_i32_0 = arith.constant 0 : i32
    %c0_i32_1 = arith.constant 0 : i32
    return %arg0, %c0_i32, %c0_i32_0 : i32, i32, i32
  }
}

module attributes {stable_mosaic.version = 11 : i64} {
  func.func @_conv3x3_bias_relu_kernel(%arg0: i32, %arg1: i32, %arg2: memref<256x128xbf16, #tpu.memory_space<vmem>>, %arg3: memref<3x384x128xbf16, #tpu.memory_space<vmem>>, %arg4: memref<1x128xf32, #tpu.memory_space<vmem>>, %arg5: memref<256x1xf32, #tpu.memory_space<vmem>>, %arg6: memref<256x128xbf16, #tpu.memory_space<vmem>>) attributes {dimension_semantics = [#tpu.dimension_semantics<parallel>, #tpu.dimension_semantics<parallel>], iteration_bounds = array<i64: 2, 1>, scalar_prefetch = 0 : i64, scratch_operands = 0 : i64, tpu.core_type = #tpu.core_type<tc>, window_params = [{transform_indices = @transform_0, window_bounds = array<i64: 256, 128>}, {transform_indices = @transform_1, window_bounds = array<i64: 3, 384, 128>}, {transform_indices = @transform_2, window_bounds = array<i64: 1, 128>}, {pipeline_mode = #tpu.pipeline_mode<synchronous>, transform_indices = @transform_3, window_bounds = array<i64: 256, 1>}, {transform_indices = @transform_4, window_bounds = array<i64: 256, 128>}]} {
    %c0 = arith.constant 0 : index
    %c0_0 = arith.constant 0 : index
    %0 = vector.load %arg2[%c0, %c0_0] : memref<256x128xbf16, #tpu.memory_space<vmem>>, vector<256x128xbf16>
    %1 = arith.extf %0 : vector<256x128xbf16> to vector<256x128xf32>
    %c16_i32 = arith.constant 16 : i32
    %2 = tpu.dynamic_rotate %1 by %c16_i32 dim 0 : vector<256x128xf32>, i32 -> vector<256x128xf32>
    %3 = arith.truncf %2 : vector<256x128xf32> to vector<256x128xbf16>
    %c240_i32 = arith.constant 240 : i32
    %4 = tpu.dynamic_rotate %1 by %c240_i32 dim 0 : vector<256x128xf32>, i32 -> vector<256x128xf32>
    %5 = arith.truncf %4 : vector<256x128xf32> to vector<256x128xbf16>
    %6 = tpu.concatenate %3, %0, %5 in 1 : vector<256x128xbf16>, vector<256x128xbf16>, vector<256x128xbf16> -> vector<256x384xbf16>
    %c0_1 = arith.constant 0 : index
    %c0_2 = arith.constant 0 : index
    %c0_3 = arith.constant 0 : index
    %7 = vector.load %arg3[%c0_1, %c0_2, %c0_3] : memref<3x384x128xbf16, #tpu.memory_space<vmem>>, vector<1x384x128xbf16>
    %8 = vector.shape_cast %7 : vector<1x384x128xbf16> to vector<384x128xbf16>
    %cst = arith.constant dense<0.000000e+00> : vector<256x128xf32>
    %9 = tpu.matmul %6, %8, %cst {dimension_numbers = #tpu.dot_dimension_numbers<[1], [0], [0], [1], [0, 0, 1, 1], [], []>} : vector<256x384xbf16>, vector<384x128xbf16>, vector<256x128xf32> -> vector<256x128xf32>
    %c1 = arith.constant 1 : index
    %c0_4 = arith.constant 0 : index
    %c0_5 = arith.constant 0 : index
    %10 = vector.load %arg3[%c1, %c0_4, %c0_5] : memref<3x384x128xbf16, #tpu.memory_space<vmem>>, vector<1x384x128xbf16>
    %11 = vector.shape_cast %10 : vector<1x384x128xbf16> to vector<384x128xbf16>
    %cst_6 = arith.constant dense<0.000000e+00> : vector<256x128xf32>
    %12 = tpu.matmul %6, %11, %cst_6 {dimension_numbers = #tpu.dot_dimension_numbers<[1], [0], [0], [1], [0, 0, 1, 1], [], []>} : vector<256x384xbf16>, vector<384x128xbf16>, vector<256x128xf32> -> vector<256x128xf32>
    %c2 = arith.constant 2 : index
    %c0_7 = arith.constant 0 : index
    %c0_8 = arith.constant 0 : index
    %13 = vector.load %arg3[%c2, %c0_7, %c0_8] : memref<3x384x128xbf16, #tpu.memory_space<vmem>>, vector<1x384x128xbf16>
    %14 = vector.shape_cast %13 : vector<1x384x128xbf16> to vector<384x128xbf16>
    %cst_9 = arith.constant dense<0.000000e+00> : vector<256x128xf32>
    %15 = tpu.matmul %6, %14, %cst_9 {dimension_numbers = #tpu.dot_dimension_numbers<[1], [0], [0], [1], [0, 0, 1, 1], [], []>} : vector<256x384xbf16>, vector<384x128xbf16>, vector<256x128xf32> -> vector<256x128xf32>
    %c1_i32 = arith.constant 1 : i32
    %16 = tpu.dynamic_rotate %9 by %c1_i32 dim 0 : vector<256x128xf32>, i32 -> vector<256x128xf32>
    %17 = arith.addf %16, %12 : vector<256x128xf32>
    %c255_i32 = arith.constant 255 : i32
    %18 = tpu.dynamic_rotate %15 by %c255_i32 dim 0 : vector<256x128xf32>, i32 -> vector<256x128xf32>
    %19 = arith.addf %17, %18 : vector<256x128xf32>
    %c0_10 = arith.constant 0 : index
    %c0_11 = arith.constant 0 : index
    %20 = vector.load %arg4[%c0_10, %c0_11] : memref<1x128xf32, #tpu.memory_space<vmem>>, vector<1x128xf32>
    %21 = vector.broadcast %20 : vector<1x128xf32> to vector<256x128xf32>
    %22 = arith.addf %19, %21 : vector<256x128xf32>
    %cst_12 = arith.constant 0.000000e+00 : f32
    %23 = vector.broadcast %cst_12 : f32 to vector<256x128xf32>
    %24 = arith.maximumf %22, %23 : vector<256x128xf32>
    %c0_13 = arith.constant 0 : index
    %c0_14 = arith.constant 0 : index
    %25 = vector.load %arg5[%c0_13, %c0_14] : memref<256x1xf32, #tpu.memory_space<vmem>>, vector<256x1xf32>
    %26 = vector.broadcast %25 : vector<256x1xf32> to vector<256x128xf32>
    %27 = arith.mulf %24, %26 : vector<256x128xf32>
    %28 = arith.truncf %27 : vector<256x128xf32> to vector<256x128xbf16>
    %c0_15 = arith.constant 0 : index
    %c0_16 = arith.constant 0 : index
    %29 = vector.load %arg6[%c0_15, %c0_16] : memref<256x128xbf16, #tpu.memory_space<vmem>>, vector<256x128xbf16>
    tpu.vector_store %arg6[%c0_15, %c0_16], %28 {strides = array<i32>} : memref<256x128xbf16, #tpu.memory_space<vmem>>, vector<256x128xbf16>,
    return
  }
  func.func @transform_0(%arg0: i32, %arg1: i32) -> (i32, i32) {
    %c0_i32 = arith.constant 0 : i32
    %c0_i32_0 = arith.constant 0 : i32
    return %arg0, %c0_i32 : i32, i32
  }
  func.func @transform_1(%arg0: i32, %arg1: i32) -> (i32, i32, i32) {
    %c0_i32 = arith.constant 0 : i32
    %c0_i32_0 = arith.constant 0 : i32
    %c0_i32_1 = arith.constant 0 : i32
    return %c0_i32, %c0_i32_0, %arg1 : i32, i32, i32
  }
  func.func @transform_2(%arg0: i32, %arg1: i32) -> (i32, i32) {
    %c0_i32 = arith.constant 0 : i32
    %c0_i32_0 = arith.constant 0 : i32
    return %c0_i32, %arg1 : i32, i32
  }
  func.func @transform_3(%arg0: i32, %arg1: i32) -> (i32, i32) {
    %c0_i32 = arith.constant 0 : i32
    %c0_i32_0 = arith.constant 0 : i32
    %c0_i32_1 = arith.constant 0 : i32
    return %c0_i32, %c0_i32_0 : i32, i32
  }
  func.func @transform_4(%arg0: i32, %arg1: i32) -> (i32, i32) {
    %c0_i32 = arith.constant 0 : i32
    return %arg0, %arg1 : i32, i32
  }
}

module attributes {stable_mosaic.version = 11 : i64} {
  func.func @_conv3x3_bias_relu_kernel(%arg0: i32, %arg1: i32, %arg2: memref<64x128xbf16, #tpu.memory_space<vmem>>, %arg3: memref<3x384x128xbf16, #tpu.memory_space<vmem>>, %arg4: memref<1x128xf32, #tpu.memory_space<vmem>>, %arg5: memref<64x1xf32, #tpu.memory_space<vmem>>, %arg6: memref<64x128xbf16, #tpu.memory_space<vmem>>) attributes {dimension_semantics = [#tpu.dimension_semantics<parallel>, #tpu.dimension_semantics<parallel>], iteration_bounds = array<i64: 2, 1>, scalar_prefetch = 0 : i64, scratch_operands = 0 : i64, tpu.core_type = #tpu.core_type<tc>, window_params = [{transform_indices = @transform_0, window_bounds = array<i64: 64, 128>}, {transform_indices = @transform_1, window_bounds = array<i64: 3, 384, 128>}, {transform_indices = @transform_2, window_bounds = array<i64: 1, 128>}, {pipeline_mode = #tpu.pipeline_mode<synchronous>, transform_indices = @transform_3, window_bounds = array<i64: 64, 1>}, {transform_indices = @transform_4, window_bounds = array<i64: 64, 128>}]} {
    %c0 = arith.constant 0 : index
    %c0_0 = arith.constant 0 : index
    %0 = vector.load %arg2[%c0, %c0_0] : memref<64x128xbf16, #tpu.memory_space<vmem>>, vector<64x128xbf16>
    %1 = arith.extf %0 : vector<64x128xbf16> to vector<64x128xf32>
    %c8_i32 = arith.constant 8 : i32
    %2 = tpu.dynamic_rotate %1 by %c8_i32 dim 0 : vector<64x128xf32>, i32 -> vector<64x128xf32>
    %3 = arith.truncf %2 : vector<64x128xf32> to vector<64x128xbf16>
    %c56_i32 = arith.constant 56 : i32
    %4 = tpu.dynamic_rotate %1 by %c56_i32 dim 0 : vector<64x128xf32>, i32 -> vector<64x128xf32>
    %5 = arith.truncf %4 : vector<64x128xf32> to vector<64x128xbf16>
    %6 = tpu.concatenate %3, %0, %5 in 1 : vector<64x128xbf16>, vector<64x128xbf16>, vector<64x128xbf16> -> vector<64x384xbf16>
    %c0_1 = arith.constant 0 : index
    %c0_2 = arith.constant 0 : index
    %c0_3 = arith.constant 0 : index
    %7 = vector.load %arg3[%c0_1, %c0_2, %c0_3] : memref<3x384x128xbf16, #tpu.memory_space<vmem>>, vector<1x384x128xbf16>
    %8 = vector.shape_cast %7 : vector<1x384x128xbf16> to vector<384x128xbf16>
    %cst = arith.constant dense<0.000000e+00> : vector<64x128xf32>
    %9 = tpu.matmul %6, %8, %cst {dimension_numbers = #tpu.dot_dimension_numbers<[1], [0], [0], [1], [0, 0, 1, 1], [], []>} : vector<64x384xbf16>, vector<384x128xbf16>, vector<64x128xf32> -> vector<64x128xf32>
    %c1 = arith.constant 1 : index
    %c0_4 = arith.constant 0 : index
    %c0_5 = arith.constant 0 : index
    %10 = vector.load %arg3[%c1, %c0_4, %c0_5] : memref<3x384x128xbf16, #tpu.memory_space<vmem>>, vector<1x384x128xbf16>
    %11 = vector.shape_cast %10 : vector<1x384x128xbf16> to vector<384x128xbf16>
    %cst_6 = arith.constant dense<0.000000e+00> : vector<64x128xf32>
    %12 = tpu.matmul %6, %11, %cst_6 {dimension_numbers = #tpu.dot_dimension_numbers<[1], [0], [0], [1], [0, 0, 1, 1], [], []>} : vector<64x384xbf16>, vector<384x128xbf16>, vector<64x128xf32> -> vector<64x128xf32>
    %c2 = arith.constant 2 : index
    %c0_7 = arith.constant 0 : index
    %c0_8 = arith.constant 0 : index
    %13 = vector.load %arg3[%c2, %c0_7, %c0_8] : memref<3x384x128xbf16, #tpu.memory_space<vmem>>, vector<1x384x128xbf16>
    %14 = vector.shape_cast %13 : vector<1x384x128xbf16> to vector<384x128xbf16>
    %cst_9 = arith.constant dense<0.000000e+00> : vector<64x128xf32>
    %15 = tpu.matmul %6, %14, %cst_9 {dimension_numbers = #tpu.dot_dimension_numbers<[1], [0], [0], [1], [0, 0, 1, 1], [], []>} : vector<64x384xbf16>, vector<384x128xbf16>, vector<64x128xf32> -> vector<64x128xf32>
    %c1_i32 = arith.constant 1 : i32
    %16 = tpu.dynamic_rotate %9 by %c1_i32 dim 0 : vector<64x128xf32>, i32 -> vector<64x128xf32>
    %17 = arith.addf %16, %12 : vector<64x128xf32>
    %c63_i32 = arith.constant 63 : i32
    %18 = tpu.dynamic_rotate %15 by %c63_i32 dim 0 : vector<64x128xf32>, i32 -> vector<64x128xf32>
    %19 = arith.addf %17, %18 : vector<64x128xf32>
    %c0_10 = arith.constant 0 : index
    %c0_11 = arith.constant 0 : index
    %20 = vector.load %arg4[%c0_10, %c0_11] : memref<1x128xf32, #tpu.memory_space<vmem>>, vector<1x128xf32>
    %21 = vector.broadcast %20 : vector<1x128xf32> to vector<64x128xf32>
    %22 = arith.addf %19, %21 : vector<64x128xf32>
    %cst_12 = arith.constant 0.000000e+00 : f32
    %23 = vector.broadcast %cst_12 : f32 to vector<64x128xf32>
    %24 = arith.maximumf %22, %23 : vector<64x128xf32>
    %c0_13 = arith.constant 0 : index
    %c0_14 = arith.constant 0 : index
    %25 = vector.load %arg5[%c0_13, %c0_14] : memref<64x1xf32, #tpu.memory_space<vmem>>, vector<64x1xf32>
    %26 = vector.broadcast %25 : vector<64x1xf32> to vector<64x128xf32>
    %27 = arith.mulf %24, %26 : vector<64x128xf32>
    %28 = arith.truncf %27 : vector<64x128xf32> to vector<64x128xbf16>
    %c0_15 = arith.constant 0 : index
    %c0_16 = arith.constant 0 : index
    %29 = vector.load %arg6[%c0_15, %c0_16] : memref<64x128xbf16, #tpu.memory_space<vmem>>, vector<64x128xbf16>
    tpu.vector_store %arg6[%c0_15, %c0_16], %28 {strides = array<i32>} : memref<64x128xbf16, #tpu.memory_space<vmem>>, vector<64x128xbf16>,
    return
  }
  func.func @transform_0(%arg0: i32, %arg1: i32) -> (i32, i32) {
    %c0_i32 = arith.constant 0 : i32
    %c0_i32_0 = arith.constant 0 : i32
    return %arg0, %c0_i32 : i32, i32
  }
  func.func @transform_1(%arg0: i32, %arg1: i32) -> (i32, i32, i32) {
    %c0_i32 = arith.constant 0 : i32
    %c0_i32_0 = arith.constant 0 : i32
    %c0_i32_1 = arith.constant 0 : i32
    return %c0_i32, %c0_i32_0, %arg1 : i32, i32, i32
  }
  func.func @transform_2(%arg0: i32, %arg1: i32) -> (i32, i32) {
    %c0_i32 = arith.constant 0 : i32
    %c0_i32_0 = arith.constant 0 : i32
    return %c0_i32, %arg1 : i32, i32
  }
  func.func @transform_3(%arg0: i32, %arg1: i32) -> (i32, i32) {
    %c0_i32 = arith.constant 0 : i32
    %c0_i32_0 = arith.constant 0 : i32
    %c0_i32_1 = arith.constant 0 : i32
    return %c0_i32, %c0_i32_0 : i32, i32
  }
  func.func @transform_4(%arg0: i32, %arg1: i32) -> (i32, i32) {
    %c0_i32 = arith.constant 0 : i32
    return %arg0, %arg1 : i32, i32
  }
}

module attributes {stable_mosaic.version = 11 : i64} {
  func.func @_maxpool2x2_pair_kernel(%arg0: i32, %arg1: memref<4x2x4x256xbf16, #tpu.memory_space<vmem>>, %arg2: memref<4x4x128xbf16, #tpu.memory_space<vmem>>) attributes {dimension_semantics = [#tpu.dimension_semantics<parallel>], iteration_bounds = array<i64: 2>, scalar_prefetch = 0 : i64, scratch_operands = 0 : i64, tpu.core_type = #tpu.core_type<tc>, window_params = [{transform_indices = @transform_0, window_bounds = array<i64: 4, 2, 4, 256>}, {transform_indices = @transform_1, window_bounds = array<i64: 4, 4, 128>}]} {
    %c0 = arith.constant 0 : index
    %c0_0 = arith.constant 0 : index
    %c0_1 = arith.constant 0 : index
    %c0_2 = arith.constant 0 : index
    %0 = vector.load %arg1[%c0, %c0_0, %c0_1, %c0_2] : memref<4x2x4x256xbf16, #tpu.memory_space<vmem>>, vector<4x2x4x256xbf16>
    %1 = vector.extract_strided_slice %0 {offsets = [0, 0, 0, 0], sizes = [4, 1, 4, 256], strides = [1, 1, 1, 1]} : vector<4x2x4x256xbf16> to vector<4x1x4x256xbf16>
    %2 = vector.shape_cast %1 : vector<4x1x4x256xbf16> to vector<4x4x256xbf16>
    %3 = vector.extract_strided_slice %0 {offsets = [0, 1, 0, 0], sizes = [4, 1, 4, 256], strides = [1, 1, 1, 1]} : vector<4x2x4x256xbf16> to vector<4x1x4x256xbf16>
    %4 = vector.shape_cast %3 : vector<4x1x4x256xbf16> to vector<4x4x256xbf16>
    %5 = arith.maximumf %2, %4 : vector<4x4x256xbf16>
    %6 = vector.extract_strided_slice %5 {offsets = [0, 0, 0], sizes = [4, 4, 128], strides = [1, 1, 1]} : vector<4x4x256xbf16> to vector<4x4x128xbf16>
    %7 = vector.extract_strided_slice %5 {offsets = [0, 0, 128], sizes = [4, 4, 128], strides = [1, 1, 1]} : vector<4x4x256xbf16> to vector<4x4x128xbf16>
    %8 = arith.maximumf %6, %7 : vector<4x4x128xbf16>
    %c0_3 = arith.constant 0 : index
    %c0_4 = arith.constant 0 : index
    %c0_5 = arith.constant 0 : index
    %9 = vector.load %arg2[%c0_3, %c0_4, %c0_5] : memref<4x4x128xbf16, #tpu.memory_space<vmem>>, vector<4x4x128xbf16>
    tpu.vector_store %arg2[%c0_3, %c0_4, %c0_5], %8 {strides = array<i32>} : memref<4x4x128xbf16, #tpu.memory_space<vmem>>, vector<4x4x128xbf16>,
    return
  }
  func.func @transform_0(%arg0: i32) -> (i32, i32, i32, i32) {
    %c0_i32 = arith.constant 0 : i32
    %c0_i32_0 = arith.constant 0 : i32
    %c0_i32_1 = arith.constant 0 : i32
    %c0_i32_2 = arith.constant 0 : i32
    return %arg0, %c0_i32, %c0_i32_0, %c0_i32_1 : i32, i32, i32, i32
  }
  func.func @transform_1(%arg0: i32) -> (i32, i32, i32) {
    %c0_i32 = arith.constant 0 : i32
    %c0_i32_0 = arith.constant 0 : i32
    %c0_i32_1 = arith.constant 0 : i32
    return %arg0, %c0_i32, %c0_i32_0 : i32, i32, i32
  }
}

</mosaic_0001>

<llo_original>
// kernel: vgg_backbone_forward.12
$region0: #{vgg_backbone_forward.12}
  #allocation0 [shape = 'u32[]', space=smem, size = 0x4, offset = 0x4, fixed_abs, tag = 'smem constant byte address 0x4 - core index']
  #allocation1 [shape = 'u32[144,128]{1,0:T(1,128)}', space=vmem, size = 0x12000, scoped, tag = 'internal scratch']
  %s0 = inlined_call_operand.vmem [shape: bf16[24,2,12,256], index: 0, kind: input, shape index: {}]
  %s1 = inlined_call_operand.vmem [shape: bf16[24,12,128], index: 1, kind: output, shape index: {}]
  %s2 = sld [smem:[#allocation0]]
  $region37: #{vgg_backbone_forward.12} parent=0
    _
  %s4 = ssub.s32 1, %s2
  %s5 = scalar_select 0, %s4, %s2
  loop: start=0, step=1, limit=4
  $region2: #{vgg_backbone_forward.12} parent=0 // loop_pre_header
    _
  $region3: #{vgg_backbone_forward.12} parent=0 // loop_header
    %s7 = sphi 0, %s11
    %p8 = scmp.ge.s32.totalorder %s7, 4
    %s17 = sphi 0, %s19
    %s20 = sphi 0, %s17
    %s21 = sphi 0, %s20
    %s37 = sphi 0, %s21
    %s43 = sphi 0, %s45
    %s46 = sphi 0, %s43
    %s47 = sphi 0, %s46
    %s63 = sphi 0, %s47
  $region4: #{vgg_backbone_forward.12} parent=0 // loop_header_branch
    %10 = sbr.rel (%p8) target = $region8
  $region5: #{vgg_backbone_forward.12} parent=0 // loop_body
    %s12 = ssub.s32 %s7, 1
    %s13 = ssub.s32 %s7, 2
    %s14 = sadd.s32 %s7, 1
    %s15 = ssub.s32 %s7, %s14
    %p16 = scmp.eq.s32.totalorder %s15, 0
    %s18 = sadd.s32 %s17, 1
    %s19 = scalar_select %p16, %s17, %s18
    %p22 = pneg %p16
    %p23 = scmp.eq.s32.totalorder %s7, 1
    %p24 = por %p22, %p23
    %p25 = scmp.ne.s32.totalorder %s17, %s20
    %p26 = scmp.eq.s32.totalorder %s7, 0
    %p27 = por %p25, %p26
    %p28 = scmp.ne.s32.totalorder %s17, %s20
    %p29 = scmp.eq.s32.totalorder %s12, 1
    %p30 = por %p28, %p29
    %p31 = scmp.ne.s32.totalorder %s20, %s21
    %p32 = scmp.eq.s32.totalorder %s12, 0
    %p33 = por %p31, %p32
    %p34 = scmp.ne.s32.totalorder %s20, %s21
    %p35 = scmp.eq.s32.totalorder %s13, 1
    %p36 = por %p34, %p35
    %p38 = scmp.ne.s32.totalorder %s21, %s37
    %p39 = scmp.eq.s32.totalorder %s13, 0
    %p40 = por %p38, %p39
    %s41 = ssub.s32 %s7, %s14
    %p42 = scmp.eq.s32.totalorder %s41, 0
    %s44 = sadd.s32 %s43, 1
    %s45 = scalar_select %p42, %s43, %s44
    %p48 = pneg %p42
    %p49 = scmp.eq.s32.totalorder %s7, 1
    %p50 = por %p48, %p49
    %p51 = scmp.ne.s32.totalorder %s43, %s46
    %p52 = scmp.eq.s32.totalorder %s7, 0
    %p53 = por %p51, %p52
    %p54 = scmp.ne.s32.totalorder %s43, %s46
    %p55 = scmp.eq.s32.totalorder %s12, 1
    %p56 = por %p54, %p55
    %p57 = scmp.ne.s32.totalorder %s46, %s47
    %p58 = scmp.eq.s32.totalorder %s12, 0
    %p59 = por %p57, %p58
    %p60 = scmp.ne.s32.totalorder %s46, %s47
    %p61 = scmp.eq.s32.totalorder %s13, 1
    %p62 = por %p60, %p61
    %p64 = scmp.ne.s32.totalorder %s47, %s63
    %p65 = scmp.eq.s32.totalorder %s13, 0
    %p66 = por %p64, %p65
    %p67 = scmp.le.s32.totalorder 1, %s7
    %p68 = scmp.lt.s32.totalorder %s7, 3
    %p69 = pnand %p67, %p68
    %p70 = pneg %p69
    // Predicated region
    $region9: #{vgg_backbone_forward.12} parent=5 // pred_check
      _
    $region10: #{vgg_backbone_forward.12} parent=5 // pred_check_branch
      %72 = sbr.rel (%p69) target = $region12
    $region11: #{vgg_backbone_forward.12} parent=5 // pred_region
      %s73 = ssub.s32 %s7, 1
    $region12: #{vgg_backbone_forward.12} parent=5 // pred_fallthru
      _
    %p74 = scmp.lt.s32.totalorder %s7, 2
    // Predicated region
    $region13: #{vgg_backbone_forward.12} parent=5 // pred_check
      %p75 = pneg %p74
    $region14: #{vgg_backbone_forward.12} parent=5 // pred_check_branch
      %77 = sbr.rel (%p75) target = $region16
    $region15: #{vgg_backbone_forward.12} parent=5 // pred_region
      // Predicated region
      $region17: #{vgg_backbone_forward.12} parent=15 // pred_check
        %p78 = pneg %p27
      $region18: #{vgg_backbone_forward.12} parent=15 // pred_check_branch
        %80 = sbr.rel (%p78) target = $region20
      $region19: #{vgg_backbone_forward.12} parent=15 // pred_region
        %s81 = smul.u32 12, %s7
        %p82 = scmp.lt.s32.totalorder %s81, 23
        %s83 = scalar_select %p82, %s81, 23
        %s84 = smul.addr %s83, 8
        %s85 = smul.addr %s84, 4
        %s86 = scalar_lea.vmem %s0, %s85
        %s87 = smul.u32 12, %s7
      $region20: #{vgg_backbone_forward.12} parent=15 // pred_fallthru
        _
    $region16: #{vgg_backbone_forward.12} parent=5 // pred_fallthru
      _
    %p88 = scmp.le.s32.totalorder 1, %s7
    %p89 = scmp.lt.s32.totalorder %s7, 3
    %p90 = pnand %p88, %p89
    %p91 = pneg %p90
    // Predicated region
    $region21: #{vgg_backbone_forward.12} parent=5 // pred_check
      _
    $region22: #{vgg_backbone_forward.12} parent=5 // pred_check_branch
      %93 = sbr.rel (%p90) target = $region24
    $region23: #{vgg_backbone_forward.12} parent=5 // pred_region
      %s94 = ssub.s32 %s7, 1
      %s95 = smul.u32 12, %s12
      %p96 = scmp.lt.s32.totalorder %s95, 23
      %s97 = scalar_select %p96, %s95, 23
      %s98 = smul.addr %s97, 8
      %s99 = smul.addr %s98, 4
      %s100 = scalar_lea.vmem %s0, %s99
      %p101 = pneg %p33
      %p102 = pneg %p30
      %p103 = pneg %p59
      %p104 = pneg %p56
      %s105 = smul.u32 12, %s12
      %p106 = scmp.lt.s32.totalorder %s105, 23
      %s107 = scalar_select %p106, %s105, 23
      %s108 = smul.addr %s107, 2
      %s109 = smul.addr %s108, 4
      %s110 = scalar_lea.vmem %s1, %s109
      %s111 = smul.u32 12, %s12
      %p112 = scmp.lt.s32.totalorder %s111, 23
      %s113 = scalar_select %p112, %s111, 23
      %s114 = smul.addr %s113, 8
      %s115 = smul.addr %s114, 4
      %s116 = scalar_lea.vmem %s0, %s115
      %s117 = smul.u32 12, %s12
      %s118 = smul.u32 12, %s12
      %p119 = scmp.lt.s32.totalorder %s118, 23
      %s120 = scalar_select %p119, %s118, 23
      %s121 = smul.addr %s120, 2
      %s122 = smul.addr %s121, 4
      %s123 = scalar_lea.vmem %s1, %s122
      %s124 = smul.u32 12, %s12
      %v125 = vld [vmem:[%s116] sm:$0xff]
      %v126 = vld [vmem:[%s116 + $0x8] sm:$0x33]
      %v127 = vld [vmem:[%s116 + $0x10] sm:$0xff]
      %v128 = vld [vmem:[%s116 + $0x18] sm:$0x33]
      %v129 = vld [vmem:[%s116 + $0x20] sm:$0xff]
      %v130 = vld [vmem:[%s116 + $0x28] sm:$0x33]
      %v131 = vld [vmem:[%s116 + $0x30] sm:$0xff]
      %v132 = vld [vmem:[%s116 + $0x38] sm:$0x33]
      %v133 = vld [vmem:[%s116 + $0x40] sm:$0xff]
      %v134 = vld [vmem:[%s116 + $0x48] sm:$0x33]
      %v135 = vld [vmem:[%s116 + $0x50] sm:$0xff]
      %v136 = vld [vmem:[%s116 + $0x58] sm:$0x33]
      %v137 = vld [vmem:[%s116 + $0x60] sm:$0xff]
      %v138 = vld [vmem:[%s116 + $0x68] sm:$0x33]
      %v139 = vld [vmem:[%s116 + $0x70] sm:$0xff]
      %v140 = vld [vmem:[%s116 + $0x78] sm:$0x33]
      %v141 = vld [vmem:[%s116 + $0x80] sm:$0xff]
      %v142 = vld [vmem:[%s116 + $0x88] sm:$0x33]
      %v143 = vld [vmem:[%s116 + $0x90] sm:$0xff]
      %v144 = vld [vmem:[%s116 + $0x98] sm:$0x33]
      %v145 = vld [vmem:[%s116 + $0xa0] sm:$0xff]
      %v146 = vld [vmem:[%s116 + $0xa8] sm:$0x33]
      %v147 = vld [vmem:[%s116 + $0xb0] sm:$0xff]
      %v148 = vld [vmem:[%s116 + $0xb8] sm:$0x33]
      %v149 = vld [vmem:[%s116 + $0xc0] sm:$0xff]
      %v150 = vld [vmem:[%s116 + $0xc8] sm:$0x33]
      %v151 = vld [vmem:[%s116 + $0xd0] sm:$0xff]
      %v152 = vld [vmem:[%s116 + $0xd8] sm:$0x33]
      %v153 = vld [vmem:[%s116 + $0xe0] sm:$0xff]
      %v154 = vld [vmem:[%s116 + $0xe8] sm:$0x33]
      %v155 = vld [vmem:[%s116 + $0xf0] sm:$0xff]
      %v156 = vld [vmem:[%s116 + $0xf8] sm:$0x33]
      %v157 = vld [vmem:[%s116 + $0x100] sm:$0xff]
      %v158 = vld [vmem:[%s116 + $0x108] sm:$0x33]
      %v159 = vld [vmem:[%s116 + $0x110] sm:$0xff]
      %v160 = vld [vmem:[%s116 + $0x118] sm:$0x33]
      %v161 = vld [vmem:[%s116 + $0x120] sm:$0xff]
      %v162 = vld [vmem:[%s116 + $0x128] sm:$0x33]
      %v163 = vld [vmem:[%s116 + $0x130] sm:$0xff]
      %v164 = vld [vmem:[%s116 + $0x138] sm:$0x33]
      %v165 = vld [vmem:[%s116 + $0x140] sm:$0xff]
      %v166 = vld [vmem:[%s116 + $0x148] sm:$0x33]
      %v167 = vld [vmem:[%s116 + $0x150] sm:$0xff]
      %v168 = vld [vmem:[%s116 + $0x158] sm:$0x33]
      %v169 = vld [vmem:[%s116 + $0x160] sm:$0xff]
      %v170 = vld [vmem:[%s116 + $0x168] sm:$0x33]
      %v171 = vld [vmem:[%s116 + $0x170] sm:$0xff]
      %v172 = vld [vmem:[%s116 + $0x178] sm:$0x33]
      %v173 = vmax.bf16 %v125, %v127
      %v174 = vmax.bf16 %v126, %v128
      %v175 = vmax.bf16 %v129, %v131
      %v176 = vmax.bf16 %v130, %v132
      %v177 = vmax.bf16 %v133, %v135
      %v178 = vmax.bf16 %v134, %v136
      %v179 = vmax.bf16 %v137, %v139
      %v180 = vmax.bf16 %v138, %v140
      %v181 = vmax.bf16 %v141, %v143
      %v182 = vmax.bf16 %v142, %v144
      %v183 = vmax.bf16 %v145, %v147
      %v184 = vmax.bf16 %v146, %v148
      %v185 = vmax.bf16 %v149, %v151
      %v186 = vmax.bf16 %v150, %v152
      %v187 = vmax.bf16 %v153, %v155
      %v188 = vmax.bf16 %v154, %v156
      %v189 = vmax.bf16 %v157, %v159
      %v190 = vmax.bf16 %v158, %v160
      %v191 = vmax.bf16 %v161, %v163
      %v192 = vmax.bf16 %v162, %v164
      %v193 = vmax.bf16 %v165, %v167
      %v194 = vmax.bf16 %v166, %v168
      %v195 = vmax.bf16 %v169, %v171
      %v196 = vmax.bf16 %v170, %v172
      %v221 = vrot.slane %v173, 4
      %v222 = vrot.slane %v174, 4
      %v223 = vrot.slane %v175, 4
      %v224 = vrot.slane %v176, 4
      %v225 = vrot.slane %v177, 4
      %v226 = vrot.slane %v178, 4
      %v227 = vrot.slane %v179, 4
      %v228 = vrot.slane %v180, 4
      %v229 = vrot.slane %v181, 4
      %v230 = vrot.slane %v182, 4
      %v231 = vrot.slane %v183, 4
      %v232 = vrot.slane %v184, 4
      %v233 = vrot.slane %v185, 4
      %v234 = vrot.slane %v186, 4
      %v235 = vrot.slane %v187, 4
      %v236 = vrot.slane %v188, 4
      %v237 = vrot.slane %v189, 4
      %v238 = vrot.slane %v190, 4
      %v239 = vrot.slane %v191, 4
      %v240 = vrot.slane %v192, 4
      %v241 = vrot.slane %v193, 4
      %v242 = vrot.slane %v194, 4
      %v243 = vrot.slane %v195, 4
      %v244 = vrot.slane %v196, 4
      %v269 = vmax.bf16 %v173, %v221
      %v270 = vmax.bf16 %v174, %v222
      %v271 = vmax.bf16 %v175, %v223
      %v272 = vmax.bf16 %v176, %v224
      %v273 = vmax.bf16 %v177, %v225
      %v274 = vmax.bf16 %v178, %v226
      %v275 = vmax.bf16 %v179, %v227
      %v276 = vmax.bf16 %v180, %v228
      %v277 = vmax.bf16 %v181, %v229
      %v278 = vmax.bf16 %v182, %v230
      %v279 = vmax.bf16 %v183, %v231
      %v280 = vmax.bf16 %v184, %v232
      %v281 = vmax.bf16 %v185, %v233
      %v282 = vmax.bf16 %v186, %v234
      %v283 = vmax.bf16 %v187, %v235
      %v284 = vmax.bf16 %v188, %v236
      %v285 = vmax.bf16 %v189, %v237
      %v286 = vmax.bf16 %v190, %v238
      %v287 = vmax.bf16 %v191, %v239
      %v288 = vmax.bf16 %v192, %v240
      %v289 = vmax.bf16 %v193, %v241
      %v290 = vmax.bf16 %v194, %v242
      %v291 = vmax.bf16 %v195, %v243
      %v292 = vmax.bf16 %v196, %v244
      %293 = vst [vmem:[%s123] sm:$0xf] %v269
      %294 = vst [vmem:[%s123 + $0x4] sm:$0x3] %v270
      %295 = vst [vmem:[%s123 + $0x8] sm:$0xf] %v271
      %296 = vst [vmem:[%s123 + $0xc] sm:$0x3] %v272
      %297 = vst [vmem:[%s123 + $0x10] sm:$0xf] %v273
      %298 = vst [vmem:[%s123 + $0x14] sm:$0x3] %v274
      %299 = vst [vmem:[%s123 + $0x18] sm:$0xf] %v275
      %300 = vst [vmem:[%s123 + $0x1c] sm:$0x3] %v276
      %301 = vst [vmem:[%s123 + $0x20] sm:$0xf] %v277
      %302 = vst [vmem:[%s123 + $0x24] sm:$0x3] %v278
      %303 = vst [vmem:[%s123 + $0x28] sm:$0xf] %v279
      %304 = vst [vmem:[%s123 + $0x2c] sm:$0x3] %v280
      %305 = vst [vmem:[%s123 + $0x30] sm:$0xf] %v281
      %306 = vst [vmem:[%s123 + $0x34] sm:$0x3] %v282
      %307 = vst [vmem:[%s123 + $0x38] sm:$0xf] %v283
      %308 = vst [vmem:[%s123 + $0x3c] sm:$0x3] %v284
      %309 = vst [vmem:[%s123 + $0x40] sm:$0xf] %v285
      %310 = vst [vmem:[%s123 + $0x44] sm:$0x3] %v286
      %311 = vst [vmem:[%s123 + $0x48] sm:$0xf] %v287
      %312 = vst [vmem:[%s123 + $0x4c] sm:$0x3] %v288
      %313 = vst [vmem:[%s123 + $0x50] sm:$0xf] %v289
      %314 = vst [vmem:[%s123 + $0x54] sm:$0x3] %v290
      %315 = vst [vmem:[%s123 + $0x58] sm:$0xf] %v291
      %316 = vst [vmem:[%s123 + $0x5c] sm:$0x3] %v292
      %s317 = smul.u32 12, %s12
      %p318 = scmp.lt.s32.totalorder %s317, 23
      %s319 = scalar_select %p318, %s317, 23
      %s320 = smul.addr %s319, 2
      %s321 = smul.addr %s320, 4
      %s322 = scalar_lea.vmem %s1, %s321
      // Predicated region
      $region25: #{vgg_backbone_forward.12} parent=23 // pred_check
        %p323 = pneg %p56
      $region26: #{vgg_backbone_forward.12} parent=23 // pred_check_branch
        %325 = sbr.rel (%p323) target = $region28
      $region27: #{vgg_backbone_forward.12} parent=23 // pred_region
        %s326 = smul.u32 12, %s12
      $region28: #{vgg_backbone_forward.12} parent=23 // pred_fallthru
        _
    $region24: #{vgg_backbone_forward.12} parent=5 // pred_fallthru
      _
    %p327 = scmp.le.s32.totalorder 2, %s7
    // Predicated region
    $region29: #{vgg_backbone_forward.12} parent=5 // pred_check
      %p328 = pneg %p327
    $region30: #{vgg_backbone_forward.12} parent=5 // pred_check_branch
      %330 = sbr.rel (%p328) target = $region32
    $region31: #{vgg_backbone_forward.12} parent=5 // pred_region
      %s331 = ssub.s32 %s7, 2
      // Predicated region
      $region33: #{vgg_backbone_forward.12} parent=31 // pred_check
        %p332 = pneg %p62
      $region34: #{vgg_backbone_forward.12} parent=31 // pred_check_branch
        %334 = sbr.rel (%p332) target = $region36
      $region35: #{vgg_backbone_forward.12} parent=31 // pred_region
        %s335 = smul.u32 12, %s13
        %p336 = scmp.lt.s32.totalorder %s335, 23
        %s337 = scalar_select %p336, %s335, 23
        %s338 = smul.addr %s337, 2
        %s339 = smul.addr %s338, 4
        %s340 = scalar_lea.vmem %s1, %s339
      $region36: #{vgg_backbone_forward.12} parent=31 // pred_fallthru
        _
    $region32: #{vgg_backbone_forward.12} parent=5 // pred_fallthru
      _
  $region6: #{vgg_backbone_forward.12} parent=0 // loop_footer
    %s11 = sadd.s32 1, %s7
  $region7: #{vgg_backbone_forward.12} parent=0 // loop_footer_branch
    %6 = sbr.rel target = $region3
  $region8: #{vgg_backbone_forward.12} parent=0 // loop_exit
    _

// kernel: vgg_backbone_forward.14
$region0: #{vgg_backbone_forward.14}
  #allocation0 [shape = 'u32[]', space=smem, size = 0x4, offset = 0x4, fixed_abs, tag = 'smem constant byte address 0x4 - core index']
  #allocation1 [shape = 'u32[144,128]{1,0:T(1,128)}', space=vmem, size = 0x12000, scoped, tag = 'internal scratch']
  %s0 = inlined_call_operand.vmem [shape: bf16[16,2,8,256], index: 0, kind: input, shape index: {}]
  %s1 = inlined_call_operand.vmem [shape: bf16[16,8,128], index: 1, kind: output, shape index: {}]
  %s2 = sld [smem:[#allocation0]]
  $region37: #{vgg_backbone_forward.14} parent=0
    _
  %s4 = ssub.s32 1, %s2
  %s5 = scalar_select 0, %s4, %s2
  loop: start=0, step=1, limit=4
  $region2: #{vgg_backbone_forward.14} parent=0 // loop_pre_header
    _
  $region3: #{vgg_backbone_forward.14} parent=0 // loop_header
    %s7 = sphi 0, %s11
    %p8 = scmp.ge.s32.totalorder %s7, 4
    %s17 = sphi 0, %s19
    %s20 = sphi 0, %s17
    %s21 = sphi 0, %s20
    %s37 = sphi 0, %s21
    %s43 = sphi 0, %s45
    %s46 = sphi 0, %s43
    %s47 = sphi 0, %s46
    %s63 = sphi 0, %s47
  $region4: #{vgg_backbone_forward.14} parent=0 // loop_header_branch
    %10 = sbr.rel (%p8) target = $region8
  $region5: #{vgg_backbone_forward.14} parent=0 // loop_body
    %s12 = ssub.s32 %s7, 1
    %s13 = ssub.s32 %s7, 2
    %s14 = sadd.s32 %s7, 1
    %s15 = ssub.s32 %s7, %s14
    %p16 = scmp.eq.s32.totalorder %s15, 0
    %s18 = sadd.s32 %s17, 1
    %s19 = scalar_select %p16, %s17, %s18
    %p22 = pneg %p16
    %p23 = scmp.eq.s32.totalorder %s7, 1
    %p24 = por %p22, %p23
    %p25 = scmp.ne.s32.totalorder %s17, %s20
    %p26 = scmp.eq.s32.totalorder %s7, 0
    %p27 = por %p25, %p26
    %p28 = scmp.ne.s32.totalorder %s17, %s20
    %p29 = scmp.eq.s32.totalorder %s12, 1
    %p30 = por %p28, %p29
    %p31 = scmp.ne.s32.totalorder %s20, %s21
    %p32 = scmp.eq.s32.totalorder %s12, 0
    %p33 = por %p31, %p32
    %p34 = scmp.ne.s32.totalorder %s20, %s21
    %p35 = scmp.eq.s32.totalorder %s13, 1
    %p36 = por %p34, %p35
    %p38 = scmp.ne.s32.totalorder %s21, %s37
    %p39 = scmp.eq.s32.totalorder %s13, 0
    %p40 = por %p38, %p39
    %s41 = ssub.s32 %s7, %s14
    %p42 = scmp.eq.s32.totalorder %s41, 0
    %s44 = sadd.s32 %s43, 1
    %s45 = scalar_select %p42, %s43, %s44
    %p48 = pneg %p42
    %p49 = scmp.eq.s32.totalorder %s7, 1
    %p50 = por %p48, %p49
    %p51 = scmp.ne.s32.totalorder %s43, %s46
    %p52 = scmp.eq.s32.totalorder %s7, 0
    %p53 = por %p51, %p52
    %p54 = scmp.ne.s32.totalorder %s43, %s46
    %p55 = scmp.eq.s32.totalorder %s12, 1
    %p56 = por %p54, %p55
    %p57 = scmp.ne.s32.totalorder %s46, %s47
    %p58 = scmp.eq.s32.totalorder %s12, 0
    %p59 = por %p57, %p58
    %p60 = scmp.ne.s32.totalorder %s46, %s47
    %p61 = scmp.eq.s32.totalorder %s13, 1
    %p62 = por %p60, %p61
    %p64 = scmp.ne.s32.totalorder %s47, %s63
    %p65 = scmp.eq.s32.totalorder %s13, 0
    %p66 = por %p64, %p65
    %p67 = scmp.le.s32.totalorder 1, %s7
    %p68 = scmp.lt.s32.totalorder %s7, 3
    %p69 = pnand %p67, %p68
    %p70 = pneg %p69
    // Predicated region
    $region9: #{vgg_backbone_forward.14} parent=5 // pred_check
      _
    $region10: #{vgg_backbone_forward.14} parent=5 // pred_check_branch
      %72 = sbr.rel (%p69) target = $region12
    $region11: #{vgg_backbone_forward.14} parent=5 // pred_region
      %s73 = ssub.s32 %s7, 1
    $region12: #{vgg_backbone_forward.14} parent=5 // pred_fallthru
      _
    %p74 = scmp.lt.s32.totalorder %s7, 2
    // Predicated region
    $region13: #{vgg_backbone_forward.14} parent=5 // pred_check
      %p75 = pneg %p74
    $region14: #{vgg_backbone_forward.14} parent=5 // pred_check_branch
      %77 = sbr.rel (%p75) target = $region16
    $region15: #{vgg_backbone_forward.14} parent=5 // pred_region
      // Predicated region
      $region17: #{vgg_backbone_forward.14} parent=15 // pred_check
        %p78 = pneg %p27
      $region18: #{vgg_backbone_forward.14} parent=15 // pred_check_branch
        %80 = sbr.rel (%p78) target = $region20
      $region19: #{vgg_backbone_forward.14} parent=15 // pred_region
        %s81 = smul.u32 8, %s7
        %p82 = scmp.lt.s32.totalorder %s81, 15
        %s83 = scalar_select %p82, %s81, 15
        %s84 = smul.addr %s83, 4
        %s85 = smul.addr %s84, 4
        %s86 = scalar_lea.vmem %s0, %s85
        %s87 = smul.u32 8, %s7
      $region20: #{vgg_backbone_forward.14} parent=15 // pred_fallthru
        _
    $region16: #{vgg_backbone_forward.14} parent=5 // pred_fallthru
      _
    %p88 = scmp.le.s32.totalorder 1, %s7
    %p89 = scmp.lt.s32.totalorder %s7, 3
    %p90 = pnand %p88, %p89
    %p91 = pneg %p90
    // Predicated region
    $region21: #{vgg_backbone_forward.14} parent=5 // pred_check
      _
    $region22: #{vgg_backbone_forward.14} parent=5 // pred_check_branch
      %93 = sbr.rel (%p90) target = $region24
    $region23: #{vgg_backbone_forward.14} parent=5 // pred_region
      %s94 = ssub.s32 %s7, 1
      %s95 = smul.u32 8, %s12
      %p96 = scmp.lt.s32.totalorder %s95, 15
      %s97 = scalar_select %p96, %s95, 15
      %s98 = smul.addr %s97, 4
      %s99 = smul.addr %s98, 4
      %s100 = scalar_lea.vmem %s0, %s99
      %p101 = pneg %p33
      %p102 = pneg %p30
      %p103 = pneg %p59
      %p104 = pneg %p56
      %s105 = smul.u32 8, %s12
      %p106 = scmp.lt.s32.totalorder %s105, 15
      %s107 = scalar_select %p106, %s105, 15
      %s108 = smul.addr %s107, 4
      %s109 = scalar_lea.vmem %s1, %s108
      %s110 = smul.u32 8, %s12
      %p111 = scmp.lt.s32.totalorder %s110, 15
      %s112 = scalar_select %p111, %s110, 15
      %s113 = smul.addr %s112, 4
      %s114 = smul.addr %s113, 4
      %s115 = scalar_lea.vmem %s0, %s114
      %s116 = smul.u32 8, %s12
      %s117 = smul.u32 8, %s12
      %p118 = scmp.lt.s32.totalorder %s117, 15
      %s119 = scalar_select %p118, %s117, 15
      %s120 = smul.addr %s119, 4
      %s121 = scalar_lea.vmem %s1, %s120
      %s122 = smul.u32 8, %s12
      %v123 = vld [vmem:[%s115] sm:$0xff]
      %v124 = vld [vmem:[%s115 + $0x8] sm:$0xff]
      %v125 = vld [vmem:[%s115 + $0x10] sm:$0xff]
      %v126 = vld [vmem:[%s115 + $0x18] sm:$0xff]
      %v127 = vld [vmem:[%s115 + $0x20] sm:$0xff]
      %v128 = vld [vmem:[%s115 + $0x28] sm:$0xff]
      %v129 = vld [vmem:[%s115 + $0x30] sm:$0xff]
      %v130 = vld [vmem:[%s115 + $0x38] sm:$0xff]
      %v131 = vld [vmem:[%s115 + $0x40] sm:$0xff]
      %v132 = vld [vmem:[%s115 + $0x48] sm:$0xff]
      %v133 = vld [vmem:[%s115 + $0x50] sm:$0xff]
      %v134 = vld [vmem:[%s115 + $0x58] sm:$0xff]
      %v135 = vld [vmem:[%s115 + $0x60] sm:$0xff]
      %v136 = vld [vmem:[%s115 + $0x68] sm:$0xff]
      %v137 = vld [vmem:[%s115 + $0x70] sm:$0xff]
      %v138 = vld [vmem:[%s115 + $0x78] sm:$0xff]
      %v139 = vmax.bf16 %v123, %v124
      %v140 = vmax.bf16 %v125, %v126
      %v141 = vmax.bf16 %v127, %v128
      %v142 = vmax.bf16 %v129, %v130
      %v143 = vmax.bf16 %v131, %v132
      %v144 = vmax.bf16 %v133, %v134
      %v145 = vmax.bf16 %v135, %v136
      %v146 = vmax.bf16 %v137, %v138
      %v155 = vrot.slane %v139, 4
      %v156 = vrot.slane %v140, 4
      %v157 = vrot.slane %v141, 4
      %v158 = vrot.slane %v142, 4
      %v159 = vrot.slane %v143, 4
      %v160 = vrot.slane %v144, 4
      %v161 = vrot.slane %v145, 4
      %v162 = vrot.slane %v146, 4
      %v171 = vmax.bf16 %v139, %v155
      %v172 = vmax.bf16 %v140, %v156
      %v173 = vmax.bf16 %v141, %v157
      %v174 = vmax.bf16 %v142, %v158
      %v175 = vmax.bf16 %v143, %v159
      %v176 = vmax.bf16 %v144, %v160
      %v177 = vmax.bf16 %v145, %v161
      %v178 = vmax.bf16 %v146, %v162
      %179 = vst [vmem:[%s121] sm:$0xf] %v171
      %180 = vst [vmem:[%s121 + $0x4] sm:$0xf] %v172
      %181 = vst [vmem:[%s121 + $0x8] sm:$0xf] %v173
      %182 = vst [vmem:[%s121 + $0xc] sm:$0xf] %v174
      %183 = vst [vmem:[%s121 + $0x10] sm:$0xf] %v175
      %184 = vst [vmem:[%s121 + $0x14] sm:$0xf] %v176
      %185 = vst [vmem:[%s121 + $0x18] sm:$0xf] %v177
      %186 = vst [vmem:[%s121 + $0x1c] sm:$0xf] %v178
      %s187 = smul.u32 8, %s12
      %p188 = scmp.lt.s32.totalorder %s187, 15
      %s189 = scalar_select %p188, %s187, 15
      %s190 = smul.addr %s189, 4
      %s191 = scalar_lea.vmem %s1, %s190
      // Predicated region
      $region25: #{vgg_backbone_forward.14} parent=23 // pred_check
        %p192 = pneg %p56
      $region26: #{vgg_backbone_forward.14} parent=23 // pred_check_branch
        %194 = sbr.rel (%p192) target = $region28
      $region27: #{vgg_backbone_forward.14} parent=23 // pred_region
        %s195 = smul.u32 8, %s12
      $region28: #{vgg_backbone_forward.14} parent=23 // pred_fallthru
        _
    $region24: #{vgg_backbone_forward.14} parent=5 // pred_fallthru
      _
    %p196 = scmp.le.s32.totalorder 2, %s7
    // Predicated region
    $region29: #{vgg_backbone_forward.14} parent=5 // pred_check
      %p197 = pneg %p196
    $region30: #{vgg_backbone_forward.14} parent=5 // pred_check_branch
      %199 = sbr.rel (%p197) target = $region32
    $region31: #{vgg_backbone_forward.14} parent=5 // pred_region
      %s200 = ssub.s32 %s7, 2
      // Predicated region
      $region33: #{vgg_backbone_forward.14} parent=31 // pred_check
        %p201 = pneg %p62
      $region34: #{vgg_backbone_forward.14} parent=31 // pred_check_branch
        %203 = sbr.rel (%p201) target = $region36
      $region35: #{vgg_backbone_forward.14} parent=31 // pred_region
        %s204 = smul.u32 8, %s13
        %p205 = scmp.lt.s32.totalorder %s204, 15
        %s206 = scalar_select %p205, %s204, 15
        %s207 = smul.addr %s206, 4
        %s208 = scalar_lea.vmem %s1, %s207
      $region36: #{vgg_backbone_forward.14} parent=31 // pred_fallthru
        _
    $region32: #{vgg_backbone_forward.14} parent=5 // pred_fallthru
      _
  $region6: #{vgg_backbone_forward.14} parent=0 // loop_footer
    %s11 = sadd.s32 1, %s7
  $region7: #{vgg_backbone_forward.14} parent=0 // loop_footer_branch
    %6 = sbr.rel target = $region3
  $region8: #{vgg_backbone_forward.14} parent=0 // loop_exit
    _

// kernel: vgg_backbone_forward.10
$region0: #{vgg_backbone_forward.10}
  #allocation0 [shape = 'u32[]', space=smem, size = 0x4, offset = 0x4, fixed_abs, tag = 'smem constant byte address 0x4 - core index']
  #allocation1 [shape = 'u32[144,128]{1,0:T(1,128)}', space=vmem, size = 0x12000, scoped, tag = 'internal scratch']
  %s0 = inlined_call_operand.vmem [shape: bf16[1152,128], index: 0, kind: input, shape index: {}]
  %s1 = inlined_call_operand.vmem [shape: bf16[3,384,128], index: 1, kind: input, shape index: {}]
  %s2 = inlined_call_operand.vmem [shape: f32[1,128], index: 2, kind: input, shape index: {}]
  %s3 = inlined_call_operand.vmem [shape: f32[576,1], index: 3, kind: input, shape index: {}]
  %s4 = inlined_call_operand.vmem [shape: bf16[1152,128], index: 4, kind: output, shape index: {}]
  %s5 = sld [smem:[#allocation0]]
  $region49: #{vgg_backbone_forward.10} parent=0
    _
  %s7 = ssub.s32 1, %s5
  %s8 = scalar_select 0, %s7, %s5
  loop: start=0, step=1, limit=4
  $region2: #{vgg_backbone_forward.10} parent=0 // loop_pre_header
    _
  $region3: #{vgg_backbone_forward.10} parent=0 // loop_header
    %s10 = sphi 0, %s14
    %p11 = scmp.ge.s32.totalorder %s10, 4
    %s17 = sphi 0, %s29
    %s18 = sphi 0, %s25
    %s19 = sphi 0, %s17
    %s20 = sphi 0, %s18
    %s21 = sphi 0, %s19
    %s22 = sphi 0, %s20
    %s32 = sphi 0, %s34
    %s35 = sphi 0, %s32
    %s36 = sphi 0, %s35
    %s52 = sphi 0, %s36
    %s58 = sphi 0, %s60
    %s61 = sphi 0, %s58
    %s62 = sphi 0, %s61
    %s78 = sphi 0, %s62
    %s84 = sphi 0, %s86
    %s87 = sphi 0, %s84
    %s88 = sphi 0, %s87
    %s104 = sphi 0, %s88
    %s108 = sphi 0, %s108
    %s110 = sphi 0, %s108
    %s111 = sphi 0, %s110
    %s125 = sphi 0, %s111
    %s133 = sphi 0, %s135
    %s136 = sphi 0, %s133
    %s137 = sphi 0, %s136
    %s153 = sphi 0, %s137
  $region4: #{vgg_backbone_forward.10} parent=0 // loop_header_branch
    %13 = sbr.rel (%p11) target = $region8
  $region5: #{vgg_backbone_forward.10} parent=0 // loop_body
    %s15 = ssub.s32 %s10, 1
    %s16 = ssub.s32 %s10, 2
    %s23 = sadd.s32 1, %s18
    %p24 = scmp.ge.s32.totalorder %s23, 1
    %s25 = scalar_select %p24, 0, %s23
    %s26 = sadd.s32 1, %s17
    %s27 = scalar_select %p24, %s26, %s17
    %p28 = scmp.ge.s32.totalorder %s27, 2
    %s29 = scalar_select %p28, 0, %s27
    %s30 = ssub.s32 %s17, %s29
    %p31 = scmp.eq.s32.totalorder %s30, 0
    %s33 = sadd.s32 %s32, 1
    %s34 = scalar_select %p31, %s32, %s33
    %p37 = pneg %p31
    %p38 = scmp.eq.s32.totalorder %s10, 1
    %p39 = por %p37, %p38
    %p40 = scmp.ne.s32.totalorder %s32, %s35
    %p41 = scmp.eq.s32.totalorder %s10, 0
    %p42 = por %p40, %p41
    %p43 = scmp.ne.s32.totalorder %s32, %s35
    %p44 = scmp.eq.s32.totalorder %s15, 1
    %p45 = por %p43, %p44
    %p46 = scmp.ne.s32.totalorder %s35, %s36
    %p47 = scmp.eq.s32.totalorder %s15, 0
    %p48 = por %p46, %p47
    %p49 = scmp.ne.s32.totalorder %s35, %s36
    %p50 = scmp.eq.s32.totalorder %s16, 1
    %p51 = por %p49, %p50
    %p53 = scmp.ne.s32.totalorder %s36, %s52
    %p54 = scmp.eq.s32.totalorder %s16, 0
    %p55 = por %p53, %p54
    %s56 = ssub.s32 %s18, %s25
    %p57 = scmp.eq.s32.totalorder %s56, 0
    %s59 = sadd.s32 %s58, 1
    %s60 = scalar_select %p57, %s58, %s59
    %p63 = pneg %p57
    %p64 = scmp.eq.s32.totalorder %s10, 1
    %p65 = por %p63, %p64
    %p66 = scmp.ne.s32.totalorder %s58, %s61
    %p67 = scmp.eq.s32.totalorder %s10, 0
    %p68 = por %p66, %p67
    %p69 = scmp.ne.s32.totalorder %s58, %s61
    %p70 = scmp.eq.s32.totalorder %s15, 1
    %p71 = por %p69, %p70
    %p72 = scmp.ne.s32.totalorder %s61, %s62
    %p73 = scmp.eq.s32.totalorder %s15, 0
    %p74 = por %p72, %p73
    %p75 = scmp.ne.s32.totalorder %s61, %s62
    %p76 = scmp.eq.s32.totalorder %s16, 1
    %p77 = por %p75, %p76
    %p79 = scmp.ne.s32.totalorder %s62, %s78
    %p80 = scmp.eq.s32.totalorder %s16, 0
    %p81 = por %p79, %p80
    %s82 = ssub.s32 %s18, %s25
    %p83 = scmp.eq.s32.totalorder %s82, 0
    %s85 = sadd.s32 %s84, 1
    %s86 = scalar_select %p83, %s84, %s85
    %p89 = pneg %p83
    %p90 = scmp.eq.s32.totalorder %s10, 1
    %p91 = por %p89, %p90
    %p92 = scmp.ne.s32.totalorder %s84, %s87
    %p93 = scmp.eq.s32.totalorder %s10, 0
    %p94 = por %p92, %p93
    %p95 = scmp.ne.s32.totalorder %s84, %s87
    %p96 = scmp.eq.s32.totalorder %s15, 1
    %p97 = por %p95, %p96
    %p98 = scmp.ne.s32.totalorder %s87, %s88
    %p99 = scmp.eq.s32.totalorder %s15, 0
    %p100 = por %p98, %p99
    %p101 = scmp.ne.s32.totalorder %s87, %s88
    %p102 = scmp.eq.s32.totalorder %s16, 1
    %p103 = por %p101, %p102
    %p105 = scmp.ne.s32.totalorder %s88, %s104
    %p106 = scmp.eq.s32.totalorder %s16, 0
    %p107 = por %p105, %p106
    %s109 = sadd.s32 %s108, 1
    %p112 = scmp.eq.s32.totalorder %s10, 1
    %p113 = scmp.ne.s32.totalorder %s108, %s110
    %p114 = scmp.eq.s32.totalorder %s10, 0
    %p115 = por %p113, %p114
    %p116 = scmp.ne.s32.totalorder %s108, %s110
    %p117 = scmp.eq.s32.totalorder %s15, 1
    %p118 = por %p116, %p117
    %p119 = scmp.ne.s32.totalorder %s110, %s111
    %p120 = scmp.eq.s32.totalorder %s15, 0
    %p121 = por %p119, %p120
    %p122 = scmp.ne.s32.totalorder %s110, %s111
    %p123 = scmp.eq.s32.totalorder %s16, 1
    %p124 = por %p122, %p123
    %p126 = scmp.ne.s32.totalorder %s111, %s125
    %p127 = scmp.eq.s32.totalorder %s16, 0
    %p128 = por %p126, %p127
    %s129 = ssub.s32 %s17, %s29
    %s130 = ssub.s32 %s18, %s25
    %s131 = sor.u32 %s129, %s130
    %p132 = scmp.eq.s32.totalorder %s131, 0
    %s134 = sadd.s32 %s133, 1
    %s135 = scalar_select %p132, %s133, %s134
    %p138 = pneg %p132
    %p139 = scmp.eq.s32.totalorder %s10, 1
    %p140 = por %p138, %p139
    %p141 = scmp.ne.s32.totalorder %s133, %s136
    %p142 = scmp.eq.s32.totalorder %s10, 0
    %p143 = por %p141, %p142
    %p144 = scmp.ne.s32.totalorder %s133, %s136
    %p145 = scmp.eq.s32.totalorder %s15, 1
    %p146 = por %p144, %p145
    %p147 = scmp.ne.s32.totalorder %s136, %s137
    %p148 = scmp.eq.s32.totalorder %s15, 0
    %p149 = por %p147, %p148
    %p150 = scmp.ne.s32.totalorder %s136, %s137
    %p151 = scmp.eq.s32.totalorder %s16, 1
    %p152 = por %p150, %p151
    %p154 = scmp.ne.s32.totalorder %s137, %s153
    %p155 = scmp.eq.s32.totalorder %s16, 0
    %p156 = por %p154, %p155
    %p157 = scmp.le.s32.totalorder 1, %s10
    %p158 = scmp.lt.s32.totalorder %s10, 3
    %p159 = pnand %p157, %p158
    %p160 = pneg %p159
    // Predicated region
    $region9: #{vgg_backbone_forward.10} parent=5 // pred_check
      _
    $region10: #{vgg_backbone_forward.10} parent=5 // pred_check_branch
      %162 = sbr.rel (%p159) target = $region12
    $region11: #{vgg_backbone_forward.10} parent=5 // pred_region
      %s163 = ssub.s32 %s10, 1
      // Predicated region
      $region13: #{vgg_backbone_forward.10} parent=11 // pred_check
        %p164 = pneg %p74
      $region14: #{vgg_backbone_forward.10} parent=11 // pred_check_branch
        %166 = sbr.rel (%p164) target = $region16
      $region15: #{vgg_backbone_forward.10} parent=11 // pred_region
        %p167 = scmp.lt.s32.totalorder %s20, 0
        %s168 = scalar_select %p167, %s20, 0
        %s169 = smul.addr %s168, 4
        %s170 = scalar_lea.vmem %s1, %s169
      $region16: #{vgg_backbone_forward.10} parent=11 // pred_fallthru
        _
      // Predicated region
      $region17: #{vgg_backbone_forward.10} parent=11 // pred_check
        %p171 = pneg %p100
      $region18: #{vgg_backbone_forward.10} parent=11 // pred_check_branch
        %173 = sbr.rel (%p171) target = $region20
      $region19: #{vgg_backbone_forward.10} parent=11 // pred_region
        %p174 = scmp.lt.s32.totalorder %s20, 0
        %s175 = scalar_select %p174, %s20, 0
        %s176 = scalar_lea.vmem %s2, %s175
      $region20: #{vgg_backbone_forward.10} parent=11 // pred_fallthru
        _
      // Predicated region
      $region21: #{vgg_backbone_forward.10} parent=11 // pred_check
        %p177 = pneg %p121
      $region22: #{vgg_backbone_forward.10} parent=11 // pred_check_branch
        %179 = sbr.rel (%p177) target = $region24
      $region23: #{vgg_backbone_forward.10} parent=11 // pred_region
        _
      $region24: #{vgg_backbone_forward.10} parent=11 // pred_fallthru
        _
    $region12: #{vgg_backbone_forward.10} parent=5 // pred_fallthru
      _
    %p180 = scmp.lt.s32.totalorder %s10, 2
    // Predicated region
    $region25: #{vgg_backbone_forward.10} parent=5 // pred_check
      %p181 = pneg %p180
    $region26: #{vgg_backbone_forward.10} parent=5 // pred_check_branch
      %183 = sbr.rel (%p181) target = $region28
    $region27: #{vgg_backbone_forward.10} parent=5 // pred_region
      // Predicated region
      $region29: #{vgg_backbone_forward.10} parent=27 // pred_check
        %p184 = pneg %p42
      $region30: #{vgg_backbone_forward.10} parent=27 // pred_check_branch
        %186 = sbr.rel (%p184) target = $region32
      $region31: #{vgg_backbone_forward.10} parent=27 // pred_region
        %s187 = smul.u32 72, %s17
        %p188 = scmp.lt.s32.totalorder %s187, 143
        %s189 = scalar_select %p188, %s187, 143
        %s190 = smul.addr %s189, 4
        %s191 = scalar_lea.vmem %s0, %s190
        %s192 = smul.u32 72, %s17
      $region32: #{vgg_backbone_forward.10} parent=27 // pred_fallthru
        _
    $region28: #{vgg_backbone_forward.10} parent=5 // pred_fallthru
      _
    %p193 = scmp.le.s32.totalorder 1, %s10
    %p194 = scmp.lt.s32.totalorder %s10, 3
    %p195 = pnand %p193, %p194
    %p196 = pneg %p195
    // Predicated region
    $region33: #{vgg_backbone_forward.10} parent=5 // pred_check
      _
    $region34: #{vgg_backbone_forward.10} parent=5 // pred_check_branch
      %198 = sbr.rel (%p195) target = $region36
    $region35: #{vgg_backbone_forward.10} parent=5 // pred_region
      %s199 = ssub.s32 %s10, 1
      %s200 = smul.u32 72, %s19
      %p201 = scmp.lt.s32.totalorder %s200, 143
      %s202 = scalar_select %p201, %s200, 143
      %s203 = smul.addr %s202, 4
      %s204 = scalar_lea.vmem %s0, %s203
      %p205 = pneg %p48
      %p206 = pneg %p45
      %p207 = scmp.lt.s32.totalorder %s20, 0
      %s208 = scalar_select %p207, %s20, 0
      %s209 = smul.addr %s208, 4
      %s210 = scalar_lea.vmem %s1, %s209
      %p211 = pneg %p74
      %p212 = pneg %p71
      %p213 = scmp.lt.s32.totalorder %s20, 0
      %s214 = scalar_select %p213, %s20, 0
      %s215 = scalar_lea.vmem %s2, %s214
      %p216 = pneg %p100
      %p217 = pneg %p97
      %p218 = pneg %p121
      %p219 = pneg %p118
      %p220 = pneg %p149
      %p221 = pneg %p146
      %s222 = smul.u32 72, %s19
      %p223 = scmp.lt.s32.totalorder %s222, 143
      %s224 = scalar_select %p223, %s222, 143
      %p225 = scmp.lt.s32.totalorder %s20, 0
      %s226 = scalar_select %p225, %s20, 0
      %s227 = sadd.s32 %s226, %s224
      %s228 = smul.addr %s227, 4
      %s229 = scalar_lea.vmem %s4, %s228
      %s230 = smul.u32 72, %s19
      %p231 = scmp.lt.s32.totalorder %s230, 143
      %s232 = scalar_select %p231, %s230, 143
      %s233 = smul.addr %s232, 4
      %s234 = scalar_lea.vmem %s0, %s233
      %s235 = smul.u32 72, %s19
      %p236 = scmp.lt.s32.totalorder %s20, 0
      %s237 = scalar_select %p236, %s20, 0
      %s238 = smul.addr %s237, 4
      %s239 = scalar_lea.vmem %s1, %s238
      %p240 = scmp.lt.s32.totalorder %s20, 0
      %s241 = scalar_select %p240, %s20, 0
      %s242 = scalar_lea.vmem %s2, %s241
      %s243 = smul.u32 72, %s19
      %p244 = scmp.lt.s32.totalorder %s243, 143
      %s245 = scalar_select %p244, %s243, 143
      %p246 = scmp.lt.s32.totalorder %s20, 0
      %s247 = scalar_select %p246, %s20, 0
      %s248 = sadd.s32 %s247, %s245
      %s249 = smul.addr %s248, 4
      %s250 = scalar_lea.vmem %s4, %s249
      %s251 = smul.u32 72, %s19
      %v253 = vld [vmem:[%s234] sm:$0xf]
      %v254 = vld [vmem:[%s234 + $0x4] sm:$0xf]
      %v255 = vld [vmem:[%s234 + $0x8] sm:$0xf]
      %v256 = vld [vmem:[%s234 + $0xc] sm:$0xf]
      %v257 = vld [vmem:[%s234 + $0x10] sm:$0xf]
      %v258 = vld [vmem:[%s234 + $0x14] sm:$0xf]
      %v259 = vld [vmem:[%s234 + $0x18] sm:$0xf]
      %v260 = vld [vmem:[%s234 + $0x1c] sm:$0xf]
      %v261 = vld [vmem:[%s234 + $0x20] sm:$0xf]
      %v262 = vld [vmem:[%s234 + $0x24] sm:$0xf]
      %v263 = vld [vmem:[%s234 + $0x28] sm:$0xf]
      %v264 = vld [vmem:[%s234 + $0x2c] sm:$0xf]
      %v265 = vld [vmem:[%s234 + $0x30] sm:$0xf]
      %v266 = vld [vmem:[%s234 + $0x34] sm:$0xf]
      %v267 = vld [vmem:[%s234 + $0x38] sm:$0xf]
      %v268 = vld [vmem:[%s234 + $0x3c] sm:$0xf]
      %v269 = vld [vmem:[%s234 + $0x40] sm:$0xf]
      %v270 = vld [vmem:[%s234 + $0x44] sm:$0xf]
      %v271 = vld [vmem:[%s234 + $0x48] sm:$0xf]
      %v272 = vld [vmem:[%s234 + $0x4c] sm:$0xf]
      %v273 = vld [vmem:[%s234 + $0x50] sm:$0xf]
      %v274 = vld [vmem:[%s234 + $0x54] sm:$0xf]
      %v275 = vld [vmem:[%s234 + $0x58] sm:$0xf]
      %v276 = vld [vmem:[%s234 + $0x5c] sm:$0xf]
      %v277 = vld [vmem:[%s234 + $0x60] sm:$0xf]
      %v278 = vld [vmem:[%s234 + $0x64] sm:$0xf]
      %v279 = vld [vmem:[%s234 + $0x68] sm:$0xf]
      %v280 = vld [vmem:[%s234 + $0x6c] sm:$0xf]
      %v281 = vld [vmem:[%s234 + $0x70] sm:$0xf]
      %v282 = vld [vmem:[%s234 + $0x74] sm:$0xf]
      %v283 = vld [vmem:[%s234 + $0x78] sm:$0xf]
      %v284 = vld [vmem:[%s234 + $0x7c] sm:$0xf]
      %v285 = vld [vmem:[%s234 + $0x80] sm:$0xf]
      %v286 = vld [vmem:[%s234 + $0x84] sm:$0xf]
      %v287 = vld [vmem:[%s234 + $0x88] sm:$0xf]
      %v288 = vld [vmem:[%s234 + $0x8c] sm:$0xf]
      %v289 = vld [vmem:[%s234 + $0x90] sm:$0xf]
      %v290 = vld [vmem:[%s234 + $0x94] sm:$0xf]
      %v291 = vld [vmem:[%s234 + $0x98] sm:$0xf]
      %v292 = vld [vmem:[%s234 + $0x9c] sm:$0xf]
      %v293 = vld [vmem:[%s234 + $0xa0] sm:$0xf]
      %v294 = vld [vmem:[%s234 + $0xa4] sm:$0xf]
      %v295 = vld [vmem:[%s234 + $0xa8] sm:$0xf]
      %v296 = vld [vmem:[%s234 + $0xac] sm:$0xf]
      %v297 = vld [vmem:[%s234 + $0xb0] sm:$0xf]
      %v298 = vld [vmem:[%s234 + $0xb4] sm:$0xf]
      %v299 = vld [vmem:[%s234 + $0xb8] sm:$0xf]
      %v300 = vld [vmem:[%s234 + $0xbc] sm:$0xf]
      %v301 = vld [vmem:[%s234 + $0xc0] sm:$0xf]
      %v302 = vld [vmem:[%s234 + $0xc4] sm:$0xf]
      %v303 = vld [vmem:[%s234 + $0xc8] sm:$0xf]
      %v304 = vld [vmem:[%s234 + $0xcc] sm:$0xf]
      %v305 = vld [vmem:[%s234 + $0xd0] sm:$0xf]
      %v306 = vld [vmem:[%s234 + $0xd4] sm:$0xf]
      %v307 = vld [vmem:[%s234 + $0xd8] sm:$0xf]
      %v308 = vld [vmem:[%s234 + $0xdc] sm:$0xf]
      %v309 = vld [vmem:[%s234 + $0xe0] sm:$0xf]
      %v310 = vld [vmem:[%s234 + $0xe4] sm:$0xf]
      %v311 = vld [vmem:[%s234 + $0xe8] sm:$0xf]
      %v312 = vld [vmem:[%s234 + $0xec] sm:$0xf]
      %v313 = vld [vmem:[%s234 + $0xf0] sm:$0xf]
      %v314 = vld [vmem:[%s234 + $0xf4] sm:$0xf]
      %v315 = vld [vmem:[%s234 + $0xf8] sm:$0xf]
      %v316 = vld [vmem:[%s234 + $0xfc] sm:$0xf]
      %v317 = vld [vmem:[%s234 + $0x100] sm:$0xf]
      %v318 = vld [vmem:[%s234 + $0x104] sm:$0xf]
      %v319 = vld [vmem:[%s234 + $0x108] sm:$0xf]
      %v320 = vld [vmem:[%s234 + $0x10c] sm:$0xf]
      %v321 = vld [vmem:[%s234 + $0x110] sm:$0xf]
      %v322 = vld [vmem:[%s234 + $0x114] sm:$0xf]
      %v323 = vld [vmem:[%s234 + $0x118] sm:$0xf]
      %v324 = vld [vmem:[%s234 + $0x11c] sm:$0xf]
      %v325 = vunpack.c.l.bf16 %v253
      %v326 = vunpack.c.l.bf16 %v254
      %v327 = vunpack.c.l.bf16 %v255
      %v328 = vunpack.c.l.bf16 %v256
      %v329 = vunpack.c.l.bf16 %v257
      %v330 = vunpack.c.l.bf16 %v258
      %v331 = vunpack.c.l.bf16 %v259
      %v332 = vunpack.c.l.bf16 %v260
      %v333 = vunpack.c.l.bf16 %v261
      %v334 = vunpack.c.l.bf16 %v262
      %v335 = vunpack.c.l.bf16 %v263
      %v336 = vunpack.c.l.bf16 %v264
      %v337 = vunpack.c.l.bf16 %v265
      %v338 = vunpack.c.l.bf16 %v266
      %v339 = vunpack.c.l.bf16 %v267
      %v340 = vunpack.c.l.bf16 %v268
      %v341 = vunpack.c.l.bf16 %v269
      %v342 = vunpack.c.l.bf16 %v270
      %v343 = vunpack.c.l.bf16 %v271
      %v344 = vunpack.c.l.bf16 %v272
      %v345 = vunpack.c.l.bf16 %v273
      %v346 = vunpack.c.l.bf16 %v274
      %v347 = vunpack.c.l.bf16 %v275
      %v348 = vunpack.c.l.bf16 %v276
      %v349 = vunpack.c.l.bf16 %v277
      %v350 = vunpack.c.l.bf16 %v278
      %v351 = vunpack.c.l.bf16 %v279
      %v352 = vunpack.c.l.bf16 %v280
      %v353 = vunpack.c.l.bf16 %v281
      %v354 = vunpack.c.l.bf16 %v282
      %v355 = vunpack.c.l.bf16 %v283
      %v356 = vunpack.c.l.bf16 %v284
      %v357 = vunpack.c.l.bf16 %v285
      %v358 = vunpack.c.l.bf16 %v286
      %v359 = vunpack.c.l.bf16 %v287
      %v360 = vunpack.c.l.bf16 %v288
      %v361 = vunpack.c.l.bf16 %v289
      %v362 = vunpack.c.l.bf16 %v290
      %v363 = vunpack.c.l.bf16 %v291
      %v364 = vunpack.c.l.bf16 %v292
      %v365 = vunpack.c.l.bf16 %v293
      %v366 = vunpack.c.l.bf16 %v294
      %v367 = vunpack.c.l.bf16 %v295
      %v368 = vunpack.c.l.bf16 %v296
      %v369 = vunpack.c.l.bf16 %v297
      %v370 = vunpack.c.l.bf16 %v298
      %v371 = vunpack.c.l.bf16 %v299
      %v372 = vunpack.c.l.bf16 %v300
      %v373 = vunpack.c.l.bf16 %v301
      %v374 = vunpack.c.l.bf16 %v302
      %v375 = vunpack.c.l.bf16 %v303
      %v376 = vunpack.c.l.bf16 %v304
      %v377 = vunpack.c.l.bf16 %v305
      %v378 = vunpack.c.l.bf16 %v306
      %v379 = vunpack.c.l.bf16 %v307
      %v380 = vunpack.c.l.bf16 %v308
      %v381 = vunpack.c.l.bf16 %v309
      %v382 = vunpack.c.l.bf16 %v310
      %v383 = vunpack.c.l.bf16 %v311
      %v384 = vunpack.c.l.bf16 %v312
      %v385 = vunpack.c.l.bf16 %v313
      %v386 = vunpack.c.l.bf16 %v314
      %v387 = vunpack.c.l.bf16 %v315
      %v388 = vunpack.c.l.bf16 %v316
      %v389 = vunpack.c.l.bf16 %v317
      %v390 = vunpack.c.l.bf16 %v318
      %v391 = vunpack.c.l.bf16 %v319
      %v392 = vunpack.c.l.bf16 %v320
      %v393 = vunpack.c.l.bf16 %v321
      %v394 = vunpack.c.l.bf16 %v322
      %v395 = vunpack.c.l.bf16 %v323
      %v396 = vunpack.c.l.bf16 %v324
      %v397 = vpack.c.bf16 %v395, %v394
      %v398 = vpack.c.bf16 %v325, %v396
      %v399 = vpack.c.bf16 %v327, %v326
      %v400 = vpack.c.bf16 %v329, %v328
      %v401 = vpack.c.bf16 %v331, %v330
      %v402 = vpack.c.bf16 %v333, %v332
      %v403 = vpack.c.bf16 %v335, %v334
      %v404 = vpack.c.bf16 %v337, %v336
      %v405 = vpack.c.bf16 %v339, %v338
      %v406 = vpack.c.bf16 %v341, %v340
      %v407 = vpack.c.bf16 %v343, %v342
      %v408 = vpack.c.bf16 %v345, %v344
      %v409 = vpack.c.bf16 %v347, %v346
      %v410 = vpack.c.bf16 %v349, %v348
      %v411 = vpack.c.bf16 %v351, %v350
      %v412 = vpack.c.bf16 %v353, %v352
      %v413 = vpack.c.bf16 %v355, %v354
      %v414 = vpack.c.bf16 %v357, %v356
      %v415 = vpack.c.bf16 %v359, %v358
      %v416 = vpack.c.bf16 %v361, %v360
      %v417 = vpack.c.bf16 %v363, %v362
      %v418 = vpack.c.bf16 %v365, %v364
      %v419 = vpack.c.bf16 %v367, %v366
      %v420 = vpack.c.bf16 %v369, %v368
      %v421 = vpack.c.bf16 %v371, %v370
      %v422 = vpack.c.bf16 %v373, %v372
      %v423 = vpack.c.bf16 %v375, %v374
      %v424 = vpack.c.bf16 %v377, %v376
      %v425 = vpack.c.bf16 %v379, %v378
      %v426 = vpack.c.bf16 %v381, %v380
      %v427 = vpack.c.bf16 %v383, %v382
      %v428 = vpack.c.bf16 %v385, %v384
      %v429 = vpack.c.bf16 %v387, %v386
      %v430 = vpack.c.bf16 %v389, %v388
      %v431 = vpack.c.bf16 %v391, %v390
      %v432 = vpack.c.bf16 %v393, %v392
      %v505 = vunpack.c.l.b16 %v253
      %v506 = vunpack.c.l.b16 %v254
      %v507 = vunpack.c.l.b16 %v255
      %v508 = vunpack.c.l.b16 %v256
      %v509 = vunpack.c.l.b16 %v257
      %v510 = vunpack.c.l.b16 %v258
      %v511 = vunpack.c.l.b16 %v259
      %v512 = vunpack.c.l.b16 %v260
      %v513 = vunpack.c.l.b16 %v261
      %v514 = vunpack.c.l.b16 %v262
      %v515 = vunpack.c.l.b16 %v263
      %v516 = vunpack.c.l.b16 %v264
      %v517 = vunpack.c.l.b16 %v265
      %v518 = vunpack.c.l.b16 %v266
      %v519 = vunpack.c.l.b16 %v267
      %v520 = vunpack.c.l.b16 %v268
      %v521 = vunpack.c.l.b16 %v269
      %v522 = vunpack.c.l.b16 %v270
      %v523 = vunpack.c.l.b16 %v271
      %v524 = vunpack.c.l.b16 %v272
      %v525 = vunpack.c.l.b16 %v273
      %v526 = vunpack.c.l.b16 %v274
      %v527 = vunpack.c.l.b16 %v275
      %v528 = vunpack.c.l.b16 %v276
      %v529 = vunpack.c.l.b16 %v277
      %v530 = vunpack.c.l.b16 %v278
      %v531 = vunpack.c.l.b16 %v279
      %v532 = vunpack.c.l.b16 %v280
      %v533 = vunpack.c.l.b16 %v281
      %v534 = vunpack.c.l.b16 %v282
      %v535 = vunpack.c.l.b16 %v283
      %v536 = vunpack.c.l.b16 %v284
      %v537 = vunpack.c.l.b16 %v285
      %v538 = vunpack.c.l.b16 %v286
      %v539 = vunpack.c.l.b16 %v287
      %v540 = vunpack.c.l.b16 %v288
      %v541 = vunpack.c.l.b16 %v289
      %v542 = vunpack.c.l.b16 %v290
      %v543 = vunpack.c.l.b16 %v291
      %v544 = vunpack.c.l.b16 %v292
      %v545 = vunpack.c.l.b16 %v293
      %v546 = vunpack.c.l.b16 %v294
      %v547 = vunpack.c.l.b16 %v295
      %v548 = vunpack.c.l.b16 %v296
      %v549 = vunpack.c.l.b16 %v297
      %v550 = vunpack.c.l.b16 %v298
      %v551 = vunpack.c.l.b16 %v299
      %v552 = vunpack.c.l.b16 %v300
      %v553 = vunpack.c.l.b16 %v301
      %v554 = vunpack.c.l.b16 %v302
      %v555 = vunpack.c.l.b16 %v303
      %v556 = vunpack.c.l.b16 %v304
      %v557 = vunpack.c.l.b16 %v305
      %v558 = vunpack.c.l.b16 %v306
      %v559 = vunpack.c.l.b16 %v307
      %v560 = vunpack.c.l.b16 %v308
      %v561 = vunpack.c.l.b16 %v309
      %v562 = vunpack.c.l.b16 %v310
      %v563 = vunpack.c.l.b16 %v311
      %v564 = vunpack.c.l.b16 %v312
      %v565 = vunpack.c.l.b16 %v313
      %v566 = vunpack.c.l.b16 %v314
      %v567 = vunpack.c.l.b16 %v315
      %v568 = vunpack.c.l.b16 %v316
      %v569 = vunpack.c.l.b16 %v317
      %v570 = vunpack.c.l.b16 %v318
      %v571 = vunpack.c.l.b16 %v319
      %v572 = vunpack.c.l.b16 %v320
      %v573 = vunpack.c.l.b16 %v321
      %v574 = vunpack.c.l.b16 %v322
      %v575 = vunpack.c.l.b16 %v323
      %v576 = vunpack.c.l.b16 %v324
      %v577 = vpack.c.b16 %v506, %v505
      %v578 = vpack.c.b16 %v508, %v507
      %v579 = vpack.c.b16 %v510, %v509
      %v580 = vpack.c.b16 %v512, %v511
      %v581 = vpack.c.b16 %v514, %v513
      %v582 = vpack.c.b16 %v516, %v515
      %v583 = vpack.c.b16 %v518, %v517
      %v584 = vpack.c.b16 %v520, %v519
      %v585 = vpack.c.b16 %v522, %v521
      %v586 = vpack.c.b16 %v524, %v523
      %v587 = vpack.c.b16 %v526, %v525
      %v588 = vpack.c.b16 %v528, %v527
      %v589 = vpack.c.b16 %v530, %v529
      %v590 = vpack.c.b16 %v532, %v531
      %v591 = vpack.c.b16 %v534, %v533
      %v592 = vpack.c.b16 %v536, %v535
      %v593 = vpack.c.b16 %v538, %v537
      %v594 = vpack.c.b16 %v540, %v539
      %v595 = vpack.c.b16 %v542, %v541
      %v596 = vpack.c.b16 %v544, %v543
      %v597 = vpack.c.b16 %v546, %v545
      %v598 = vpack.c.b16 %v548, %v547
      %v599 = vpack.c.b16 %v550, %v549
      %v600 = vpack.c.b16 %v552, %v551
      %v601 = vpack.c.b16 %v554, %v553
      %v602 = vpack.c.b16 %v556, %v555
      %v603 = vpack.c.b16 %v558, %v557
      %v604 = vpack.c.b16 %v560, %v559
      %v605 = vpack.c.b16 %v562, %v561
      %v606 = vpack.c.b16 %v564, %v563
      %v607 = vpack.c.b16 %v566, %v565
      %v608 = vpack.c.b16 %v568, %v567
      %v609 = vpack.c.b16 %v570, %v569
      %v610 = vpack.c.b16 %v572, %v571
      %v611 = vpack.c.b16 %v574, %v573
      %v612 = vpack.c.b16 %v576, %v575
      %v649 = vld [vmem:[%s239] sm:$0xf]
      %v650 = vld [vmem:[%s239 + $0x4] sm:$0xf]
      %v651 = vld [vmem:[%s239 + $0x8] sm:$0xf]
      %v652 = vld [vmem:[%s239 + $0xc] sm:$0xf]
      %v653 = vld [vmem:[%s239 + $0x10] sm:$0xf]
      %v654 = vld [vmem:[%s239 + $0x14] sm:$0xf]
      %v655 = vld [vmem:[%s239 + $0x18] sm:$0xf]
      %v656 = vld [vmem:[%s239 + $0x1c] sm:$0xf]
      %v657 = vld [vmem:[%s239 + $0x20] sm:$0xf]
      %v658 = vld [vmem:[%s239 + $0x24] sm:$0xf]
      %v659 = vld [vmem:[%s239 + $0x28] sm:$0xf]
      %v660 = vld [vmem:[%s239 + $0x2c] sm:$0xf]
      %v661 = vld [vmem:[%s239 + $0x30] sm:$0xf]
      %v662 = vld [vmem:[%s239 + $0x34] sm:$0xf]
      %v663 = vld [vmem:[%s239 + $0x38] sm:$0xf]
      %v664 = vld [vmem:[%s239 + $0x3c] sm:$0xf]
      %v665 = vld [vmem:[%s239 + $0x40] sm:$0xf]
      %v666 = vld [vmem:[%s239 + $0x44] sm:$0xf]
      %v667 = vld [vmem:[%s239 + $0x48] sm:$0xf]
      %v668 = vld [vmem:[%s239 + $0x4c] sm:$0xf]
      %v669 = vld [vmem:[%s239 + $0x50] sm:$0xf]
      %v670 = vld [vmem:[%s239 + $0x54] sm:$0xf]
      %v671 = vld [vmem:[%s239 + $0x58] sm:$0xf]
      %v672 = vld [vmem:[%s239 + $0x5c] sm:$0xf]
      %v673 = vld [vmem:[%s239 + $0x60] sm:$0xf]
      %v674 = vld [vmem:[%s239 + $0x64] sm:$0xf]
      %v675 = vld [vmem:[%s239 + $0x68] sm:$0xf]
      %v676 = vld [vmem:[%s239 + $0x6c] sm:$0xf]
      %v677 = vld [vmem:[%s239 + $0x70] sm:$0xf]
      %v678 = vld [vmem:[%s239 + $0x74] sm:$0xf]
      %v679 = vld [vmem:[%s239 + $0x78] sm:$0xf]
      %v680 = vld [vmem:[%s239 + $0x7c] sm:$0xf]
      %v681 = vld [vmem:[%s239 + $0x80] sm:$0xf]
      %v682 = vld [vmem:[%s239 + $0x84] sm:$0xf]
      %v683 = vld [vmem:[%s239 + $0x88] sm:$0xf]
      %v684 = vld [vmem:[%s239 + $0x8c] sm:$0xf]
      %v685 = vld [vmem:[%s239 + $0x90] sm:$0xf]
      %v686 = vld [vmem:[%s239 + $0x94] sm:$0xf]
      %v687 = vld [vmem:[%s239 + $0x98] sm:$0xf]
      %v688 = vld [vmem:[%s239 + $0x9c] sm:$0xf]
      %v689 = vld [vmem:[%s239 + $0xa0] sm:$0xf]
      %v690 = vld [vmem:[%s239 + $0xa4] sm:$0xf]
      %v691 = vld [vmem:[%s239 + $0xa8] sm:$0xf]
      %v692 = vld [vmem:[%s239 + $0xac] sm:$0xf]
      %v693 = vld [vmem:[%s239 + $0xb0] sm:$0xf]
      %v694 = vld [vmem:[%s239 + $0xb4] sm:$0xf]
      %v695 = vld [vmem:[%s239 + $0xb8] sm:$0xf]
      %v696 = vld [vmem:[%s239 + $0xbc] sm:$0xf]
      %v745 = vunpack.c.l.b16 %v649
      %v746 = vunpack.c.l.b16 %v650
      %v747 = vunpack.c.l.b16 %v651
      %v748 = vunpack.c.l.b16 %v652
      %v749 = vunpack.c.l.b16 %v653
      %v750 = vunpack.c.l.b16 %v654
      %v751 = vunpack.c.l.b16 %v655
      %v752 = vunpack.c.l.b16 %v656
      %v753 = vunpack.c.l.b16 %v657
      %v754 = vunpack.c.l.b16 %v658
      %v755 = vunpack.c.l.b16 %v659
      %v756 = vunpack.c.l.b16 %v660
      %v757 = vunpack.c.l.b16 %v661
      %v758 = vunpack.c.l.b16 %v662
      %v759 = vunpack.c.l.b16 %v663
      %v760 = vunpack.c.l.b16 %v664
      %v761 = vunpack.c.l.b16 %v665
      %v762 = vunpack.c.l.b16 %v666
      %v763 = vunpack.c.l.b16 %v667
      %v764 = vunpack.c.l.b16 %v668
      %v765 = vunpack.c.l.b16 %v669
      %v766 = vunpack.c.l.b16 %v670
      %v767 = vunpack.c.l.b16 %v671
      %v768 = vunpack.c.l.b16 %v672
      %v769 = vunpack.c.l.b16 %v673
      %v770 = vunpack.c.l.b16 %v674
      %v771 = vunpack.c.l.b16 %v675
      %v772 = vunpack.c.l.b16 %v676
      %v773 = vunpack.c.l.b16 %v677
      %v774 = vunpack.c.l.b16 %v678
      %v775 = vunpack.c.l.b16 %v679
      %v776 = vunpack.c.l.b16 %v680
      %v777 = vunpack.c.l.b16 %v681
      %v778 = vunpack.c.l.b16 %v682
      %v779 = vunpack.c.l.b16 %v683
      %v780 = vunpack.c.l.b16 %v684
      %v781 = vunpack.c.l.b16 %v685
      %v782 = vunpack.c.l.b16 %v686
      %v783 = vunpack.c.l.b16 %v687
      %v784 = vunpack.c.l.b16 %v688
      %v785 = vunpack.c.l.b16 %v689
      %v786 = vunpack.c.l.b16 %v690
      %v787 = vunpack.c.l.b16 %v691
      %v788 = vunpack.c.l.b16 %v692
      %v789 = vunpack.c.l.b16 %v693
      %v790 = vunpack.c.l.b16 %v694
      %v791 = vunpack.c.l.b16 %v695
      %v792 = vunpack.c.l.b16 %v696
      %v793 = vpack.c.b16 %v746, %v745
      %v794 = vpack.c.b16 %v748, %v747
      %v795 = vpack.c.b16 %v750, %v749
      %v796 = vpack.c.b16 %v752, %v751
      %v797 = vpack.c.b16 %v754, %v753
      %v798 = vpack.c.b16 %v756, %v755
      %v799 = vpack.c.b16 %v758, %v757
      %v800 = vpack.c.b16 %v760, %v759
      %v801 = vpack.c.b16 %v762, %v761
      %v802 = vpack.c.b16 %v764, %v763
      %v803 = vpack.c.b16 %v766, %v765
      %v804 = vpack.c.b16 %v768, %v767
      %v805 = vpack.c.b16 %v770, %v769
      %v806 = vpack.c.b16 %v772, %v771
      %v807 = vpack.c.b16 %v774, %v773
      %v808 = vpack.c.b16 %v776, %v775
      %v809 = vpack.c.b16 %v778, %v777
      %v810 = vpack.c.b16 %v780, %v779
      %v811 = vpack.c.b16 %v782, %v781
      %v812 = vpack.c.b16 %v784, %v783
      %v813 = vpack.c.b16 %v786, %v785
      %v814 = vpack.c.b16 %v788, %v787
      %v815 = vpack.c.b16 %v790, %v789
      %v816 = vpack.c.b16 %v792, %v791
      %841 = vmatprep.subr.bf16.mxu0 0
      %842 = vmatpush1.bf16.msra.mxu0 %v800
      %843 = vmatprep.subr.bf16.mxu0 0
      %844 = vmatpush1.bf16.msra.mxu0 %v799
      %845 = vmatprep.subr.bf16.mxu0 0
      %846 = vmatpush1.bf16.msra.mxu0 %v798
      %847 = vmatprep.subr.bf16.mxu0 0
      %848 = vmatpush1.bf16.msra.mxu0 %v797
      %849 = vmatprep.subr.bf16.mxu0 0
      %850 = vmatpush1.bf16.msra.mxu0 %v796
      %851 = vmatprep.subr.bf16.mxu0 0
      %852 = vmatpush1.bf16.msra.mxu0 %v795
      %853 = vmatprep.subr.bf16.mxu0 0
      %854 = vmatpush1.bf16.msra.mxu0 %v794
      %855 = vmatprep.subr.bf16.mxu0 0
      %856 = vmatpush1.bf16.msra.mxu0 %v793
      %857 = vmatprep.subr.bf16.mxu0 0
      %858 = vmatpush2.bf16.msra.mxu0 %v808
      %859 = vmatprep.subr.bf16.mxu0 0
      %860 = vmatpush2.bf16.msra.mxu0 %v807
      %861 = vmatprep.subr.bf16.mxu0 0
      %862 = vmatpush2.bf16.msra.mxu0 %v806
      %863 = vmatprep.subr.bf16.mxu0 0
      %864 = vmatpush2.bf16.msra.mxu0 %v805
      %865 = vmatprep.subr.bf16.mxu0 0
      %866 = vmatpush2.bf16.msra.mxu0 %v804
      %867 = vmatprep.subr.bf16.mxu0 0
      %868 = vmatpush2.bf16.msra.mxu0 %v803
      %869 = vmatprep.subr.bf16.mxu0 0
      %870 = vmatpush2.bf16.msra.mxu0 %v802
      %871 = vmatprep.subr.bf16.mxu0 0
      %872 = vmatpush2.bf16.msra.mxu0 %v801
      %873 = vmatprep.mubr.bf16.mxu0 %v577
      %874 = vmatmul.mubr.bf16.gmra.mxu0 %v397
      %v875 = vpop.f32.mrf.mxu0
      %v876 = vadd.f32 0.0, %v875
      %v877 = vpop.f32.mrf.mxu0
      %v878 = vpop.f32.mrf.mxu0
      %v879 = vadd.f32 0.0, %v878
      %v880 = vpop.f32.mrf.mxu0
      %881 = vmatprep.mubr.bf16.mxu0 %v578
      %882 = vmatmul.mubr.bf16.gmra.mxu0 %v398
      %v883 = vpop.f32.mrf.mxu0
      %v884 = vadd.f32 0.0, %v883
      %v885 = vpop.f32.mrf.mxu0
      %v886 = vpop.f32.mrf.mxu0
      %v887 = vadd.f32 0.0, %v886
      %v888 = vpop.f32.mrf.mxu0
      %889 = vmatprep.mubr.bf16.mxu0 %v579
      %890 = vmatmul.mubr.bf16.gmra.mxu0 %v399
      %v891 = vpop.f32.mrf.mxu0
      %v892 = vadd.f32 0.0, %v891
      %v893 = vpop.f32.mrf.mxu0
      %v894 = vpop.f32.mrf.mxu0
      %v895 = vadd.f32 0.0, %v894
      %v896 = vpop.f32.mrf.mxu0
      %897 = vmatprep.mubr.bf16.mxu0 %v580
      %898 = vmatmul.mubr.bf16.gmra.mxu0 %v400
      %v899 = vpop.f32.mrf.mxu0
      %v900 = vadd.f32 0.0, %v899
      %v901 = vpop.f32.mrf.mxu0
      %v902 = vpop.f32.mrf.mxu0
      %v903 = vadd.f32 0.0, %v902
      %v904 = vpop.f32.mrf.mxu0
      %905 = vmatprep.mubr.bf16.mxu0 %v581
      %906 = vmatmul.mubr.bf16.gmra.mxu0 %v401
      %v907 = vpop.f32.mrf.mxu0
      %v908 = vadd.f32 0.0, %v907
      %v909 = vpop.f32.mrf.mxu0
      %v910 = vpop.f32.mrf.mxu0
      %v911 = vadd.f32 0.0, %v910
      %v912 = vpop.f32.mrf.mxu0
      %913 = vmatprep.mubr.bf16.mxu0 %v582
      %914 = vmatmul.mubr.bf16.gmra.mxu0 %v402
      %v915 = vpop.f32.mrf.mxu0
      %v916 = vadd.f32 0.0, %v915
      %v917 = vpop.f32.mrf.mxu0
      %v918 = vpop.f32.mrf.mxu0
      %v919 = vadd.f32 0.0, %v918
      %v920 = vpop.f32.mrf.mxu0
      %921 = vmatprep.mubr.bf16.mxu0 %v583
      %922 = vmatmul.mubr.bf16.gmra.mxu0 %v403
      %v923 = vpop.f32.mrf.mxu0
      %v924 = vadd.f32 0.0, %v923
      %v925 = vpop.f32.mrf.mxu0
      %v926 = vpop.f32.mrf.mxu0
      %v927 = vadd.f32 0.0, %v926
      %v928 = vpop.f32.mrf.mxu0
      %929 = vmatprep.mubr.bf16.mxu0 %v584
      %930 = vmatmul.mubr.bf16.gmra.mxu0 %v404
      %v931 = vpop.f32.mrf.mxu0
      %v932 = vadd.f32 0.0, %v931
      %v933 = vpop.f32.mrf.mxu0
      %v934 = vpop.f32.mrf.mxu0
      %v935 = vadd.f32 0.0, %v934
      %v936 = vpop.f32.mrf.mxu0
      %937 = vmatprep.mubr.bf16.mxu0 %v585
      %938 = vmatmul.mubr.bf16.gmra.mxu0 %v405
      %v939 = vpop.f32.mrf.mxu0
      %v940 = vadd.f32 0.0, %v939
      %v941 = vpop.f32.mrf.mxu0
      %v942 = vpop.f32.mrf.mxu0
      %v943 = vadd.f32 0.0, %v942
      %v944 = vpop.f32.mrf.mxu0
      %945 = vmatprep.mubr.bf16.mxu0 %v586
      %946 = vmatmul.mubr.bf16.gmra.mxu0 %v406
      %v947 = vpop.f32.mrf.mxu0
      %v948 = vadd.f32 0.0, %v947
      %v949 = vpop.f32.mrf.mxu0
      %v950 = vpop.f32.mrf.mxu0
      %v951 = vadd.f32 0.0, %v950
      %v952 = vpop.f32.mrf.mxu0
      %953 = vmatprep.mubr.bf16.mxu0 %v587
      %954 = vmatmul.mubr.bf16.gmra.mxu0 %v407
      %v955 = vpop.f32.mrf.mxu0
      %v956 = vadd.f32 0.0, %v955
      %v957 = vpop.f32.mrf.mxu0
      %v958 = vpop.f32.mrf.mxu0
      %v959 = vadd.f32 0.0, %v958
      %v960 = vpop.f32.mrf.mxu0
      %961 = vmatprep.mubr.bf16.mxu0 %v588
      %962 = vmatmul.mubr.bf16.gmra.mxu0 %v408
      %v963 = vpop.f32.mrf.mxu0
      %v964 = vadd.f32 0.0, %v963
      %v965 = vpop.f32.mrf.mxu0
      %v966 = vpop.f32.mrf.mxu0
      %v967 = vadd.f32 0.0, %v966
      %v968 = vpop.f32.mrf.mxu0
      %969 = vmatprep.mubr.bf16.mxu0 %v589
      %970 = vmatmul.mubr.bf16.gmra.mxu0 %v409
      %v971 = vpop.f32.mrf.mxu0
      %v972 = vadd.f32 0.0, %v971
      %v973 = vpop.f32.mrf.mxu0
      %v974 = vpop.f32.mrf.mxu0
      %v975 = vadd.f32 0.0, %v974
      %v976 = vpop.f32.mrf.mxu0
      %977 = vmatprep.mubr.bf16.mxu0 %v590
      %978 = vmatmul.mubr.bf16.gmra.mxu0 %v410
      %v979 = vpop.f32.mrf.mxu0
      %v980 = vadd.f32 0.0, %v979
      %v981 = vpop.f32.mrf.mxu0
      %v982 = vpop.f32.mrf.mxu0
      %v983 = vadd.f32 0.0, %v982
      %v984 = vpop.f32.mrf.mxu0
      %985 = vmatprep.mubr.bf16.mxu0 %v591
      %986 = vmatmul.mubr.bf16.gmra.mxu0 %v411
      %v987 = vpop.f32.mrf.mxu0
      %v988 = vadd.f32 0.0, %v987
      %v989 = vpop.f32.mrf.mxu0
      %v990 = vpop.f32.mrf.mxu0
      %v991 = vadd.f32 0.0, %v990
      %v992 = vpop.f32.mrf.mxu0
      %993 = vmatprep.mubr.bf16.mxu0 %v592
      %994 = vmatmul.mubr.bf16.gmra.mxu0 %v412
      %v995 = vpop.f32.mrf.mxu0
      %v996 = vadd.f32 0.0, %v995
      %v997 = vpop.f32.mrf.mxu0
      %v998 = vpop.f32.mrf.mxu0
      %v999 = vadd.f32 0.0, %v998
      %v1000 = vpop.f32.mrf.mxu0
      %1001 = vmatprep.mubr.bf16.mxu0 %v593
      %1002 = vmatmul.mubr.bf16.gmra.mxu0 %v413
      %v1003 = vpop.f32.mrf.mxu0
      %v1004 = vadd.f32 0.0, %v1003
      %v1005 = vpop.f32.mrf.mxu0
      %v1006 = vpop.f32.mrf.mxu0
      %v1007 = vadd.f32 0.0, %v1006
      %v1008 = vpop.f32.mrf.mxu0
      %1009 = vmatprep.mubr.bf16.mxu0 %v594
      %1010 = vmatmul.mubr.bf16.gmra.mxu0 %v414
      %v1011 = vpop.f32.mrf.mxu0
      %v1012 = vadd.f32 0.0, %v1011
      %v1013 = vpop.f32.mrf.mxu0
      %v1014 = vpop.f32.mrf.mxu0
      %v1015 = vadd.f32 0.0, %v1014
      %v1016 = vpop.f32.mrf.mxu0
      %1017 = vmatprep.mubr.bf16.mxu0 %v595
      %1018 = vmatmul.mubr.bf16.gmra.mxu0 %v415
      %v1019 = vpop.f32.mrf.mxu0
      %v1020 = vadd.f32 0.0, %v1019
      %v1021 = vpop.f32.mrf.mxu0
      %v1022 = vpop.f32.mrf.mxu0
      %v1023 = vadd.f32 0.0, %v1022
      %v1024 = vpop.f32.mrf.mxu0
      %1025 = vmatprep.mubr.bf16.mxu0 %v596
      %1026 = vmatmul.mubr.bf16.gmra.mxu0 %v416
      %v1027 = vpop.f32.mrf.mxu0
      %v1028 = vadd.f32 0.0, %v1027
      %v1029 = vpop.f32.mrf.mxu0
      %v1030 = vpop.f32.mrf.mxu0
      %v1031 = vadd.f32 0.0, %v1030
      %v1032 = vpop.f32.mrf.mxu0
      %1033 = vmatprep.mubr.bf16.mxu0 %v597
      %1034 = vmatmul.mubr.bf16.gmra.mxu0 %v417
      %v1035 = vpop.f32.mrf.mxu0
      %v1036 = vadd.f32 0.0, %v1035
      %v1037 = vpop.f32.mrf.mxu0
      %v1038 = vpop.f32.mrf.mxu0
      %v1039 = vadd.f32 0.0, %v1038
      %v1040 = vpop.f32.mrf.mxu0
      %1041 = vmatprep.mubr.bf16.mxu0 %v598
      %1042 = vmatmul.mubr.bf16.gmra.mxu0 %v418
      %v1043 = vpop.f32.mrf.mxu0
      %v1044 = vadd.f32 0.0, %v1043
      %v1045 = vpop.f32.mrf.mxu0
      %v1046 = vpop.f32.mrf.mxu0
      %v1047 = vadd.f32 0.0, %v1046
      %v1048 = vpop.f32.mrf.mxu0
      %1049 = vmatprep.mubr.bf16.mxu0 %v599
      %1050 = vmatmul.mubr.bf16.gmra.mxu0 %v419
      %v1051 = vpop.f32.mrf.mxu0
      %v1052 = vadd.f32 0.0, %v1051
      %v1053 = vpop.f32.mrf.mxu0
      %v1054 = vpop.f32.mrf.mxu0
      %v1055 = vadd.f32 0.0, %v1054
      %v1056 = vpop.f32.mrf.mxu0
      %1057 = vmatprep.mubr.bf16.mxu0 %v600
      %1058 = vmatmul.mubr.bf16.gmra.mxu0 %v420
      %v1059 = vpop.f32.mrf.mxu0
      %v1060 = vadd.f32 0.0, %v1059
      %v1061 = vpop.f32.mrf.mxu0
      %v1062 = vpop.f32.mrf.mxu0
      %v1063 = vadd.f32 0.0, %v1062
      %v1064 = vpop.f32.mrf.mxu0
      %1065 = vmatprep.mubr.bf16.mxu0 %v601
      %1066 = vmatmul.mubr.bf16.gmra.mxu0 %v421
      %v1067 = vpop.f32.mrf.mxu0
      %v1068 = vadd.f32 0.0, %v1067
      %v1069 = vpop.f32.mrf.mxu0
      %v1070 = vpop.f32.mrf.mxu0
      %v1071 = vadd.f32 0.0, %v1070
      %v1072 = vpop.f32.mrf.mxu0
      %1073 = vmatprep.mubr.bf16.mxu0 %v602
      %1074 = vmatmul.mubr.bf16.gmra.mxu0 %v422
      %v1075 = vpop.f32.mrf.mxu0
      %v1076 = vadd.f32 0.0, %v1075
      %v1077 = vpop.f32.mrf.mxu0
      %v1078 = vpop.f32.mrf.mxu0
      %v1079 = vadd.f32 0.0, %v1078
      %v1080 = vpop.f32.mrf.mxu0
      %1081 = vmatprep.mubr.bf16.mxu0 %v603
      %1082 = vmatmul.mubr.bf16.gmra.mxu0 %v423
      %v1083 = vpop.f32.mrf.mxu0
      %v1084 = vadd.f32 0.0, %v1083
      %v1085 = vpop.f32.mrf.mxu0
      %v1086 = vpop.f32.mrf.mxu0
      %v1087 = vadd.f32 0.0, %v1086
      %v1088 = vpop.f32.mrf.mxu0
      %1089 = vmatprep.mubr.bf16.mxu0 %v604
      %1090 = vmatmul.mubr.bf16.gmra.mxu0 %v424
      %v1091 = vpop.f32.mrf.mxu0
      %v1092 = vadd.f32 0.0, %v1091
      %v1093 = vpop.f32.mrf.mxu0
      %v1094 = vpop.f32.mrf.mxu0
      %v1095 = vadd.f32 0.0, %v1094
      %v1096 = vpop.f32.mrf.mxu0
      %1097 = vmatprep.mubr.bf16.mxu0 %v605
      %1098 = vmatmul.mubr.bf16.gmra.mxu0 %v425
      %v1099 = vpop.f32.mrf.mxu0
      %v1100 = vadd.f32 0.0, %v1099
      %v1101 = vpop.f32.mrf.mxu0
      %v1102 = vpop.f32.mrf.mxu0
      %v1103 = vadd.f32 0.0, %v1102
      %v1104 = vpop.f32.mrf.mxu0
      %1105 = vmatprep.mubr.bf16.mxu0 %v606
      %1106 = vmatmul.mubr.bf16.gmra.mxu0 %v426
      %v1107 = vpop.f32.mrf.mxu0
      %v1108 = vadd.f32 0.0, %v1107
      %v1109 = vpop.f32.mrf.mxu0
      %v1110 = vpop.f32.mrf.mxu0
      %v1111 = vadd.f32 0.0, %v1110
      %v1112 = vpop.f32.mrf.mxu0
      %1113 = vmatprep.mubr.bf16.mxu0 %v607
      %1114 = vmatmul.mubr.bf16.gmra.mxu0 %v427
      %v1115 = vpop.f32.mrf.mxu0
      %v1116 = vadd.f32 0.0, %v1115
      %v1117 = vpop.f32.mrf.mxu0
      %v1118 = vpop.f32.mrf.mxu0
      %v1119 = vadd.f32 0.0, %v1118
      %v1120 = vpop.f32.mrf.mxu0
      %1121 = vmatprep.mubr.bf16.mxu0 %v608
      %1122 = vmatmul.mubr.bf16.gmra.mxu0 %v428
      %v1123 = vpop.f32.mrf.mxu0
      %v1124 = vadd.f32 0.0, %v1123
      %v1125 = vpop.f32.mrf.mxu0
      %v1126 = vpop.f32.mrf.mxu0
      %v1127 = vadd.f32 0.0, %v1126
      %v1128 = vpop.f32.mrf.mxu0
      %1129 = vmatprep.mubr.bf16.mxu0 %v609
      %1130 = vmatmul.mubr.bf16.gmra.mxu0 %v429
      %v1131 = vpop.f32.mrf.mxu0
      %v1132 = vadd.f32 0.0, %v1131
      %v1133 = vpop.f32.mrf.mxu0
      %v1134 = vpop.f32.mrf.mxu0
      %v1135 = vadd.f32 0.0, %v1134
      %v1136 = vpop.f32.mrf.mxu0
      %1137 = vmatprep.mubr.bf16.mxu0 %v610
      %1138 = vmatmul.mubr.bf16.gmra.mxu0 %v430
      %v1139 = vpop.f32.mrf.mxu0
      %v1140 = vadd.f32 0.0, %v1139
      %v1141 = vpop.f32.mrf.mxu0
      %v1142 = vpop.f32.mrf.mxu0
      %v1143 = vadd.f32 0.0, %v1142
      %v1144 = vpop.f32.mrf.mxu0
      %1145 = vmatprep.mubr.bf16.mxu0 %v611
      %1146 = vmatmul.mubr.bf16.gmra.mxu0 %v431
      %v1147 = vpop.f32.mrf.mxu0
      %v1148 = vadd.f32 0.0, %v1147
      %v1149 = vpop.f32.mrf.mxu0
      %v1150 = vpop.f32.mrf.mxu0
      %v1151 = vadd.f32 0.0, %v1150
      %v1152 = vpop.f32.mrf.mxu0
      %1153 = vmatprep.mubr.bf16.mxu0 %v612
      %1154 = vmatmul.mubr.bf16.gmra.mxu0 %v432
      %v1155 = vpop.f32.mrf.mxu0
      %v1156 = vadd.f32 0.0, %v1155
      %v1157 = vpop.f32.mrf.mxu0
      %v1158 = vpop.f32.mrf.mxu0
      %v1159 = vadd.f32 0.0, %v1158
      %v1160 = vpop.f32.mrf.mxu0
      %1161 = vdwg.mxu0
      %1162 = vmatprep.subr.bf16.mxu0 0
      %1163 = vmatpush1.bf16.msra.mxu0 %v816
      %1164 = vmatprep.subr.bf16.mxu0 0
      %1165 = vmatpush1.bf16.msra.mxu0 %v815
      %1166 = vmatprep.subr.bf16.mxu0 0
      %1167 = vmatpush1.bf16.msra.mxu0 %v814
      %1168 = vmatprep.subr.bf16.mxu0 0
      %1169 = vmatpush1.bf16.msra.mxu0 %v813
      %1170 = vmatprep.subr.bf16.mxu0 0
      %1171 = vmatpush1.bf16.msra.mxu0 %v812
      %1172 = vmatprep.subr.bf16.mxu0 0
      %1173 = vmatpush1.bf16.msra.mxu0 %v811
      %1174 = vmatprep.subr.bf16.mxu0 0
      %1175 = vmatpush1.bf16.msra.mxu0 %v810
      %1176 = vmatprep.subr.bf16.mxu0 0
      %1177 = vmatpush1.bf16.msra.mxu0 %v809
      %1178 = vmatprep.subr.bf16.mxu0 0
      %1179 = vmatpush2.bf16.msra.mxu0 0
      %1180 = vmatprep.subr.bf16.mxu0 0
      %1181 = vmatpush2.bf16.msra.mxu0 0
      %1182 = vmatprep.subr.bf16.mxu0 0
      %1183 = vmatpush2.bf16.msra.mxu0 0
      %1184 = vmatprep.subr.bf16.mxu0 0
      %1185 = vmatpush2.bf16.msra.mxu0 0
      %1186 = vmatprep.subr.bf16.mxu0 0
      %1187 = vmatpush2.bf16.msra.mxu0 0
      %1188 = vmatprep.subr.bf16.mxu0 0
      %1189 = vmatpush2.bf16.msra.mxu0 0
      %1190 = vmatprep.subr.bf16.mxu0 0
      %1191 = vmatpush2.bf16.msra.mxu0 0
      %1192 = vmatprep.subr.bf16.mxu0 0
      %1193 = vmatpush2.bf16.msra.mxu0 0
      %1194 = vmatprep.mubr.bf16.mxu0 0
      %1195 = vmatmul.mubr.bf16.gmra.mxu0 %v400
      %v1196 = vpop.f32.mrf.mxu0
      %v1197 = vadd.f32 %v876, %v1196
      %v1198 = vpop.f32.mrf.mxu0
      %v1199 = vpop.f32.mrf.mxu0
      %v1200 = vadd.f32 %v879, %v1199
      %v1201 = vpop.f32.mrf.mxu0
      %1202 = vmatprep.mubr.bf16.mxu0 0
      %1203 = vmatmul.mubr.bf16.gmra.mxu0 %v401
      %v1204 = vpop.f32.mrf.mxu0
      %v1205 = vadd.f32 %v884, %v1204
      %v1206 = vpop.f32.mrf.mxu0
      %v1207 = vpop.f32.mrf.mxu0
      %v1208 = vadd.f32 %v887, %v1207
      %v1209 = vpop.f32.mrf.mxu0
      %1210 = vmatprep.mubr.bf16.mxu0 0
      %1211 = vmatmul.mubr.bf16.gmra.mxu0 %v402
      %v1212 = vpop.f32.mrf.mxu0
      %v1213 = vadd.f32 %v892, %v1212
      %v1214 = vpop.f32.mrf.mxu0
      %v1215 = vpop.f32.mrf.mxu0
      %v1216 = vadd.f32 %v895, %v1215
      %v1217 = vpop.f32.mrf.mxu0
      %1218 = vmatprep.mubr.bf16.mxu0 0
      %1219 = vmatmul.mubr.bf16.gmra.mxu0 %v403
      %v1220 = vpop.f32.mrf.mxu0
      %v1221 = vadd.f32 %v900, %v1220
      %v1222 = vpop.f32.mrf.mxu0
      %v1223 = vpop.f32.mrf.mxu0
      %v1224 = vadd.f32 %v903, %v1223
      %v1225 = vpop.f32.mrf.mxu0
      %1226 = vmatprep.mubr.bf16.mxu0 0
      %1227 = vmatmul.mubr.bf16.gmra.mxu0 %v404
      %v1228 = vpop.f32.mrf.mxu0
      %v1229 = vadd.f32 %v908, %v1228
      %v1230 = vpop.f32.mrf.mxu0
      %v1231 = vpop.f32.mrf.mxu0
      %v1232 = vadd.f32 %v911, %v1231
      %v1233 = vpop.f32.mrf.mxu0
      %1234 = vmatprep.mubr.bf16.mxu0 0
      %1235 = vmatmul.mubr.bf16.gmra.mxu0 %v405
      %v1236 = vpop.f32.mrf.mxu0
      %v1237 = vadd.f32 %v916, %v1236
      %v1238 = vpop.f32.mrf.mxu0
      %v1239 = vpop.f32.mrf.mxu0
      %v1240 = vadd.f32 %v919, %v1239
      %v1241 = vpop.f32.mrf.mxu0
      %1242 = vmatprep.mubr.bf16.mxu0 0
      %1243 = vmatmul.mubr.bf16.gmra.mxu0 %v406
      %v1244 = vpop.f32.mrf.mxu0
      %v1245 = vadd.f32 %v924, %v1244
      %v1246 = vpop.f32.mrf.mxu0
      %v1247 = vpop.f32.mrf.mxu0
      %v1248 = vadd.f32 %v927, %v1247
      %v1249 = vpop.f32.mrf.mxu0
      %1250 = vmatprep.mubr.bf16.mxu0 0
      %1251 = vmatmul.mubr.bf16.gmra.mxu0 %v407
      %v1252 = vpop.f32.mrf.mxu0
      %v1253 = vadd.f32 %v932, %v1252
      %v1254 = vpop.f32.mrf.mxu0
      %v1255 = vpop.f32.mrf.mxu0
      %v1256 = vadd.f32 %v935, %v1255
      %v1257 = vpop.f32.mrf.mxu0
      %1258 = vmatprep.mubr.bf16.mxu0 0
      %1259 = vmatmul.mubr.bf16.gmra.mxu0 %v408
      %v1260 = vpop.f32.mrf.mxu0
      %v1261 = vadd.f32 %v940, %v1260
      %v1262 = vpop.f32.mrf.mxu0
      %v1263 = vpop.f32.mrf.mxu0
      %v1264 = vadd.f32 %v943, %v1263
      %v1265 = vpop.f32.mrf.mxu0
      %1266 = vmatprep.mubr.bf16.mxu0 0
      %1267 = vmatmul.mubr.bf16.gmra.mxu0 %v409
      %v1268 = vpop.f32.mrf.mxu0
      %v1269 = vadd.f32 %v948, %v1268
      %v1270 = vpop.f32.mrf.mxu0
      %v1271 = vpop.f32.mrf.mxu0
      %v1272 = vadd.f32 %v951, %v1271
      %v1273 = vpop.f32.mrf.mxu0
      %1274 = vmatprep.mubr.bf16.mxu0 0
      %1275 = vmatmul.mubr.bf16.gmra.mxu0 %v410
      %v1276 = vpop.f32.mrf.mxu0
      %v1277 = vadd.f32 %v956, %v1276
      %v1278 = vpop.f32.mrf.mxu0
      %v1279 = vpop.f32.mrf.mxu0
      %v1280 = vadd.f32 %v959, %v1279
      %v1281 = vpop.f32.mrf.mxu0
      %1282 = vmatprep.mubr.bf16.mxu0 0
      %1283 = vmatmul.mubr.bf16.gmra.mxu0 %v411
      %v1284 = vpop.f32.mrf.mxu0
      %v1285 = vadd.f32 %v964, %v1284
      %v1286 = vpop.f32.mrf.mxu0
      %v1287 = vpop.f32.mrf.mxu0
      %v1288 = vadd.f32 %v967, %v1287
      %v1289 = vpop.f32.mrf.mxu0
      %1290 = vmatprep.mubr.bf16.mxu0 0
      %1291 = vmatmul.mubr.bf16.gmra.mxu0 %v412
      %v1292 = vpop.f32.mrf.mxu0
      %v1293 = vadd.f32 %v972, %v1292
      %v1294 = vpop.f32.mrf.mxu0
      %v1295 = vpop.f32.mrf.mxu0
      %v1296 = vadd.f32 %v975, %v1295
      %v1297 = vpop.f32.mrf.mxu0
      %1298 = vmatprep.mubr.bf16.mxu0 0
      %1299 = vmatmul.mubr.bf16.gmra.mxu0 %v413
      %v1300 = vpop.f32.mrf.mxu0
      %v1301 = vadd.f32 %v980, %v1300
      %v1302 = vpop.f32.mrf.mxu0
      %v1303 = vpop.f32.mrf.mxu0
      %v1304 = vadd.f32 %v983, %v1303
      %v1305 = vpop.f32.mrf.mxu0
      %1306 = vmatprep.mubr.bf16.mxu0 0
      %1307 = vmatmul.mubr.bf16.gmra.mxu0 %v414
      %v1308 = vpop.f32.mrf.mxu0
      %v1309 = vadd.f32 %v988, %v1308
      %v1310 = vpop.f32.mrf.mxu0
      %v1311 = vpop.f32.mrf.mxu0
      %v1312 = vadd.f32 %v991, %v1311
      %v1313 = vpop.f32.mrf.mxu0
      %1314 = vmatprep.mubr.bf16.mxu0 0
      %1315 = vmatmul.mubr.bf16.gmra.mxu0 %v415
      %v1316 = vpop.f32.mrf.mxu0
      %v1317 = vadd.f32 %v996, %v1316
      %v1318 = vpop.f32.mrf.mxu0
      %v1319 = vpop.f32.mrf.mxu0
      %v1320 = vadd.f32 %v999, %v1319
      %v1321 = vpop.f32.mrf.mxu0
      %1322 = vmatprep.mubr.bf16.mxu0 0
      %1323 = vmatmul.mubr.bf16.gmra.mxu0 %v416
      %v1324 = vpop.f32.mrf.mxu0
      %v1325 = vadd.f32 %v1004, %v1324
      %v1326 = vpop.f32.mrf.mxu0
      %v1327 = vpop.f32.mrf.mxu0
      %v1328 = vadd.f32 %v1007, %v1327
      %v1329 = vpop.f32.mrf.mxu0
      %1330 = vmatprep.mubr.bf16.mxu0 0
      %1331 = vmatmul.mubr.bf16.gmra.mxu0 %v417
      %v1332 = vpop.f32.mrf.mxu0
      %v1333 = vadd.f32 %v1012, %v1332
      %v1334 = vpop.f32.mrf.mxu0
      %v1335 = vpop.f32.mrf.mxu0
      %v1336 = vadd.f32 %v1015, %v1335
      %v1337 = vpop.f32.mrf.mxu0
      %1338 = vmatprep.mubr.bf16.mxu0 0
      %1339 = vmatmul.mubr.bf16.gmra.mxu0 %v418
      %v1340 = vpop.f32.mrf.mxu0
      %v1341 = vadd.f32 %v1020, %v1340
      %v1342 = vpop.f32.mrf.mxu0
      %v1343 = vpop.f32.mrf.mxu0
      %v1344 = vadd.f32 %v1023, %v1343
      %v1345 = vpop.f32.mrf.mxu0
      %1346 = vmatprep.mubr.bf16.mxu0 0
      %1347 = vmatmul.mubr.bf16.gmra.mxu0 %v419
      %v1348 = vpop.f32.mrf.mxu0
      %v1349 = vadd.f32 %v1028, %v1348
      %v1350 = vpop.f32.mrf.mxu0
      %v1351 = vpop.f32.mrf.mxu0
      %v1352 = vadd.f32 %v1031, %v1351
      %v1353 = vpop.f32.mrf.mxu0
      %1354 = vmatprep.mubr.bf16.mxu0 0
      %1355 = vmatmul.mubr.bf16.gmra.mxu0 %v420
      %v1356 = vpop.f32.mrf.mxu0
      %v1357 = vadd.f32 %v1036, %v1356
      %v1358 = vpop.f32.mrf.mxu0
      %v1359 = vpop.f32.mrf.mxu0
      %v1360 = vadd.f32 %v1039, %v1359
      %v1361 = vpop.f32.mrf.mxu0
      %1362 = vmatprep.mubr.bf16.mxu0 0
      %1363 = vmatmul.mubr.bf16.gmra.mxu0 %v421
      %v1364 = vpop.f32.mrf.mxu0
      %v1365 = vadd.f32 %v1044, %v1364
      %v1366 = vpop.f32.mrf.mxu0
      %v1367 = vpop.f32.mrf.mxu0
      %v1368 = vadd.f32 %v1047, %v1367
      %v1369 = vpop.f32.mrf.mxu0
      %1370 = vmatprep.mubr.bf16.mxu0 0
      %1371 = vmatmul.mubr.bf16.gmra.mxu0 %v422
      %v1372 = vpop.f32.mrf.mxu0
      %v1373 = vadd.f32 %v1052, %v1372
      %v1374 = vpop.f32.mrf.mxu0
      %v1375 = vpop.f32.mrf.mxu0
      %v1376 = vadd.f32 %v1055, %v1375
      %v1377 = vpop.f32.mrf.mxu0
      %1378 = vmatprep.mubr.bf16.mxu0 0
      %1379 = vmatmul.mubr.bf16.gmra.mxu0 %v423
      %v1380 = vpop.f32.mrf.mxu0
      %v1381 = vadd.f32 %v1060, %v1380
      %v1382 = vpop.f32.mrf.mxu0
      %v1383 = vpop.f32.mrf.mxu0
      %v1384 = vadd.f32 %v1063, %v1383
      %v1385 = vpop.f32.mrf.mxu0
      %1386 = vmatprep.mubr.bf16.mxu0 0
      %1387 = vmatmul.mubr.bf16.gmra.mxu0 %v424
      %v1388 = vpop.f32.mrf.mxu0
      %v1389 = vadd.f32 %v1068, %v1388
      %v1390 = vpop.f32.mrf.mxu0
      %v1391 = vpop.f32.mrf.mxu0
      %v1392 = vadd.f32 %v1071, %v1391
      %v1393 = vpop.f32.mrf.mxu0
      %1394 = vmatprep.mubr.bf16.mxu0 0
      %1395 = vmatmul.mubr.bf16.gmra.mxu0 %v425
      %v1396 = vpop.f32.mrf.mxu0
      %v1397 = vadd.f32 %v1076, %v1396
      %v1398 = vpop.f32.mrf.mxu0
      %v1399 = vpop.f32.mrf.mxu0
      %v1400 = vadd.f32 %v1079, %v1399
      %v1401 = vpop.f32.mrf.mxu0
      %1402 = vmatprep.mubr.bf16.mxu0 0
      %1403 = vmatmul.mubr.bf16.gmra.mxu0 %v426
      %v1404 = vpop.f32.mrf.mxu0
      %v1405 = vadd.f32 %v1084, %v1404
      %v1406 = vpop.f32.mrf.mxu0
      %v1407 = vpop.f32.mrf.mxu0
      %v1408 = vadd.f32 %v1087, %v1407
      %v1409 = vpop.f32.mrf.mxu0
      %1410 = vmatprep.mubr.bf16.mxu0 0
      %1411 = vmatmul.mubr.bf16.gmra.mxu0 %v427
      %v1412 = vpop.f32.mrf.mxu0
      %v1413 = vadd.f32 %v1092, %v1412
      %v1414 = vpop.f32.mrf.mxu0
      %v1415 = vpop.f32.mrf.mxu0
      %v1416 = vadd.f32 %v1095, %v1415
      %v1417 = vpop.f32.mrf.mxu0
      %1418 = vmatprep.mubr.bf16.mxu0 0
      %1419 = vmatmul.mubr.bf16.gmra.mxu0 %v428
      %v1420 = vpop.f32.mrf.mxu0
      %v1421 = vadd.f32 %v1100, %v1420
      %v1422 = vpop.f32.mrf.mxu0
      %v1423 = vpop.f32.mrf.mxu0
      %v1424 = vadd.f32 %v1103, %v1423
      %v1425 = vpop.f32.mrf.mxu0
      %1426 = vmatprep.mubr.bf16.mxu0 0
      %1427 = vmatmul.mubr.bf16.gmra.mxu0 %v429
      %v1428 = vpop.f32.mrf.mxu0
      %v1429 = vadd.f32 %v1108, %v1428
      %v1430 = vpop.f32.mrf.mxu0
      %v1431 = vpop.f32.mrf.mxu0
      %v1432 = vadd.f32 %v1111, %v1431
      %v1433 = vpop.f32.mrf.mxu0
      %1434 = vmatprep.mubr.bf16.mxu0 0
      %1435 = vmatmul.mubr.bf16.gmra.mxu0 %v430
      %v1436 = vpop.f32.mrf.mxu0
      %v1437 = vadd.f32 %v1116, %v1436
      %v1438 = vpop.f32.mrf.mxu0
      %v1439 = vpop.f32.mrf.mxu0
      %v1440 = vadd.f32 %v1119, %v1439
      %v1441 = vpop.f32.mrf.mxu0
      %1442 = vmatprep.mubr.bf16.mxu0 0
      %1443 = vmatmul.mubr.bf16.gmra.mxu0 %v431
      %v1444 = vpop.f32.mrf.mxu0
      %v1445 = vadd.f32 %v1124, %v1444
      %v1446 = vpop.f32.mrf.mxu0
      %v1447 = vpop.f32.mrf.mxu0
      %v1448 = vadd.f32 %v1127, %v1447
      %v1449 = vpop.f32.mrf.mxu0
      %1450 = vmatprep.mubr.bf16.mxu0 0
      %1451 = vmatmul.mubr.bf16.gmra.mxu0 %v432
      %v1452 = vpop.f32.mrf.mxu0
      %v1453 = vadd.f32 %v1132, %v1452
      %v1454 = vpop.f32.mrf.mxu0
      %v1455 = vpop.f32.mrf.mxu0
      %v1456 = vadd.f32 %v1135, %v1455
      %v1457 = vpop.f32.mrf.mxu0
      %1458 = vmatprep.mubr.bf16.mxu0 0
      %1459 = vmatmul.mubr.bf16.gmra.mxu0 %v397
      %v1460 = vpop.f32.mrf.mxu0
      %v1461 = vadd.f32 %v1140, %v1460
      %v1462 = vpop.f32.mrf.mxu0
      %v1463 = vpop.f32.mrf.mxu0
      %v1464 = vadd.f32 %v1143, %v1463
      %v1465 = vpop.f32.mrf.mxu0
      %1466 = vmatprep.mubr.bf16.mxu0 0
      %1467 = vmatmul.mubr.bf16.gmra.mxu0 %v398
      %v1468 = vpop.f32.mrf.mxu0
      %v1469 = vadd.f32 %v1148, %v1468
      %v1470 = vpop.f32.mrf.mxu0
      %v1471 = vpop.f32.mrf.mxu0
      %v1472 = vadd.f32 %v1151, %v1471
      %v1473 = vpop.f32.mrf.mxu0
      %1474 = vmatprep.mubr.bf16.mxu0 0
      %1475 = vmatmul.mubr.bf16.gmra.mxu0 %v399
      %v1476 = vpop.f32.mrf.mxu0
      %v1477 = vadd.f32 %v1156, %v1476
      %v1478 = vpop.f32.mrf.mxu0
      %v1479 = vpop.f32.mrf.mxu0
      %v1480 = vadd.f32 %v1159, %v1479
      %v1481 = vpop.f32.mrf.mxu0
      %1482 = vdwg.mxu0
      %s1483 = scalar_lea.vmem %s239, 192
      %v1484 = vld [vmem:[%s1483] sm:$0xf]
      %v1485 = vld [vmem:[%s1483 + $0x4] sm:$0xf]
      %v1486 = vld [vmem:[%s1483 + $0x8] sm:$0xf]
      %v1487 = vld [vmem:[%s1483 + $0xc] sm:$0xf]
      %v1488 = vld [vmem:[%s1483 + $0x10] sm:$0xf]
      %v1489 = vld [vmem:[%s1483 + $0x14] sm:$0xf]
      %v1490 = vld [vmem:[%s1483 + $0x18] sm:$0xf]
      %v1491 = vld [vmem:[%s1483 + $0x1c] sm:$0xf]
      %v1492 = vld [vmem:[%s1483 + $0x20] sm:$0xf]
      %v1493 = vld [vmem:[%s1483 + $0x24] sm:$0xf]
      %v1494 = vld [vmem:[%s1483 + $0x28] sm:$0xf]
      %v1495 = vld [vmem:[%s1483 + $0x2c] sm:$0xf]
      %v1496 = vld [vmem:[%s1483 + $0x30] sm:$0xf]
      %v1497 = vld [vmem:[%s1483 + $0x34] sm:$0xf]
      %v1498 = vld [vmem:[%s1483 + $0x38] sm:$0xf]
      %v1499 = vld [vmem:[%s1483 + $0x3c] sm:$0xf]
      %v1500 = vld [vmem:[%s1483 + $0x40] sm:$0xf]
      %v1501 = vld [vmem:[%s1483 + $0x44] sm:$0xf]
      %v1502 = vld [vmem:[%s1483 + $0x48] sm:$0xf]
      %v1503 = vld [vmem:[%s1483 + $0x4c] sm:$0xf]
      %v1504 = vld [vmem:[%s1483 + $0x50] sm:$0xf]
      %v1505 = vld [vmem:[%s1483 + $0x54] sm:$0xf]
      %v1506 = vld [vmem:[%s1483 + $0x58] sm:$0xf]
      %v1507 = vld [vmem:[%s1483 + $0x5c] sm:$0xf]
      %v1508 = vld [vmem:[%s1483 + $0x60] sm:$0xf]
      %v1509 = vld [vmem:[%s1483 + $0x64] sm:$0xf]
      %v1510 = vld [vmem:[%s1483 + $0x68] sm:$0xf]
      %v1511 = vld [vmem:[%s1483 + $0x6c] sm:$0xf]
      %v1512 = vld [vmem:[%s1483 + $0x70] sm:$0xf]
      %v1513 = vld [vmem:[%s1483 + $0x74] sm:$0xf]
      %v1514 = vld [vmem:[%s1483 + $0x78] sm:$0xf]
      %v1515 = vld [vmem:[%s1483 + $0x7c] sm:$0xf]
      %v1516 = vld [vmem:[%s1483 + $0x80] sm:$0xf]
      %v1517 = vld [vmem:[%s1483 + $0x84] sm:$0xf]
      %v1518 = vld [vmem:[%s1483 + $0x88] sm:$0xf]
      %v1519 = vld [vmem:[%s1483 + $0x8c] sm:$0xf]
      %v1520 = vld [vmem:[%s1483 + $0x90] sm:$0xf]
      %v1521 = vld [vmem:[%s1483 + $0x94] sm:$0xf]
      %v1522 = vld [vmem:[%s1483 + $0x98] sm:$0xf]
      %v1523 = vld [vmem:[%s1483 + $0x9c] sm:$0xf]
      %v1524 = vld [vmem:[%s1483 + $0xa0] sm:$0xf]
      %v1525 = vld [vmem:[%s1483 + $0xa4] sm:$0xf]
      %v1526 = vld [vmem:[%s1483 + $0xa8] sm:$0xf]
      %v1527 = vld [vmem:[%s1483 + $0xac] sm:$0xf]
      %v1528 = vld [vmem:[%s1483 + $0xb0] sm:$0xf]
      %v1529 = vld [vmem:[%s1483 + $0xb4] sm:$0xf]
      %v1530 = vld [vmem:[%s1483 + $0xb8] sm:$0xf]
      %v1531 = vld [vmem:[%s1483 + $0xbc] sm:$0xf]
      %v1580 = vunpack.c.l.b16 %v1484
      %v1581 = vunpack.c.l.b16 %v1485
      %v1582 = vunpack.c.l.b16 %v1486
      %v1583 = vunpack.c.l.b16 %v1487
      %v1584 = vunpack.c.l.b16 %v1488
      %v1585 = vunpack.c.l.b16 %v1489
      %v1586 = vunpack.c.l.b16 %v1490
      %v1587 = vunpack.c.l.b16 %v1491
      %v1588 = vunpack.c.l.b16 %v1492
      %v1589 = vunpack.c.l.b16 %v1493
      %v1590 = vunpack.c.l.b16 %v1494
      %v1591 = vunpack.c.l.b16 %v1495
      %v1592 = vunpack.c.l.b16 %v1496
      %v1593 = vunpack.c.l.b16 %v1497
      %v1594 = vunpack.c.l.b16 %v1498
      %v1595 = vunpack.c.l.b16 %v1499
      %v1596 = vunpack.c.l.b16 %v1500
      %v1597 = vunpack.c.l.b16 %v1501
      %v1598 = vunpack.c.l.b16 %v1502
      %v1599 = vunpack.c.l.b16 %v1503
      %v1600 = vunpack.c.l.b16 %v1504
      %v1601 = vunpack.c.l.b16 %v1505
      %v1602 = vunpack.c.l.b16 %v1506
      %v1603 = vunpack.c.l.b16 %v1507
      %v1604 = vunpack.c.l.b16 %v1508
      %v1605 = vunpack.c.l.b16 %v1509
      %v1606 = vunpack.c.l.b16 %v1510
      %v1607 = vunpack.c.l.b16 %v1511
      %v1608 = vunpack.c.l.b16 %v1512
      %v1609 = vunpack.c.l.b16 %v1513
      %v1610 = vunpack.c.l.b16 %v1514
      %v1611 = vunpack.c.l.b16 %v1515
      %v1612 = vunpack.c.l.b16 %v1516
      %v1613 = vunpack.c.l.b16 %v1517
      %v1614 = vunpack.c.l.b16 %v1518
      %v1615 = vunpack.c.l.b16 %v1519
      %v1616 = vunpack.c.l.b16 %v1520
      %v1617 = vunpack.c.l.b16 %v1521
      %v1618 = vunpack.c.l.b16 %v1522
      %v1619 = vunpack.c.l.b16 %v1523
      %v1620 = vunpack.c.l.b16 %v1524
      %v1621 = vunpack.c.l.b16 %v1525
      %v1622 = vunpack.c.l.b16 %v1526
      %v1623 = vunpack.c.l.b16 %v1527
      %v1624 = vunpack.c.l.b16 %v1528
      %v1625 = vunpack.c.l.b16 %v1529
      %v1626 = vunpack.c.l.b16 %v1530
      %v1627 = vunpack.c.l.b16 %v1531
      %v1628 = vpack.c.b16 %v1581, %v1580
      %v1629 = vpack.c.b16 %v1583, %v1582
      %v1630 = vpack.c.b16 %v1585, %v1584
      %v1631 = vpack.c.b16 %v1587, %v1586
      %v1632 = vpack.c.b16 %v1589, %v1588
      %v1633 = vpack.c.b16 %v1591, %v1590
      %v1634 = vpack.c.b16 %v1593, %v1592
      %v1635 = vpack.c.b16 %v1595, %v1594
      %v1636 = vpack.c.b16 %v1597, %v1596
      %v1637 = vpack.c.b16 %v1599, %v1598
      %v1638 = vpack.c.b16 %v1601, %v1600
      %v1639 = vpack.c.b16 %v1603, %v1602
      %v1640 = vpack.c.b16 %v1605, %v1604
      %v1641 = vpack.c.b16 %v1607, %v1606
      %v1642 = vpack.c.b16 %v1609, %v1608
      %v1643 = vpack.c.b16 %v1611, %v1610
      %v1644 = vpack.c.b16 %v1613, %v1612
      %v1645 = vpack.c.b16 %v1615, %v1614
      %v1646 = vpack.c.b16 %v1617, %v1616
      %v1647 = vpack.c.b16 %v1619, %v1618
      %v1648 = vpack.c.b16 %v1621, %v1620
      %v1649 = vpack.c.b16 %v1623, %v1622
      %v1650 = vpack.c.b16 %v1625, %v1624
      %v1651 = vpack.c.b16 %v1627, %v1626
      %1676 = vmatprep.subr.bf16.mxu0 0
      %1677 = vmatpush1.bf16.msra.mxu0 %v1635
      %1678 = vmatprep.subr.bf16.mxu0 0
      %1679 = vmatpush1.bf16.msra.mxu0 %v1634
      %1680 = vmatprep.subr.bf16.mxu0 0
      %1681 = vmatpush1.bf16.msra.mxu0 %v1633
      %1682 = vmatprep.subr.bf16.mxu0 0
      %1683 = vmatpush1.bf16.msra.mxu0 %v1632
      %1684 = vmatprep.subr.bf16.mxu0 0
      %1685 = vmatpush1.bf16.msra.mxu0 %v1631
      %1686 = vmatprep.subr.bf16.mxu0 0
      %1687 = vmatpush1.bf16.msra.mxu0 %v1630
      %1688 = vmatprep.subr.bf16.mxu0 0
      %1689 = vmatpush1.bf16.msra.mxu0 %v1629
      %1690 = vmatprep.subr.bf16.mxu0 0
      %1691 = vmatpush1.bf16.msra.mxu0 %v1628
      %1692 = vmatprep.subr.bf16.mxu0 0
      %1693 = vmatpush2.bf16.msra.mxu0 %v1643
      %1694 = vmatprep.subr.bf16.mxu0 0
      %1695 = vmatpush2.bf16.msra.mxu0 %v1642
      %1696 = vmatprep.subr.bf16.mxu0 0
      %1697 = vmatpush2.bf16.msra.mxu0 %v1641
      %1698 = vmatprep.subr.bf16.mxu0 0
      %1699 = vmatpush2.bf16.msra.mxu0 %v1640
      %1700 = vmatprep.subr.bf16.mxu0 0
      %1701 = vmatpush2.bf16.msra.mxu0 %v1639
      %1702 = vmatprep.subr.bf16.mxu0 0
      %1703 = vmatpush2.bf16.msra.mxu0 %v1638
      %1704 = vmatprep.subr.bf16.mxu0 0
      %1705 = vmatpush2.bf16.msra.mxu0 %v1637
      %1706 = vmatprep.subr.bf16.mxu0 0
      %1707 = vmatpush2.bf16.msra.mxu0 %v1636
      %1708 = vmatprep.mubr.bf16.mxu0 %v577
      %1709 = vmatmul.mubr.bf16.gmra.mxu0 %v397
      %v1710 = vpop.f32.mrf.mxu0
      %v1711 = vadd.f32 0.0, %v1710
      %v1712 = vpop.f32.mrf.mxu0
      %v1713 = vpop.f32.mrf.mxu0
      %v1714 = vadd.f32 0.0, %v1713
      %v1715 = vpop.f32.mrf.mxu0
      %1716 = vmatprep.mubr.bf16.mxu0 %v578
      %1717 = vmatmul.mubr.bf16.gmra.mxu0 %v398
      %v1718 = vpop.f32.mrf.mxu0
      %v1719 = vadd.f32 0.0, %v1718
      %v1720 = vpop.f32.mrf.mxu0
      %v1721 = vpop.f32.mrf.mxu0
      %v1722 = vadd.f32 0.0, %v1721
      %v1723 = vpop.f32.mrf.mxu0
      %1724 = vmatprep.mubr.bf16.mxu0 %v579
      %1725 = vmatmul.mubr.bf16.gmra.mxu0 %v399
      %v1726 = vpop.f32.mrf.mxu0
      %v1727 = vadd.f32 0.0, %v1726
      %v1728 = vpop.f32.mrf.mxu0
      %v1729 = vpop.f32.mrf.mxu0
      %v1730 = vadd.f32 0.0, %v1729
      %v1731 = vpop.f32.mrf.mxu0
      %1732 = vmatprep.mubr.bf16.mxu0 %v580
      %1733 = vmatmul.mubr.bf16.gmra.mxu0 %v400
      %v1734 = vpop.f32.mrf.mxu0
      %v1735 = vadd.f32 0.0, %v1734
      %v1736 = vpop.f32.mrf.mxu0
      %v1737 = vpop.f32.mrf.mxu0
      %v1738 = vadd.f32 0.0, %v1737
      %v1739 = vpop.f32.mrf.mxu0
      %1740 = vmatprep.mubr.bf16.mxu0 %v581
      %1741 = vmatmul.mubr.bf16.gmra.mxu0 %v401
      %v1742 = vpop.f32.mrf.mxu0
      %v1743 = vadd.f32 0.0, %v1742
      %v1744 = vpop.f32.mrf.mxu0
      %v1745 = vpop.f32.mrf.mxu0
      %v1746 = vadd.f32 0.0, %v1745
      %v1747 = vpop.f32.mrf.mxu0
      %1748 = vmatprep.mubr.bf16.mxu0 %v582
      %1749 = vmatmul.mubr.bf16.gmra.mxu0 %v402
      %v1750 = vpop.f32.mrf.mxu0
      %v1751 = vadd.f32 0.0, %v1750
      %v1752 = vpop.f32.mrf.mxu0
      %v1753 = vpop.f32.mrf.mxu0
      %v1754 = vadd.f32 0.0, %v1753
      %v1755 = vpop.f32.mrf.mxu0
      %1756 = vmatprep.mubr.bf16.mxu0 %v583
      %1757 = vmatmul.mubr.bf16.gmra.mxu0 %v403
      %v1758 = vpop.f32.mrf.mxu0
      %v1759 = vadd.f32 0.0, %v1758
      %v1760 = vpop.f32.mrf.mxu0
      %v1761 = vpop.f32.mrf.mxu0
      %v1762 = vadd.f32 0.0, %v1761
      %v1763 = vpop.f32.mrf.mxu0
      %1764 = vmatprep.mubr.bf16.mxu0 %v584
      %1765 = vmatmul.mubr.bf16.gmra.mxu0 %v404
      %v1766 = vpop.f32.mrf.mxu0
      %v1767 = vadd.f32 0.0, %v1766
      %v1768 = vpop.f32.mrf.mxu0
      %v1769 = vpop.f32.mrf.mxu0
      %v1770 = vadd.f32 0.0, %v1769
      %v1771 = vpop.f32.mrf.mxu0
      %1772 = vmatprep.mubr.bf16.mxu0 %v585
      %1773 = vmatmul.mubr.bf16.gmra.mxu0 %v405
      %v1774 = vpop.f32.mrf.mxu0
      %v1775 = vadd.f32 0.0, %v1774
      %v1776 = vpop.f32.mrf.mxu0
      %v1777 = vpop.f32.mrf.mxu0
      %v1778 = vadd.f32 0.0, %v1777
      %v1779 = vpop.f32.mrf.mxu0
      %1780 = vmatprep.mubr.bf16.mxu0 %v586
      %1781 = vmatmul.mubr.bf16.gmra.mxu0 %v406
      %v1782 = vpop.f32.mrf.mxu0
      %v1783 = vadd.f32 0.0, %v1782
      %v1784 = vpop.f32.mrf.mxu0
      %v1785 = vpop.f32.mrf.mxu0
      %v1786 = vadd.f32 0.0, %v1785
      %v1787 = vpop.f32.mrf.mxu0
      %1788 = vmatprep.mubr.bf16.mxu0 %v587
      %1789 = vmatmul.mubr.bf16.gmra.mxu0 %v407
      %v1790 = vpop.f32.mrf.mxu0
      %v1791 = vadd.f32 0.0, %v1790
      %v1792 = vpop.f32.mrf.mxu0
      %v1793 = vpop.f32.mrf.mxu0
      %v1794 = vadd.f32 0.0, %v1793
      %v1795 = vpop.f32.mrf.mxu0
      %1796 = vmatprep.mubr.bf16.mxu0 %v588
      %1797 = vmatmul.mubr.bf16.gmra.mxu0 %v408
      %v1798 = vpop.f32.mrf.mxu0
      %v1799 = vadd.f32 0.0, %v1798
      %v1800 = vpop.f32.mrf.mxu0
      %v1801 = vpop.f32.mrf.mxu0
      %v1802 = vadd.f32 0.0, %v1801
      %v1803 = vpop.f32.mrf.mxu0
      %1804 = vmatprep.mubr.bf16.mxu0 %v589
      %1805 = vmatmul.mubr.bf16.gmra.mxu0 %v409
      %v1806 = vpop.f32.mrf.mxu0
      %v1807 = vadd.f32 0.0, %v1806
      %v1808 = vpop.f32.mrf.mxu0
      %v1809 = vpop.f32.mrf.mxu0
      %v1810 = vadd.f32 0.0, %v1809
      %v1811 = vpop.f32.mrf.mxu0
      %1812 = vmatprep.mubr.bf16.mxu0 %v590
      %1813 = vmatmul.mubr.bf16.gmra.mxu0 %v410
      %v1814 = vpop.f32.mrf.mxu0
      %v1815 = vadd.f32 0.0, %v1814
      %v1816 = vpop.f32.mrf.mxu0
      %v1817 = vpop.f32.mrf.mxu0
      %v1818 = vadd.f32 0.0, %v1817
      %v1819 = vpop.f32.mrf.mxu0
      %1820 = vmatprep.mubr.bf16.mxu0 %v591
      %1821 = vmatmul.mubr.bf16.gmra.mxu0 %v411
      %v1822 = vpop.f32.mrf.mxu0
      %v1823 = vadd.f32 0.0, %v1822
      %v1824 = vpop.f32.mrf.mxu0
      %v1825 = vpop.f32.mrf.mxu0
      %v1826 = vadd.f32 0.0, %v1825
      %v1827 = vpop.f32.mrf.mxu0
      %1828 = vmatprep.mubr.bf16.mxu0 %v592
      %1829 = vmatmul.mubr.bf16.gmra.mxu0 %v412
      %v1830 = vpop.f32.mrf.mxu0
      %v1831 = vadd.f32 0.0, %v1830
      %v1832 = vpop.f32.mrf.mxu0
      %v1833 = vpop.f32.mrf.mxu0
      %v1834 = vadd.f32 0.0, %v1833
      %v1835 = vpop.f32.mrf.mxu0
      %1836 = vmatprep.mubr.bf16.mxu0 %v593
      %1837 = vmatmul.mubr.bf16.gmra.mxu0 %v413
      %v1838 = vpop.f32.mrf.mxu0
      %v1839 = vadd.f32 0.0, %v1838
      %v1840 = vpop.f32.mrf.mxu0
      %v1841 = vpop.f32.mrf.mxu0
      %v1842 = vadd.f32 0.0, %v1841
      %v1843 = vpop.f32.mrf.mxu0
      %1844 = vmatprep.mubr.bf16.mxu0 %v594
      %1845 = vmatmul.mubr.bf16.gmra.mxu0 %v414
      %v1846 = vpop.f32.mrf.mxu0
      %v1847 = vadd.f32 0.0, %v1846
      %v1848 = vpop.f32.mrf.mxu0
      %v1849 = vpop.f32.mrf.mxu0
      %v1850 = vadd.f32 0.0, %v1849
      %v1851 = vpop.f32.mrf.mxu0
      %1852 = vmatprep.mubr.bf16.mxu0 %v595
      %1853 = vmatmul.mubr.bf16.gmra.mxu0 %v415
      %v1854 = vpop.f32.mrf.mxu0
      %v1855 = vadd.f32 0.0, %v1854
      %v1856 = vpop.f32.mrf.mxu0
      %v1857 = vpop.f32.mrf.mxu0
      %v1858 = vadd.f32 0.0, %v1857
      %v1859 = vpop.f32.mrf.mxu0
      %1860 = vmatprep.mubr.bf16.mxu0 %v596
      %1861 = vmatmul.mubr.bf16.gmra.mxu0 %v416
      %v1862 = vpop.f32.mrf.mxu0
      %v1863 = vadd.f32 0.0, %v1862
      %v1864 = vpop.f32.mrf.mxu0
      %v1865 = vpop.f32.mrf.mxu0
      %v1866 = vadd.f32 0.0, %v1865
      %v1867 = vpop.f32.mrf.mxu0
      %1868 = vmatprep.mubr.bf16.mxu0 %v597
      %1869 = vmatmul.mubr.bf16.gmra.mxu0 %v417
      %v1870 = vpop.f32.mrf.mxu0
      %v1871 = vadd.f32 0.0, %v1870
      %v1872 = vpop.f32.mrf.mxu0
      %v1873 = vpop.f32.mrf.mxu0
      %v1874 = vadd.f32 0.0, %v1873
      %v1875 = vpop.f32.mrf.mxu0
      %1876 = vmatprep.mubr.bf16.mxu0 %v598
      %1877 = vmatmul.mubr.bf16.gmra.mxu0 %v418
      %v1878 = vpop.f32.mrf.mxu0
      %v1879 = vadd.f32 0.0, %v1878
      %v1880 = vpop.f32.mrf.mxu0
      %v1881 = vpop.f32.mrf.mxu0
      %v1882 = vadd.f32 0.0, %v1881
      %v1883 = vpop.f32.mrf.mxu0
      %1884 = vmatprep.mubr.bf16.mxu0 %v599
      %1885 = vmatmul.mubr.bf16.gmra.mxu0 %v419
      %v1886 = vpop.f32.mrf.mxu0
      %v1887 = vadd.f32 0.0, %v1886
      %v1888 = vpop.f32.mrf.mxu0
      %v1889 = vpop.f32.mrf.mxu0
      %v1890 = vadd.f32 0.0, %v1889
      %v1891 = vpop.f32.mrf.mxu0
      %1892 = vmatprep.mubr.bf16.mxu0 %v600
      %1893 = vmatmul.mubr.bf16.gmra.mxu0 %v420
      %v1894 = vpop.f32.mrf.mxu0
      %v1895 = vadd.f32 0.0, %v1894
      %v1896 = vpop.f32.mrf.mxu0
      %v1897 = vpop.f32.mrf.mxu0
      %v1898 = vadd.f32 0.0, %v1897
      %v1899 = vpop.f32.mrf.mxu0
      %1900 = vmatprep.mubr.bf16.mxu0 %v601
      %1901 = vmatmul.mubr.bf16.gmra.mxu0 %v421
      %v1902 = vpop.f32.mrf.mxu0
      %v1903 = vadd.f32 0.0, %v1902
      %v1904 = vpop.f32.mrf.mxu0
      %v1905 = vpop.f32.mrf.mxu0
      %v1906 = vadd.f32 0.0, %v1905
      %v1907 = vpop.f32.mrf.mxu0
      %1908 = vmatprep.mubr.bf16.mxu0 %v602
      %1909 = vmatmul.mubr.bf16.gmra.mxu0 %v422
      %v1910 = vpop.f32.mrf.mxu0
      %v1911 = vadd.f32 0.0, %v1910
      %v1912 = vpop.f32.mrf.mxu0
      %v1913 = vpop.f32.mrf.mxu0
      %v1914 = vadd.f32 0.0, %v1913
      %v1915 = vpop.f32.mrf.mxu0
      %1916 = vmatprep.mubr.bf16.mxu0 %v603
      %1917 = vmatmul.mubr.bf16.gmra.mxu0 %v423
      %v1918 = vpop.f32.mrf.mxu0
      %v1919 = vadd.f32 0.0, %v1918
      %v1920 = vpop.f32.mrf.mxu0
      %v1921 = vpop.f32.mrf.mxu0
      %v1922 = vadd.f32 0.0, %v1921
      %v1923 = vpop.f32.mrf.mxu0
      %1924 = vmatprep.mubr.bf16.mxu0 %v604
      %1925 = vmatmul.mubr.bf16.gmra.mxu0 %v424
      %v1926 = vpop.f32.mrf.mxu0
      %v1927 = vadd.f32 0.0, %v1926
      %v1928 = vpop.f32.mrf.mxu0
      %v1929 = vpop.f32.mrf.mxu0
      %v1930 = vadd.f32 0.0, %v1929
      %v1931 = vpop.f32.mrf.mxu0
      %1932 = vmatprep.mubr.bf16.mxu0 %v605
      %1933 = vmatmul.mubr.bf16.gmra.mxu0 %v425
      %v1934 = vpop.f32.mrf.mxu0
      %v1935 = vadd.f32 0.0, %v1934
      %v1936 = vpop.f32.mrf.mxu0
      %v1937 = vpop.f32.mrf.mxu0
      %v1938 = vadd.f32 0.0, %v1937
      %v1939 = vpop.f32.mrf.mxu0
      %1940 = vmatprep.mubr.bf16.mxu0 %v606
      %1941 = vmatmul.mubr.bf16.gmra.mxu0 %v426
      %v1942 = vpop.f32.mrf.mxu0
      %v1943 = vadd.f32 0.0, %v1942
      %v1944 = vpop.f32.mrf.mxu0
      %v1945 = vpop.f32.mrf.mxu0
      %v1946 = vadd.f32 0.0, %v1945
      %v1947 = vpop.f32.mrf.mxu0
      %1948 = vmatprep.mubr.bf16.mxu0 %v607
      %1949 = vmatmul.mubr.bf16.gmra.mxu0 %v427
      %v1950 = vpop.f32.mrf.mxu0
      %v1951 = vadd.f32 0.0, %v1950
      %v1952 = vpop.f32.mrf.mxu0
      %v1953 = vpop.f32.mrf.mxu0
      %v1954 = vadd.f32 0.0, %v1953
      %v1955 = vpop.f32.mrf.mxu0
      %1956 = vmatprep.mubr.bf16.mxu0 %v608
      %1957 = vmatmul.mubr.bf16.gmra.mxu0 %v428
      %v1958 = vpop.f32.mrf.mxu0
      %v1959 = vadd.f32 0.0, %v1958
      %v1960 = vpop.f32.mrf.mxu0
      %v1961 = vpop.f32.mrf.mxu0
      %v1962 = vadd.f32 0.0, %v1961
      %v1963 = vpop.f32.mrf.mxu0
      %1964 = vmatprep.mubr.bf16.mxu0 %v609
      %1965 = vmatmul.mubr.bf16.gmra.mxu0 %v429
      %v1966 = vpop.f32.mrf.mxu0
      %v1967 = vadd.f32 0.0, %v1966
      %v1968 = vpop.f32.mrf.mxu0
      %v1969 = vpop.f32.mrf.mxu0
      %v1970 = vadd.f32 0.0, %v1969
      %v1971 = vpop.f32.mrf.mxu0
      %1972 = vmatprep.mubr.bf16.mxu0 %v610
      %1973 = vmatmul.mubr.bf16.gmra.mxu0 %v430
      %v1974 = vpop.f32.mrf.mxu0
      %v1975 = vadd.f32 0.0, %v1974
      %v1976 = vpop.f32.mrf.mxu0
      %v1977 = vpop.f32.mrf.mxu0
      %v1978 = vadd.f32 0.0, %v1977
      %v1979 = vpop.f32.mrf.mxu0
      %1980 = vmatprep.mubr.bf16.mxu0 %v611
      %1981 = vmatmul.mubr.bf16.gmra.mxu0 %v431
      %v1982 = vpop.f32.mrf.mxu0
      %v1983 = vadd.f32 0.0, %v1982
      %v1984 = vpop.f32.mrf.mxu0
      %v1985 = vpop.f32.mrf.mxu0
      %v1986 = vadd.f32 0.0, %v1985
      %v1987 = vpop.f32.mrf.mxu0
      %1988 = vmatprep.mubr.bf16.mxu0 %v612
      %1989 = vmatmul.mubr.bf16.gmra.mxu0 %v432
      %v1990 = vpop.f32.mrf.mxu0
      %v1991 = vadd.f32 0.0, %v1990
      %v1992 = vpop.f32.mrf.mxu0
      %v1993 = vpop.f32.mrf.mxu0
      %v1994 = vadd.f32 0.0, %v1993
      %v1995 = vpop.f32.mrf.mxu0
      %1996 = vdwg.mxu0
      %1997 = vmatprep.subr.bf16.mxu0 0
      %1998 = vmatpush1.bf16.msra.mxu0 %v1651
      %1999 = vmatprep.subr.bf16.mxu0 0
      %2000 = vmatpush1.bf16.msra.mxu0 %v1650
      %2001 = vmatprep.subr.bf16.mxu0 0
      %2002 = vmatpush1.bf16.msra.mxu0 %v1649
      %2003 = vmatprep.subr.bf16.mxu0 0
      %2004 = vmatpush1.bf16.msra.mxu0 %v1648
      %2005 = vmatprep.subr.bf16.mxu0 0
      %2006 = vmatpush1.bf16.msra.mxu0 %v1647
      %2007 = vmatprep.subr.bf16.mxu0 0
      %2008 = vmatpush1.bf16.msra.mxu0 %v1646
      %2009 = vmatprep.subr.bf16.mxu0 0
      %2010 = vmatpush1.bf16.msra.mxu0 %v1645
      %2011 = vmatprep.subr.bf16.mxu0 0
      %2012 = vmatpush1.bf16.msra.mxu0 %v1644
      %2013 = vmatprep.subr.bf16.mxu0 0
      %2014 = vmatpush2.bf16.msra.mxu0 0
      %2015 = vmatprep.subr.bf16.mxu0 0
      %2016 = vmatpush2.bf16.msra.mxu0 0
      %2017 = vmatprep.subr.bf16.mxu0 0
      %2018 = vmatpush2.bf16.msra.mxu0 0
      %2019 = vmatprep.subr.bf16.mxu0 0
      %2020 = vmatpush2.bf16.msra.mxu0 0
      %2021 = vmatprep.subr.bf16.mxu0 0
      %2022 = vmatpush2.bf16.msra.mxu0 0
      %2023 = vmatprep.subr.bf16.mxu0 0
      %2024 = vmatpush2.bf16.msra.mxu0 0
      %2025 = vmatprep.subr.bf16.mxu0 0
      %2026 = vmatpush2.bf16.msra.mxu0 0
      %2027 = vmatprep.subr.bf16.mxu0 0
      %2028 = vmatpush2.bf16.msra.mxu0 0
      %2029 = vmatprep.mubr.bf16.mxu0 0
      %2030 = vmatmul.mubr.bf16.gmra.mxu0 %v400
      %v2031 = vpop.f32.mrf.mxu0
      %v2032 = vadd.f32 %v1711, %v2031
      %v2033 = vpop.f32.mrf.mxu0
      %v2034 = vpop.f32.mrf.mxu0
      %v2035 = vadd.f32 %v1714, %v2034
      %v2036 = vpop.f32.mrf.mxu0
      %2037 = vmatprep.mubr.bf16.mxu0 0
      %2038 = vmatmul.mubr.bf16.gmra.mxu0 %v401
      %v2039 = vpop.f32.mrf.mxu0
      %v2040 = vadd.f32 %v1719, %v2039
      %v2041 = vpop.f32.mrf.mxu0
      %v2042 = vpop.f32.mrf.mxu0
      %v2043 = vadd.f32 %v1722, %v2042
      %v2044 = vpop.f32.mrf.mxu0
      %2045 = vmatprep.mubr.bf16.mxu0 0
      %2046 = vmatmul.mubr.bf16.gmra.mxu0 %v402
      %v2047 = vpop.f32.mrf.mxu0
      %v2048 = vadd.f32 %v1727, %v2047
      %v2049 = vpop.f32.mrf.mxu0
      %v2050 = vpop.f32.mrf.mxu0
      %v2051 = vadd.f32 %v1730, %v2050
      %v2052 = vpop.f32.mrf.mxu0
      %2053 = vmatprep.mubr.bf16.mxu0 0
      %2054 = vmatmul.mubr.bf16.gmra.mxu0 %v403
      %v2055 = vpop.f32.mrf.mxu0
      %v2056 = vadd.f32 %v1735, %v2055
      %v2057 = vpop.f32.mrf.mxu0
      %v2058 = vpop.f32.mrf.mxu0
      %v2059 = vadd.f32 %v1738, %v2058
      %v2060 = vpop.f32.mrf.mxu0
      %2061 = vmatprep.mubr.bf16.mxu0 0
      %2062 = vmatmul.mubr.bf16.gmra.mxu0 %v404
      %v2063 = vpop.f32.mrf.mxu0
      %v2064 = vadd.f32 %v1743, %v2063
      %v2065 = vpop.f32.mrf.mxu0
      %v2066 = vpop.f32.mrf.mxu0
      %v2067 = vadd.f32 %v1746, %v2066
      %v2068 = vpop.f32.mrf.mxu0
      %2069 = vmatprep.mubr.bf16.mxu0 0
      %2070 = vmatmul.mubr.bf16.gmra.mxu0 %v405
      %v2071 = vpop.f32.mrf.mxu0
      %v2072 = vadd.f32 %v1751, %v2071
      %v2073 = vpop.f32.mrf.mxu0
      %v2074 = vpop.f32.mrf.mxu0
      %v2075 = vadd.f32 %v1754, %v2074
      %v2076 = vpop.f32.mrf.mxu0
      %2077 = vmatprep.mubr.bf16.mxu0 0
      %2078 = vmatmul.mubr.bf16.gmra.mxu0 %v406
      %v2079 = vpop.f32.mrf.mxu0
      %v2080 = vadd.f32 %v1759, %v2079
      %v2081 = vpop.f32.mrf.mxu0
      %v2082 = vpop.f32.mrf.mxu0
      %v2083 = vadd.f32 %v1762, %v2082
      %v2084 = vpop.f32.mrf.mxu0
      %2085 = vmatprep.mubr.bf16.mxu0 0
      %2086 = vmatmul.mubr.bf16.gmra.mxu0 %v407
      %v2087 = vpop.f32.mrf.mxu0
      %v2088 = vadd.f32 %v1767, %v2087
      %v2089 = vpop.f32.mrf.mxu0
      %v2090 = vpop.f32.mrf.mxu0
      %v2091 = vadd.f32 %v1770, %v2090
      %v2092 = vpop.f32.mrf.mxu0
      %2093 = vmatprep.mubr.bf16.mxu0 0
      %2094 = vmatmul.mubr.bf16.gmra.mxu0 %v408
      %v2095 = vpop.f32.mrf.mxu0
      %v2096 = vadd.f32 %v1775, %v2095
      %v2097 = vpop.f32.mrf.mxu0
      %v2098 = vpop.f32.mrf.mxu0
      %v2099 = vadd.f32 %v1778, %v2098
      %v2100 = vpop.f32.mrf.mxu0
      %2101 = vmatprep.mubr.bf16.mxu0 0
      %2102 = vmatmul.mubr.bf16.gmra.mxu0 %v409
      %v2103 = vpop.f32.mrf.mxu0
      %v2104 = vadd.f32 %v1783, %v2103
      %v2105 = vpop.f32.mrf.mxu0
      %v2106 = vpop.f32.mrf.mxu0
      %v2107 = vadd.f32 %v1786, %v2106
      %v2108 = vpop.f32.mrf.mxu0
      %2109 = vmatprep.mubr.bf16.mxu0 0
      %2110 = vmatmul.mubr.bf16.gmra.mxu0 %v410
      %v2111 = vpop.f32.mrf.mxu0
      %v2112 = vadd.f32 %v1791, %v2111
      %v2113 = vpop.f32.mrf.mxu0
      %v2114 = vpop.f32.mrf.mxu0
      %v2115 = vadd.f32 %v1794, %v2114
      %v2116 = vpop.f32.mrf.mxu0
      %2117 = vmatprep.mubr.bf16.mxu0 0
      %2118 = vmatmul.mubr.bf16.gmra.mxu0 %v411
      %v2119 = vpop.f32.mrf.mxu0
      %v2120 = vadd.f32 %v1799, %v2119
      %v2121 = vpop.f32.mrf.mxu0
      %v2122 = vpop.f32.mrf.mxu0
      %v2123 = vadd.f32 %v1802, %v2122
      %v2124 = vpop.f32.mrf.mxu0
      %2125 = vmatprep.mubr.bf16.mxu0 0
      %2126 = vmatmul.mubr.bf16.gmra.mxu0 %v412
      %v2127 = vpop.f32.mrf.mxu0
      %v2128 = vadd.f32 %v1807, %v2127
      %v2129 = vpop.f32.mrf.mxu0
      %v2130 = vpop.f32.mrf.mxu0
      %v2131 = vadd.f32 %v1810, %v2130
      %v2132 = vpop.f32.mrf.mxu0
      %2133 = vmatprep.mubr.bf16.mxu0 0
      %2134 = vmatmul.mubr.bf16.gmra.mxu0 %v413
      %v2135 = vpop.f32.mrf.mxu0
      %v2136 = vadd.f32 %v1815, %v2135
      %v2137 = vpop.f32.mrf.mxu0
      %v2138 = vpop.f32.mrf.mxu0
      %v2139 = vadd.f32 %v1818, %v2138
      %v2140 = vpop.f32.mrf.mxu0
      %2141 = vmatprep.mubr.bf16.mxu0 0
      %2142 = vmatmul.mubr.bf16.gmra.mxu0 %v414
      %v2143 = vpop.f32.mrf.mxu0
      %v2144 = vadd.f32 %v1823, %v2143
      %v2145 = vpop.f32.mrf.mxu0
      %v2146 = vpop.f32.mrf.mxu0
      %v2147 = vadd.f32 %v1826, %v2146
      %v2148 = vpop.f32.mrf.mxu0
      %2149 = vmatprep.mubr.bf16.mxu0 0
      %2150 = vmatmul.mubr.bf16.gmra.mxu0 %v415
      %v2151 = vpop.f32.mrf.mxu0
      %v2152 = vadd.f32 %v1831, %v2151
      %v2153 = vpop.f32.mrf.mxu0
      %v2154 = vpop.f32.mrf.mxu0
      %v2155 = vadd.f32 %v1834, %v2154
      %v2156 = vpop.f32.mrf.mxu0
      %2157 = vmatprep.mubr.bf16.mxu0 0
      %2158 = vmatmul.mubr.bf16.gmra.mxu0 %v416
      %v2159 = vpop.f32.mrf.mxu0
      %v2160 = vadd.f32 %v1839, %v2159
      %v2161 = vpop.f32.mrf.mxu0
      %v2162 = vpop.f32.mrf.mxu0
      %v2163 = vadd.f32 %v1842, %v2162
      %v2164 = vpop.f32.mrf.mxu0
      %2165 = vmatprep.mubr.bf16.mxu0 0
      %2166 = vmatmul.mubr.bf16.gmra.mxu0 %v417
      %v2167 = vpop.f32.mrf.mxu0
      %v2168 = vadd.f32 %v1847, %v2167
      %v2169 = vpop.f32.mrf.mxu0
      %v2170 = vpop.f32.mrf.mxu0
      %v2171 = vadd.f32 %v1850, %v2170
      %v2172 = vpop.f32.mrf.mxu0
      %2173 = vmatprep.mubr.bf16.mxu0 0
      %2174 = vmatmul.mubr.bf16.gmra.mxu0 %v418
      %v2175 = vpop.f32.mrf.mxu0
      %v2176 = vadd.f32 %v1855, %v2175
      %v2177 = vpop.f32.mrf.mxu0
      %v2178 = vpop.f32.mrf.mxu0
      %v2179 = vadd.f32 %v1858, %v2178
      %v2180 = vpop.f32.mrf.mxu0
      %2181 = vmatprep.mubr.bf16.mxu0 0
      %2182 = vmatmul.mubr.bf16.gmra.mxu0 %v419
      %v2183 = vpop.f32.mrf.mxu0
      %v2184 = vadd.f32 %v1863, %v2183
      %v2185 = vpop.f32.mrf.mxu0
      %v2186 = vpop.f32.mrf.mxu0
      %v2187 = vadd.f32 %v1866, %v2186
      %v2188 = vpop.f32.mrf.mxu0
      %2189 = vmatprep.mubr.bf16.mxu0 0
      %2190 = vmatmul.mubr.bf16.gmra.mxu0 %v420
      %v2191 = vpop.f32.mrf.mxu0
      %v2192 = vadd.f32 %v1871, %v2191
      %v2193 = vpop.f32.mrf.mxu0
      %v2194 = vpop.f32.mrf.mxu0
      %v2195 = vadd.f32 %v1874, %v2194
      %v2196 = vpop.f32.mrf.mxu0
      %2197 = vmatprep.mubr.bf16.mxu0 0
      %2198 = vmatmul.mubr.bf16.gmra.mxu0 %v421
      %v2199 = vpop.f32.mrf.mxu0
      %v2200 = vadd.f32 %v1879, %v2199
      %v2201 = vpop.f32.mrf.mxu0
      %v2202 = vpop.f32.mrf.mxu0
      %v2203 = vadd.f32 %v1882, %v2202
      %v2204 = vpop.f32.mrf.mxu0
      %2205 = vmatprep.mubr.bf16.mxu0 0
      %2206 = vmatmul.mubr.bf16.gmra.mxu0 %v422
      %v2207 = vpop.f32.mrf.mxu0
      %v2208 = vadd.f32 %v1887, %v2207
      %v2209 = vpop.f32.mrf.mxu0
      %v2210 = vpop.f32.mrf.mxu0
      %v2211 = vadd.f32 %v1890, %v2210
      %v2212 = vpop.f32.mrf.mxu0
      %2213 = vmatprep.mubr.bf16.mxu0 0
      %2214 = vmatmul.mubr.bf16.gmra.mxu0 %v423
      %v2215 = vpop.f32.mrf.mxu0
      %v2216 = vadd.f32 %v1895, %v2215
      %v2217 = vpop.f32.mrf.mxu0
      %v2218 = vpop.f32.mrf.mxu0
      %v2219 = vadd.f32 %v1898, %v2218
      %v2220 = vpop.f32.mrf.mxu0
      %2221 = vmatprep.mubr.bf16.mxu0 0
      %2222 = vmatmul.mubr.bf16.gmra.mxu0 %v424
      %v2223 = vpop.f32.mrf.mxu0
      %v2224 = vadd.f32 %v1903, %v2223
      %v2225 = vpop.f32.mrf.mxu0
      %v2226 = vpop.f32.mrf.mxu0
      %v2227 = vadd.f32 %v1906, %v2226
      %v2228 = vpop.f32.mrf.mxu0
      %2229 = vmatprep.mubr.bf16.mxu0 0
      %2230 = vmatmul.mubr.bf16.gmra.mxu0 %v425
      %v2231 = vpop.f32.mrf.mxu0
      %v2232 = vadd.f32 %v1911, %v2231
      %v2233 = vpop.f32.mrf.mxu0
      %v2234 = vpop.f32.mrf.mxu0
      %v2235 = vadd.f32 %v1914, %v2234
      %v2236 = vpop.f32.mrf.mxu0
      %2237 = vmatprep.mubr.bf16.mxu0 0
      %2238 = vmatmul.mubr.bf16.gmra.mxu0 %v426
      %v2239 = vpop.f32.mrf.mxu0
      %v2240 = vadd.f32 %v1919, %v2239
      %v2241 = vpop.f32.mrf.mxu0
      %v2242 = vpop.f32.mrf.mxu0
      %v2243 = vadd.f32 %v1922, %v2242
      %v2244 = vpop.f32.mrf.mxu0
      %2245 = vmatprep.mubr.bf16.mxu0 0
      %2246 = vmatmul.mubr.bf16.gmra.mxu0 %v427
      %v2247 = vpop.f32.mrf.mxu0
      %v2248 = vadd.f32 %v1927, %v2247
      %v2249 = vpop.f32.mrf.mxu0
      %v2250 = vpop.f32.mrf.mxu0
      %v2251 = vadd.f32 %v1930, %v2250
      %v2252 = vpop.f32.mrf.mxu0
      %2253 = vmatprep.mubr.bf16.mxu0 0
      %2254 = vmatmul.mubr.bf16.gmra.mxu0 %v428
      %v2255 = vpop.f32.mrf.mxu0
      %v2256 = vadd.f32 %v1935, %v2255
      %v2257 = vpop.f32.mrf.mxu0
      %v2258 = vpop.f32.mrf.mxu0
      %v2259 = vadd.f32 %v1938, %v2258
      %v2260 = vpop.f32.mrf.mxu0
      %2261 = vmatprep.mubr.bf16.mxu0 0
      %2262 = vmatmul.mubr.bf16.gmra.mxu0 %v429
      %v2263 = vpop.f32.mrf.mxu0
      %v2264 = vadd.f32 %v1943, %v2263
      %v2265 = vpop.f32.mrf.mxu0
      %v2266 = vpop.f32.mrf.mxu0
      %v2267 = vadd.f32 %v1946, %v2266
      %v2268 = vpop.f32.mrf.mxu0
      %2269 = vmatprep.mubr.bf16.mxu0 0
      %2270 = vmatmul.mubr.bf16.gmra.mxu0 %v430
      %v2271 = vpop.f32.mrf.mxu0
      %v2272 = vadd.f32 %v1951, %v2271
      %v2273 = vpop.f32.mrf.mxu0
      %v2274 = vpop.f32.mrf.mxu0
      %v2275 = vadd.f32 %v1954, %v2274
      %v2276 = vpop.f32.mrf.mxu0
      %2277 = vmatprep.mubr.bf16.mxu0 0
      %2278 = vmatmul.mubr.bf16.gmra.mxu0 %v431
      %v2279 = vpop.f32.mrf.mxu0
      %v2280 = vadd.f32 %v1959, %v2279
      %v2281 = vpop.f32.mrf.mxu0
      %v2282 = vpop.f32.mrf.mxu0
      %v2283 = vadd.f32 %v1962, %v2282
      %v2284 = vpop.f32.mrf.mxu0
      %2285 = vmatprep.mubr.bf16.mxu0 0
      %2286 = vmatmul.mubr.bf16.gmra.mxu0 %v432
      %v2287 = vpop.f32.mrf.mxu0
      %v2288 = vadd.f32 %v1967, %v2287
      %v2289 = vpop.f32.mrf.mxu0
      %v2290 = vpop.f32.mrf.mxu0
      %v2291 = vadd.f32 %v1970, %v2290
      %v2292 = vpop.f32.mrf.mxu0
      %2293 = vmatprep.mubr.bf16.mxu0 0
      %2294 = vmatmul.mubr.bf16.gmra.mxu0 %v397
      %v2295 = vpop.f32.mrf.mxu0
      %v2296 = vadd.f32 %v1975, %v2295
      %v2297 = vpop.f32.mrf.mxu0
      %v2298 = vpop.f32.mrf.mxu0
      %v2299 = vadd.f32 %v1978, %v2298
      %v2300 = vpop.f32.mrf.mxu0
      %2301 = vmatprep.mubr.bf16.mxu0 0
      %2302 = vmatmul.mubr.bf16.gmra.mxu0 %v398
      %v2303 = vpop.f32.mrf.mxu0
      %v2304 = vadd.f32 %v1983, %v2303
      %v2305 = vpop.f32.mrf.mxu0
      %v2306 = vpop.f32.mrf.mxu0
      %v2307 = vadd.f32 %v1986, %v2306
      %v2308 = vpop.f32.mrf.mxu0
      %2309 = vmatprep.mubr.bf16.mxu0 0
      %2310 = vmatmul.mubr.bf16.gmra.mxu0 %v399
      %v2311 = vpop.f32.mrf.mxu0
      %v2312 = vadd.f32 %v1991, %v2311
      %v2313 = vpop.f32.mrf.mxu0
      %v2314 = vpop.f32.mrf.mxu0
      %v2315 = vadd.f32 %v1994, %v2314
      %v2316 = vpop.f32.mrf.mxu0
      %2317 = vdwg.mxu0
      %s2318 = scalar_lea.vmem %s239, 384
      %v2319 = vld [vmem:[%s2318] sm:$0xf]
      %v2320 = vld [vmem:[%s2318 + $0x4] sm:$0xf]
      %v2321 = vld [vmem:[%s2318 + $0x8] sm:$0xf]
      %v2322 = vld [vmem:[%s2318 + $0xc] sm:$0xf]
      %v2323 = vld [vmem:[%s2318 + $0x10] sm:$0xf]
      %v2324 = vld [vmem:[%s2318 + $0x14] sm:$0xf]
      %v2325 = vld [vmem:[%s2318 + $0x18] sm:$0xf]
      %v2326 = vld [vmem:[%s2318 + $0x1c] sm:$0xf]
      %v2327 = vld [vmem:[%s2318 + $0x20] sm:$0xf]
      %v2328 = vld [vmem:[%s2318 + $0x24] sm:$0xf]
      %v2329 = vld [vmem:[%s2318 + $0x28] sm:$0xf]
      %v2330 = vld [vmem:[%s2318 + $0x2c] sm:$0xf]
      %v2331 = vld [vmem:[%s2318 + $0x30] sm:$0xf]
      %v2332 = vld [vmem:[%s2318 + $0x34] sm:$0xf]
      %v2333 = vld [vmem:[%s2318 + $0x38] sm:$0xf]
      %v2334 = vld [vmem:[%s2318 + $0x3c] sm:$0xf]
      %v2335 = vld [vmem:[%s2318 + $0x40] sm:$0xf]
      %v2336 = vld [vmem:[%s2318 + $0x44] sm:$0xf]
      %v2337 = vld [vmem:[%s2318 + $0x48] sm:$0xf]
      %v2338 = vld [vmem:[%s2318 + $0x4c] sm:$0xf]
      %v2339 = vld [vmem:[%s2318 + $0x50] sm:$0xf]
      %v2340 = vld [vmem:[%s2318 + $0x54] sm:$0xf]
      %v2341 = vld [vmem:[%s2318 + $0x58] sm:$0xf]
      %v2342 = vld [vmem:[%s2318 + $0x5c] sm:$0xf]
      %v2343 = vld [vmem:[%s2318 + $0x60] sm:$0xf]
      %v2344 = vld [vmem:[%s2318 + $0x64] sm:$0xf]
      %v2345 = vld [vmem:[%s2318 + $0x68] sm:$0xf]
      %v2346 = vld [vmem:[%s2318 + $0x6c] sm:$0xf]
      %v2347 = vld [vmem:[%s2318 + $0x70] sm:$0xf]
      %v2348 = vld [vmem:[%s2318 + $0x74] sm:$0xf]
      %v2349 = vld [vmem:[%s2318 + $0x78] sm:$0xf]
      %v2350 = vld [vmem:[%s2318 + $0x7c] sm:$0xf]
      %v2351 = vld [vmem:[%s2318 + $0x80] sm:$0xf]
      %v2352 = vld [vmem:[%s2318 + $0x84] sm:$0xf]
      %v2353 = vld [vmem:[%s2318 + $0x88] sm:$0xf]
      %v2354 = vld [vmem:[%s2318 + $0x8c] sm:$0xf]
      %v2355 = vld [vmem:[%s2318 + $0x90] sm:$0xf]
      %v2356 = vld [vmem:[%s2318 + $0x94] sm:$0xf]
      %v2357 = vld [vmem:[%s2318 + $0x98] sm:$0xf]
      %v2358 = vld [vmem:[%s2318 + $0x9c] sm:$0xf]
      %v2359 = vld [vmem:[%s2318 + $0xa0] sm:$0xf]
      %v2360 = vld [vmem:[%s2318 + $0xa4] sm:$0xf]
      %v2361 = vld [vmem:[%s2318 + $0xa8] sm:$0xf]
      %v2362 = vld [vmem:[%s2318 + $0xac] sm:$0xf]
      %v2363 = vld [vmem:[%s2318 + $0xb0] sm:$0xf]
      %v2364 = vld [vmem:[%s2318 + $0xb4] sm:$0xf]
      %v2365 = vld [vmem:[%s2318 + $0xb8] sm:$0xf]
      %v2366 = vld [vmem:[%s2318 + $0xbc] sm:$0xf]
      %v2415 = vunpack.c.l.b16 %v2319
      %v2416 = vunpack.c.l.b16 %v2320
      %v2417 = vunpack.c.l.b16 %v2321
      %v2418 = vunpack.c.l.b16 %v2322
      %v2419 = vunpack.c.l.b16 %v2323
      %v2420 = vunpack.c.l.b16 %v2324
      %v2421 = vunpack.c.l.b16 %v2325
      %v2422 = vunpack.c.l.b16 %v2326
      %v2423 = vunpack.c.l.b16 %v2327
      %v2424 = vunpack.c.l.b16 %v2328
      %v2425 = vunpack.c.l.b16 %v2329
      %v2426 = vunpack.c.l.b16 %v2330
      %v2427 = vunpack.c.l.b16 %v2331
      %v2428 = vunpack.c.l.b16 %v2332
      %v2429 = vunpack.c.l.b16 %v2333
      %v2430 = vunpack.c.l.b16 %v2334
      %v2431 = vunpack.c.l.b16 %v2335
      %v2432 = vunpack.c.l.b16 %v2336
      %v2433 = vunpack.c.l.b16 %v2337
      %v2434 = vunpack.c.l.b16 %v2338
      %v2435 = vunpack.c.l.b16 %v2339
      %v2436 = vunpack.c.l.b16 %v2340
      %v2437 = vunpack.c.l.b16 %v2341
      %v2438 = vunpack.c.l.b16 %v2342
      %v2439 = vunpack.c.l.b16 %v2343
      %v2440 = vunpack.c.l.b16 %v2344
      %v2441 = vunpack.c.l.b16 %v2345
      %v2442 = vunpack.c.l.b16 %v2346
      %v2443 = vunpack.c.l.b16 %v2347
      %v2444 = vunpack.c.l.b16 %v2348
      %v2445 = vunpack.c.l.b16 %v2349
      %v2446 = vunpack.c.l.b16 %v2350
      %v2447 = vunpack.c.l.b16 %v2351
      %v2448 = vunpack.c.l.b16 %v2352
      %v2449 = vunpack.c.l.b16 %v2353
      %v2450 = vunpack.c.l.b16 %v2354
      %v2451 = vunpack.c.l.b16 %v2355
      %v2452 = vunpack.c.l.b16 %v2356
      %v2453 = vunpack.c.l.b16 %v2357
      %v2454 = vunpack.c.l.b16 %v2358
      %v2455 = vunpack.c.l.b16 %v2359
      %v2456 = vunpack.c.l.b16 %v2360
      %v2457 = vunpack.c.l.b16 %v2361
      %v2458 = vunpack.c.l.b16 %v2362
      %v2459 = vunpack.c.l.b16 %v2363
      %v2460 = vunpack.c.l.b16 %v2364
      %v2461 = vunpack.c.l.b16 %v2365
      %v2462 = vunpack.c.l.b16 %v2366
      %v2463 = vpack.c.b16 %v2416, %v2415
      %v2464 = vpack.c.b16 %v2418, %v2417
      %v2465 = vpack.c.b16 %v2420, %v2419
      %v2466 = vpack.c.b16 %v2422, %v2421
      %v2467 = vpack.c.b16 %v2424, %v2423
      %v2468 = vpack.c.b16 %v2426, %v2425
      %v2469 = vpack.c.b16 %v2428, %v2427
      %v2470 = vpack.c.b16 %v2430, %v2429
      %v2471 = vpack.c.b16 %v2432, %v2431
      %v2472 = vpack.c.b16 %v2434, %v2433
      %v2473 = vpack.c.b16 %v2436, %v2435
      %v2474 = vpack.c.b16 %v2438, %v2437
      %v2475 = vpack.c.b16 %v2440, %v2439
      %v2476 = vpack.c.b16 %v2442, %v2441
      %v2477 = vpack.c.b16 %v2444, %v2443
      %v2478 = vpack.c.b16 %v2446, %v2445
      %v2479 = vpack.c.b16 %v2448, %v2447
      %v2480 = vpack.c.b16 %v2450, %v2449
      %v2481 = vpack.c.b16 %v2452, %v2451
      %v2482 = vpack.c.b16 %v2454, %v2453
      %v2483 = vpack.c.b16 %v2456, %v2455
      %v2484 = vpack.c.b16 %v2458, %v2457
      %v2485 = vpack.c.b16 %v2460, %v2459
      %v2486 = vpack.c.b16 %v2462, %v2461
      %2511 = vmatprep.subr.bf16.mxu0 0
      %2512 = vmatpush1.bf16.msra.mxu0 %v2470
      %2513 = vmatprep.subr.bf16.mxu0 0
      %2514 = vmatpush1.bf16.msra.mxu0 %v2469
      %2515 = vmatprep.subr.bf16.mxu0 0
      %2516 = vmatpush1.bf16.msra.mxu0 %v2468
      %2517 = vmatprep.subr.bf16.mxu0 0
      %2518 = vmatpush1.bf16.msra.mxu0 %v2467
      %2519 = vmatprep.subr.bf16.mxu0 0
      %2520 = vmatpush1.bf16.msra.mxu0 %v2466
      %2521 = vmatprep.subr.bf16.mxu0 0
      %2522 = vmatpush1.bf16.msra.mxu0 %v2465
      %2523 = vmatprep.subr.bf16.mxu0 0
      %2524 = vmatpush1.bf16.msra.mxu0 %v2464
      %2525 = vmatprep.subr.bf16.mxu0 0
      %2526 = vmatpush1.bf16.msra.mxu0 %v2463
      %2527 = vmatprep.subr.bf16.mxu0 0
      %2528 = vmatpush2.bf16.msra.mxu0 %v2478
      %2529 = vmatprep.subr.bf16.mxu0 0
      %2530 = vmatpush2.bf16.msra.mxu0 %v2477
      %2531 = vmatprep.subr.bf16.mxu0 0
      %2532 = vmatpush2.bf16.msra.mxu0 %v2476
      %2533 = vmatprep.subr.bf16.mxu0 0
      %2534 = vmatpush2.bf16.msra.mxu0 %v2475
      %2535 = vmatprep.subr.bf16.mxu0 0
      %2536 = vmatpush2.bf16.msra.mxu0 %v2474
      %2537 = vmatprep.subr.bf16.mxu0 0
      %2538 = vmatpush2.bf16.msra.mxu0 %v2473
      %2539 = vmatprep.subr.bf16.mxu0 0
      %2540 = vmatpush2.bf16.msra.mxu0 %v2472
      %2541 = vmatprep.subr.bf16.mxu0 0
      %2542 = vmatpush2.bf16.msra.mxu0 %v2471
      %2543 = vmatprep.mubr.bf16.mxu0 %v577
      %2544 = vmatmul.mubr.bf16.gmra.mxu0 %v397
      %v2545 = vpop.f32.mrf.mxu0
      %v2546 = vadd.f32 0.0, %v2545
      %v2547 = vpop.f32.mrf.mxu0
      %v2548 = vpop.f32.mrf.mxu0
      %v2549 = vadd.f32 0.0, %v2548
      %v2550 = vpop.f32.mrf.mxu0
      %2551 = vmatprep.mubr.bf16.mxu0 %v578
      %2552 = vmatmul.mubr.bf16.gmra.mxu0 %v398
      %v2553 = vpop.f32.mrf.mxu0
      %v2554 = vadd.f32 0.0, %v2553
      %v2555 = vpop.f32.mrf.mxu0
      %v2556 = vpop.f32.mrf.mxu0
      %v2557 = vadd.f32 0.0, %v2556
      %v2558 = vpop.f32.mrf.mxu0
      %2559 = vmatprep.mubr.bf16.mxu0 %v579
      %2560 = vmatmul.mubr.bf16.gmra.mxu0 %v399
      %v2561 = vpop.f32.mrf.mxu0
      %v2562 = vadd.f32 0.0, %v2561
      %v2563 = vpop.f32.mrf.mxu0
      %v2564 = vpop.f32.mrf.mxu0
      %v2565 = vadd.f32 0.0, %v2564
      %v2566 = vpop.f32.mrf.mxu0
      %2567 = vmatprep.mubr.bf16.mxu0 %v580
      %2568 = vmatmul.mubr.bf16.gmra.mxu0 %v400
      %v2569 = vpop.f32.mrf.mxu0
      %v2570 = vadd.f32 0.0, %v2569
      %v2571 = vpop.f32.mrf.mxu0
      %v2572 = vpop.f32.mrf.mxu0
      %v2573 = vadd.f32 0.0, %v2572
      %v2574 = vpop.f32.mrf.mxu0
      %2575 = vmatprep.mubr.bf16.mxu0 %v581
      %2576 = vmatmul.mubr.bf16.gmra.mxu0 %v401
      %v2577 = vpop.f32.mrf.mxu0
      %v2578 = vadd.f32 0.0, %v2577
      %v2579 = vpop.f32.mrf.mxu0
      %v2580 = vpop.f32.mrf.mxu0
      %v2581 = vadd.f32 0.0, %v2580
      %v2582 = vpop.f32.mrf.mxu0
      %2583 = vmatprep.mubr.bf16.mxu0 %v582
      %2584 = vmatmul.mubr.bf16.gmra.mxu0 %v402
      %v2585 = vpop.f32.mrf.mxu0
      %v2586 = vadd.f32 0.0, %v2585
      %v2587 = vpop.f32.mrf.mxu0
      %v2588 = vpop.f32.mrf.mxu0
      %v2589 = vadd.f32 0.0, %v2588
      %v2590 = vpop.f32.mrf.mxu0
      %2591 = vmatprep.mubr.bf16.mxu0 %v583
      %2592 = vmatmul.mubr.bf16.gmra.mxu0 %v403
      %v2593 = vpop.f32.mrf.mxu0
      %v2594 = vadd.f32 0.0, %v2593
      %v2595 = vpop.f32.mrf.mxu0
      %v2596 = vpop.f32.mrf.mxu0
      %v2597 = vadd.f32 0.0, %v2596
      %v2598 = vpop.f32.mrf.mxu0
      %2599 = vmatprep.mubr.bf16.mxu0 %v584
      %2600 = vmatmul.mubr.bf16.gmra.mxu0 %v404
      %v2601 = vpop.f32.mrf.mxu0
      %v2602 = vadd.f32 0.0, %v2601
      %v2603 = vpop.f32.mrf.mxu0
      %v2604 = vpop.f32.mrf.mxu0
      %v2605 = vadd.f32 0.0, %v2604
      %v2606 = vpop.f32.mrf.mxu0
      %2607 = vmatprep.mubr.bf16.mxu0 %v585
      %2608 = vmatmul.mubr.bf16.gmra.mxu0 %v405
      %v2609 = vpop.f32.mrf.mxu0
      %v2610 = vadd.f32 0.0, %v2609
      %v2611 = vpop.f32.mrf.mxu0
      %v2612 = vpop.f32.mrf.mxu0
      %v2613 = vadd.f32 0.0, %v2612
      %v2614 = vpop.f32.mrf.mxu0
      %2615 = vmatprep.mubr.bf16.mxu0 %v586
      %2616 = vmatmul.mubr.bf16.gmra.mxu0 %v406
      %v2617 = vpop.f32.mrf.mxu0
      %v2618 = vadd.f32 0.0, %v2617
      %v2619 = vpop.f32.mrf.mxu0
      %v2620 = vpop.f32.mrf.mxu0
      %v2621 = vadd.f32 0.0, %v2620
      %v2622 = vpop.f32.mrf.mxu0
      %2623 = vmatprep.mubr.bf16.mxu0 %v587
      %2624 = vmatmul.mubr.bf16.gmra.mxu0 %v407
      %v2625 = vpop.f32.mrf.mxu0
      %v2626 = vadd.f32 0.0, %v2625
      %v2627 = vpop.f32.mrf.mxu0
      %v2628 = vpop.f32.mrf.mxu0
      %v2629 = vadd.f32 0.0, %v2628
      %v2630 = vpop.f32.mrf.mxu0
      %2631 = vmatprep.mubr.bf16.mxu0 %v588
      %2632 = vmatmul.mubr.bf16.gmra.mxu0 %v408
      %v2633 = vpop.f32.mrf.mxu0
      %v2634 = vadd.f32 0.0, %v2633
      %v2635 = vpop.f32.mrf.mxu0
      %v2636 = vpop.f32.mrf.mxu0
      %v2637 = vadd.f32 0.0, %v2636
      %v2638 = vpop.f32.mrf.mxu0
      %2639 = vmatprep.mubr.bf16.mxu0 %v589
      %2640 = vmatmul.mubr.bf16.gmra.mxu0 %v409
      %v2641 = vpop.f32.mrf.mxu0
      %v2642 = vadd.f32 0.0, %v2641
      %v2643 = vpop.f32.mrf.mxu0
      %v2644 = vpop.f32.mrf.mxu0
      %v2645 = vadd.f32 0.0, %v2644
      %v2646 = vpop.f32.mrf.mxu0
      %2647 = vmatprep.mubr.bf16.mxu0 %v590
      %2648 = vmatmul.mubr.bf16.gmra.mxu0 %v410
      %v2649 = vpop.f32.mrf.mxu0
      %v2650 = vadd.f32 0.0, %v2649
      %v2651 = vpop.f32.mrf.mxu0
      %v2652 = vpop.f32.mrf.mxu0
      %v2653 = vadd.f32 0.0, %v2652
      %v2654 = vpop.f32.mrf.mxu0
      %2655 = vmatprep.mubr.bf16.mxu0 %v591
      %2656 = vmatmul.mubr.bf16.gmra.mxu0 %v411
      %v2657 = vpop.f32.mrf.mxu0
      %v2658 = vadd.f32 0.0, %v2657
      %v2659 = vpop.f32.mrf.mxu0
      %v2660 = vpop.f32.mrf.mxu0
      %v2661 = vadd.f32 0.0, %v2660
      %v2662 = vpop.f32.mrf.mxu0
      %2663 = vmatprep.mubr.bf16.mxu0 %v592
      %2664 = vmatmul.mubr.bf16.gmra.mxu0 %v412
      %v2665 = vpop.f32.mrf.mxu0
      %v2666 = vadd.f32 0.0, %v2665
      %v2667 = vpop.f32.mrf.mxu0
      %v2668 = vpop.f32.mrf.mxu0
      %v2669 = vadd.f32 0.0, %v2668
      %v2670 = vpop.f32.mrf.mxu0
      %2671 = vmatprep.mubr.bf16.mxu0 %v593
      %2672 = vmatmul.mubr.bf16.gmra.mxu0 %v413
      %v2673 = vpop.f32.mrf.mxu0
      %v2674 = vadd.f32 0.0, %v2673
      %v2675 = vpop.f32.mrf.mxu0
      %v2676 = vpop.f32.mrf.mxu0
      %v2677 = vadd.f32 0.0, %v2676
      %v2678 = vpop.f32.mrf.mxu0
      %2679 = vmatprep.mubr.bf16.mxu0 %v594
      %2680 = vmatmul.mubr.bf16.gmra.mxu0 %v414
      %v2681 = vpop.f32.mrf.mxu0
      %v2682 = vadd.f32 0.0, %v2681
      %v2683 = vpop.f32.mrf.mxu0
      %v2684 = vpop.f32.mrf.mxu0
      %v2685 = vadd.f32 0.0, %v2684
      %v2686 = vpop.f32.mrf.mxu0
      %2687 = vmatprep.mubr.bf16.mxu0 %v595
      %2688 = vmatmul.mubr.bf16.gmra.mxu0 %v415
      %v2689 = vpop.f32.mrf.mxu0
      %v2690 = vadd.f32 0.0, %v2689
      %v2691 = vpop.f32.mrf.mxu0
      %v2692 = vpop.f32.mrf.mxu0
      %v2693 = vadd.f32 0.0, %v2692
      %v2694 = vpop.f32.mrf.mxu0
      %2695 = vmatprep.mubr.bf16.mxu0 %v596
      %2696 = vmatmul.mubr.bf16.gmra.mxu0 %v416
      %v2697 = vpop.f32.mrf.mxu0
      %v2698 = vadd.f32 0.0, %v2697
      %v2699 = vpop.f32.mrf.mxu0
      %v2700 = vpop.f32.mrf.mxu0
      %v2701 = vadd.f32 0.0, %v2700
      %v2702 = vpop.f32.mrf.mxu0
      %2703 = vmatprep.mubr.bf16.mxu0 %v597
      %2704 = vmatmul.mubr.bf16.gmra.mxu0 %v417
      %v2705 = vpop.f32.mrf.mxu0
      %v2706 = vadd.f32 0.0, %v2705
      %v2707 = vpop.f32.mrf.mxu0
      %v2708 = vpop.f32.mrf.mxu0
      %v2709 = vadd.f32 0.0, %v2708
      %v2710 = vpop.f32.mrf.mxu0
      %2711 = vmatprep.mubr.bf16.mxu0 %v598
      %2712 = vmatmul.mubr.bf16.gmra.mxu0 %v418
      %v2713 = vpop.f32.mrf.mxu0
      %v2714 = vadd.f32 0.0, %v2713
      %v2715 = vpop.f32.mrf.mxu0
      %v2716 = vpop.f32.mrf.mxu0
      %v2717 = vadd.f32 0.0, %v2716
      %v2718 = vpop.f32.mrf.mxu0
      %2719 = vmatprep.mubr.bf16.mxu0 %v599
      %2720 = vmatmul.mubr.bf16.gmra.mxu0 %v419
      %v2721 = vpop.f32.mrf.mxu0
      %v2722 = vadd.f32 0.0, %v2721
      %v2723 = vpop.f32.mrf.mxu0
      %v2724 = vpop.f32.mrf.mxu0
      %v2725 = vadd.f32 0.0, %v2724
      %v2726 = vpop.f32.mrf.mxu0
      %2727 = vmatprep.mubr.bf16.mxu0 %v600
      %2728 = vmatmul.mubr.bf16.gmra.mxu0 %v420
      %v2729 = vpop.f32.mrf.mxu0
      %v2730 = vadd.f32 0.0, %v2729
      %v2731 = vpop.f32.mrf.mxu0
      %v2732 = vpop.f32.mrf.mxu0
      %v2733 = vadd.f32 0.0, %v2732
      %v2734 = vpop.f32.mrf.mxu0
      %2735 = vmatprep.mubr.bf16.mxu0 %v601
      %2736 = vmatmul.mubr.bf16.gmra.mxu0 %v421
      %v2737 = vpop.f32.mrf.mxu0
      %v2738 = vadd.f32 0.0, %v2737
      %v2739 = vpop.f32.mrf.mxu0
      %v2740 = vpop.f32.mrf.mxu0
      %v2741 = vadd.f32 0.0, %v2740
      %v2742 = vpop.f32.mrf.mxu0
      %2743 = vmatprep.mubr.bf16.mxu0 %v602
      %2744 = vmatmul.mubr.bf16.gmra.mxu0 %v422
      %v2745 = vpop.f32.mrf.mxu0
      %v2746 = vadd.f32 0.0, %v2745
      %v2747 = vpop.f32.mrf.mxu0
      %v2748 = vpop.f32.mrf.mxu0
      %v2749 = vadd.f32 0.0, %v2748
      %v2750 = vpop.f32.mrf.mxu0
      %2751 = vmatprep.mubr.bf16.mxu0 %v603
      %2752 = vmatmul.mubr.bf16.gmra.mxu0 %v423
      %v2753 = vpop.f32.mrf.mxu0
      %v2754 = vadd.f32 0.0, %v2753
      %v2755 = vpop.f32.mrf.mxu0
      %v2756 = vpop.f32.mrf.mxu0
      %v2757 = vadd.f32 0.0, %v2756
      %v2758 = vpop.f32.mrf.mxu0
      %2759 = vmatprep.mubr.bf16.mxu0 %v604
      %2760 = vmatmul.mubr.bf16.gmra.mxu0 %v424
      %v2761 = vpop.f32.mrf.mxu0
      %v2762 = vadd.f32 0.0, %v2761
      %v2763 = vpop.f32.mrf.mxu0
      %v2764 = vpop.f32.mrf.mxu0
      %v2765 = vadd.f32 0.0, %v2764
      %v2766 = vpop.f32.mrf.mxu0
      %2767 = vmatprep.mubr.bf16.mxu0 %v605
      %2768 = vmatmul.mubr.bf16.gmra.mxu0 %v425
      %v2769 = vpop.f32.mrf.mxu0
      %v2770 = vadd.f32 0.0, %v2769
      %v2771 = vpop.f32.mrf.mxu0
      %v2772 = vpop.f32.mrf.mxu0
      %v2773 = vadd.f32 0.0, %v2772
      %v2774 = vpop.f32.mrf.mxu0
      %2775 = vmatprep.mubr.bf16.mxu0 %v606
      %2776 = vmatmul.mubr.bf16.gmra.mxu0 %v426
      %v2777 = vpop.f32.mrf.mxu0
      %v2778 = vadd.f32 0.0, %v2777
      %v2779 = vpop.f32.mrf.mxu0
      %v2780 = vpop.f32.mrf.mxu0
      %v2781 = vadd.f32 0.0, %v2780
      %v2782 = vpop.f32.mrf.mxu0
      %2783 = vmatprep.mubr.bf16.mxu0 %v607
      %2784 = vmatmul.mubr.bf16.gmra.mxu0 %v427
      %v2785 = vpop.f32.mrf.mxu0
      %v2786 = vadd.f32 0.0, %v2785
      %v2787 = vpop.f32.mrf.mxu0
      %v2788 = vpop.f32.mrf.mxu0
      %v2789 = vadd.f32 0.0, %v2788
      %v2790 = vpop.f32.mrf.mxu0
      %2791 = vmatprep.mubr.bf16.mxu0 %v608
      %2792 = vmatmul.mubr.bf16.gmra.mxu0 %v428
      %v2793 = vpop.f32.mrf.mxu0
      %v2794 = vadd.f32 0.0, %v2793
      %v2795 = vpop.f32.mrf.mxu0
      %v2796 = vpop.f32.mrf.mxu0
      %v2797 = vadd.f32 0.0, %v2796
      %v2798 = vpop.f32.mrf.mxu0
      %2799 = vmatprep.mubr.bf16.mxu0 %v609
      %2800 = vmatmul.mubr.bf16.gmra.mxu0 %v429
      %v2801 = vpop.f32.mrf.mxu0
      %v2802 = vadd.f32 0.0, %v2801
      %v2803 = vpop.f32.mrf.mxu0
      %v2804 = vpop.f32.mrf.mxu0
      %v2805 = vadd.f32 0.0, %v2804
      %v2806 = vpop.f32.mrf.mxu0
      %2807 = vmatprep.mubr.bf16.mxu0 %v610
      %2808 = vmatmul.mubr.bf16.gmra.mxu0 %v430
      %v2809 = vpop.f32.mrf.mxu0
      %v2810 = vadd.f32 0.0, %v2809
      %v2811 = vpop.f32.mrf.mxu0
      %v2812 = vpop.f32.mrf.mxu0
      %v2813 = vadd.f32 0.0, %v2812
      %v2814 = vpop.f32.mrf.mxu0
      %2815 = vmatprep.mubr.bf16.mxu0 %v611
      %2816 = vmatmul.mubr.bf16.gmra.mxu0 %v431
      %v2817 = vpop.f32.mrf.mxu0
      %v2818 = vadd.f32 0.0, %v2817
      %v2819 = vpop.f32.mrf.mxu0
      %v2820 = vpop.f32.mrf.mxu0
      %v2821 = vadd.f32 0.0, %v2820
      %v2822 = vpop.f32.mrf.mxu0
      %2823 = vmatprep.mubr.bf16.mxu0 %v612
      %2824 = vmatmul.mubr.bf16.gmra.mxu0 %v432
      %v2825 = vpop.f32.mrf.mxu0
      %v2826 = vadd.f32 0.0, %v2825
      %v2827 = vpop.f32.mrf.mxu0
      %v2828 = vpop.f32.mrf.mxu0
      %v2829 = vadd.f32 0.0, %v2828
      %v2830 = vpop.f32.mrf.mxu0
      %2831 = vdwg.mxu0
      %2832 = vmatprep.subr.bf16.mxu0 0
      %2833 = vmatpush1.bf16.msra.mxu0 %v2486
      %2834 = vmatprep.subr.bf16.mxu0 0
      %2835 = vmatpush1.bf16.msra.mxu0 %v2485
      %2836 = vmatprep.subr.bf16.mxu0 0
      %2837 = vmatpush1.bf16.msra.mxu0 %v2484
      %2838 = vmatprep.subr.bf16.mxu0 0
      %2839 = vmatpush1.bf16.msra.mxu0 %v2483
      %2840 = vmatprep.subr.bf16.mxu0 0
      %2841 = vmatpush1.bf16.msra.mxu0 %v2482
      %2842 = vmatprep.subr.bf16.mxu0 0
      %2843 = vmatpush1.bf16.msra.mxu0 %v2481
      %2844 = vmatprep.subr.bf16.mxu0 0
      %2845 = vmatpush1.bf16.msra.mxu0 %v2480
      %2846 = vmatprep.subr.bf16.mxu0 0
      %2847 = vmatpush1.bf16.msra.mxu0 %v2479
      %2848 = vmatprep.subr.bf16.mxu0 0
      %2849 = vmatpush2.bf16.msra.mxu0 0
      %2850 = vmatprep.subr.bf16.mxu0 0
      %2851 = vmatpush2.bf16.msra.mxu0 0
      %2852 = vmatprep.subr.bf16.mxu0 0
      %2853 = vmatpush2.bf16.msra.mxu0 0
      %2854 = vmatprep.subr.bf16.mxu0 0
      %2855 = vmatpush2.bf16.msra.mxu0 0
      %2856 = vmatprep.subr.bf16.mxu0 0
      %2857 = vmatpush2.bf16.msra.mxu0 0
      %2858 = vmatprep.subr.bf16.mxu0 0
      %2859 = vmatpush2.bf16.msra.mxu0 0
      %2860 = vmatprep.subr.bf16.mxu0 0
      %2861 = vmatpush2.bf16.msra.mxu0 0
      %2862 = vmatprep.subr.bf16.mxu0 0
      %2863 = vmatpush2.bf16.msra.mxu0 0
      %2864 = vmatprep.mubr.bf16.mxu0 0
      %2865 = vmatmul.mubr.bf16.gmra.mxu0 %v400
      %v2866 = vpop.f32.mrf.mxu0
      %v2867 = vadd.f32 %v2546, %v2866
      %v2868 = vpop.f32.mrf.mxu0
      %v2869 = vpop.f32.mrf.mxu0
      %v2870 = vadd.f32 %v2549, %v2869
      %v2871 = vpop.f32.mrf.mxu0
      %2872 = vmatprep.mubr.bf16.mxu0 0
      %2873 = vmatmul.mubr.bf16.gmra.mxu0 %v401
      %v2874 = vpop.f32.mrf.mxu0
      %v2875 = vadd.f32 %v2554, %v2874
      %v2876 = vpop.f32.mrf.mxu0
      %v2877 = vpop.f32.mrf.mxu0
      %v2878 = vadd.f32 %v2557, %v2877
      %v2879 = vpop.f32.mrf.mxu0
      %2880 = vmatprep.mubr.bf16.mxu0 0
      %2881 = vmatmul.mubr.bf16.gmra.mxu0 %v402
      %v2882 = vpop.f32.mrf.mxu0
      %v2883 = vadd.f32 %v2562, %v2882
      %v2884 = vpop.f32.mrf.mxu0
      %v2885 = vpop.f32.mrf.mxu0
      %v2886 = vadd.f32 %v2565, %v2885
      %v2887 = vpop.f32.mrf.mxu0
      %2888 = vmatprep.mubr.bf16.mxu0 0
      %2889 = vmatmul.mubr.bf16.gmra.mxu0 %v403
      %v2890 = vpop.f32.mrf.mxu0
      %v2891 = vadd.f32 %v2570, %v2890
      %v2892 = vpop.f32.mrf.mxu0
      %v2893 = vpop.f32.mrf.mxu0
      %v2894 = vadd.f32 %v2573, %v2893
      %v2895 = vpop.f32.mrf.mxu0
      %2896 = vmatprep.mubr.bf16.mxu0 0
      %2897 = vmatmul.mubr.bf16.gmra.mxu0 %v404
      %v2898 = vpop.f32.mrf.mxu0
      %v2899 = vadd.f32 %v2578, %v2898
      %v2900 = vpop.f32.mrf.mxu0
      %v2901 = vpop.f32.mrf.mxu0
      %v2902 = vadd.f32 %v2581, %v2901
      %v2903 = vpop.f32.mrf.mxu0
      %2904 = vmatprep.mubr.bf16.mxu0 0
      %2905 = vmatmul.mubr.bf16.gmra.mxu0 %v405
      %v2906 = vpop.f32.mrf.mxu0
      %v2907 = vadd.f32 %v2586, %v2906
      %v2908 = vpop.f32.mrf.mxu0
      %v2909 = vpop.f32.mrf.mxu0
      %v2910 = vadd.f32 %v2589, %v2909
      %v2911 = vpop.f32.mrf.mxu0
      %2912 = vmatprep.mubr.bf16.mxu0 0
      %2913 = vmatmul.mubr.bf16.gmra.mxu0 %v406
      %v2914 = vpop.f32.mrf.mxu0
      %v2915 = vadd.f32 %v2594, %v2914
      %v2916 = vpop.f32.mrf.mxu0
      %v2917 = vpop.f32.mrf.mxu0
      %v2918 = vadd.f32 %v2597, %v2917
      %v2919 = vpop.f32.mrf.mxu0
      %2920 = vmatprep.mubr.bf16.mxu0 0
      %2921 = vmatmul.mubr.bf16.gmra.mxu0 %v407
      %v2922 = vpop.f32.mrf.mxu0
      %v2923 = vadd.f32 %v2602, %v2922
      %v2924 = vpop.f32.mrf.mxu0
      %v2925 = vpop.f32.mrf.mxu0
      %v2926 = vadd.f32 %v2605, %v2925
      %v2927 = vpop.f32.mrf.mxu0
      %2928 = vmatprep.mubr.bf16.mxu0 0
      %2929 = vmatmul.mubr.bf16.gmra.mxu0 %v408
      %v2930 = vpop.f32.mrf.mxu0
      %v2931 = vadd.f32 %v2610, %v2930
      %v2932 = vpop.f32.mrf.mxu0
      %v2933 = vpop.f32.mrf.mxu0
      %v2934 = vadd.f32 %v2613, %v2933
      %v2935 = vpop.f32.mrf.mxu0
      %2936 = vmatprep.mubr.bf16.mxu0 0
      %2937 = vmatmul.mubr.bf16.gmra.mxu0 %v409
      %v2938 = vpop.f32.mrf.mxu0
      %v2939 = vadd.f32 %v2618, %v2938
      %v2940 = vpop.f32.mrf.mxu0
      %v2941 = vpop.f32.mrf.mxu0
      %v2942 = vadd.f32 %v2621, %v2941
      %v2943 = vpop.f32.mrf.mxu0
      %2944 = vmatprep.mubr.bf16.mxu0 0
      %2945 = vmatmul.mubr.bf16.gmra.mxu0 %v410
      %v2946 = vpop.f32.mrf.mxu0
      %v2947 = vadd.f32 %v2626, %v2946
      %v2948 = vpop.f32.mrf.mxu0
      %v2949 = vpop.f32.mrf.mxu0
      %v2950 = vadd.f32 %v2629, %v2949
      %v2951 = vpop.f32.mrf.mxu0
      %2952 = vmatprep.mubr.bf16.mxu0 0
      %2953 = vmatmul.mubr.bf16.gmra.mxu0 %v411
      %v2954 = vpop.f32.mrf.mxu0
      %v2955 = vadd.f32 %v2634, %v2954
      %v2956 = vpop.f32.mrf.mxu0
      %v2957 = vpop.f32.mrf.mxu0
      %v2958 = vadd.f32 %v2637, %v2957
      %v2959 = vpop.f32.mrf.mxu0
      %2960 = vmatprep.mubr.bf16.mxu0 0
      %2961 = vmatmul.mubr.bf16.gmra.mxu0 %v412
      %v2962 = vpop.f32.mrf.mxu0
      %v2963 = vadd.f32 %v2642, %v2962
      %v2964 = vpop.f32.mrf.mxu0
      %v2965 = vpop.f32.mrf.mxu0
      %v2966 = vadd.f32 %v2645, %v2965
      %v2967 = vpop.f32.mrf.mxu0
      %2968 = vmatprep.mubr.bf16.mxu0 0
      %2969 = vmatmul.mubr.bf16.gmra.mxu0 %v413
      %v2970 = vpop.f32.mrf.mxu0
      %v2971 = vadd.f32 %v2650, %v2970
      %v2972 = vpop.f32.mrf.mxu0
      %v2973 = vpop.f32.mrf.mxu0
      %v2974 = vadd.f32 %v2653, %v2973
      %v2975 = vpop.f32.mrf.mxu0
      %2976 = vmatprep.mubr.bf16.mxu0 0
      %2977 = vmatmul.mubr.bf16.gmra.mxu0 %v414
      %v2978 = vpop.f32.mrf.mxu0
      %v2979 = vadd.f32 %v2658, %v2978
      %v2980 = vpop.f32.mrf.mxu0
      %v2981 = vpop.f32.mrf.mxu0
      %v2982 = vadd.f32 %v2661, %v2981
      %v2983 = vpop.f32.mrf.mxu0
      %2984 = vmatprep.mubr.bf16.mxu0 0
      %2985 = vmatmul.mubr.bf16.gmra.mxu0 %v415
      %v2986 = vpop.f32.mrf.mxu0
      %v2987 = vadd.f32 %v2666, %v2986
      %v2988 = vpop.f32.mrf.mxu0
      %v2989 = vpop.f32.mrf.mxu0
      %v2990 = vadd.f32 %v2669, %v2989
      %v2991 = vpop.f32.mrf.mxu0
      %2992 = vmatprep.mubr.bf16.mxu0 0
      %2993 = vmatmul.mubr.bf16.gmra.mxu0 %v416
      %v2994 = vpop.f32.mrf.mxu0
      %v2995 = vadd.f32 %v2674, %v2994
      %v2996 = vpop.f32.mrf.mxu0
      %v2997 = vpop.f32.mrf.mxu0
      %v2998 = vadd.f32 %v2677, %v2997
      %v2999 = vpop.f32.mrf.mxu0
      %3000 = vmatprep.mubr.bf16.mxu0 0
      %3001 = vmatmul.mubr.bf16.gmra.mxu0 %v417
      %v3002 = vpop.f32.mrf.mxu0
      %v3003 = vadd.f32 %v2682, %v3002
      %v3004 = vpop.f32.mrf.mxu0
      %v3005 = vpop.f32.mrf.mxu0
      %v3006 = vadd.f32 %v2685, %v3005
      %v3007 = vpop.f32.mrf.mxu0
      %3008 = vmatprep.mubr.bf16.mxu0 0
      %3009 = vmatmul.mubr.bf16.gmra.mxu0 %v418
      %v3010 = vpop.f32.mrf.mxu0
      %v3011 = vadd.f32 %v2690, %v3010
      %v3012 = vpop.f32.mrf.mxu0
      %v3013 = vpop.f32.mrf.mxu0
      %v3014 = vadd.f32 %v2693, %v3013
      %v3015 = vpop.f32.mrf.mxu0
      %3016 = vmatprep.mubr.bf16.mxu0 0
      %3017 = vmatmul.mubr.bf16.gmra.mxu0 %v419
      %v3018 = vpop.f32.mrf.mxu0
      %v3019 = vadd.f32 %v2698, %v3018
      %v3020 = vpop.f32.mrf.mxu0
      %v3021 = vpop.f32.mrf.mxu0
      %v3022 = vadd.f32 %v2701, %v3021
      %v3023 = vpop.f32.mrf.mxu0
      %3024 = vmatprep.mubr.bf16.mxu0 0
      %3025 = vmatmul.mubr.bf16.gmra.mxu0 %v420
      %v3026 = vpop.f32.mrf.mxu0
      %v3027 = vadd.f32 %v2706, %v3026
      %v3028 = vpop.f32.mrf.mxu0
      %v3029 = vpop.f32.mrf.mxu0
      %v3030 = vadd.f32 %v2709, %v3029
      %v3031 = vpop.f32.mrf.mxu0
      %3032 = vmatprep.mubr.bf16.mxu0 0
      %3033 = vmatmul.mubr.bf16.gmra.mxu0 %v421
      %v3034 = vpop.f32.mrf.mxu0
      %v3035 = vadd.f32 %v2714, %v3034
      %v3036 = vpop.f32.mrf.mxu0
      %v3037 = vpop.f32.mrf.mxu0
      %v3038 = vadd.f32 %v2717, %v3037
      %v3039 = vpop.f32.mrf.mxu0
      %3040 = vmatprep.mubr.bf16.mxu0 0
      %3041 = vmatmul.mubr.bf16.gmra.mxu0 %v422
      %v3042 = vpop.f32.mrf.mxu0
      %v3043 = vadd.f32 %v2722, %v3042
      %v3044 = vpop.f32.mrf.mxu0
      %v3045 = vpop.f32.mrf.mxu0
      %v3046 = vadd.f32 %v2725, %v3045
      %v3047 = vpop.f32.mrf.mxu0
      %3048 = vmatprep.mubr.bf16.mxu0 0
      %3049 = vmatmul.mubr.bf16.gmra.mxu0 %v423
      %v3050 = vpop.f32.mrf.mxu0
      %v3051 = vadd.f32 %v2730, %v3050
      %v3052 = vpop.f32.mrf.mxu0
      %v3053 = vpop.f32.mrf.mxu0
      %v3054 = vadd.f32 %v2733, %v3053
      %v3055 = vpop.f32.mrf.mxu0
      %3056 = vmatprep.mubr.bf16.mxu0 0
      %3057 = vmatmul.mubr.bf16.gmra.mxu0 %v424
      %v3058 = vpop.f32.mrf.mxu0
      %v3059 = vadd.f32 %v2738, %v3058
      %v3060 = vpop.f32.mrf.mxu0
      %v3061 = vpop.f32.mrf.mxu0
      %v3062 = vadd.f32 %v2741, %v3061
      %v3063 = vpop.f32.mrf.mxu0
      %3064 = vmatprep.mubr.bf16.mxu0 0
      %3065 = vmatmul.mubr.bf16.gmra.mxu0 %v425
      %v3066 = vpop.f32.mrf.mxu0
      %v3067 = vadd.f32 %v2746, %v3066
      %v3068 = vpop.f32.mrf.mxu0
      %v3069 = vpop.f32.mrf.mxu0
      %v3070 = vadd.f32 %v2749, %v3069
      %v3071 = vpop.f32.mrf.mxu0
      %3072 = vmatprep.mubr.bf16.mxu0 0
      %3073 = vmatmul.mubr.bf16.gmra.mxu0 %v426
      %v3074 = vpop.f32.mrf.mxu0
      %v3075 = vadd.f32 %v2754, %v3074
      %v3076 = vpop.f32.mrf.mxu0
      %v3077 = vpop.f32.mrf.mxu0
      %v3078 = vadd.f32 %v2757, %v3077
      %v3079 = vpop.f32.mrf.mxu0
      %3080 = vmatprep.mubr.bf16.mxu0 0
      %3081 = vmatmul.mubr.bf16.gmra.mxu0 %v427
      %v3082 = vpop.f32.mrf.mxu0
      %v3083 = vadd.f32 %v2762, %v3082
      %v3084 = vpop.f32.mrf.mxu0
      %v3085 = vpop.f32.mrf.mxu0
      %v3086 = vadd.f32 %v2765, %v3085
      %v3087 = vpop.f32.mrf.mxu0
      %3088 = vmatprep.mubr.bf16.mxu0 0
      %3089 = vmatmul.mubr.bf16.gmra.mxu0 %v428
      %v3090 = vpop.f32.mrf.mxu0
      %v3091 = vadd.f32 %v2770, %v3090
      %v3092 = vpop.f32.mrf.mxu0
      %v3093 = vpop.f32.mrf.mxu0
      %v3094 = vadd.f32 %v2773, %v3093
      %v3095 = vpop.f32.mrf.mxu0
      %3096 = vmatprep.mubr.bf16.mxu0 0
      %3097 = vmatmul.mubr.bf16.gmra.mxu0 %v429
      %v3098 = vpop.f32.mrf.mxu0
      %v3099 = vadd.f32 %v2778, %v3098
      %v3100 = vpop.f32.mrf.mxu0
      %v3101 = vpop.f32.mrf.mxu0
      %v3102 = vadd.f32 %v2781, %v3101
      %v3103 = vpop.f32.mrf.mxu0
      %3104 = vmatprep.mubr.bf16.mxu0 0
      %3105 = vmatmul.mubr.bf16.gmra.mxu0 %v430
      %v3106 = vpop.f32.mrf.mxu0
      %v3107 = vadd.f32 %v2786, %v3106
      %v3108 = vpop.f32.mrf.mxu0
      %v3109 = vpop.f32.mrf.mxu0
      %v3110 = vadd.f32 %v2789, %v3109
      %v3111 = vpop.f32.mrf.mxu0
      %3112 = vmatprep.mubr.bf16.mxu0 0
      %3113 = vmatmul.mubr.bf16.gmra.mxu0 %v431
      %v3114 = vpop.f32.mrf.mxu0
      %v3115 = vadd.f32 %v2794, %v3114
      %v3116 = vpop.f32.mrf.mxu0
      %v3117 = vpop.f32.mrf.mxu0
      %v3118 = vadd.f32 %v2797, %v3117
      %v3119 = vpop.f32.mrf.mxu0
      %3120 = vmatprep.mubr.bf16.mxu0 0
      %3121 = vmatmul.mubr.bf16.gmra.mxu0 %v432
      %v3122 = vpop.f32.mrf.mxu0
      %v3123 = vadd.f32 %v2802, %v3122
      %v3124 = vpop.f32.mrf.mxu0
      %v3125 = vpop.f32.mrf.mxu0
      %v3126 = vadd.f32 %v2805, %v3125
      %v3127 = vpop.f32.mrf.mxu0
      %3128 = vmatprep.mubr.bf16.mxu0 0
      %3129 = vmatmul.mubr.bf16.gmra.mxu0 %v397
      %v3130 = vpop.f32.mrf.mxu0
      %v3131 = vadd.f32 %v2810, %v3130
      %v3132 = vpop.f32.mrf.mxu0
      %v3133 = vpop.f32.mrf.mxu0
      %v3134 = vadd.f32 %v2813, %v3133
      %v3135 = vpop.f32.mrf.mxu0
      %3136 = vmatprep.mubr.bf16.mxu0 0
      %3137 = vmatmul.mubr.bf16.gmra.mxu0 %v398
      %v3138 = vpop.f32.mrf.mxu0
      %v3139 = vadd.f32 %v2818, %v3138
      %v3140 = vpop.f32.mrf.mxu0
      %v3141 = vpop.f32.mrf.mxu0
      %v3142 = vadd.f32 %v2821, %v3141
      %v3143 = vpop.f32.mrf.mxu0
      %3144 = vmatprep.mubr.bf16.mxu0 0
      %3145 = vmatmul.mubr.bf16.gmra.mxu0 %v399
      %v3146 = vpop.f32.mrf.mxu0
      %v3147 = vadd.f32 %v2826, %v3146
      %v3148 = vpop.f32.mrf.mxu0
      %v3149 = vpop.f32.mrf.mxu0
      %v3150 = vadd.f32 %v2829, %v3149
      %v3151 = vpop.f32.mrf.mxu0
      %3152 = vdwg.mxu0
      %v3153 = vrot.slane %v1197, 7
      %v3154 = vrot.slane %v1200, 7
      %v3155 = vrot.slane %v1205, 7
      %v3156 = vrot.slane %v1208, 7
      %v3157 = vrot.slane %v1213, 7
      %v3158 = vrot.slane %v1216, 7
      %v3159 = vrot.slane %v1221, 7
      %v3160 = vrot.slane %v1224, 7
      %v3161 = vrot.slane %v1229, 7
      %v3162 = vrot.slane %v1232, 7
      %v3163 = vrot.slane %v1237, 7
      %v3164 = vrot.slane %v1240, 7
      %v3165 = vrot.slane %v1245, 7
      %v3166 = vrot.slane %v1248, 7
      %v3167 = vrot.slane %v1253, 7
      %v3168 = vrot.slane %v1256, 7
      %v3169 = vrot.slane %v1261, 7
      %v3170 = vrot.slane %v1264, 7
      %v3171 = vrot.slane %v1269, 7
      %v3172 = vrot.slane %v1272, 7
      %v3173 = vrot.slane %v1277, 7
      %v3174 = vrot.slane %v1280, 7
      %v3175 = vrot.slane %v1285, 7
      %v3176 = vrot.slane %v1288, 7
      %v3177 = vrot.slane %v1293, 7
      %v3178 = vrot.slane %v1296, 7
      %v3179 = vrot.slane %v1301, 7
      %v3180 = vrot.slane %v1304, 7
      %v3181 = vrot.slane %v1309, 7
      %v3182 = vrot.slane %v1312, 7
      %v3183 = vrot.slane %v1317, 7
      %v3184 = vrot.slane %v1320, 7
      %v3185 = vrot.slane %v1325, 7
      %v3186 = vrot.slane %v1328, 7
      %v3187 = vrot.slane %v1333, 7
      %v3188 = vrot.slane %v1336, 7
      %v3189 = vrot.slane %v1341, 7
      %v3190 = vrot.slane %v1344, 7
      %v3191 = vrot.slane %v1349, 7
      %v3192 = vrot.slane %v1352, 7
      %v3193 = vrot.slane %v1357, 7
      %v3194 = vrot.slane %v1360, 7
      %v3195 = vrot.slane %v1365, 7
      %v3196 = vrot.slane %v1368, 7
      %v3197 = vrot.slane %v1373, 7
      %v3198 = vrot.slane %v1376, 7
      %v3199 = vrot.slane %v1381, 7
      %v3200 = vrot.slane %v1384, 7
      %v3201 = vrot.slane %v1389, 7
      %v3202 = vrot.slane %v1392, 7
      %v3203 = vrot.slane %v1397, 7
      %v3204 = vrot.slane %v1400, 7
      %v3205 = vrot.slane %v1405, 7
      %v3206 = vrot.slane %v1408, 7
      %v3207 = vrot.slane %v1413, 7
      %v3208 = vrot.slane %v1416, 7
      %v3209 = vrot.slane %v1421, 7
      %v3210 = vrot.slane %v1424, 7
      %v3211 = vrot.slane %v1429, 7
      %v3212 = vrot.slane %v1432, 7
      %v3213 = vrot.slane %v1437, 7
      %v3214 = vrot.slane %v1440, 7
      %v3215 = vrot.slane %v1445, 7
      %v3216 = vrot.slane %v1448, 7
      %v3217 = vrot.slane %v1453, 7
      %v3218 = vrot.slane %v1456, 7
      %v3219 = vrot.slane %v1461, 7
      %v3220 = vrot.slane %v1464, 7
      %v3221 = vrot.slane %v1469, 7
      %v3222 = vrot.slane %v1472, 7
      %v3223 = vrot.slane %v1477, 7
      %v3224 = vrot.slane %v1480, 7
      %v3225 = vlaneseq
      %v3226 = vshrl.u32 %v3225, 7
      %vm3227 = vcmp.lt.s32.totalorder %v3226, 1
      %v3228 = vsel %vm3227, %v3223, %v3224
      %v3229 = vsel %vm3227, %v3222, %v3223
      %v3230 = vsel %vm3227, %v3221, %v3222
      %v3231 = vsel %vm3227, %v3220, %v3221
      %v3232 = vsel %vm3227, %v3219, %v3220
      %v3233 = vsel %vm3227, %v3218, %v3219
      %v3234 = vsel %vm3227, %v3217, %v3218
      %v3235 = vsel %vm3227, %v3216, %v3217
      %v3236 = vsel %vm3227, %v3215, %v3216
      %v3237 = vsel %vm3227, %v3214, %v3215
      %v3238 = vsel %vm3227, %v3213, %v3214
      %v3239 = vsel %vm3227, %v3212, %v3213
      %v3240 = vsel %vm3227, %v3211, %v3212
      %v3241 = vsel %vm3227, %v3210, %v3211
      %v3242 = vsel %vm3227, %v3209, %v3210
      %v3243 = vsel %vm3227, %v3208, %v3209
      %v3244 = vsel %vm3227, %v3207, %v3208
      %v3245 = vsel %vm3227, %v3206, %v3207
      %v3246 = vsel %vm3227, %v3205, %v3206
      %v3247 = vsel %vm3227, %v3204, %v3205
      %v3248 = vsel %vm3227, %v3203, %v3204
      %v3249 = vsel %vm3227, %v3202, %v3203
      %v3250 = vsel %vm3227, %v3201, %v3202
      %v3251 = vsel %vm3227, %v3200, %v3201
      %v3252 = vsel %vm3227, %v3199, %v3200
      %v3253 = vsel %vm3227, %v3198, %v3199
      %v3254 = vsel %vm3227, %v3197, %v3198
      %v3255 = vsel %vm3227, %v3196, %v3197
      %v3256 = vsel %vm3227, %v3195, %v3196
      %v3257 = vsel %vm3227, %v3194, %v3195
      %v3258 = vsel %vm3227, %v3193, %v3194
      %v3259 = vsel %vm3227, %v3192, %v3193
      %v3260 = vsel %vm3227, %v3191, %v3192
      %v3261 = vsel %vm3227, %v3190, %v3191
      %v3262 = vsel %vm3227, %v3189, %v3190
      %v3263 = vsel %vm3227, %v3188, %v3189
      %v3264 = vsel %vm3227, %v3187, %v3188
      %v3265 = vsel %vm3227, %v3186, %v3187
      %v3266 = vsel %vm3227, %v3185, %v3186
      %v3267 = vsel %vm3227, %v3184, %v3185
      %v3268 = vsel %vm3227, %v3183, %v3184
      %v3269 = vsel %vm3227, %v3182, %v3183
      %v3270 = vsel %vm3227, %v3181, %v3182
      %v3271 = vsel %vm3227, %v3180, %v3181
      %v3272 = vsel %vm3227, %v3179, %v3180
      %v3273 = vsel %vm3227, %v3178, %v3179
      %v3274 = vsel %vm3227, %v3177, %v3178
      %v3275 = vsel %vm3227, %v3176, %v3177
      %v3276 = vsel %vm3227, %v3175, %v3176
      %v3277 = vsel %vm3227, %v3174, %v3175
      %v3278 = vsel %vm3227, %v3173, %v3174
      %v3279 = vsel %vm3227, %v3172, %v3173
      %v3280 = vsel %vm3227, %v3171, %v3172
      %v3281 = vsel %vm3227, %v3170, %v3171
      %v3282 = vsel %vm3227, %v3169, %v3170
      %v3283 = vsel %vm3227, %v3168, %v3169
      %v3284 = vsel %vm3227, %v3167, %v3168
      %v3285 = vsel %vm3227, %v3166, %v3167
      %v3286 = vsel %vm3227, %v3165, %v3166
      %v3287 = vsel %vm3227, %v3164, %v3165
      %v3288 = vsel %vm3227, %v3163, %v3164
      %v3289 = vsel %vm3227, %v3162, %v3163
      %v3290 = vsel %vm3227, %v3161, %v3162
      %v3291 = vsel %vm3227, %v3160, %v3161
      %v3292 = vsel %vm3227, %v3159, %v3160
      %v3293 = vsel %vm3227, %v3158, %v3159
      %v3294 = vsel %vm3227, %v3157, %v3158
      %v3295 = vsel %vm3227, %v3156, %v3157
      %v3296 = vsel %vm3227, %v3155, %v3156
      %v3297 = vsel %vm3227, %v3154, %v3155
      %v3298 = vsel %vm3227, %v3153, %v3154
      %v3299 = vsel %vm3227, %v3224, %v3153
      %v3300 = vadd.f32 %v3299, %v2032
      %v3301 = vadd.f32 %v3298, %v2035
      %v3302 = vadd.f32 %v3297, %v2040
      %v3303 = vadd.f32 %v3296, %v2043
      %v3304 = vadd.f32 %v3295, %v2048
      %v3305 = vadd.f32 %v3294, %v2051
      %v3306 = vadd.f32 %v3293, %v2056
      %v3307 = vadd.f32 %v3292, %v2059
      %v3308 = vadd.f32 %v3291, %v2064
      %v3309 = vadd.f32 %v3290, %v2067
      %v3310 = vadd.f32 %v3289, %v2072
      %v3311 = vadd.f32 %v3288, %v2075
      %v3312 = vadd.f32 %v3287, %v2080
      %v3313 = vadd.f32 %v3286, %v2083
      %v3314 = vadd.f32 %v3285, %v2088
      %v3315 = vadd.f32 %v3284, %v2091
      %v3316 = vadd.f32 %v3283, %v2096
      %v3317 = vadd.f32 %v3282, %v2099
      %v3318 = vadd.f32 %v3281, %v2104
      %v3319 = vadd.f32 %v3280, %v2107
      %v3320 = vadd.f32 %v3279, %v2112
      %v3321 = vadd.f32 %v3278, %v2115
      %v3322 = vadd.f32 %v3277, %v2120
      %v3323 = vadd.f32 %v3276, %v2123
      %v3324 = vadd.f32 %v3275, %v2128
      %v3325 = vadd.f32 %v3274, %v2131
      %v3326 = vadd.f32 %v3273, %v2136
      %v3327 = vadd.f32 %v3272, %v2139
      %v3328 = vadd.f32 %v3271, %v2144
      %v3329 = vadd.f32 %v3270, %v2147
      %v3330 = vadd.f32 %v3269, %v2152
      %v3331 = vadd.f32 %v3268, %v2155
      %v3332 = vadd.f32 %v3267, %v2160
      %v3333 = vadd.f32 %v3266, %v2163
      %v3334 = vadd.f32 %v3265, %v2168
      %v3335 = vadd.f32 %v3264, %v2171
      %v3336 = vadd.f32 %v3263, %v2176
      %v3337 = vadd.f32 %v3262, %v2179
      %v3338 = vadd.f32 %v3261, %v2184
      %v3339 = vadd.f32 %v3260, %v2187
      %v3340 = vadd.f32 %v3259, %v2192
      %v3341 = vadd.f32 %v3258, %v2195
      %v3342 = vadd.f32 %v3257, %v2200
      %v3343 = vadd.f32 %v3256, %v2203
      %v3344 = vadd.f32 %v3255, %v2208
      %v3345 = vadd.f32 %v3254, %v2211
      %v3346 = vadd.f32 %v3253, %v2216
      %v3347 = vadd.f32 %v3252, %v2219
      %v3348 = vadd.f32 %v3251, %v2224
      %v3349 = vadd.f32 %v3250, %v2227
      %v3350 = vadd.f32 %v3249, %v2232
      %v3351 = vadd.f32 %v3248, %v2235
      %v3352 = vadd.f32 %v3247, %v2240
      %v3353 = vadd.f32 %v3246, %v2243
      %v3354 = vadd.f32 %v3245, %v2248
      %v3355 = vadd.f32 %v3244, %v2251
      %v3356 = vadd.f32 %v3243, %v2256
      %v3357 = vadd.f32 %v3242, %v2259
      %v3358 = vadd.f32 %v3241, %v2264
      %v3359 = vadd.f32 %v3240, %v2267
      %v3360 = vadd.f32 %v3239, %v2272
      %v3361 = vadd.f32 %v3238, %v2275
      %v3362 = vadd.f32 %v3237, %v2280
      %v3363 = vadd.f32 %v3236, %v2283
      %v3364 = vadd.f32 %v3235, %v2288
      %v3365 = vadd.f32 %v3234, %v2291
      %v3366 = vadd.f32 %v3233, %v2296
      %v3367 = vadd.f32 %v3232, %v2299
      %v3368 = vadd.f32 %v3231, %v2304
      %v3369 = vadd.f32 %v3230, %v2307
      %v3370 = vadd.f32 %v3229, %v2312
      %v3371 = vadd.f32 %v3228, %v2315
      %v3372 = vrot.slane %v2867, 1
      %v3373 = vrot.slane %v2870, 1
      %v3374 = vrot.slane %v2875, 1
      %v3375 = vrot.slane %v2878, 1
      %v3376 = vrot.slane %v2883, 1
      %v3377 = vrot.slane %v2886, 1
      %v3378 = vrot.slane %v2891, 1
      %v3379 = vrot.slane %v2894, 1
      %v3380 = vrot.slane %v2899, 1
      %v3381 = vrot.slane %v2902, 1
      %v3382 = vrot.slane %v2907, 1
      %v3383 = vrot.slane %v2910, 1
      %v3384 = vrot.slane %v2915, 1
      %v3385 = vrot.slane %v2918, 1
      %v3386 = vrot.slane %v2923, 1
      %v3387 = vrot.slane %v2926, 1
      %v3388 = vrot.slane %v2931, 1
      %v3389 = vrot.slane %v2934, 1
      %v3390 = vrot.slane %v2939, 1
      %v3391 = vrot.slane %v2942, 1
      %v3392 = vrot.slane %v2947, 1
      %v3393 = vrot.slane %v2950, 1
      %v3394 = vrot.slane %v2955, 1
      %v3395 = vrot.slane %v2958, 1
      %v3396 = vrot.slane %v2963, 1
      %v3397 = vrot.slane %v2966, 1
      %v3398 = vrot.slane %v2971, 1
      %v3399 = vrot.slane %v2974, 1
      %v3400 = vrot.slane %v2979, 1
      %v3401 = vrot.slane %v2982, 1
      %v3402 = vrot.slane %v2987, 1
      %v3403 = vrot.slane %v2990, 1
      %v3404 = vrot.slane %v2995, 1
      %v3405 = vrot.slane %v2998, 1
      %v3406 = vrot.slane %v3003, 1
      %v3407 = vrot.slane %v3006, 1
      %v3408 = vrot.slane %v3011, 1
      %v3409 = vrot.slane %v3014, 1
      %v3410 = vrot.slane %v3019, 1
      %v3411 = vrot.slane %v3022, 1
      %v3412 = vrot.slane %v3027, 1
      %v3413 = vrot.slane %v3030, 1
      %v3414 = vrot.slane %v3035, 1
      %v3415 = vrot.slane %v3038, 1
      %v3416 = vrot.slane %v3043, 1
      %v3417 = vrot.slane %v3046, 1
      %v3418 = vrot.slane %v3051, 1
      %v3419 = vrot.slane %v3054, 1
      %v3420 = vrot.slane %v3059, 1
      %v3421 = vrot.slane %v3062, 1
      %v3422 = vrot.slane %v3067, 1
      %v3423 = vrot.slane %v3070, 1
      %v3424 = vrot.slane %v3075, 1
      %v3425 = vrot.slane %v3078, 1
      %v3426 = vrot.slane %v3083, 1
      %v3427 = vrot.slane %v3086, 1
      %v3428 = vrot.slane %v3091, 1
      %v3429 = vrot.slane %v3094, 1
      %v3430 = vrot.slane %v3099, 1
      %v3431 = vrot.slane %v3102, 1
      %v3432 = vrot.slane %v3107, 1
      %v3433 = vrot.slane %v3110, 1
      %v3434 = vrot.slane %v3115, 1
      %v3435 = vrot.slane %v3118, 1
      %v3436 = vrot.slane %v3123, 1
      %v3437 = vrot.slane %v3126, 1
      %v3438 = vrot.slane %v3131, 1
      %v3439 = vrot.slane %v3134, 1
      %v3440 = vrot.slane %v3139, 1
      %v3441 = vrot.slane %v3142, 1
      %v3442 = vrot.slane %v3147, 1
      %v3443 = vrot.slane %v3150, 1
      %vm3444 = vcmp.lt.s32.totalorder %v3226, 7
      %v3445 = vsel %vm3444, %v3442, %v3443
      %v3446 = vsel %vm3444, %v3441, %v3442
      %v3447 = vsel %vm3444, %v3440, %v3441
      %v3448 = vsel %vm3444, %v3439, %v3440
      %v3449 = vsel %vm3444, %v3438, %v3439
      %v3450 = vsel %vm3444, %v3437, %v3438
      %v3451 = vsel %vm3444, %v3436, %v3437
      %v3452 = vsel %vm3444, %v3435, %v3436
      %v3453 = vsel %vm3444, %v3434, %v3435
      %v3454 = vsel %vm3444, %v3433, %v3434
      %v3455 = vsel %vm3444, %v3432, %v3433
      %v3456 = vsel %vm3444, %v3431, %v3432
      %v3457 = vsel %vm3444, %v3430, %v3431
      %v3458 = vsel %vm3444, %v3429, %v3430
      %v3459 = vsel %vm3444, %v3428, %v3429
      %v3460 = vsel %vm3444, %v3427, %v3428
      %v3461 = vsel %vm3444, %v3426, %v3427
      %v3462 = vsel %vm3444, %v3425, %v3426
      %v3463 = vsel %vm3444, %v3424, %v3425
      %v3464 = vsel %vm3444, %v3423, %v3424
      %v3465 = vsel %vm3444, %v3422, %v3423
      %v3466 = vsel %vm3444, %v3421, %v3422
      %v3467 = vsel %vm3444, %v3420, %v3421
      %v3468 = vsel %vm3444, %v3419, %v3420
      %v3469 = vsel %vm3444, %v3418, %v3419
      %v3470 = vsel %vm3444, %v3417, %v3418
      %v3471 = vsel %vm3444, %v3416, %v3417
      %v3472 = vsel %vm3444, %v3415, %v3416
      %v3473 = vsel %vm3444, %v3414, %v3415
      %v3474 = vsel %vm3444, %v3413, %v3414
      %v3475 = vsel %vm3444, %v3412, %v3413
      %v3476 = vsel %vm3444, %v3411, %v3412
      %v3477 = vsel %vm3444, %v3410, %v3411
      %v3478 = vsel %vm3444, %v3409, %v3410
      %v3479 = vsel %vm3444, %v3408, %v3409
      %v3480 = vsel %vm3444, %v3407, %v3408
      %v3481 = vsel %vm3444, %v3406, %v3407
      %v3482 = vsel %vm3444, %v3405, %v3406
      %v3483 = vsel %vm3444, %v3404, %v3405
      %v3484 = vsel %vm3444, %v3403, %v3404
      %v3485 = vsel %vm3444, %v3402, %v3403
      %v3486 = vsel %vm3444, %v3401, %v3402
      %v3487 = vsel %vm3444, %v3400, %v3401
      %v3488 = vsel %vm3444, %v3399, %v3400
      %v3489 = vsel %vm3444, %v3398, %v3399
      %v3490 = vsel %vm3444, %v3397, %v3398
      %v3491 = vsel %vm3444, %v3396, %v3397
      %v3492 = vsel %vm3444, %v3395, %v3396
      %v3493 = vsel %vm3444, %v3394, %v3395
      %v3494 = vsel %vm3444, %v3393, %v3394
      %v3495 = vsel %vm3444, %v3392, %v3393
      %v3496 = vsel %vm3444, %v3391, %v3392
      %v3497 = vsel %vm3444, %v3390, %v3391
      %v3498 = vsel %vm3444, %v3389, %v3390
      %v3499 = vsel %vm3444, %v3388, %v3389
      %v3500 = vsel %vm3444, %v3387, %v3388
      %v3501 = vsel %vm3444, %v3386, %v3387
      %v3502 = vsel %vm3444, %v3385, %v3386
      %v3503 = vsel %vm3444, %v3384, %v3385
      %v3504 = vsel %vm3444, %v3383, %v3384
      %v3505 = vsel %vm3444, %v3382, %v3383
      %v3506 = vsel %vm3444, %v3381, %v3382
      %v3507 = vsel %vm3444, %v3380, %v3381
      %v3508 = vsel %vm3444, %v3379, %v3380
      %v3509 = vsel %vm3444, %v3378, %v3379
      %v3510 = vsel %vm3444, %v3377, %v3378
      %v3511 = vsel %vm3444, %v3376, %v3377
      %v3512 = vsel %vm3444, %v3375, %v3376
      %v3513 = vsel %vm3444, %v3374, %v3375
      %v3514 = vsel %vm3444, %v3373, %v3374
      %v3515 = vsel %vm3444, %v3372, %v3373
      %v3516 = vsel %vm3444, %v3443, %v3372
      %v3517 = vadd.f32 %v3300, %v3515
      %v3518 = vadd.f32 %v3301, %v3514
      %v3519 = vadd.f32 %v3302, %v3513
      %v3520 = vadd.f32 %v3303, %v3512
      %v3521 = vadd.f32 %v3304, %v3511
      %v3522 = vadd.f32 %v3305, %v3510
      %v3523 = vadd.f32 %v3306, %v3509
      %v3524 = vadd.f32 %v3307, %v3508
      %v3525 = vadd.f32 %v3308, %v3507
      %v3526 = vadd.f32 %v3309, %v3506
      %v3527 = vadd.f32 %v3310, %v3505
      %v3528 = vadd.f32 %v3311, %v3504
      %v3529 = vadd.f32 %v3312, %v3503
      %v3530 = vadd.f32 %v3313, %v3502
      %v3531 = vadd.f32 %v3314, %v3501
      %v3532 = vadd.f32 %v3315, %v3500
      %v3533 = vadd.f32 %v3316, %v3499
      %v3534 = vadd.f32 %v3317, %v3498
      %v3535 = vadd.f32 %v3318, %v3497
      %v3536 = vadd.f32 %v3319, %v3496
      %v3537 = vadd.f32 %v3320, %v3495
      %v3538 = vadd.f32 %v3321, %v3494
      %v3539 = vadd.f32 %v3322, %v3493
      %v3540 = vadd.f32 %v3323, %v3492
      %v3541 = vadd.f32 %v3324, %v3491
      %v3542 = vadd.f32 %v3325, %v3490
      %v3543 = vadd.f32 %v3326, %v3489
      %v3544 = vadd.f32 %v3327, %v3488
      %v3545 = vadd.f32 %v3328, %v3487
      %v3546 = vadd.f32 %v3329, %v3486
      %v3547 = vadd.f32 %v3330, %v3485
      %v3548 = vadd.f32 %v3331, %v3484
      %v3549 = vadd.f32 %v3332, %v3483
      %v3550 = vadd.f32 %v3333, %v3482
      %v3551 = vadd.f32 %v3334, %v3481
      %v3552 = vadd.f32 %v3335, %v3480
      %v3553 = vadd.f32 %v3336, %v3479
      %v3554 = vadd.f32 %v3337, %v3478
      %v3555 = vadd.f32 %v3338, %v3477
      %v3556 = vadd.f32 %v3339, %v3476
      %v3557 = vadd.f32 %v3340, %v3475
      %v3558 = vadd.f32 %v3341, %v3474
      %v3559 = vadd.f32 %v3342, %v3473
      %v3560 = vadd.f32 %v3343, %v3472
      %v3561 = vadd.f32 %v3344, %v3471
      %v3562 = vadd.f32 %v3345, %v3470
      %v3563 = vadd.f32 %v3346, %v3469
      %v3564 = vadd.f32 %v3347, %v3468
      %v3565 = vadd.f32 %v3348, %v3467
      %v3566 = vadd.f32 %v3349, %v3466
      %v3567 = vadd.f32 %v3350, %v3465
      %v3568 = vadd.f32 %v3351, %v3464
      %v3569 = vadd.f32 %v3352, %v3463
      %v3570 = vadd.f32 %v3353, %v3462
      %v3571 = vadd.f32 %v3354, %v3461
      %v3572 = vadd.f32 %v3355, %v3460
      %v3573 = vadd.f32 %v3356, %v3459
      %v3574 = vadd.f32 %v3357, %v3458
      %v3575 = vadd.f32 %v3358, %v3457
      %v3576 = vadd.f32 %v3359, %v3456
      %v3577 = vadd.f32 %v3360, %v3455
      %v3578 = vadd.f32 %v3361, %v3454
      %v3579 = vadd.f32 %v3362, %v3453
      %v3580 = vadd.f32 %v3363, %v3452
      %v3581 = vadd.f32 %v3364, %v3451
      %v3582 = vadd.f32 %v3365, %v3450
      %v3583 = vadd.f32 %v3366, %v3449
      %v3584 = vadd.f32 %v3367, %v3448
      %v3585 = vadd.f32 %v3368, %v3447
      %v3586 = vadd.f32 %v3369, %v3446
      %v3587 = vadd.f32 %v3370, %v3445
      %v3588 = vadd.f32 %v3371, %v3516
      %v3589 = vld [vmem:[%s242] sm:$0x1]
      %v3591 = vlaneseq
      %v3592 = vshrl.u32 %v3591, 7
      %v3593 = vsub.s32 0, %v3592
      %v3594 = vrot.slane %v3589, %v3593
      %v3596 = vadd.f32 %v3517, %v3594
      %v3597 = vadd.f32 %v3518, %v3594
      %v3598 = vadd.f32 %v3519, %v3594
      %v3599 = vadd.f32 %v3520, %v3594
      %v3600 = vadd.f32 %v3521, %v3594
      %v3601 = vadd.f32 %v3522, %v3594
      %v3602 = vadd.f32 %v3523, %v3594
      %v3603 = vadd.f32 %v3524, %v3594
      %v3604 = vadd.f32 %v3525, %v3594
      %v3605 = vadd.f32 %v3526, %v3594
      %v3606 = vadd.f32 %v3527, %v3594
      %v3607 = vadd.f32 %v3528, %v3594
      %v3608 = vadd.f32 %v3529, %v3594
      %v3609 = vadd.f32 %v3530, %v3594
      %v3610 = vadd.f32 %v3531, %v3594
      %v3611 = vadd.f32 %v3532, %v3594
      %v3612 = vadd.f32 %v3533, %v3594
      %v3613 = vadd.f32 %v3534, %v3594
      %v3614 = vadd.f32 %v3535, %v3594
      %v3615 = vadd.f32 %v3536, %v3594
      %v3616 = vadd.f32 %v3537, %v3594
      %v3617 = vadd.f32 %v3538, %v3594
      %v3618 = vadd.f32 %v3539, %v3594
      %v3619 = vadd.f32 %v3540, %v3594
      %v3620 = vadd.f32 %v3541, %v3594
      %v3621 = vadd.f32 %v3542, %v3594
      %v3622 = vadd.f32 %v3543, %v3594
      %v3623 = vadd.f32 %v3544, %v3594
      %v3624 = vadd.f32 %v3545, %v3594
      %v3625 = vadd.f32 %v3546, %v3594
      %v3626 = vadd.f32 %v3547, %v3594
      %v3627 = vadd.f32 %v3548, %v3594
      %v3628 = vadd.f32 %v3549, %v3594
      %v3629 = vadd.f32 %v3550, %v3594
      %v3630 = vadd.f32 %v3551, %v3594
      %v3631 = vadd.f32 %v3552, %v3594
      %v3632 = vadd.f32 %v3553, %v3594
      %v3633 = vadd.f32 %v3554, %v3594
      %v3634 = vadd.f32 %v3555, %v3594
      %v3635 = vadd.f32 %v3556, %v3594
      %v3636 = vadd.f32 %v3557, %v3594
      %v3637 = vadd.f32 %v3558, %v3594
      %v3638 = vadd.f32 %v3559, %v3594
      %v3639 = vadd.f32 %v3560, %v3594
      %v3640 = vadd.f32 %v3561, %v3594
      %v3641 = vadd.f32 %v3562, %v3594
      %v3642 = vadd.f32 %v3563, %v3594
      %v3643 = vadd.f32 %v3564, %v3594
      %v3644 = vadd.f32 %v3565, %v3594
      %v3645 = vadd.f32 %v3566, %v3594
      %v3646 = vadd.f32 %v3567, %v3594
      %v3647 = vadd.f32 %v3568, %v3594
      %v3648 = vadd.f32 %v3569, %v3594
      %v3649 = vadd.f32 %v3570, %v3594
      %v3650 = vadd.f32 %v3571, %v3594
      %v3651 = vadd.f32 %v3572, %v3594
      %v3652 = vadd.f32 %v3573, %v3594
      %v3653 = vadd.f32 %v3574, %v3594
      %v3654 = vadd.f32 %v3575, %v3594
      %v3655 = vadd.f32 %v3576, %v3594
      %v3656 = vadd.f32 %v3577, %v3594
      %v3657 = vadd.f32 %v3578, %v3594
      %v3658 = vadd.f32 %v3579, %v3594
      %v3659 = vadd.f32 %v3580, %v3594
      %v3660 = vadd.f32 %v3581, %v3594
      %v3661 = vadd.f32 %v3582, %v3594
      %v3662 = vadd.f32 %v3583, %v3594
      %v3663 = vadd.f32 %v3584, %v3594
      %v3664 = vadd.f32 %v3585, %v3594
      %v3665 = vadd.f32 %v3586, %v3594
      %v3666 = vadd.f32 %v3587, %v3594
      %v3667 = vadd.f32 %v3588, %v3594
      %v3668 = vmax.f32 %v3596, 0.0
      %v3669 = vmax.f32 %v3597, 0.0
      %v3670 = vmax.f32 %v3598, 0.0
      %v3671 = vmax.f32 %v3599, 0.0
      %v3672 = vmax.f32 %v3600, 0.0
      %v3673 = vmax.f32 %v3601, 0.0
      %v3674 = vmax.f32 %v3602, 0.0
      %v3675 = vmax.f32 %v3603, 0.0
      %v3676 = vmax.f32 %v3604, 0.0
      %v3677 = vmax.f32 %v3605, 0.0
      %v3678 = vmax.f32 %v3606, 0.0
      %v3679 = vmax.f32 %v3607, 0.0
      %v3680 = vmax.f32 %v3608, 0.0
      %v3681 = vmax.f32 %v3609, 0.0
      %v3682 = vmax.f32 %v3610, 0.0
      %v3683 = vmax.f32 %v3611, 0.0
      %v3684 = vmax.f32 %v3612, 0.0
      %v3685 = vmax.f32 %v3613, 0.0
      %v3686 = vmax.f32 %v3614, 0.0
      %v3687 = vmax.f32 %v3615, 0.0
      %v3688 = vmax.f32 %v3616, 0.0
      %v3689 = vmax.f32 %v3617, 0.0
      %v3690 = vmax.f32 %v3618, 0.0
      %v3691 = vmax.f32 %v3619, 0.0
      %v3692 = vmax.f32 %v3620, 0.0
      %v3693 = vmax.f32 %v3621, 0.0
      %v3694 = vmax.f32 %v3622, 0.0
      %v3695 = vmax.f32 %v3623, 0.0
      %v3696 = vmax.f32 %v3624, 0.0
      %v3697 = vmax.f32 %v3625, 0.0
      %v3698 = vmax.f32 %v3626, 0.0
      %v3699 = vmax.f32 %v3627, 0.0
      %v3700 = vmax.f32 %v3628, 0.0
      %v3701 = vmax.f32 %v3629, 0.0
      %v3702 = vmax.f32 %v3630, 0.0
      %v3703 = vmax.f32 %v3631, 0.0
      %v3704 = vmax.f32 %v3632, 0.0
      %v3705 = vmax.f32 %v3633, 0.0
      %v3706 = vmax.f32 %v3634, 0.0
      %v3707 = vmax.f32 %v3635, 0.0
      %v3708 = vmax.f32 %v3636, 0.0
      %v3709 = vmax.f32 %v3637, 0.0
      %v3710 = vmax.f32 %v3638, 0.0
      %v3711 = vmax.f32 %v3639, 0.0
      %v3712 = vmax.f32 %v3640, 0.0
      %v3713 = vmax.f32 %v3641, 0.0
      %v3714 = vmax.f32 %v3642, 0.0
      %v3715 = vmax.f32 %v3643, 0.0
      %v3716 = vmax.f32 %v3644, 0.0
      %v3717 = vmax.f32 %v3645, 0.0
      %v3718 = vmax.f32 %v3646, 0.0
      %v3719 = vmax.f32 %v3647, 0.0
      %v3720 = vmax.f32 %v3648, 0.0
      %v3721 = vmax.f32 %v3649, 0.0
      %v3722 = vmax.f32 %v3650, 0.0
      %v3723 = vmax.f32 %v3651, 0.0
      %v3724 = vmax.f32 %v3652, 0.0
      %v3725 = vmax.f32 %v3653, 0.0
      %v3726 = vmax.f32 %v3654, 0.0
      %v3727 = vmax.f32 %v3655, 0.0
      %v3728 = vmax.f32 %v3656, 0.0
      %v3729 = vmax.f32 %v3657, 0.0
      %v3730 = vmax.f32 %v3658, 0.0
      %v3731 = vmax.f32 %v3659, 0.0
      %v3732 = vmax.f32 %v3660, 0.0
      %v3733 = vmax.f32 %v3661, 0.0
      %v3734 = vmax.f32 %v3662, 0.0
      %v3735 = vmax.f32 %v3663, 0.0
      %v3736 = vmax.f32 %v3664, 0.0
      %v3737 = vmax.f32 %v3665, 0.0
      %v3738 = vmax.f32 %v3666, 0.0
      %v3739 = vmax.f32 %v3667, 0.0
      %v3740 = vld [vmem:[%s3] sm:$0xff]
      %v3741 = vld [vmem:[%s3 + $0x8] sm:$0xff]
      %v3742 = vld [vmem:[%s3 + $0x10] sm:$0xff]
      %v3743 = vld [vmem:[%s3 + $0x18] sm:$0xff]
      %v3744 = vld [vmem:[%s3 + $0x20] sm:$0xff]
      %v3745 = vld [vmem:[%s3 + $0x28] sm:$0xff]
      %v3746 = vld [vmem:[%s3 + $0x30] sm:$0xff]
      %v3747 = vld [vmem:[%s3 + $0x38] sm:$0xff]
      %v3748 = vld [vmem:[%s3 + $0x40] sm:$0xff]
      %v3749 = vld [vmem:[%s3 + $0x48] sm:$0xff]
      %v3750 = vld [vmem:[%s3 + $0x50] sm:$0xff]
      %v3751 = vld [vmem:[%s3 + $0x58] sm:$0xff]
      %v3752 = vld [vmem:[%s3 + $0x60] sm:$0xff]
      %v3753 = vld [vmem:[%s3 + $0x68] sm:$0xff]
      %v3754 = vld [vmem:[%s3 + $0x70] sm:$0xff]
      %v3755 = vld [vmem:[%s3 + $0x78] sm:$0xff]
      %v3756 = vld [vmem:[%s3 + $0x80] sm:$0xff]
      %v3757 = vld [vmem:[%s3 + $0x88] sm:$0xff]
      %v3758 = vld [vmem:[%s3 + $0x90] sm:$0xff]
      %v3759 = vld [vmem:[%s3 + $0x98] sm:$0xff]
      %v3760 = vld [vmem:[%s3 + $0xa0] sm:$0xff]
      %v3761 = vld [vmem:[%s3 + $0xa8] sm:$0xff]
      %v3762 = vld [vmem:[%s3 + $0xb0] sm:$0xff]
      %v3763 = vld [vmem:[%s3 + $0xb8] sm:$0xff]
      %v3764 = vld [vmem:[%s3 + $0xc0] sm:$0xff]
      %v3765 = vld [vmem:[%s3 + $0xc8] sm:$0xff]
      %v3766 = vld [vmem:[%s3 + $0xd0] sm:$0xff]
      %v3767 = vld [vmem:[%s3 + $0xd8] sm:$0xff]
      %v3768 = vld [vmem:[%s3 + $0xe0] sm:$0xff]
      %v3769 = vld [vmem:[%s3 + $0xe8] sm:$0xff]
      %v3770 = vld [vmem:[%s3 + $0xf0] sm:$0xff]
      %v3771 = vld [vmem:[%s3 + $0xf8] sm:$0xff]
      %v3772 = vld [vmem:[%s3 + $0x100] sm:$0xff]
      %v3773 = vld [vmem:[%s3 + $0x108] sm:$0xff]
      %v3774 = vld [vmem:[%s3 + $0x110] sm:$0xff]
      %v3775 = vld [vmem:[%s3 + $0x118] sm:$0xff]
      %v3776 = vld [vmem:[%s3 + $0x120] sm:$0xff]
      %v3777 = vld [vmem:[%s3 + $0x128] sm:$0xff]
      %v3778 = vld [vmem:[%s3 + $0x130] sm:$0xff]
      %v3779 = vld [vmem:[%s3 + $0x138] sm:$0xff]
      %v3780 = vld [vmem:[%s3 + $0x140] sm:$0xff]
      %v3781 = vld [vmem:[%s3 + $0x148] sm:$0xff]
      %v3782 = vld [vmem:[%s3 + $0x150] sm:$0xff]
      %v3783 = vld [vmem:[%s3 + $0x158] sm:$0xff]
      %v3784 = vld [vmem:[%s3 + $0x160] sm:$0xff]
      %v3785 = vld [vmem:[%s3 + $0x168] sm:$0xff]
      %v3786 = vld [vmem:[%s3 + $0x170] sm:$0xff]
      %v3787 = vld [vmem:[%s3 + $0x178] sm:$0xff]
      %v3788 = vld [vmem:[%s3 + $0x180] sm:$0xff]
      %v3789 = vld [vmem:[%s3 + $0x188] sm:$0xff]
      %v3790 = vld [vmem:[%s3 + $0x190] sm:$0xff]
      %v3791 = vld [vmem:[%s3 + $0x198] sm:$0xff]
      %v3792 = vld [vmem:[%s3 + $0x1a0] sm:$0xff]
      %v3793 = vld [vmem:[%s3 + $0x1a8] sm:$0xff]
      %v3794 = vld [vmem:[%s3 + $0x1b0] sm:$0xff]
      %v3795 = vld [vmem:[%s3 + $0x1b8] sm:$0xff]
      %v3796 = vld [vmem:[%s3 + $0x1c0] sm:$0xff]
      %v3797 = vld [vmem:[%s3 + $0x1c8] sm:$0xff]
      %v3798 = vld [vmem:[%s3 + $0x1d0] sm:$0xff]
      %v3799 = vld [vmem:[%s3 + $0x1d8] sm:$0xff]
      %v3800 = vld [vmem:[%s3 + $0x1e0] sm:$0xff]
      %v3801 = vld [vmem:[%s3 + $0x1e8] sm:$0xff]
      %v3802 = vld [vmem:[%s3 + $0x1f0] sm:$0xff]
      %v3803 = vld [vmem:[%s3 + $0x1f8] sm:$0xff]
      %v3804 = vld [vmem:[%s3 + $0x200] sm:$0xff]
      %v3805 = vld [vmem:[%s3 + $0x208] sm:$0xff]
      %v3806 = vld [vmem:[%s3 + $0x210] sm:$0xff]
      %v3807 = vld [vmem:[%s3 + $0x218] sm:$0xff]
      %v3808 = vld [vmem:[%s3 + $0x220] sm:$0xff]
      %v3809 = vld [vmem:[%s3 + $0x228] sm:$0xff]
      %v3810 = vld [vmem:[%s3 + $0x230] sm:$0xff]
      %v3811 = vld [vmem:[%s3 + $0x238] sm:$0xff]
      %3813 = vset.pattern.permute.xlu0 0
      %3814 = vperm.xlu0 %3813, %v3740
      %v3815 = vpop.permute.xlu0 %3814
      %3818 = vset.pattern.permute.xlu0 0
      %3819 = vperm.xlu0 %3818, %v3741
      %v3820 = vpop.permute.xlu0 %3819
      %3823 = vset.pattern.permute.xlu0 0
      %3824 = vperm.xlu0 %3823, %v3742
      %v3825 = vpop.permute.xlu0 %3824
      %3828 = vset.pattern.permute.xlu0 0
      %3829 = vperm.xlu0 %3828, %v3743
      %v3830 = vpop.permute.xlu0 %3829
      %3833 = vset.pattern.permute.xlu0 0
      %3834 = vperm.xlu0 %3833, %v3744
      %v3835 = vpop.permute.xlu0 %3834
      %3838 = vset.pattern.permute.xlu0 0
      %3839 = vperm.xlu0 %3838, %v3745
      %v3840 = vpop.permute.xlu0 %3839
      %3843 = vset.pattern.permute.xlu0 0
      %3844 = vperm.xlu0 %3843, %v3746
      %v3845 = vpop.permute.xlu0 %3844
      %3848 = vset.pattern.permute.xlu0 0
      %3849 = vperm.xlu0 %3848, %v3747
      %v3850 = vpop.permute.xlu0 %3849
      %3853 = vset.pattern.permute.xlu0 0
      %3854 = vperm.xlu0 %3853, %v3748
      %v3855 = vpop.permute.xlu0 %3854
      %3858 = vset.pattern.permute.xlu0 0
      %3859 = vperm.xlu0 %3858, %v3749
      %v3860 = vpop.permute.xlu0 %3859
      %3863 = vset.pattern.permute.xlu0 0
      %3864 = vperm.xlu0 %3863, %v3750
      %v3865 = vpop.permute.xlu0 %3864
      %3868 = vset.pattern.permute.xlu0 0
      %3869 = vperm.xlu0 %3868, %v3751
      %v3870 = vpop.permute.xlu0 %3869
      %3873 = vset.pattern.permute.xlu0 0
      %3874 = vperm.xlu0 %3873, %v3752
      %v3875 = vpop.permute.xlu0 %3874
      %3878 = vset.pattern.permute.xlu0 0
      %3879 = vperm.xlu0 %3878, %v3753
      %v3880 = vpop.permute.xlu0 %3879
      %3883 = vset.pattern.permute.xlu0 0
      %3884 = vperm.xlu0 %3883, %v3754
      %v3885 = vpop.permute.xlu0 %3884
      %3888 = vset.pattern.permute.xlu0 0
      %3889 = vperm.xlu0 %3888, %v3755
      %v3890 = vpop.permute.xlu0 %3889
      %3893 = vset.pattern.permute.xlu0 0
      %3894 = vperm.xlu0 %3893, %v3756
      %v3895 = vpop.permute.xlu0 %3894
      %3898 = vset.pattern.permute.xlu0 0
      %3899 = vperm.xlu0 %3898, %v3757
      %v3900 = vpop.permute.xlu0 %3899
      %3903 = vset.pattern.permute.xlu0 0
      %3904 = vperm.xlu0 %3903, %v3758
      %v3905 = vpop.permute.xlu0 %3904
      %3908 = vset.pattern.permute.xlu0 0
      %3909 = vperm.xlu0 %3908, %v3759
      %v3910 = vpop.permute.xlu0 %3909
      %3913 = vset.pattern.permute.xlu0 0
      %3914 = vperm.xlu0 %3913, %v3760
      %v3915 = vpop.permute.xlu0 %3914
      %3918 = vset.pattern.permute.xlu0 0
      %3919 = vperm.xlu0 %3918, %v3761
      %v3920 = vpop.permute.xlu0 %3919
      %3923 = vset.pattern.permute.xlu0 0
      %3924 = vperm.xlu0 %3923, %v3762
      %v3925 = vpop.permute.xlu0 %3924
      %3928 = vset.pattern.permute.xlu0 0
      %3929 = vperm.xlu0 %3928, %v3763
      %v3930 = vpop.permute.xlu0 %3929
      %3933 = vset.pattern.permute.xlu0 0
      %3934 = vperm.xlu0 %3933, %v3764
      %v3935 = vpop.permute.xlu0 %3934
      %3938 = vset.pattern.permute.xlu0 0
      %3939 = vperm.xlu0 %3938, %v3765
      %v3940 = vpop.permute.xlu0 %3939
      %3943 = vset.pattern.permute.xlu0 0
      %3944 = vperm.xlu0 %3943, %v3766
      %v3945 = vpop.permute.xlu0 %3944
      %3948 = vset.pattern.permute.xlu0 0
      %3949 = vperm.xlu0 %3948, %v3767
      %v3950 = vpop.permute.xlu0 %3949
      %3953 = vset.pattern.permute.xlu0 0
      %3954 = vperm.xlu0 %3953, %v3768
      %v3955 = vpop.permute.xlu0 %3954
      %3958 = vset.pattern.permute.xlu0 0
      %3959 = vperm.xlu0 %3958, %v3769
      %v3960 = vpop.permute.xlu0 %3959
      %3963 = vset.pattern.permute.xlu0 0
      %3964 = vperm.xlu0 %3963, %v3770
      %v3965 = vpop.permute.xlu0 %3964
      %3968 = vset.pattern.permute.xlu0 0
      %3969 = vperm.xlu0 %3968, %v3771
      %v3970 = vpop.permute.xlu0 %3969
      %3973 = vset.pattern.permute.xlu0 0
      %3974 = vperm.xlu0 %3973, %v3772
      %v3975 = vpop.permute.xlu0 %3974
      %3978 = vset.pattern.permute.xlu0 0
      %3979 = vperm.xlu0 %3978, %v3773
      %v3980 = vpop.permute.xlu0 %3979
      %3983 = vset.pattern.permute.xlu0 0
      %3984 = vperm.xlu0 %3983, %v3774
      %v3985 = vpop.permute.xlu0 %3984
      %3988 = vset.pattern.permute.xlu0 0
      %3989 = vperm.xlu0 %3988, %v3775
      %v3990 = vpop.permute.xlu0 %3989
      %3993 = vset.pattern.permute.xlu0 0
      %3994 = vperm.xlu0 %3993, %v3776
      %v3995 = vpop.permute.xlu0 %3994
      %3998 = vset.pattern.permute.xlu0 0
      %3999 = vperm.xlu0 %3998, %v3777
      %v4000 = vpop.permute.xlu0 %3999
      %4003 = vset.pattern.permute.xlu0 0
      %4004 = vperm.xlu0 %4003, %v3778
      %v4005 = vpop.permute.xlu0 %4004
      %4008 = vset.pattern.permute.xlu0 0
      %4009 = vperm.xlu0 %4008, %v3779
      %v4010 = vpop.permute.xlu0 %4009
      %4013 = vset.pattern.permute.xlu0 0
      %4014 = vperm.xlu0 %4013, %v3780
      %v4015 = vpop.permute.xlu0 %4014
      %4018 = vset.pattern.permute.xlu0 0
      %4019 = vperm.xlu0 %4018, %v3781
      %v4020 = vpop.permute.xlu0 %4019
      %4023 = vset.pattern.permute.xlu0 0
      %4024 = vperm.xlu0 %4023, %v3782
      %v4025 = vpop.permute.xlu0 %4024
      %4028 = vset.pattern.permute.xlu0 0
      %4029 = vperm.xlu0 %4028, %v3783
      %v4030 = vpop.permute.xlu0 %4029
      %4033 = vset.pattern.permute.xlu0 0
      %4034 = vperm.xlu0 %4033, %v3784
      %v4035 = vpop.permute.xlu0 %4034
      %4038 = vset.pattern.permute.xlu0 0
      %4039 = vperm.xlu0 %4038, %v3785
      %v4040 = vpop.permute.xlu0 %4039
      %4043 = vset.pattern.permute.xlu0 0
      %4044 = vperm.xlu0 %4043, %v3786
      %v4045 = vpop.permute.xlu0 %4044
      %4048 = vset.pattern.permute.xlu0 0
      %4049 = vperm.xlu0 %4048, %v3787
      %v4050 = vpop.permute.xlu0 %4049
      %4053 = vset.pattern.permute.xlu0 0
      %4054 = vperm.xlu0 %4053, %v3788
      %v4055 = vpop.permute.xlu0 %4054
      %4058 = vset.pattern.permute.xlu0 0
      %4059 = vperm.xlu0 %4058, %v3789
      %v4060 = vpop.permute.xlu0 %4059
      %4063 = vset.pattern.permute.xlu0 0
      %4064 = vperm.xlu0 %4063, %v3790
      %v4065 = vpop.permute.xlu0 %4064
      %4068 = vset.pattern.permute.xlu0 0
      %4069 = vperm.xlu0 %4068, %v3791
      %v4070 = vpop.permute.xlu0 %4069
      %4073 = vset.pattern.permute.xlu0 0
      %4074 = vperm.xlu0 %4073, %v3792
      %v4075 = vpop.permute.xlu0 %4074
      %4078 = vset.pattern.permute.xlu0 0
      %4079 = vperm.xlu0 %4078, %v3793
      %v4080 = vpop.permute.xlu0 %4079
      %4083 = vset.pattern.permute.xlu0 0
      %4084 = vperm.xlu0 %4083, %v3794
      %v4085 = vpop.permute.xlu0 %4084
      %4088 = vset.pattern.permute.xlu0 0
      %4089 = vperm.xlu0 %4088, %v3795
      %v4090 = vpop.permute.xlu0 %4089
      %4093 = vset.pattern.permute.xlu0 0
      %4094 = vperm.xlu0 %4093, %v3796
      %v4095 = vpop.permute.xlu0 %4094
      %4098 = vset.pattern.permute.xlu0 0
      %4099 = vperm.xlu0 %4098, %v3797
      %v4100 = vpop.permute.xlu0 %4099
      %4103 = vset.pattern.permute.xlu0 0
      %4104 = vperm.xlu0 %4103, %v3798
      %v4105 = vpop.permute.xlu0 %4104
      %4108 = vset.pattern.permute.xlu0 0
      %4109 = vperm.xlu0 %4108, %v3799
      %v4110 = vpop.permute.xlu0 %4109
      %4113 = vset.pattern.permute.xlu0 0
      %4114 = vperm.xlu0 %4113, %v3800
      %v4115 = vpop.permute.xlu0 %4114
      %4118 = vset.pattern.permute.xlu0 0
      %4119 = vperm.xlu0 %4118, %v3801
      %v4120 = vpop.permute.xlu0 %4119
      %4123 = vset.pattern.permute.xlu0 0
      %4124 = vperm.xlu0 %4123, %v3802
      %v4125 = vpop.permute.xlu0 %4124
      %4128 = vset.pattern.permute.xlu0 0
      %4129 = vperm.xlu0 %4128, %v3803
      %v4130 = vpop.permute.xlu0 %4129
      %4133 = vset.pattern.permute.xlu0 0
      %4134 = vperm.xlu0 %4133, %v3804
      %v4135 = vpop.permute.xlu0 %4134
      %4138 = vset.pattern.permute.xlu0 0
      %4139 = vperm.xlu0 %4138, %v3805
      %v4140 = vpop.permute.xlu0 %4139
      %4143 = vset.pattern.permute.xlu0 0
      %4144 = vperm.xlu0 %4143, %v3806
      %v4145 = vpop.permute.xlu0 %4144
      %4148 = vset.pattern.permute.xlu0 0
      %4149 = vperm.xlu0 %4148, %v3807
      %v4150 = vpop.permute.xlu0 %4149
      %4153 = vset.pattern.permute.xlu0 0
      %4154 = vperm.xlu0 %4153, %v3808
      %v4155 = vpop.permute.xlu0 %4154
      %4158 = vset.pattern.permute.xlu0 0
      %4159 = vperm.xlu0 %4158, %v3809
      %v4160 = vpop.permute.xlu0 %4159
      %4163 = vset.pattern.permute.xlu0 0
      %4164 = vperm.xlu0 %4163, %v3810
      %v4165 = vpop.permute.xlu0 %4164
      %4168 = vset.pattern.permute.xlu0 0
      %4169 = vperm.xlu0 %4168, %v3811
      %v4170 = vpop.permute.xlu0 %4169
      %v4172 = vmul.f32 %v3668, %v3815
      %v4173 = vmul.f32 %v3669, %v3820
      %v4174 = vmul.f32 %v3670, %v3825
      %v4175 = vmul.f32 %v3671, %v3830
      %v4176 = vmul.f32 %v3672, %v3835
      %v4177 = vmul.f32 %v3673, %v3840
      %v4178 = vmul.f32 %v3674, %v3845
      %v4179 = vmul.f32 %v3675, %v3850
      %v4180 = vmul.f32 %v3676, %v3855
      %v4181 = vmul.f32 %v3677, %v3860
      %v4182 = vmul.f32 %v3678, %v3865
      %v4183 = vmul.f32 %v3679, %v3870
      %v4184 = vmul.f32 %v3680, %v3875
      %v4185 = vmul.f32 %v3681, %v3880
      %v4186 = vmul.f32 %v3682, %v3885
      %v4187 = vmul.f32 %v3683, %v3890
      %v4188 = vmul.f32 %v3684, %v3895
      %v4189 = vmul.f32 %v3685, %v3900
      %v4190 = vmul.f32 %v3686, %v3905
      %v4191 = vmul.f32 %v3687, %v3910
      %v4192 = vmul.f32 %v3688, %v3915
      %v4193 = vmul.f32 %v3689, %v3920
      %v4194 = vmul.f32 %v3690, %v3925
      %v4195 = vmul.f32 %v3691, %v3930
      %v4196 = vmul.f32 %v3692, %v3935
      %v4197 = vmul.f32 %v3693, %v3940
      %v4198 = vmul.f32 %v3694, %v3945
      %v4199 = vmul.f32 %v3695, %v3950
      %v4200 = vmul.f32 %v3696, %v3955
      %v4201 = vmul.f32 %v3697, %v3960
      %v4202 = vmul.f32 %v3698, %v3965
      %v4203 = vmul.f32 %v3699, %v3970
      %v4204 = vmul.f32 %v3700, %v3975
      %v4205 = vmul.f32 %v3701, %v3980
      %v4206 = vmul.f32 %v3702, %v3985
      %v4207 = vmul.f32 %v3703, %v3990
      %v4208 = vmul.f32 %v3704, %v3995
      %v4209 = vmul.f32 %v3705, %v4000
      %v4210 = vmul.f32 %v3706, %v4005
      %v4211 = vmul.f32 %v3707, %v4010
      %v4212 = vmul.f32 %v3708, %v4015
      %v4213 = vmul.f32 %v3709, %v4020
      %v4214 = vmul.f32 %v3710, %v4025
      %v4215 = vmul.f32 %v3711, %v4030
      %v4216 = vmul.f32 %v3712, %v4035
      %v4217 = vmul.f32 %v3713, %v4040
      %v4218 = vmul.f32 %v3714, %v4045
      %v4219 = vmul.f32 %v3715, %v4050
      %v4220 = vmul.f32 %v3716, %v4055
      %v4221 = vmul.f32 %v3717, %v4060
      %v4222 = vmul.f32 %v3718, %v4065
      %v4223 = vmul.f32 %v3719, %v4070
      %v4224 = vmul.f32 %v3720, %v4075
      %v4225 = vmul.f32 %v3721, %v4080
      %v4226 = vmul.f32 %v3722, %v4085
      %v4227 = vmul.f32 %v3723, %v4090
      %v4228 = vmul.f32 %v3724, %v4095
      %v4229 = vmul.f32 %v3725, %v4100
      %v4230 = vmul.f32 %v3726, %v4105
      %v4231 = vmul.f32 %v3727, %v4110
      %v4232 = vmul.f32 %v3728, %v4115
      %v4233 = vmul.f32 %v3729, %v4120
      %v4234 = vmul.f32 %v3730, %v4125
      %v4235 = vmul.f32 %v3731, %v4130
      %v4236 = vmul.f32 %v3732, %v4135
      %v4237 = vmul.f32 %v3733, %v4140
      %v4238 = vmul.f32 %v3734, %v4145
      %v4239 = vmul.f32 %v3735, %v4150
      %v4240 = vmul.f32 %v3736, %v4155
      %v4241 = vmul.f32 %v3737, %v4160
      %v4242 = vmul.f32 %v3738, %v4165
      %v4243 = vmul.f32 %v3739, %v4170
      %v4244 = vpack.c.bf16 %v4173, %v4172
      %v4245 = vpack.c.bf16 %v4175, %v4174
      %v4246 = vpack.c.bf16 %v4177, %v4176
      %v4247 = vpack.c.bf16 %v4179, %v4178
      %v4248 = vpack.c.bf16 %v4181, %v4180
      %v4249 = vpack.c.bf16 %v4183, %v4182
      %v4250 = vpack.c.bf16 %v4185, %v4184
      %v4251 = vpack.c.bf16 %v4187, %v4186
      %v4252 = vpack.c.bf16 %v4189, %v4188
      %v4253 = vpack.c.bf16 %v4191, %v4190
      %v4254 = vpack.c.bf16 %v4193, %v4192
      %v4255 = vpack.c.bf16 %v4195, %v4194
      %v4256 = vpack.c.bf16 %v4197, %v4196
      %v4257 = vpack.c.bf16 %v4199, %v4198
      %v4258 = vpack.c.bf16 %v4201, %v4200
      %v4259 = vpack.c.bf16 %v4203, %v4202
      %v4260 = vpack.c.bf16 %v4205, %v4204
      %v4261 = vpack.c.bf16 %v4207, %v4206
      %v4262 = vpack.c.bf16 %v4209, %v4208
      %v4263 = vpack.c.bf16 %v4211, %v4210
      %v4264 = vpack.c.bf16 %v4213, %v4212
      %v4265 = vpack.c.bf16 %v4215, %v4214
      %v4266 = vpack.c.bf16 %v4217, %v4216
      %v4267 = vpack.c.bf16 %v4219, %v4218
      %v4268 = vpack.c.bf16 %v4221, %v4220
      %v4269 = vpack.c.bf16 %v4223, %v4222
      %v4270 = vpack.c.bf16 %v4225, %v4224
      %v4271 = vpack.c.bf16 %v4227, %v4226
      %v4272 = vpack.c.bf16 %v4229, %v4228
      %v4273 = vpack.c.bf16 %v4231, %v4230
      %v4274 = vpack.c.bf16 %v4233, %v4232
      %v4275 = vpack.c.bf16 %v4235, %v4234
      %v4276 = vpack.c.bf16 %v4237, %v4236
      %v4277 = vpack.c.bf16 %v4239, %v4238
      %v4278 = vpack.c.bf16 %v4241, %v4240
      %v4279 = vpack.c.bf16 %v4243, %v4242
      %v4316 = vunpack.c.l.b16 %v4244
      %v4317 = vunpack.c.h.b16 %v4244
      %v4318 = vunpack.c.l.b16 %v4245
      %v4319 = vunpack.c.h.b16 %v4245
      %v4320 = vunpack.c.l.b16 %v4246
      %v4321 = vunpack.c.h.b16 %v4246
      %v4322 = vunpack.c.l.b16 %v4247
      %v4323 = vunpack.c.h.b16 %v4247
      %v4324 = vunpack.c.l.b16 %v4248
      %v4325 = vunpack.c.h.b16 %v4248
      %v4326 = vunpack.c.l.b16 %v4249
      %v4327 = vunpack.c.h.b16 %v4249
      %v4328 = vunpack.c.l.b16 %v4250
      %v4329 = vunpack.c.h.b16 %v4250
      %v4330 = vunpack.c.l.b16 %v4251
      %v4331 = vunpack.c.h.b16 %v4251
      %v4332 = vunpack.c.l.b16 %v4252
      %v4333 = vunpack.c.h.b16 %v4252
      %v4334 = vunpack.c.l.b16 %v4253
      %v4335 = vunpack.c.h.b16 %v4253
      %v4336 = vunpack.c.l.b16 %v4254
      %v4337 = vunpack.c.h.b16 %v4254
      %v4338 = vunpack.c.l.b16 %v4255
      %v4339 = vunpack.c.h.b16 %v4255
      %v4340 = vunpack.c.l.b16 %v4256
      %v4341 = vunpack.c.h.b16 %v4256
      %v4342 = vunpack.c.l.b16 %v4257
      %v4343 = vunpack.c.h.b16 %v4257
      %v4344 = vunpack.c.l.b16 %v4258
      %v4345 = vunpack.c.h.b16 %v4258
      %v4346 = vunpack.c.l.b16 %v4259
      %v4347 = vunpack.c.h.b16 %v4259
      %v4348 = vunpack.c.l.b16 %v4260
      %v4349 = vunpack.c.h.b16 %v4260
      %v4350 = vunpack.c.l.b16 %v4261
      %v4351 = vunpack.c.h.b16 %v4261
      %v4352 = vunpack.c.l.b16 %v4262
      %v4353 = vunpack.c.h.b16 %v4262
      %v4354 = vunpack.c.l.b16 %v4263
      %v4355 = vunpack.c.h.b16 %v4263
      %v4356 = vunpack.c.l.b16 %v4264
      %v4357 = vunpack.c.h.b16 %v4264
      %v4358 = vunpack.c.l.b16 %v4265
      %v4359 = vunpack.c.h.b16 %v4265
      %v4360 = vunpack.c.l.b16 %v4266
      %v4361 = vunpack.c.h.b16 %v4266
      %v4362 = vunpack.c.l.b16 %v4267
      %v4363 = vunpack.c.h.b16 %v4267
      %v4364 = vunpack.c.l.b16 %v4268
      %v4365 = vunpack.c.h.b16 %v4268
      %v4366 = vunpack.c.l.b16 %v4269
      %v4367 = vunpack.c.h.b16 %v4269
      %v4368 = vunpack.c.l.b16 %v4270
      %v4369 = vunpack.c.h.b16 %v4270
      %v4370 = vunpack.c.l.b16 %v4271
      %v4371 = vunpack.c.h.b16 %v4271
      %v4372 = vunpack.c.l.b16 %v4272
      %v4373 = vunpack.c.h.b16 %v4272
      %v4374 = vunpack.c.l.b16 %v4273
      %v4375 = vunpack.c.h.b16 %v4273
      %v4376 = vunpack.c.l.b16 %v4274
      %v4377 = vunpack.c.h.b16 %v4274
      %v4378 = vunpack.c.l.b16 %v4275
      %v4379 = vunpack.c.h.b16 %v4275
      %v4380 = vunpack.c.l.b16 %v4276
      %v4381 = vunpack.c.h.b16 %v4276
      %v4382 = vunpack.c.l.b16 %v4277
      %v4383 = vunpack.c.h.b16 %v4277
      %v4384 = vunpack.c.l.b16 %v4278
      %v4385 = vunpack.c.h.b16 %v4278
      %v4386 = vunpack.c.l.b16 %v4279
      %v4387 = vunpack.c.h.b16 %v4279
      %v4388 = vpack.c.b16 %v4316, %v4316
      %v4389 = vpack.c.b16 %v4317, %v4317
      %v4390 = vpack.c.b16 %v4318, %v4318
      %v4391 = vpack.c.b16 %v4319, %v4319
      %v4392 = vpack.c.b16 %v4320, %v4320
      %v4393 = vpack.c.b16 %v4321, %v4321
      %v4394 = vpack.c.b16 %v4322, %v4322
      %v4395 = vpack.c.b16 %v4323, %v4323
      %v4396 = vpack.c.b16 %v4324, %v4324
      %v4397 = vpack.c.b16 %v4325, %v4325
      %v4398 = vpack.c.b16 %v4326, %v4326
      %v4399 = vpack.c.b16 %v4327, %v4327
      %v4400 = vpack.c.b16 %v4328, %v4328
      %v4401 = vpack.c.b16 %v4329, %v4329
      %v4402 = vpack.c.b16 %v4330, %v4330
      %v4403 = vpack.c.b16 %v4331, %v4331
      %v4404 = vpack.c.b16 %v4332, %v4332
      %v4405 = vpack.c.b16 %v4333, %v4333
      %v4406 = vpack.c.b16 %v4334, %v4334
      %v4407 = vpack.c.b16 %v4335, %v4335
      %v4408 = vpack.c.b16 %v4336, %v4336
      %v4409 = vpack.c.b16 %v4337, %v4337
      %v4410 = vpack.c.b16 %v4338, %v4338
      %v4411 = vpack.c.b16 %v4339, %v4339
      %v4412 = vpack.c.b16 %v4340, %v4340
      %v4413 = vpack.c.b16 %v4341, %v4341
      %v4414 = vpack.c.b16 %v4342, %v4342
      %v4415 = vpack.c.b16 %v4343, %v4343
      %v4416 = vpack.c.b16 %v4344, %v4344
      %v4417 = vpack.c.b16 %v4345, %v4345
      %v4418 = vpack.c.b16 %v4346, %v4346
      %v4419 = vpack.c.b16 %v4347, %v4347
      %v4420 = vpack.c.b16 %v4348, %v4348
      %v4421 = vpack.c.b16 %v4349, %v4349
      %v4422 = vpack.c.b16 %v4350, %v4350
      %v4423 = vpack.c.b16 %v4351, %v4351
      %v4424 = vpack.c.b16 %v4352, %v4352
      %v4425 = vpack.c.b16 %v4353, %v4353
      %v4426 = vpack.c.b16 %v4354, %v4354
      %v4427 = vpack.c.b16 %v4355, %v4355
      %v4428 = vpack.c.b16 %v4356, %v4356
      %v4429 = vpack.c.b16 %v4357, %v4357
      %v4430 = vpack.c.b16 %v4358, %v4358
      %v4431 = vpack.c.b16 %v4359, %v4359
      %v4432 = vpack.c.b16 %v4360, %v4360
      %v4433 = vpack.c.b16 %v4361, %v4361
      %v4434 = vpack.c.b16 %v4362, %v4362
      %v4435 = vpack.c.b16 %v4363, %v4363
      %v4436 = vpack.c.b16 %v4364, %v4364
      %v4437 = vpack.c.b16 %v4365, %v4365
      %v4438 = vpack.c.b16 %v4366, %v4366
      %v4439 = vpack.c.b16 %v4367, %v4367
      %v4440 = vpack.c.b16 %v4368, %v4368
      %v4441 = vpack.c.b16 %v4369, %v4369
      %v4442 = vpack.c.b16 %v4370, %v4370
      %v4443 = vpack.c.b16 %v4371, %v4371
      %v4444 = vpack.c.b16 %v4372, %v4372
      %v4445 = vpack.c.b16 %v4373, %v4373
      %v4446 = vpack.c.b16 %v4374, %v4374
      %v4447 = vpack.c.b16 %v4375, %v4375
      %v4448 = vpack.c.b16 %v4376, %v4376
      %v4449 = vpack.c.b16 %v4377, %v4377
      %v4450 = vpack.c.b16 %v4378, %v4378
      %v4451 = vpack.c.b16 %v4379, %v4379
      %v4452 = vpack.c.b16 %v4380, %v4380
      %v4453 = vpack.c.b16 %v4381, %v4381
      %v4454 = vpack.c.b16 %v4382, %v4382
      %v4455 = vpack.c.b16 %v4383, %v4383
      %v4456 = vpack.c.b16 %v4384, %v4384
      %v4457 = vpack.c.b16 %v4385, %v4385
      %v4458 = vpack.c.b16 %v4386, %v4386
      %v4459 = vpack.c.b16 %v4387, %v4387
      %4532 = vst [vmem:[%s250] sm:$0xf] %v4388
      %4533 = vst [vmem:[%s250 + $0x4] sm:$0xf] %v4389
      %4534 = vst [vmem:[%s250 + $0x8] sm:$0xf] %v4390
      %4535 = vst [vmem:[%s250 + $0xc] sm:$0xf] %v4391
      %4536 = vst [vmem:[%s250 + $0x10] sm:$0xf] %v4392
      %4537 = vst [vmem:[%s250 + $0x14] sm:$0xf] %v4393
      %4538 = vst [vmem:[%s250 + $0x18] sm:$0xf] %v4394
      %4539 = vst [vmem:[%s250 + $0x1c] sm:$0xf] %v4395
      %4540 = vst [vmem:[%s250 + $0x20] sm:$0xf] %v4396
      %4541 = vst [vmem:[%s250 + $0x24] sm:$0xf] %v4397
      %4542 = vst [vmem:[%s250 + $0x28] sm:$0xf] %v4398
      %4543 = vst [vmem:[%s250 + $0x2c] sm:$0xf] %v4399
      %4544 = vst [vmem:[%s250 + $0x30] sm:$0xf] %v4400
      %4545 = vst [vmem:[%s250 + $0x34] sm:$0xf] %v4401
      %4546 = vst [vmem:[%s250 + $0x38] sm:$0xf] %v4402
      %4547 = vst [vmem:[%s250 + $0x3c] sm:$0xf] %v4403
      %4548 = vst [vmem:[%s250 + $0x40] sm:$0xf] %v4404
      %4549 = vst [vmem:[%s250 + $0x44] sm:$0xf] %v4405
      %4550 = vst [vmem:[%s250 + $0x48] sm:$0xf] %v4406
      %4551 = vst [vmem:[%s250 + $0x4c] sm:$0xf] %v4407
      %4552 = vst [vmem:[%s250 + $0x50] sm:$0xf] %v4408
      %4553 = vst [vmem:[%s250 + $0x54] sm:$0xf] %v4409
      %4554 = vst [vmem:[%s250 + $0x58] sm:$0xf] %v4410
      %4555 = vst [vmem:[%s250 + $0x5c] sm:$0xf] %v4411
      %4556 = vst [vmem:[%s250 + $0x60] sm:$0xf] %v4412
      %4557 = vst [vmem:[%s250 + $0x64] sm:$0xf] %v4413
      %4558 = vst [vmem:[%s250 + $0x68] sm:$0xf] %v4414
      %4559 = vst [vmem:[%s250 + $0x6c] sm:$0xf] %v4415
      %4560 = vst [vmem:[%s250 + $0x70] sm:$0xf] %v4416
      %4561 = vst [vmem:[%s250 + $0x74] sm:$0xf] %v4417
      %4562 = vst [vmem:[%s250 + $0x78] sm:$0xf] %v4418
      %4563 = vst [vmem:[%s250 + $0x7c] sm:$0xf] %v4419
      %4564 = vst [vmem:[%s250 + $0x80] sm:$0xf] %v4420
      %4565 = vst [vmem:[%s250 + $0x84] sm:$0xf] %v4421
      %4566 = vst [vmem:[%s250 + $0x88] sm:$0xf] %v4422
      %4567 = vst [vmem:[%s250 + $0x8c] sm:$0xf] %v4423
      %4568 = vst [vmem:[%s250 + $0x90] sm:$0xf] %v4424
      %4569 = vst [vmem:[%s250 + $0x94] sm:$0xf] %v4425
      %4570 = vst [vmem:[%s250 + $0x98] sm:$0xf] %v4426
      %4571 = vst [vmem:[%s250 + $0x9c] sm:$0xf] %v4427
      %4572 = vst [vmem:[%s250 + $0xa0] sm:$0xf] %v4428
      %4573 = vst [vmem:[%s250 + $0xa4] sm:$0xf] %v4429
      %4574 = vst [vmem:[%s250 + $0xa8] sm:$0xf] %v4430
      %4575 = vst [vmem:[%s250 + $0xac] sm:$0xf] %v4431
      %4576 = vst [vmem:[%s250 + $0xb0] sm:$0xf] %v4432
      %4577 = vst [vmem:[%s250 + $0xb4] sm:$0xf] %v4433
      %4578 = vst [vmem:[%s250 + $0xb8] sm:$0xf] %v4434
      %4579 = vst [vmem:[%s250 + $0xbc] sm:$0xf] %v4435
      %4580 = vst [vmem:[%s250 + $0xc0] sm:$0xf] %v4436
      %4581 = vst [vmem:[%s250 + $0xc4] sm:$0xf] %v4437
      %4582 = vst [vmem:[%s250 + $0xc8] sm:$0xf] %v4438
      %4583 = vst [vmem:[%s250 + $0xcc] sm:$0xf] %v4439
      %4584 = vst [vmem:[%s250 + $0xd0] sm:$0xf] %v4440
      %4585 = vst [vmem:[%s250 + $0xd4] sm:$0xf] %v4441
      %4586 = vst [vmem:[%s250 + $0xd8] sm:$0xf] %v4442
      %4587 = vst [vmem:[%s250 + $0xdc] sm:$0xf] %v4443
      %4588 = vst [vmem:[%s250 + $0xe0] sm:$0xf] %v4444
      %4589 = vst [vmem:[%s250 + $0xe4] sm:$0xf] %v4445
      %4590 = vst [vmem:[%s250 + $0xe8] sm:$0xf] %v4446
      %4591 = vst [vmem:[%s250 + $0xec] sm:$0xf] %v4447
      %4592 = vst [vmem:[%s250 + $0xf0] sm:$0xf] %v4448
      %4593 = vst [vmem:[%s250 + $0xf4] sm:$0xf] %v4449
      %4594 = vst [vmem:[%s250 + $0xf8] sm:$0xf] %v4450
      %4595 = vst [vmem:[%s250 + $0xfc] sm:$0xf] %v4451
      %4596 = vst [vmem:[%s250 + $0x100] sm:$0xf] %v4452
      %4597 = vst [vmem:[%s250 + $0x104] sm:$0xf] %v4453
      %4598 = vst [vmem:[%s250 + $0x108] sm:$0xf] %v4454
      %4599 = vst [vmem:[%s250 + $0x10c] sm:$0xf] %v4455
      %4600 = vst [vmem:[%s250 + $0x110] sm:$0xf] %v4456
      %4601 = vst [vmem:[%s250 + $0x114] sm:$0xf] %v4457
      %4602 = vst [vmem:[%s250 + $0x118] sm:$0xf] %v4458
      %4603 = vst [vmem:[%s250 + $0x11c] sm:$0xf] %v4459
      %s4604 = smul.u32 72, %s19
      %p4605 = scmp.lt.s32.totalorder %s4604, 143
      %s4606 = scalar_select %p4605, %s4604, 143
      %p4607 = scmp.lt.s32.totalorder %s20, 0
      %s4608 = scalar_select %p4607, %s20, 0
      %s4609 = sadd.s32 %s4608, %s4606
      %s4610 = smul.addr %s4609, 4
      %s4611 = scalar_lea.vmem %s4, %s4610
      // Predicated region
      $region37: #{vgg_backbone_forward.10} parent=35 // pred_check
        %p4612 = pneg %p146
      $region38: #{vgg_backbone_forward.10} parent=35 // pred_check_branch
        %4614 = sbr.rel (%p4612) target = $region40
      $region39: #{vgg_backbone_forward.10} parent=35 // pred_region
        %s4615 = smul.u32 72, %s19
      $region40: #{vgg_backbone_forward.10} parent=35 // pred_fallthru
        _
    $region36: #{vgg_backbone_forward.10} parent=5 // pred_fallthru
      _
    %p4616 = scmp.le.s32.totalorder 2, %s10
    // Predicated region
    $region41: #{vgg_backbone_forward.10} parent=5 // pred_check
      %p4617 = pneg %p4616
    $region42: #{vgg_backbone_forward.10} parent=5 // pred_check_branch
      %4619 = sbr.rel (%p4617) target = $region44
    $region43: #{vgg_backbone_forward.10} parent=5 // pred_region
      %s4620 = ssub.s32 %s10, 2
      // Predicated region
      $region45: #{vgg_backbone_forward.10} parent=43 // pred_check
        %p4621 = pneg %p152
      $region46: #{vgg_backbone_forward.10} parent=43 // pred_check_branch
        %4623 = sbr.rel (%p4621) target = $region48
      $region47: #{vgg_backbone_forward.10} parent=43 // pred_region
        %s4624 = smul.u32 72, %s21
        %p4625 = scmp.lt.s32.totalorder %s4624, 143
        %s4626 = scalar_select %p4625, %s4624, 143
        %p4627 = scmp.lt.s32.totalorder %s22, 0
        %s4628 = scalar_select %p4627, %s22, 0
        %s4629 = sadd.s32 %s4628, %s4626
        %s4630 = smul.addr %s4629, 4
        %s4631 = scalar_lea.vmem %s4, %s4630
      $region48: #{vgg_backbone_forward.10} parent=43 // pred_fallthru
        _
    $region44: #{vgg_backbone_forward.10} parent=5 // pred_fallthru
      _
  $region6: #{vgg_backbone_forward.10} parent=0 // loop_footer
    %s14 = sadd.s32 1, %s10
  $region7: #{vgg_backbone_forward.10} parent=0 // loop_footer_branch
    %9 = sbr.rel target = $region3
  $region8: #{vgg_backbone_forward.10} parent=0 // loop_exit
    _

// kernel: vgg_backbone_forward.16
$region0: #{vgg_backbone_forward.16}
  #allocation0 [shape = 'u32[]', space=smem, size = 0x4, offset = 0x4, fixed_abs, tag = 'smem constant byte address 0x4 - core index']
  #allocation1 [shape = 'u32[144,128]{1,0:T(1,128)}', space=vmem, size = 0x12000, scoped, tag = 'internal scratch']
  %s0 = inlined_call_operand.vmem [shape: bf16[8,2,4,256], index: 0, kind: input, shape index: {}]
  %s1 = inlined_call_operand.vmem [shape: bf16[8,4,128], index: 1, kind: output, shape index: {}]
  %s2 = sld [smem:[#allocation0]]
  $region37: #{vgg_backbone_forward.16} parent=0
    _
  %s4 = ssub.s32 1, %s2
  %s5 = scalar_select 0, %s4, %s2
  loop: start=0, step=1, limit=4
  $region2: #{vgg_backbone_forward.16} parent=0 // loop_pre_header
    _
  $region3: #{vgg_backbone_forward.16} parent=0 // loop_header
    %s7 = sphi 0, %s11
    %p8 = scmp.ge.s32.totalorder %s7, 4
    %s17 = sphi 0, %s19
    %s20 = sphi 0, %s17
    %s21 = sphi 0, %s20
    %s37 = sphi 0, %s21
    %s43 = sphi 0, %s45
    %s46 = sphi 0, %s43
    %s47 = sphi 0, %s46
    %s63 = sphi 0, %s47
  $region4: #{vgg_backbone_forward.16} parent=0 // loop_header_branch
    %10 = sbr.rel (%p8) target = $region8
  $region5: #{vgg_backbone_forward.16} parent=0 // loop_body
    %s12 = ssub.s32 %s7, 1
    %s13 = ssub.s32 %s7, 2
    %s14 = sadd.s32 %s7, 1
    %s15 = ssub.s32 %s7, %s14
    %p16 = scmp.eq.s32.totalorder %s15, 0
    %s18 = sadd.s32 %s17, 1
    %s19 = scalar_select %p16, %s17, %s18
    %p22 = pneg %p16
    %p23 = scmp.eq.s32.totalorder %s7, 1
    %p24 = por %p22, %p23
    %p25 = scmp.ne.s32.totalorder %s17, %s20
    %p26 = scmp.eq.s32.totalorder %s7, 0
    %p27 = por %p25, %p26
    %p28 = scmp.ne.s32.totalorder %s17, %s20
    %p29 = scmp.eq.s32.totalorder %s12, 1
    %p30 = por %p28, %p29
    %p31 = scmp.ne.s32.totalorder %s20, %s21
    %p32 = scmp.eq.s32.totalorder %s12, 0
    %p33 = por %p31, %p32
    %p34 = scmp.ne.s32.totalorder %s20, %s21
    %p35 = scmp.eq.s32.totalorder %s13, 1
    %p36 = por %p34, %p35
    %p38 = scmp.ne.s32.totalorder %s21, %s37
    %p39 = scmp.eq.s32.totalorder %s13, 0
    %p40 = por %p38, %p39
    %s41 = ssub.s32 %s7, %s14
    %p42 = scmp.eq.s32.totalorder %s41, 0
    %s44 = sadd.s32 %s43, 1
    %s45 = scalar_select %p42, %s43, %s44
    %p48 = pneg %p42
    %p49 = scmp.eq.s32.totalorder %s7, 1
    %p50 = por %p48, %p49
    %p51 = scmp.ne.s32.totalorder %s43, %s46
    %p52 = scmp.eq.s32.totalorder %s7, 0
    %p53 = por %p51, %p52
    %p54 = scmp.ne.s32.totalorder %s43, %s46
    %p55 = scmp.eq.s32.totalorder %s12, 1
    %p56 = por %p54, %p55
    %p57 = scmp.ne.s32.totalorder %s46, %s47
    %p58 = scmp.eq.s32.totalorder %s12, 0
    %p59 = por %p57, %p58
    %p60 = scmp.ne.s32.totalorder %s46, %s47
    %p61 = scmp.eq.s32.totalorder %s13, 1
    %p62 = por %p60, %p61
    %p64 = scmp.ne.s32.totalorder %s47, %s63
    %p65 = scmp.eq.s32.totalorder %s13, 0
    %p66 = por %p64, %p65
    %p67 = scmp.le.s32.totalorder 1, %s7
    %p68 = scmp.lt.s32.totalorder %s7, 3
    %p69 = pnand %p67, %p68
    %p70 = pneg %p69
    // Predicated region
    $region9: #{vgg_backbone_forward.16} parent=5 // pred_check
      _
    $region10: #{vgg_backbone_forward.16} parent=5 // pred_check_branch
      %72 = sbr.rel (%p69) target = $region12
    $region11: #{vgg_backbone_forward.16} parent=5 // pred_region
      %s73 = ssub.s32 %s7, 1
    $region12: #{vgg_backbone_forward.16} parent=5 // pred_fallthru
      _
    %p74 = scmp.lt.s32.totalorder %s7, 2
    // Predicated region
    $region13: #{vgg_backbone_forward.16} parent=5 // pred_check
      %p75 = pneg %p74
    $region14: #{vgg_backbone_forward.16} parent=5 // pred_check_branch
      %77 = sbr.rel (%p75) target = $region16
    $region15: #{vgg_backbone_forward.16} parent=5 // pred_region
      // Predicated region
      $region17: #{vgg_backbone_forward.16} parent=15 // pred_check
        %p78 = pneg %p27
      $region18: #{vgg_backbone_forward.16} parent=15 // pred_check_branch
        %80 = sbr.rel (%p78) target = $region20
      $region19: #{vgg_backbone_forward.16} parent=15 // pred_region
        %s81 = smul.u32 4, %s7
        %p82 = scmp.lt.s32.totalorder %s81, 7
        %s83 = scalar_select %p82, %s81, 7
        %s84 = smul.addr %s83, 4
        %s85 = smul.addr %s84, 2
        %s86 = scalar_lea.vmem %s0, %s85
        %s87 = smul.u32 4, %s7
      $region20: #{vgg_backbone_forward.16} parent=15 // pred_fallthru
        _
    $region16: #{vgg_backbone_forward.16} parent=5 // pred_fallthru
      _
    %p88 = scmp.le.s32.totalorder 1, %s7
    %p89 = scmp.lt.s32.totalorder %s7, 3
    %p90 = pnand %p88, %p89
    %p91 = pneg %p90
    // Predicated region
    $region21: #{vgg_backbone_forward.16} parent=5 // pred_check
      _
    $region22: #{vgg_backbone_forward.16} parent=5 // pred_check_branch
      %93 = sbr.rel (%p90) target = $region24
    $region23: #{vgg_backbone_forward.16} parent=5 // pred_region
      %s94 = ssub.s32 %s7, 1
      %s95 = smul.u32 4, %s12
      %p96 = scmp.lt.s32.totalorder %s95, 7
      %s97 = scalar_select %p96, %s95, 7
      %s98 = smul.addr %s97, 4
      %s99 = smul.addr %s98, 2
      %s100 = scalar_lea.vmem %s0, %s99
      %p101 = pneg %p33
      %p102 = pneg %p30
      %p103 = pneg %p59
      %p104 = pneg %p56
      %s105 = smul.u32 4, %s12
      %p106 = scmp.lt.s32.totalorder %s105, 7
      %s107 = scalar_select %p106, %s105, 7
      %s108 = smul.addr %s107, 2
      %s109 = scalar_lea.vmem %s1, %s108
      %s110 = smul.u32 4, %s12
      %p111 = scmp.lt.s32.totalorder %s110, 7
      %s112 = scalar_select %p111, %s110, 7
      %s113 = smul.addr %s112, 4
      %s114 = smul.addr %s113, 2
      %s115 = scalar_lea.vmem %s0, %s114
      %s116 = smul.u32 4, %s12
      %s117 = smul.u32 4, %s12
      %p118 = scmp.lt.s32.totalorder %s117, 7
      %s119 = scalar_select %p118, %s117, 7
      %s120 = smul.addr %s119, 2
      %s121 = scalar_lea.vmem %s1, %s120
      %s122 = smul.u32 4, %s12
      %v123 = vld [vmem:[%s115] sm:$0xf]
      %v124 = vld [vmem:[%s115 + $0x4] sm:$0xf]
      %v125 = vld [vmem:[%s115 + $0x8] sm:$0xf]
      %v126 = vld [vmem:[%s115 + $0xc] sm:$0xf]
      %v127 = vld [vmem:[%s115 + $0x10] sm:$0xf]
      %v128 = vld [vmem:[%s115 + $0x14] sm:$0xf]
      %v129 = vld [vmem:[%s115 + $0x18] sm:$0xf]
      %v130 = vld [vmem:[%s115 + $0x1c] sm:$0xf]
      %v131 = vmax.bf16 %v123, %v124
      %v132 = vmax.bf16 %v125, %v126
      %v133 = vmax.bf16 %v127, %v128
      %v134 = vmax.bf16 %v129, %v130
      %v139 = vrot.slane %v131, 2
      %v140 = vrot.slane %v132, 2
      %v141 = vrot.slane %v133, 2
      %v142 = vrot.slane %v134, 2
      %v147 = vmax.bf16 %v131, %v139
      %v148 = vmax.bf16 %v132, %v140
      %v149 = vmax.bf16 %v133, %v141
      %v150 = vmax.bf16 %v134, %v142
      %151 = vst [vmem:[%s121] sm:$0x3] %v147
      %152 = vst [vmem:[%s121 + $0x2] sm:$0x3] %v148
      %153 = vst [vmem:[%s121 + $0x4] sm:$0x3] %v149
      %154 = vst [vmem:[%s121 + $0x6] sm:$0x3] %v150
      %s155 = smul.u32 4, %s12
      %p156 = scmp.lt.s32.totalorder %s155, 7
      %s157 = scalar_select %p156, %s155, 7
      %s158 = smul.addr %s157, 2
      %s159 = scalar_lea.vmem %s1, %s158
      // Predicated region
      $region25: #{vgg_backbone_forward.16} parent=23 // pred_check
        %p160 = pneg %p56
      $region26: #{vgg_backbone_forward.16} parent=23 // pred_check_branch
        %162 = sbr.rel (%p160) target = $region28
      $region27: #{vgg_backbone_forward.16} parent=23 // pred_region
        %s163 = smul.u32 4, %s12
      $region28: #{vgg_backbone_forward.16} parent=23 // pred_fallthru
        _
    $region24: #{vgg_backbone_forward.16} parent=5 // pred_fallthru
      _
    %p164 = scmp.le.s32.totalorder 2, %s7
    // Predicated region
    $region29: #{vgg_backbone_forward.16} parent=5 // pred_check
      %p165 = pneg %p164
    $region30: #{vgg_backbone_forward.16} parent=5 // pred_check_branch
      %167 = sbr.rel (%p165) target = $region32
    $region31: #{vgg_backbone_forward.16} parent=5 // pred_region
      %s168 = ssub.s32 %s7, 2
      // Predicated region
      $region33: #{vgg_backbone_forward.16} parent=31 // pred_check
        %p169 = pneg %p62
      $region34: #{vgg_backbone_forward.16} parent=31 // pred_check_branch
        %171 = sbr.rel (%p169) target = $region36
      $region35: #{vgg_backbone_forward.16} parent=31 // pred_region
        %s172 = smul.u32 4, %s13
        %p173 = scmp.lt.s32.totalorder %s172, 7
        %s174 = scalar_select %p173, %s172, 7
        %s175 = smul.addr %s174, 2
        %s176 = scalar_lea.vmem %s1, %s175
      $region36: #{vgg_backbone_forward.16} parent=31 // pred_fallthru
        _
    $region32: #{vgg_backbone_forward.16} parent=5 // pred_fallthru
      _
  $region6: #{vgg_backbone_forward.16} parent=0 // loop_footer
    %s11 = sadd.s32 1, %s7
  $region7: #{vgg_backbone_forward.16} parent=0 // loop_footer_branch
    %6 = sbr.rel target = $region3
  $region8: #{vgg_backbone_forward.16} parent=0 // loop_exit
    _

// kernel: vgg_backbone_forward.13
$region0: #{vgg_backbone_forward.13}
  #allocation0 [shape = 'u32[]', space=smem, size = 0x4, offset = 0x4, fixed_abs, tag = 'smem constant byte address 0x4 - core index']
  #allocation1 [shape = 'u32[144,128]{1,0:T(1,128)}', space=vmem, size = 0x12000, scoped, tag = 'internal scratch']
  %s0 = inlined_call_operand.vmem [shape: bf16[512,128], index: 0, kind: input, shape index: {}]
  %s1 = inlined_call_operand.vmem [shape: bf16[3,384,128], index: 1, kind: input, shape index: {}]
  %s2 = inlined_call_operand.vmem [shape: f32[1,128], index: 2, kind: input, shape index: {}]
  %s3 = inlined_call_operand.vmem [shape: f32[256,1], index: 3, kind: input, shape index: {}]
  %s4 = inlined_call_operand.vmem [shape: bf16[512,128], index: 4, kind: output, shape index: {}]
  %s5 = sld [smem:[#allocation0]]
  $region49: #{vgg_backbone_forward.13} parent=0
    _
  %s7 = ssub.s32 1, %s5
  %s8 = scalar_select 0, %s7, %s5
  loop: start=0, step=1, limit=4
  $region2: #{vgg_backbone_forward.13} parent=0 // loop_pre_header
    _
  $region3: #{vgg_backbone_forward.13} parent=0 // loop_header
    %s10 = sphi 0, %s14
    %p11 = scmp.ge.s32.totalorder %s10, 4
    %s17 = sphi 0, %s29
    %s18 = sphi 0, %s25
    %s19 = sphi 0, %s17
    %s20 = sphi 0, %s18
    %s21 = sphi 0, %s19
    %s22 = sphi 0, %s20
    %s32 = sphi 0, %s34
    %s35 = sphi 0, %s32
    %s36 = sphi 0, %s35
    %s52 = sphi 0, %s36
    %s58 = sphi 0, %s60
    %s61 = sphi 0, %s58
    %s62 = sphi 0, %s61
    %s78 = sphi 0, %s62
    %s84 = sphi 0, %s86
    %s87 = sphi 0, %s84
    %s88 = sphi 0, %s87
    %s104 = sphi 0, %s88
    %s108 = sphi 0, %s108
    %s110 = sphi 0, %s108
    %s111 = sphi 0, %s110
    %s125 = sphi 0, %s111
    %s133 = sphi 0, %s135
    %s136 = sphi 0, %s133
    %s137 = sphi 0, %s136
    %s153 = sphi 0, %s137
  $region4: #{vgg_backbone_forward.13} parent=0 // loop_header_branch
    %13 = sbr.rel (%p11) target = $region8
  $region5: #{vgg_backbone_forward.13} parent=0 // loop_body
    %s15 = ssub.s32 %s10, 1
    %s16 = ssub.s32 %s10, 2
    %s23 = sadd.s32 1, %s18
    %p24 = scmp.ge.s32.totalorder %s23, 1
    %s25 = scalar_select %p24, 0, %s23
    %s26 = sadd.s32 1, %s17
    %s27 = scalar_select %p24, %s26, %s17
    %p28 = scmp.ge.s32.totalorder %s27, 2
    %s29 = scalar_select %p28, 0, %s27
    %s30 = ssub.s32 %s17, %s29
    %p31 = scmp.eq.s32.totalorder %s30, 0
    %s33 = sadd.s32 %s32, 1
    %s34 = scalar_select %p31, %s32, %s33
    %p37 = pneg %p31
    %p38 = scmp.eq.s32.totalorder %s10, 1
    %p39 = por %p37, %p38
    %p40 = scmp.ne.s32.totalorder %s32, %s35
    %p41 = scmp.eq.s32.totalorder %s10, 0
    %p42 = por %p40, %p41
    %p43 = scmp.ne.s32.totalorder %s32, %s35
    %p44 = scmp.eq.s32.totalorder %s15, 1
    %p45 = por %p43, %p44
    %p46 = scmp.ne.s32.totalorder %s35, %s36
    %p47 = scmp.eq.s32.totalorder %s15, 0
    %p48 = por %p46, %p47
    %p49 = scmp.ne.s32.totalorder %s35, %s36
    %p50 = scmp.eq.s32.totalorder %s16, 1
    %p51 = por %p49, %p50
    %p53 = scmp.ne.s32.totalorder %s36, %s52
    %p54 = scmp.eq.s32.totalorder %s16, 0
    %p55 = por %p53, %p54
    %s56 = ssub.s32 %s18, %s25
    %p57 = scmp.eq.s32.totalorder %s56, 0
    %s59 = sadd.s32 %s58, 1
    %s60 = scalar_select %p57, %s58, %s59
    %p63 = pneg %p57
    %p64 = scmp.eq.s32.totalorder %s10, 1
    %p65 = por %p63, %p64
    %p66 = scmp.ne.s32.totalorder %s58, %s61
    %p67 = scmp.eq.s32.totalorder %s10, 0
    %p68 = por %p66, %p67
    %p69 = scmp.ne.s32.totalorder %s58, %s61
    %p70 = scmp.eq.s32.totalorder %s15, 1
    %p71 = por %p69, %p70
    %p72 = scmp.ne.s32.totalorder %s61, %s62
    %p73 = scmp.eq.s32.totalorder %s15, 0
    %p74 = por %p72, %p73
    %p75 = scmp.ne.s32.totalorder %s61, %s62
    %p76 = scmp.eq.s32.totalorder %s16, 1
    %p77 = por %p75, %p76
    %p79 = scmp.ne.s32.totalorder %s62, %s78
    %p80 = scmp.eq.s32.totalorder %s16, 0
    %p81 = por %p79, %p80
    %s82 = ssub.s32 %s18, %s25
    %p83 = scmp.eq.s32.totalorder %s82, 0
    %s85 = sadd.s32 %s84, 1
    %s86 = scalar_select %p83, %s84, %s85
    %p89 = pneg %p83
    %p90 = scmp.eq.s32.totalorder %s10, 1
    %p91 = por %p89, %p90
    %p92 = scmp.ne.s32.totalorder %s84, %s87
    %p93 = scmp.eq.s32.totalorder %s10, 0
    %p94 = por %p92, %p93
    %p95 = scmp.ne.s32.totalorder %s84, %s87
    %p96 = scmp.eq.s32.totalorder %s15, 1
    %p97 = por %p95, %p96
    %p98 = scmp.ne.s32.totalorder %s87, %s88
    %p99 = scmp.eq.s32.totalorder %s15, 0
    %p100 = por %p98, %p99
    %p101 = scmp.ne.s32.totalorder %s87, %s88
    %p102 = scmp.eq.s32.totalorder %s16, 1
    %p103 = por %p101, %p102
    %p105 = scmp.ne.s32.totalorder %s88, %s104
    %p106 = scmp.eq.s32.totalorder %s16, 0
    %p107 = por %p105, %p106
    %s109 = sadd.s32 %s108, 1
    %p112 = scmp.eq.s32.totalorder %s10, 1
    %p113 = scmp.ne.s32.totalorder %s108, %s110
    %p114 = scmp.eq.s32.totalorder %s10, 0
    %p115 = por %p113, %p114
    %p116 = scmp.ne.s32.totalorder %s108, %s110
    %p117 = scmp.eq.s32.totalorder %s15, 1
    %p118 = por %p116, %p117
    %p119 = scmp.ne.s32.totalorder %s110, %s111
    %p120 = scmp.eq.s32.totalorder %s15, 0
    %p121 = por %p119, %p120
    %p122 = scmp.ne.s32.totalorder %s110, %s111
    %p123 = scmp.eq.s32.totalorder %s16, 1
    %p124 = por %p122, %p123
    %p126 = scmp.ne.s32.totalorder %s111, %s125
    %p127 = scmp.eq.s32.totalorder %s16, 0
    %p128 = por %p126, %p127
    %s129 = ssub.s32 %s17, %s29
    %s130 = ssub.s32 %s18, %s25
    %s131 = sor.u32 %s129, %s130
    %p132 = scmp.eq.s32.totalorder %s131, 0
    %s134 = sadd.s32 %s133, 1
    %s135 = scalar_select %p132, %s133, %s134
    %p138 = pneg %p132
    %p139 = scmp.eq.s32.totalorder %s10, 1
    %p140 = por %p138, %p139
    %p141 = scmp.ne.s32.totalorder %s133, %s136
    %p142 = scmp.eq.s32.totalorder %s10, 0
    %p143 = por %p141, %p142
    %p144 = scmp.ne.s32.totalorder %s133, %s136
    %p145 = scmp.eq.s32.totalorder %s15, 1
    %p146 = por %p144, %p145
    %p147 = scmp.ne.s32.totalorder %s136, %s137
    %p148 = scmp.eq.s32.totalorder %s15, 0
    %p149 = por %p147, %p148
    %p150 = scmp.ne.s32.totalorder %s136, %s137
    %p151 = scmp.eq.s32.totalorder %s16, 1
    %p152 = por %p150, %p151
    %p154 = scmp.ne.s32.totalorder %s137, %s153
    %p155 = scmp.eq.s32.totalorder %s16, 0
    %p156 = por %p154, %p155
    %p157 = scmp.le.s32.totalorder 1, %s10
    %p158 = scmp.lt.s32.totalorder %s10, 3
    %p159 = pnand %p157, %p158
    %p160 = pneg %p159
    // Predicated region
    $region9: #{vgg_backbone_forward.13} parent=5 // pred_check
      _
    $region10: #{vgg_backbone_forward.13} parent=5 // pred_check_branch
      %162 = sbr.rel (%p159) target = $region12
    $region11: #{vgg_backbone_forward.13} parent=5 // pred_region
      %s163 = ssub.s32 %s10, 1
      // Predicated region
      $region13: #{vgg_backbone_forward.13} parent=11 // pred_check
        %p164 = pneg %p74
      $region14: #{vgg_backbone_forward.13} parent=11 // pred_check_branch
        %166 = sbr.rel (%p164) target = $region16
      $region15: #{vgg_backbone_forward.13} parent=11 // pred_region
        %p167 = scmp.lt.s32.totalorder %s20, 0
        %s168 = scalar_select %p167, %s20, 0
        %s169 = smul.addr %s168, 4
        %s170 = scalar_lea.vmem %s1, %s169
      $region16: #{vgg_backbone_forward.13} parent=11 // pred_fallthru
        _
      // Predicated region
      $region17: #{vgg_backbone_forward.13} parent=11 // pred_check
        %p171 = pneg %p100
      $region18: #{vgg_backbone_forward.13} parent=11 // pred_check_branch
        %173 = sbr.rel (%p171) target = $region20
      $region19: #{vgg_backbone_forward.13} parent=11 // pred_region
        %p174 = scmp.lt.s32.totalorder %s20, 0
        %s175 = scalar_select %p174, %s20, 0
        %s176 = scalar_lea.vmem %s2, %s175
      $region20: #{vgg_backbone_forward.13} parent=11 // pred_fallthru
        _
      // Predicated region
      $region21: #{vgg_backbone_forward.13} parent=11 // pred_check
        %p177 = pneg %p121
      $region22: #{vgg_backbone_forward.13} parent=11 // pred_check_branch
        %179 = sbr.rel (%p177) target = $region24
      $region23: #{vgg_backbone_forward.13} parent=11 // pred_region
        _
      $region24: #{vgg_backbone_forward.13} parent=11 // pred_fallthru
        _
    $region12: #{vgg_backbone_forward.13} parent=5 // pred_fallthru
      _
    %p180 = scmp.lt.s32.totalorder %s10, 2
    // Predicated region
    $region25: #{vgg_backbone_forward.13} parent=5 // pred_check
      %p181 = pneg %p180
    $region26: #{vgg_backbone_forward.13} parent=5 // pred_check_branch
      %183 = sbr.rel (%p181) target = $region28
    $region27: #{vgg_backbone_forward.13} parent=5 // pred_region
      // Predicated region
      $region29: #{vgg_backbone_forward.13} parent=27 // pred_check
        %p184 = pneg %p42
      $region30: #{vgg_backbone_forward.13} parent=27 // pred_check_branch
        %186 = sbr.rel (%p184) target = $region32
      $region31: #{vgg_backbone_forward.13} parent=27 // pred_region
        %s187 = smul.u32 32, %s17
        %p188 = scmp.lt.s32.totalorder %s187, 63
        %s189 = scalar_select %p188, %s187, 63
        %s190 = smul.addr %s189, 4
        %s191 = scalar_lea.vmem %s0, %s190
        %s192 = smul.u32 32, %s17
      $region32: #{vgg_backbone_forward.13} parent=27 // pred_fallthru
        _
    $region28: #{vgg_backbone_forward.13} parent=5 // pred_fallthru
      _
    %p193 = scmp.le.s32.totalorder 1, %s10
    %p194 = scmp.lt.s32.totalorder %s10, 3
    %p195 = pnand %p193, %p194
    %p196 = pneg %p195
    // Predicated region
    $region33: #{vgg_backbone_forward.13} parent=5 // pred_check
      _
    $region34: #{vgg_backbone_forward.13} parent=5 // pred_check_branch
      %198 = sbr.rel (%p195) target = $region36
    $region35: #{vgg_backbone_forward.13} parent=5 // pred_region
      %s199 = ssub.s32 %s10, 1
      %s200 = smul.u32 32, %s19
      %p201 = scmp.lt.s32.totalorder %s200, 63
      %s202 = scalar_select %p201, %s200, 63
      %s203 = smul.addr %s202, 4
      %s204 = scalar_lea.vmem %s0, %s203
      %p205 = pneg %p48
      %p206 = pneg %p45
      %p207 = scmp.lt.s32.totalorder %s20, 0
      %s208 = scalar_select %p207, %s20, 0
      %s209 = smul.addr %s208, 4
      %s210 = scalar_lea.vmem %s1, %s209
      %p211 = pneg %p74
      %p212 = pneg %p71
      %p213 = scmp.lt.s32.totalorder %s20, 0
      %s214 = scalar_select %p213, %s20, 0
      %s215 = scalar_lea.vmem %s2, %s214
      %p216 = pneg %p100
      %p217 = pneg %p97
      %p218 = pneg %p121
      %p219 = pneg %p118
      %p220 = pneg %p149
      %p221 = pneg %p146
      %s222 = smul.u32 32, %s19
      %p223 = scmp.lt.s32.totalorder %s222, 63
      %s224 = scalar_select %p223, %s222, 63
      %p225 = scmp.lt.s32.totalorder %s20, 0
      %s226 = scalar_select %p225, %s20, 0
      %s227 = sadd.s32 %s226, %s224
      %s228 = smul.addr %s227, 4
      %s229 = scalar_lea.vmem %s4, %s228
      %s230 = smul.u32 32, %s19
      %p231 = scmp.lt.s32.totalorder %s230, 63
      %s232 = scalar_select %p231, %s230, 63
      %s233 = smul.addr %s232, 4
      %s234 = scalar_lea.vmem %s0, %s233
      %s235 = smul.u32 32, %s19
      %p236 = scmp.lt.s32.totalorder %s20, 0
      %s237 = scalar_select %p236, %s20, 0
      %s238 = smul.addr %s237, 4
      %s239 = scalar_lea.vmem %s1, %s238
      %p240 = scmp.lt.s32.totalorder %s20, 0
      %s241 = scalar_select %p240, %s20, 0
      %s242 = scalar_lea.vmem %s2, %s241
      %s243 = smul.u32 32, %s19
      %p244 = scmp.lt.s32.totalorder %s243, 63
      %s245 = scalar_select %p244, %s243, 63
      %p246 = scmp.lt.s32.totalorder %s20, 0
      %s247 = scalar_select %p246, %s20, 0
      %s248 = sadd.s32 %s247, %s245
      %s249 = smul.addr %s248, 4
      %s250 = scalar_lea.vmem %s4, %s249
      %s251 = smul.u32 32, %s19
      %v253 = vld [vmem:[%s234] sm:$0xf]
      %v254 = vld [vmem:[%s234 + $0x4] sm:$0xf]
      %v255 = vld [vmem:[%s234 + $0x8] sm:$0xf]
      %v256 = vld [vmem:[%s234 + $0xc] sm:$0xf]
      %v257 = vld [vmem:[%s234 + $0x10] sm:$0xf]
      %v258 = vld [vmem:[%s234 + $0x14] sm:$0xf]
      %v259 = vld [vmem:[%s234 + $0x18] sm:$0xf]
      %v260 = vld [vmem:[%s234 + $0x1c] sm:$0xf]
      %v261 = vld [vmem:[%s234 + $0x20] sm:$0xf]
      %v262 = vld [vmem:[%s234 + $0x24] sm:$0xf]
      %v263 = vld [vmem:[%s234 + $0x28] sm:$0xf]
      %v264 = vld [vmem:[%s234 + $0x2c] sm:$0xf]
      %v265 = vld [vmem:[%s234 + $0x30] sm:$0xf]
      %v266 = vld [vmem:[%s234 + $0x34] sm:$0xf]
      %v267 = vld [vmem:[%s234 + $0x38] sm:$0xf]
      %v268 = vld [vmem:[%s234 + $0x3c] sm:$0xf]
      %v269 = vld [vmem:[%s234 + $0x40] sm:$0xf]
      %v270 = vld [vmem:[%s234 + $0x44] sm:$0xf]
      %v271 = vld [vmem:[%s234 + $0x48] sm:$0xf]
      %v272 = vld [vmem:[%s234 + $0x4c] sm:$0xf]
      %v273 = vld [vmem:[%s234 + $0x50] sm:$0xf]
      %v274 = vld [vmem:[%s234 + $0x54] sm:$0xf]
      %v275 = vld [vmem:[%s234 + $0x58] sm:$0xf]
      %v276 = vld [vmem:[%s234 + $0x5c] sm:$0xf]
      %v277 = vld [vmem:[%s234 + $0x60] sm:$0xf]
      %v278 = vld [vmem:[%s234 + $0x64] sm:$0xf]
      %v279 = vld [vmem:[%s234 + $0x68] sm:$0xf]
      %v280 = vld [vmem:[%s234 + $0x6c] sm:$0xf]
      %v281 = vld [vmem:[%s234 + $0x70] sm:$0xf]
      %v282 = vld [vmem:[%s234 + $0x74] sm:$0xf]
      %v283 = vld [vmem:[%s234 + $0x78] sm:$0xf]
      %v284 = vld [vmem:[%s234 + $0x7c] sm:$0xf]
      %v285 = vunpack.c.l.bf16 %v253
      %v286 = vunpack.c.l.bf16 %v254
      %v287 = vunpack.c.l.bf16 %v255
      %v288 = vunpack.c.l.bf16 %v256
      %v289 = vunpack.c.l.bf16 %v257
      %v290 = vunpack.c.l.bf16 %v258
      %v291 = vunpack.c.l.bf16 %v259
      %v292 = vunpack.c.l.bf16 %v260
      %v293 = vunpack.c.l.bf16 %v261
      %v294 = vunpack.c.l.bf16 %v262
      %v295 = vunpack.c.l.bf16 %v263
      %v296 = vunpack.c.l.bf16 %v264
      %v297 = vunpack.c.l.bf16 %v265
      %v298 = vunpack.c.l.bf16 %v266
      %v299 = vunpack.c.l.bf16 %v267
      %v300 = vunpack.c.l.bf16 %v268
      %v301 = vunpack.c.l.bf16 %v269
      %v302 = vunpack.c.l.bf16 %v270
      %v303 = vunpack.c.l.bf16 %v271
      %v304 = vunpack.c.l.bf16 %v272
      %v305 = vunpack.c.l.bf16 %v273
      %v306 = vunpack.c.l.bf16 %v274
      %v307 = vunpack.c.l.bf16 %v275
      %v308 = vunpack.c.l.bf16 %v276
      %v309 = vunpack.c.l.bf16 %v277
      %v310 = vunpack.c.l.bf16 %v278
      %v311 = vunpack.c.l.bf16 %v279
      %v312 = vunpack.c.l.bf16 %v280
      %v313 = vunpack.c.l.bf16 %v281
      %v314 = vunpack.c.l.bf16 %v282
      %v315 = vunpack.c.l.bf16 %v283
      %v316 = vunpack.c.l.bf16 %v284
      %v317 = vpack.c.bf16 %v316, %v315
      %v318 = vpack.c.bf16 %v286, %v285
      %v319 = vpack.c.bf16 %v288, %v287
      %v320 = vpack.c.bf16 %v290, %v289
      %v321 = vpack.c.bf16 %v292, %v291
      %v322 = vpack.c.bf16 %v294, %v293
      %v323 = vpack.c.bf16 %v296, %v295
      %v324 = vpack.c.bf16 %v298, %v297
      %v325 = vpack.c.bf16 %v300, %v299
      %v326 = vpack.c.bf16 %v302, %v301
      %v327 = vpack.c.bf16 %v304, %v303
      %v328 = vpack.c.bf16 %v306, %v305
      %v329 = vpack.c.bf16 %v308, %v307
      %v330 = vpack.c.bf16 %v310, %v309
      %v331 = vpack.c.bf16 %v312, %v311
      %v332 = vpack.c.bf16 %v314, %v313
      %v365 = vunpack.c.l.b16 %v253
      %v366 = vunpack.c.l.b16 %v254
      %v367 = vunpack.c.l.b16 %v255
      %v368 = vunpack.c.l.b16 %v256
      %v369 = vunpack.c.l.b16 %v257
      %v370 = vunpack.c.l.b16 %v258
      %v371 = vunpack.c.l.b16 %v259
      %v372 = vunpack.c.l.b16 %v260
      %v373 = vunpack.c.l.b16 %v261
      %v374 = vunpack.c.l.b16 %v262
      %v375 = vunpack.c.l.b16 %v263
      %v376 = vunpack.c.l.b16 %v264
      %v377 = vunpack.c.l.b16 %v265
      %v378 = vunpack.c.l.b16 %v266
      %v379 = vunpack.c.l.b16 %v267
      %v380 = vunpack.c.l.b16 %v268
      %v381 = vunpack.c.l.b16 %v269
      %v382 = vunpack.c.l.b16 %v270
      %v383 = vunpack.c.l.b16 %v271
      %v384 = vunpack.c.l.b16 %v272
      %v385 = vunpack.c.l.b16 %v273
      %v386 = vunpack.c.l.b16 %v274
      %v387 = vunpack.c.l.b16 %v275
      %v388 = vunpack.c.l.b16 %v276
      %v389 = vunpack.c.l.b16 %v277
      %v390 = vunpack.c.l.b16 %v278
      %v391 = vunpack.c.l.b16 %v279
      %v392 = vunpack.c.l.b16 %v280
      %v393 = vunpack.c.l.b16 %v281
      %v394 = vunpack.c.l.b16 %v282
      %v395 = vunpack.c.l.b16 %v283
      %v396 = vunpack.c.l.b16 %v284
      %v397 = vpack.c.b16 %v366, %v365
      %v398 = vpack.c.b16 %v368, %v367
      %v399 = vpack.c.b16 %v370, %v369
      %v400 = vpack.c.b16 %v372, %v371
      %v401 = vpack.c.b16 %v374, %v373
      %v402 = vpack.c.b16 %v376, %v375
      %v403 = vpack.c.b16 %v378, %v377
      %v404 = vpack.c.b16 %v380, %v379
      %v405 = vpack.c.b16 %v382, %v381
      %v406 = vpack.c.b16 %v384, %v383
      %v407 = vpack.c.b16 %v386, %v385
      %v408 = vpack.c.b16 %v388, %v387
      %v409 = vpack.c.b16 %v390, %v389
      %v410 = vpack.c.b16 %v392, %v391
      %v411 = vpack.c.b16 %v394, %v393
      %v412 = vpack.c.b16 %v396, %v395
      %v429 = vld [vmem:[%s239] sm:$0xf]
      %v430 = vld [vmem:[%s239 + $0x4] sm:$0xf]
      %v431 = vld [vmem:[%s239 + $0x8] sm:$0xf]
      %v432 = vld [vmem:[%s239 + $0xc] sm:$0xf]
      %v433 = vld [vmem:[%s239 + $0x10] sm:$0xf]
      %v434 = vld [vmem:[%s239 + $0x14] sm:$0xf]
      %v435 = vld [vmem:[%s239 + $0x18] sm:$0xf]
      %v436 = vld [vmem:[%s239 + $0x1c] sm:$0xf]
      %v437 = vld [vmem:[%s239 + $0x20] sm:$0xf]
      %v438 = vld [vmem:[%s239 + $0x24] sm:$0xf]
      %v439 = vld [vmem:[%s239 + $0x28] sm:$0xf]
      %v440 = vld [vmem:[%s239 + $0x2c] sm:$0xf]
      %v441 = vld [vmem:[%s239 + $0x30] sm:$0xf]
      %v442 = vld [vmem:[%s239 + $0x34] sm:$0xf]
      %v443 = vld [vmem:[%s239 + $0x38] sm:$0xf]
      %v444 = vld [vmem:[%s239 + $0x3c] sm:$0xf]
      %v445 = vld [vmem:[%s239 + $0x40] sm:$0xf]
      %v446 = vld [vmem:[%s239 + $0x44] sm:$0xf]
      %v447 = vld [vmem:[%s239 + $0x48] sm:$0xf]
      %v448 = vld [vmem:[%s239 + $0x4c] sm:$0xf]
      %v449 = vld [vmem:[%s239 + $0x50] sm:$0xf]
      %v450 = vld [vmem:[%s239 + $0x54] sm:$0xf]
      %v451 = vld [vmem:[%s239 + $0x58] sm:$0xf]
      %v452 = vld [vmem:[%s239 + $0x5c] sm:$0xf]
      %v453 = vld [vmem:[%s239 + $0x60] sm:$0xf]
      %v454 = vld [vmem:[%s239 + $0x64] sm:$0xf]
      %v455 = vld [vmem:[%s239 + $0x68] sm:$0xf]
      %v456 = vld [vmem:[%s239 + $0x6c] sm:$0xf]
      %v457 = vld [vmem:[%s239 + $0x70] sm:$0xf]
      %v458 = vld [vmem:[%s239 + $0x74] sm:$0xf]
      %v459 = vld [vmem:[%s239 + $0x78] sm:$0xf]
      %v460 = vld [vmem:[%s239 + $0x7c] sm:$0xf]
      %v461 = vld [vmem:[%s239 + $0x80] sm:$0xf]
      %v462 = vld [vmem:[%s239 + $0x84] sm:$0xf]
      %v463 = vld [vmem:[%s239 + $0x88] sm:$0xf]
      %v464 = vld [vmem:[%s239 + $0x8c] sm:$0xf]
      %v465 = vld [vmem:[%s239 + $0x90] sm:$0xf]
      %v466 = vld [vmem:[%s239 + $0x94] sm:$0xf]
      %v467 = vld [vmem:[%s239 + $0x98] sm:$0xf]
      %v468 = vld [vmem:[%s239 + $0x9c] sm:$0xf]
      %v469 = vld [vmem:[%s239 + $0xa0] sm:$0xf]
      %v470 = vld [vmem:[%s239 + $0xa4] sm:$0xf]
      %v471 = vld [vmem:[%s239 + $0xa8] sm:$0xf]
      %v472 = vld [vmem:[%s239 + $0xac] sm:$0xf]
      %v473 = vld [vmem:[%s239 + $0xb0] sm:$0xf]
      %v474 = vld [vmem:[%s239 + $0xb4] sm:$0xf]
      %v475 = vld [vmem:[%s239 + $0xb8] sm:$0xf]
      %v476 = vld [vmem:[%s239 + $0xbc] sm:$0xf]
      %v525 = vunpack.c.l.b16 %v429
      %v526 = vunpack.c.l.b16 %v430
      %v527 = vunpack.c.l.b16 %v431
      %v528 = vunpack.c.l.b16 %v432
      %v529 = vunpack.c.l.b16 %v433
      %v530 = vunpack.c.l.b16 %v434
      %v531 = vunpack.c.l.b16 %v435
      %v532 = vunpack.c.l.b16 %v436
      %v533 = vunpack.c.l.b16 %v437
      %v534 = vunpack.c.l.b16 %v438
      %v535 = vunpack.c.l.b16 %v439
      %v536 = vunpack.c.l.b16 %v440
      %v537 = vunpack.c.l.b16 %v441
      %v538 = vunpack.c.l.b16 %v442
      %v539 = vunpack.c.l.b16 %v443
      %v540 = vunpack.c.l.b16 %v444
      %v541 = vunpack.c.l.b16 %v445
      %v542 = vunpack.c.l.b16 %v446
      %v543 = vunpack.c.l.b16 %v447
      %v544 = vunpack.c.l.b16 %v448
      %v545 = vunpack.c.l.b16 %v449
      %v546 = vunpack.c.l.b16 %v450
      %v547 = vunpack.c.l.b16 %v451
      %v548 = vunpack.c.l.b16 %v452
      %v549 = vunpack.c.l.b16 %v453
      %v550 = vunpack.c.l.b16 %v454
      %v551 = vunpack.c.l.b16 %v455
      %v552 = vunpack.c.l.b16 %v456
      %v553 = vunpack.c.l.b16 %v457
      %v554 = vunpack.c.l.b16 %v458
      %v555 = vunpack.c.l.b16 %v459
      %v556 = vunpack.c.l.b16 %v460
      %v557 = vunpack.c.l.b16 %v461
      %v558 = vunpack.c.l.b16 %v462
      %v559 = vunpack.c.l.b16 %v463
      %v560 = vunpack.c.l.b16 %v464
      %v561 = vunpack.c.l.b16 %v465
      %v562 = vunpack.c.l.b16 %v466
      %v563 = vunpack.c.l.b16 %v467
      %v564 = vunpack.c.l.b16 %v468
      %v565 = vunpack.c.l.b16 %v469
      %v566 = vunpack.c.l.b16 %v470
      %v567 = vunpack.c.l.b16 %v471
      %v568 = vunpack.c.l.b16 %v472
      %v569 = vunpack.c.l.b16 %v473
      %v570 = vunpack.c.l.b16 %v474
      %v571 = vunpack.c.l.b16 %v475
      %v572 = vunpack.c.l.b16 %v476
      %v573 = vpack.c.b16 %v526, %v525
      %v574 = vpack.c.b16 %v528, %v527
      %v575 = vpack.c.b16 %v530, %v529
      %v576 = vpack.c.b16 %v532, %v531
      %v577 = vpack.c.b16 %v534, %v533
      %v578 = vpack.c.b16 %v536, %v535
      %v579 = vpack.c.b16 %v538, %v537
      %v580 = vpack.c.b16 %v540, %v539
      %v581 = vpack.c.b16 %v542, %v541
      %v582 = vpack.c.b16 %v544, %v543
      %v583 = vpack.c.b16 %v546, %v545
      %v584 = vpack.c.b16 %v548, %v547
      %v585 = vpack.c.b16 %v550, %v549
      %v586 = vpack.c.b16 %v552, %v551
      %v587 = vpack.c.b16 %v554, %v553
      %v588 = vpack.c.b16 %v556, %v555
      %v589 = vpack.c.b16 %v558, %v557
      %v590 = vpack.c.b16 %v560, %v559
      %v591 = vpack.c.b16 %v562, %v561
      %v592 = vpack.c.b16 %v564, %v563
      %v593 = vpack.c.b16 %v566, %v565
      %v594 = vpack.c.b16 %v568, %v567
      %v595 = vpack.c.b16 %v570, %v569
      %v596 = vpack.c.b16 %v572, %v571
      %621 = vmatprep.subr.bf16.mxu0 0
      %622 = vmatpush1.bf16.msra.mxu0 %v580
      %623 = vmatprep.subr.bf16.mxu0 0
      %624 = vmatpush1.bf16.msra.mxu0 %v579
      %625 = vmatprep.subr.bf16.mxu0 0
      %626 = vmatpush1.bf16.msra.mxu0 %v578
      %627 = vmatprep.subr.bf16.mxu0 0
      %628 = vmatpush1.bf16.msra.mxu0 %v577
      %629 = vmatprep.subr.bf16.mxu0 0
      %630 = vmatpush1.bf16.msra.mxu0 %v576
      %631 = vmatprep.subr.bf16.mxu0 0
      %632 = vmatpush1.bf16.msra.mxu0 %v575
      %633 = vmatprep.subr.bf16.mxu0 0
      %634 = vmatpush1.bf16.msra.mxu0 %v574
      %635 = vmatprep.subr.bf16.mxu0 0
      %636 = vmatpush1.bf16.msra.mxu0 %v573
      %637 = vmatprep.subr.bf16.mxu0 0
      %638 = vmatpush2.bf16.msra.mxu0 %v588
      %639 = vmatprep.subr.bf16.mxu0 0
      %640 = vmatpush2.bf16.msra.mxu0 %v587
      %641 = vmatprep.subr.bf16.mxu0 0
      %642 = vmatpush2.bf16.msra.mxu0 %v586
      %643 = vmatprep.subr.bf16.mxu0 0
      %644 = vmatpush2.bf16.msra.mxu0 %v585
      %645 = vmatprep.subr.bf16.mxu0 0
      %646 = vmatpush2.bf16.msra.mxu0 %v584
      %647 = vmatprep.subr.bf16.mxu0 0
      %648 = vmatpush2.bf16.msra.mxu0 %v583
      %649 = vmatprep.subr.bf16.mxu0 0
      %650 = vmatpush2.bf16.msra.mxu0 %v582
      %651 = vmatprep.subr.bf16.mxu0 0
      %652 = vmatpush2.bf16.msra.mxu0 %v581
      %653 = vmatprep.mubr.bf16.mxu0 %v397
      %654 = vmatmul.mubr.bf16.gmra.mxu0 %v317
      %v655 = vpop.f32.mrf.mxu0
      %v656 = vadd.f32 0.0, %v655
      %v657 = vpop.f32.mrf.mxu0
      %v658 = vpop.f32.mrf.mxu0
      %v659 = vadd.f32 0.0, %v658
      %v660 = vpop.f32.mrf.mxu0
      %661 = vmatprep.mubr.bf16.mxu0 %v398
      %662 = vmatmul.mubr.bf16.gmra.mxu0 %v318
      %v663 = vpop.f32.mrf.mxu0
      %v664 = vadd.f32 0.0, %v663
      %v665 = vpop.f32.mrf.mxu0
      %v666 = vpop.f32.mrf.mxu0
      %v667 = vadd.f32 0.0, %v666
      %v668 = vpop.f32.mrf.mxu0
      %669 = vmatprep.mubr.bf16.mxu0 %v399
      %670 = vmatmul.mubr.bf16.gmra.mxu0 %v319
      %v671 = vpop.f32.mrf.mxu0
      %v672 = vadd.f32 0.0, %v671
      %v673 = vpop.f32.mrf.mxu0
      %v674 = vpop.f32.mrf.mxu0
      %v675 = vadd.f32 0.0, %v674
      %v676 = vpop.f32.mrf.mxu0
      %677 = vmatprep.mubr.bf16.mxu0 %v400
      %678 = vmatmul.mubr.bf16.gmra.mxu0 %v320
      %v679 = vpop.f32.mrf.mxu0
      %v680 = vadd.f32 0.0, %v679
      %v681 = vpop.f32.mrf.mxu0
      %v682 = vpop.f32.mrf.mxu0
      %v683 = vadd.f32 0.0, %v682
      %v684 = vpop.f32.mrf.mxu0
      %685 = vmatprep.mubr.bf16.mxu0 %v401
      %686 = vmatmul.mubr.bf16.gmra.mxu0 %v321
      %v687 = vpop.f32.mrf.mxu0
      %v688 = vadd.f32 0.0, %v687
      %v689 = vpop.f32.mrf.mxu0
      %v690 = vpop.f32.mrf.mxu0
      %v691 = vadd.f32 0.0, %v690
      %v692 = vpop.f32.mrf.mxu0
      %693 = vmatprep.mubr.bf16.mxu0 %v402
      %694 = vmatmul.mubr.bf16.gmra.mxu0 %v322
      %v695 = vpop.f32.mrf.mxu0
      %v696 = vadd.f32 0.0, %v695
      %v697 = vpop.f32.mrf.mxu0
      %v698 = vpop.f32.mrf.mxu0
      %v699 = vadd.f32 0.0, %v698
      %v700 = vpop.f32.mrf.mxu0
      %701 = vmatprep.mubr.bf16.mxu0 %v403
      %702 = vmatmul.mubr.bf16.gmra.mxu0 %v323
      %v703 = vpop.f32.mrf.mxu0
      %v704 = vadd.f32 0.0, %v703
      %v705 = vpop.f32.mrf.mxu0
      %v706 = vpop.f32.mrf.mxu0
      %v707 = vadd.f32 0.0, %v706
      %v708 = vpop.f32.mrf.mxu0
      %709 = vmatprep.mubr.bf16.mxu0 %v404
      %710 = vmatmul.mubr.bf16.gmra.mxu0 %v324
      %v711 = vpop.f32.mrf.mxu0
      %v712 = vadd.f32 0.0, %v711
      %v713 = vpop.f32.mrf.mxu0
      %v714 = vpop.f32.mrf.mxu0
      %v715 = vadd.f32 0.0, %v714
      %v716 = vpop.f32.mrf.mxu0
      %717 = vmatprep.mubr.bf16.mxu0 %v405
      %718 = vmatmul.mubr.bf16.gmra.mxu0 %v325
      %v719 = vpop.f32.mrf.mxu0
      %v720 = vadd.f32 0.0, %v719
      %v721 = vpop.f32.mrf.mxu0
      %v722 = vpop.f32.mrf.mxu0
      %v723 = vadd.f32 0.0, %v722
      %v724 = vpop.f32.mrf.mxu0
      %725 = vmatprep.mubr.bf16.mxu0 %v406
      %726 = vmatmul.mubr.bf16.gmra.mxu0 %v326
      %v727 = vpop.f32.mrf.mxu0
      %v728 = vadd.f32 0.0, %v727
      %v729 = vpop.f32.mrf.mxu0
      %v730 = vpop.f32.mrf.mxu0
      %v731 = vadd.f32 0.0, %v730
      %v732 = vpop.f32.mrf.mxu0
      %733 = vmatprep.mubr.bf16.mxu0 %v407
      %734 = vmatmul.mubr.bf16.gmra.mxu0 %v327
      %v735 = vpop.f32.mrf.mxu0
      %v736 = vadd.f32 0.0, %v735
      %v737 = vpop.f32.mrf.mxu0
      %v738 = vpop.f32.mrf.mxu0
      %v739 = vadd.f32 0.0, %v738
      %v740 = vpop.f32.mrf.mxu0
      %741 = vmatprep.mubr.bf16.mxu0 %v408
      %742 = vmatmul.mubr.bf16.gmra.mxu0 %v328
      %v743 = vpop.f32.mrf.mxu0
      %v744 = vadd.f32 0.0, %v743
      %v745 = vpop.f32.mrf.mxu0
      %v746 = vpop.f32.mrf.mxu0
      %v747 = vadd.f32 0.0, %v746
      %v748 = vpop.f32.mrf.mxu0
      %749 = vmatprep.mubr.bf16.mxu0 %v409
      %750 = vmatmul.mubr.bf16.gmra.mxu0 %v329
      %v751 = vpop.f32.mrf.mxu0
      %v752 = vadd.f32 0.0, %v751
      %v753 = vpop.f32.mrf.mxu0
      %v754 = vpop.f32.mrf.mxu0
      %v755 = vadd.f32 0.0, %v754
      %v756 = vpop.f32.mrf.mxu0
      %757 = vmatprep.mubr.bf16.mxu0 %v410
      %758 = vmatmul.mubr.bf16.gmra.mxu0 %v330
      %v759 = vpop.f32.mrf.mxu0
      %v760 = vadd.f32 0.0, %v759
      %v761 = vpop.f32.mrf.mxu0
      %v762 = vpop.f32.mrf.mxu0
      %v763 = vadd.f32 0.0, %v762
      %v764 = vpop.f32.mrf.mxu0
      %765 = vmatprep.mubr.bf16.mxu0 %v411
      %766 = vmatmul.mubr.bf16.gmra.mxu0 %v331
      %v767 = vpop.f32.mrf.mxu0
      %v768 = vadd.f32 0.0, %v767
      %v769 = vpop.f32.mrf.mxu0
      %v770 = vpop.f32.mrf.mxu0
      %v771 = vadd.f32 0.0, %v770
      %v772 = vpop.f32.mrf.mxu0
      %773 = vmatprep.mubr.bf16.mxu0 %v412
      %774 = vmatmul.mubr.bf16.gmra.mxu0 %v332
      %v775 = vpop.f32.mrf.mxu0
      %v776 = vadd.f32 0.0, %v775
      %v777 = vpop.f32.mrf.mxu0
      %v778 = vpop.f32.mrf.mxu0
      %v779 = vadd.f32 0.0, %v778
      %v780 = vpop.f32.mrf.mxu0
      %781 = vdwg.mxu0
      %782 = vmatprep.subr.bf16.mxu0 0
      %783 = vmatpush1.bf16.msra.mxu0 %v596
      %784 = vmatprep.subr.bf16.mxu0 0
      %785 = vmatpush1.bf16.msra.mxu0 %v595
      %786 = vmatprep.subr.bf16.mxu0 0
      %787 = vmatpush1.bf16.msra.mxu0 %v594
      %788 = vmatprep.subr.bf16.mxu0 0
      %789 = vmatpush1.bf16.msra.mxu0 %v593
      %790 = vmatprep.subr.bf16.mxu0 0
      %791 = vmatpush1.bf16.msra.mxu0 %v592
      %792 = vmatprep.subr.bf16.mxu0 0
      %793 = vmatpush1.bf16.msra.mxu0 %v591
      %794 = vmatprep.subr.bf16.mxu0 0
      %795 = vmatpush1.bf16.msra.mxu0 %v590
      %796 = vmatprep.subr.bf16.mxu0 0
      %797 = vmatpush1.bf16.msra.mxu0 %v589
      %798 = vmatprep.subr.bf16.mxu0 0
      %799 = vmatpush2.bf16.msra.mxu0 0
      %800 = vmatprep.subr.bf16.mxu0 0
      %801 = vmatpush2.bf16.msra.mxu0 0
      %802 = vmatprep.subr.bf16.mxu0 0
      %803 = vmatpush2.bf16.msra.mxu0 0
      %804 = vmatprep.subr.bf16.mxu0 0
      %805 = vmatpush2.bf16.msra.mxu0 0
      %806 = vmatprep.subr.bf16.mxu0 0
      %807 = vmatpush2.bf16.msra.mxu0 0
      %808 = vmatprep.subr.bf16.mxu0 0
      %809 = vmatpush2.bf16.msra.mxu0 0
      %810 = vmatprep.subr.bf16.mxu0 0
      %811 = vmatpush2.bf16.msra.mxu0 0
      %812 = vmatprep.subr.bf16.mxu0 0
      %813 = vmatpush2.bf16.msra.mxu0 0
      %814 = vmatprep.mubr.bf16.mxu0 0
      %815 = vmatmul.mubr.bf16.gmra.mxu0 %v319
      %v816 = vpop.f32.mrf.mxu0
      %v817 = vadd.f32 %v656, %v816
      %v818 = vpop.f32.mrf.mxu0
      %v819 = vpop.f32.mrf.mxu0
      %v820 = vadd.f32 %v659, %v819
      %v821 = vpop.f32.mrf.mxu0
      %822 = vmatprep.mubr.bf16.mxu0 0
      %823 = vmatmul.mubr.bf16.gmra.mxu0 %v320
      %v824 = vpop.f32.mrf.mxu0
      %v825 = vadd.f32 %v664, %v824
      %v826 = vpop.f32.mrf.mxu0
      %v827 = vpop.f32.mrf.mxu0
      %v828 = vadd.f32 %v667, %v827
      %v829 = vpop.f32.mrf.mxu0
      %830 = vmatprep.mubr.bf16.mxu0 0
      %831 = vmatmul.mubr.bf16.gmra.mxu0 %v321
      %v832 = vpop.f32.mrf.mxu0
      %v833 = vadd.f32 %v672, %v832
      %v834 = vpop.f32.mrf.mxu0
      %v835 = vpop.f32.mrf.mxu0
      %v836 = vadd.f32 %v675, %v835
      %v837 = vpop.f32.mrf.mxu0
      %838 = vmatprep.mubr.bf16.mxu0 0
      %839 = vmatmul.mubr.bf16.gmra.mxu0 %v322
      %v840 = vpop.f32.mrf.mxu0
      %v841 = vadd.f32 %v680, %v840
      %v842 = vpop.f32.mrf.mxu0
      %v843 = vpop.f32.mrf.mxu0
      %v844 = vadd.f32 %v683, %v843
      %v845 = vpop.f32.mrf.mxu0
      %846 = vmatprep.mubr.bf16.mxu0 0
      %847 = vmatmul.mubr.bf16.gmra.mxu0 %v323
      %v848 = vpop.f32.mrf.mxu0
      %v849 = vadd.f32 %v688, %v848
      %v850 = vpop.f32.mrf.mxu0
      %v851 = vpop.f32.mrf.mxu0
      %v852 = vadd.f32 %v691, %v851
      %v853 = vpop.f32.mrf.mxu0
      %854 = vmatprep.mubr.bf16.mxu0 0
      %855 = vmatmul.mubr.bf16.gmra.mxu0 %v324
      %v856 = vpop.f32.mrf.mxu0
      %v857 = vadd.f32 %v696, %v856
      %v858 = vpop.f32.mrf.mxu0
      %v859 = vpop.f32.mrf.mxu0
      %v860 = vadd.f32 %v699, %v859
      %v861 = vpop.f32.mrf.mxu0
      %862 = vmatprep.mubr.bf16.mxu0 0
      %863 = vmatmul.mubr.bf16.gmra.mxu0 %v325
      %v864 = vpop.f32.mrf.mxu0
      %v865 = vadd.f32 %v704, %v864
      %v866 = vpop.f32.mrf.mxu0
      %v867 = vpop.f32.mrf.mxu0
      %v868 = vadd.f32 %v707, %v867
      %v869 = vpop.f32.mrf.mxu0
      %870 = vmatprep.mubr.bf16.mxu0 0
      %871 = vmatmul.mubr.bf16.gmra.mxu0 %v326
      %v872 = vpop.f32.mrf.mxu0
      %v873 = vadd.f32 %v712, %v872
      %v874 = vpop.f32.mrf.mxu0
      %v875 = vpop.f32.mrf.mxu0
      %v876 = vadd.f32 %v715, %v875
      %v877 = vpop.f32.mrf.mxu0
      %878 = vmatprep.mubr.bf16.mxu0 0
      %879 = vmatmul.mubr.bf16.gmra.mxu0 %v327
      %v880 = vpop.f32.mrf.mxu0
      %v881 = vadd.f32 %v720, %v880
      %v882 = vpop.f32.mrf.mxu0
      %v883 = vpop.f32.mrf.mxu0
      %v884 = vadd.f32 %v723, %v883
      %v885 = vpop.f32.mrf.mxu0
      %886 = vmatprep.mubr.bf16.mxu0 0
      %887 = vmatmul.mubr.bf16.gmra.mxu0 %v328
      %v888 = vpop.f32.mrf.mxu0
      %v889 = vadd.f32 %v728, %v888
      %v890 = vpop.f32.mrf.mxu0
      %v891 = vpop.f32.mrf.mxu0
      %v892 = vadd.f32 %v731, %v891
      %v893 = vpop.f32.mrf.mxu0
      %894 = vmatprep.mubr.bf16.mxu0 0
      %895 = vmatmul.mubr.bf16.gmra.mxu0 %v329
      %v896 = vpop.f32.mrf.mxu0
      %v897 = vadd.f32 %v736, %v896
      %v898 = vpop.f32.mrf.mxu0
      %v899 = vpop.f32.mrf.mxu0
      %v900 = vadd.f32 %v739, %v899
      %v901 = vpop.f32.mrf.mxu0
      %902 = vmatprep.mubr.bf16.mxu0 0
      %903 = vmatmul.mubr.bf16.gmra.mxu0 %v330
      %v904 = vpop.f32.mrf.mxu0
      %v905 = vadd.f32 %v744, %v904
      %v906 = vpop.f32.mrf.mxu0
      %v907 = vpop.f32.mrf.mxu0
      %v908 = vadd.f32 %v747, %v907
      %v909 = vpop.f32.mrf.mxu0
      %910 = vmatprep.mubr.bf16.mxu0 0
      %911 = vmatmul.mubr.bf16.gmra.mxu0 %v331
      %v912 = vpop.f32.mrf.mxu0
      %v913 = vadd.f32 %v752, %v912
      %v914 = vpop.f32.mrf.mxu0
      %v915 = vpop.f32.mrf.mxu0
      %v916 = vadd.f32 %v755, %v915
      %v917 = vpop.f32.mrf.mxu0
      %918 = vmatprep.mubr.bf16.mxu0 0
      %919 = vmatmul.mubr.bf16.gmra.mxu0 %v332
      %v920 = vpop.f32.mrf.mxu0
      %v921 = vadd.f32 %v760, %v920
      %v922 = vpop.f32.mrf.mxu0
      %v923 = vpop.f32.mrf.mxu0
      %v924 = vadd.f32 %v763, %v923
      %v925 = vpop.f32.mrf.mxu0
      %926 = vmatprep.mubr.bf16.mxu0 0
      %927 = vmatmul.mubr.bf16.gmra.mxu0 %v317
      %v928 = vpop.f32.mrf.mxu0
      %v929 = vadd.f32 %v768, %v928
      %v930 = vpop.f32.mrf.mxu0
      %v931 = vpop.f32.mrf.mxu0
      %v932 = vadd.f32 %v771, %v931
      %v933 = vpop.f32.mrf.mxu0
      %934 = vmatprep.mubr.bf16.mxu0 0
      %935 = vmatmul.mubr.bf16.gmra.mxu0 %v318
      %v936 = vpop.f32.mrf.mxu0
      %v937 = vadd.f32 %v776, %v936
      %v938 = vpop.f32.mrf.mxu0
      %v939 = vpop.f32.mrf.mxu0
      %v940 = vadd.f32 %v779, %v939
      %v941 = vpop.f32.mrf.mxu0
      %942 = vdwg.mxu0
      %s943 = scalar_lea.vmem %s239, 192
      %v944 = vld [vmem:[%s943] sm:$0xf]
      %v945 = vld [vmem:[%s943 + $0x4] sm:$0xf]
      %v946 = vld [vmem:[%s943 + $0x8] sm:$0xf]
      %v947 = vld [vmem:[%s943 + $0xc] sm:$0xf]
      %v948 = vld [vmem:[%s943 + $0x10] sm:$0xf]
      %v949 = vld [vmem:[%s943 + $0x14] sm:$0xf]
      %v950 = vld [vmem:[%s943 + $0x18] sm:$0xf]
      %v951 = vld [vmem:[%s943 + $0x1c] sm:$0xf]
      %v952 = vld [vmem:[%s943 + $0x20] sm:$0xf]
      %v953 = vld [vmem:[%s943 + $0x24] sm:$0xf]
      %v954 = vld [vmem:[%s943 + $0x28] sm:$0xf]
      %v955 = vld [vmem:[%s943 + $0x2c] sm:$0xf]
      %v956 = vld [vmem:[%s943 + $0x30] sm:$0xf]
      %v957 = vld [vmem:[%s943 + $0x34] sm:$0xf]
      %v958 = vld [vmem:[%s943 + $0x38] sm:$0xf]
      %v959 = vld [vmem:[%s943 + $0x3c] sm:$0xf]
      %v960 = vld [vmem:[%s943 + $0x40] sm:$0xf]
      %v961 = vld [vmem:[%s943 + $0x44] sm:$0xf]
      %v962 = vld [vmem:[%s943 + $0x48] sm:$0xf]
      %v963 = vld [vmem:[%s943 + $0x4c] sm:$0xf]
      %v964 = vld [vmem:[%s943 + $0x50] sm:$0xf]
      %v965 = vld [vmem:[%s943 + $0x54] sm:$0xf]
      %v966 = vld [vmem:[%s943 + $0x58] sm:$0xf]
      %v967 = vld [vmem:[%s943 + $0x5c] sm:$0xf]
      %v968 = vld [vmem:[%s943 + $0x60] sm:$0xf]
      %v969 = vld [vmem:[%s943 + $0x64] sm:$0xf]
      %v970 = vld [vmem:[%s943 + $0x68] sm:$0xf]
      %v971 = vld [vmem:[%s943 + $0x6c] sm:$0xf]
      %v972 = vld [vmem:[%s943 + $0x70] sm:$0xf]
      %v973 = vld [vmem:[%s943 + $0x74] sm:$0xf]
      %v974 = vld [vmem:[%s943 + $0x78] sm:$0xf]
      %v975 = vld [vmem:[%s943 + $0x7c] sm:$0xf]
      %v976 = vld [vmem:[%s943 + $0x80] sm:$0xf]
      %v977 = vld [vmem:[%s943 + $0x84] sm:$0xf]
      %v978 = vld [vmem:[%s943 + $0x88] sm:$0xf]
      %v979 = vld [vmem:[%s943 + $0x8c] sm:$0xf]
      %v980 = vld [vmem:[%s943 + $0x90] sm:$0xf]
      %v981 = vld [vmem:[%s943 + $0x94] sm:$0xf]
      %v982 = vld [vmem:[%s943 + $0x98] sm:$0xf]
      %v983 = vld [vmem:[%s943 + $0x9c] sm:$0xf]
      %v984 = vld [vmem:[%s943 + $0xa0] sm:$0xf]
      %v985 = vld [vmem:[%s943 + $0xa4] sm:$0xf]
      %v986 = vld [vmem:[%s943 + $0xa8] sm:$0xf]
      %v987 = vld [vmem:[%s943 + $0xac] sm:$0xf]
      %v988 = vld [vmem:[%s943 + $0xb0] sm:$0xf]
      %v989 = vld [vmem:[%s943 + $0xb4] sm:$0xf]
      %v990 = vld [vmem:[%s943 + $0xb8] sm:$0xf]
      %v991 = vld [vmem:[%s943 + $0xbc] sm:$0xf]
      %v1040 = vunpack.c.l.b16 %v944
      %v1041 = vunpack.c.l.b16 %v945
      %v1042 = vunpack.c.l.b16 %v946
      %v1043 = vunpack.c.l.b16 %v947
      %v1044 = vunpack.c.l.b16 %v948
      %v1045 = vunpack.c.l.b16 %v949
      %v1046 = vunpack.c.l.b16 %v950
      %v1047 = vunpack.c.l.b16 %v951
      %v1048 = vunpack.c.l.b16 %v952
      %v1049 = vunpack.c.l.b16 %v953
      %v1050 = vunpack.c.l.b16 %v954
      %v1051 = vunpack.c.l.b16 %v955
      %v1052 = vunpack.c.l.b16 %v956
      %v1053 = vunpack.c.l.b16 %v957
      %v1054 = vunpack.c.l.b16 %v958
      %v1055 = vunpack.c.l.b16 %v959
      %v1056 = vunpack.c.l.b16 %v960
      %v1057 = vunpack.c.l.b16 %v961
      %v1058 = vunpack.c.l.b16 %v962
      %v1059 = vunpack.c.l.b16 %v963
      %v1060 = vunpack.c.l.b16 %v964
      %v1061 = vunpack.c.l.b16 %v965
      %v1062 = vunpack.c.l.b16 %v966
      %v1063 = vunpack.c.l.b16 %v967
      %v1064 = vunpack.c.l.b16 %v968
      %v1065 = vunpack.c.l.b16 %v969
      %v1066 = vunpack.c.l.b16 %v970
      %v1067 = vunpack.c.l.b16 %v971
      %v1068 = vunpack.c.l.b16 %v972
      %v1069 = vunpack.c.l.b16 %v973
      %v1070 = vunpack.c.l.b16 %v974
      %v1071 = vunpack.c.l.b16 %v975
      %v1072 = vunpack.c.l.b16 %v976
      %v1073 = vunpack.c.l.b16 %v977
      %v1074 = vunpack.c.l.b16 %v978
      %v1075 = vunpack.c.l.b16 %v979
      %v1076 = vunpack.c.l.b16 %v980
      %v1077 = vunpack.c.l.b16 %v981
      %v1078 = vunpack.c.l.b16 %v982
      %v1079 = vunpack.c.l.b16 %v983
      %v1080 = vunpack.c.l.b16 %v984
      %v1081 = vunpack.c.l.b16 %v985
      %v1082 = vunpack.c.l.b16 %v986
      %v1083 = vunpack.c.l.b16 %v987
      %v1084 = vunpack.c.l.b16 %v988
      %v1085 = vunpack.c.l.b16 %v989
      %v1086 = vunpack.c.l.b16 %v990
      %v1087 = vunpack.c.l.b16 %v991
      %v1088 = vpack.c.b16 %v1041, %v1040
      %v1089 = vpack.c.b16 %v1043, %v1042
      %v1090 = vpack.c.b16 %v1045, %v1044
      %v1091 = vpack.c.b16 %v1047, %v1046
      %v1092 = vpack.c.b16 %v1049, %v1048
      %v1093 = vpack.c.b16 %v1051, %v1050
      %v1094 = vpack.c.b16 %v1053, %v1052
      %v1095 = vpack.c.b16 %v1055, %v1054
      %v1096 = vpack.c.b16 %v1057, %v1056
      %v1097 = vpack.c.b16 %v1059, %v1058
      %v1098 = vpack.c.b16 %v1061, %v1060
      %v1099 = vpack.c.b16 %v1063, %v1062
      %v1100 = vpack.c.b16 %v1065, %v1064
      %v1101 = vpack.c.b16 %v1067, %v1066
      %v1102 = vpack.c.b16 %v1069, %v1068
      %v1103 = vpack.c.b16 %v1071, %v1070
      %v1104 = vpack.c.b16 %v1073, %v1072
      %v1105 = vpack.c.b16 %v1075, %v1074
      %v1106 = vpack.c.b16 %v1077, %v1076
      %v1107 = vpack.c.b16 %v1079, %v1078
      %v1108 = vpack.c.b16 %v1081, %v1080
      %v1109 = vpack.c.b16 %v1083, %v1082
      %v1110 = vpack.c.b16 %v1085, %v1084
      %v1111 = vpack.c.b16 %v1087, %v1086
      %1136 = vmatprep.subr.bf16.mxu0 0
      %1137 = vmatpush1.bf16.msra.mxu0 %v1095
      %1138 = vmatprep.subr.bf16.mxu0 0
      %1139 = vmatpush1.bf16.msra.mxu0 %v1094
      %1140 = vmatprep.subr.bf16.mxu0 0
      %1141 = vmatpush1.bf16.msra.mxu0 %v1093
      %1142 = vmatprep.subr.bf16.mxu0 0
      %1143 = vmatpush1.bf16.msra.mxu0 %v1092
      %1144 = vmatprep.subr.bf16.mxu0 0
      %1145 = vmatpush1.bf16.msra.mxu0 %v1091
      %1146 = vmatprep.subr.bf16.mxu0 0
      %1147 = vmatpush1.bf16.msra.mxu0 %v1090
      %1148 = vmatprep.subr.bf16.mxu0 0
      %1149 = vmatpush1.bf16.msra.mxu0 %v1089
      %1150 = vmatprep.subr.bf16.mxu0 0
      %1151 = vmatpush1.bf16.msra.mxu0 %v1088
      %1152 = vmatprep.subr.bf16.mxu0 0
      %1153 = vmatpush2.bf16.msra.mxu0 %v1103
      %1154 = vmatprep.subr.bf16.mxu0 0
      %1155 = vmatpush2.bf16.msra.mxu0 %v1102
      %1156 = vmatprep.subr.bf16.mxu0 0
      %1157 = vmatpush2.bf16.msra.mxu0 %v1101
      %1158 = vmatprep.subr.bf16.mxu0 0
      %1159 = vmatpush2.bf16.msra.mxu0 %v1100
      %1160 = vmatprep.subr.bf16.mxu0 0
      %1161 = vmatpush2.bf16.msra.mxu0 %v1099
      %1162 = vmatprep.subr.bf16.mxu0 0
      %1163 = vmatpush2.bf16.msra.mxu0 %v1098
      %1164 = vmatprep.subr.bf16.mxu0 0
      %1165 = vmatpush2.bf16.msra.mxu0 %v1097
      %1166 = vmatprep.subr.bf16.mxu0 0
      %1167 = vmatpush2.bf16.msra.mxu0 %v1096
      %1168 = vmatprep.mubr.bf16.mxu0 %v397
      %1169 = vmatmul.mubr.bf16.gmra.mxu0 %v317
      %v1170 = vpop.f32.mrf.mxu0
      %v1171 = vadd.f32 0.0, %v1170
      %v1172 = vpop.f32.mrf.mxu0
      %v1173 = vpop.f32.mrf.mxu0
      %v1174 = vadd.f32 0.0, %v1173
      %v1175 = vpop.f32.mrf.mxu0
      %1176 = vmatprep.mubr.bf16.mxu0 %v398
      %1177 = vmatmul.mubr.bf16.gmra.mxu0 %v318
      %v1178 = vpop.f32.mrf.mxu0
      %v1179 = vadd.f32 0.0, %v1178
      %v1180 = vpop.f32.mrf.mxu0
      %v1181 = vpop.f32.mrf.mxu0
      %v1182 = vadd.f32 0.0, %v1181
      %v1183 = vpop.f32.mrf.mxu0
      %1184 = vmatprep.mubr.bf16.mxu0 %v399
      %1185 = vmatmul.mubr.bf16.gmra.mxu0 %v319
      %v1186 = vpop.f32.mrf.mxu0
      %v1187 = vadd.f32 0.0, %v1186
      %v1188 = vpop.f32.mrf.mxu0
      %v1189 = vpop.f32.mrf.mxu0
      %v1190 = vadd.f32 0.0, %v1189
      %v1191 = vpop.f32.mrf.mxu0
      %1192 = vmatprep.mubr.bf16.mxu0 %v400
      %1193 = vmatmul.mubr.bf16.gmra.mxu0 %v320
      %v1194 = vpop.f32.mrf.mxu0
      %v1195 = vadd.f32 0.0, %v1194
      %v1196 = vpop.f32.mrf.mxu0
      %v1197 = vpop.f32.mrf.mxu0
      %v1198 = vadd.f32 0.0, %v1197
      %v1199 = vpop.f32.mrf.mxu0
      %1200 = vmatprep.mubr.bf16.mxu0 %v401
      %1201 = vmatmul.mubr.bf16.gmra.mxu0 %v321
      %v1202 = vpop.f32.mrf.mxu0
      %v1203 = vadd.f32 0.0, %v1202
      %v1204 = vpop.f32.mrf.mxu0
      %v1205 = vpop.f32.mrf.mxu0
      %v1206 = vadd.f32 0.0, %v1205
      %v1207 = vpop.f32.mrf.mxu0
      %1208 = vmatprep.mubr.bf16.mxu0 %v402
      %1209 = vmatmul.mubr.bf16.gmra.mxu0 %v322
      %v1210 = vpop.f32.mrf.mxu0
      %v1211 = vadd.f32 0.0, %v1210
      %v1212 = vpop.f32.mrf.mxu0
      %v1213 = vpop.f32.mrf.mxu0
      %v1214 = vadd.f32 0.0, %v1213
      %v1215 = vpop.f32.mrf.mxu0
      %1216 = vmatprep.mubr.bf16.mxu0 %v403
      %1217 = vmatmul.mubr.bf16.gmra.mxu0 %v323
      %v1218 = vpop.f32.mrf.mxu0
      %v1219 = vadd.f32 0.0, %v1218
      %v1220 = vpop.f32.mrf.mxu0
      %v1221 = vpop.f32.mrf.mxu0
      %v1222 = vadd.f32 0.0, %v1221
      %v1223 = vpop.f32.mrf.mxu0
      %1224 = vmatprep.mubr.bf16.mxu0 %v404
      %1225 = vmatmul.mubr.bf16.gmra.mxu0 %v324
      %v1226 = vpop.f32.mrf.mxu0
      %v1227 = vadd.f32 0.0, %v1226
      %v1228 = vpop.f32.mrf.mxu0
      %v1229 = vpop.f32.mrf.mxu0
      %v1230 = vadd.f32 0.0, %v1229
      %v1231 = vpop.f32.mrf.mxu0
      %1232 = vmatprep.mubr.bf16.mxu0 %v405
      %1233 = vmatmul.mubr.bf16.gmra.mxu0 %v325
      %v1234 = vpop.f32.mrf.mxu0
      %v1235 = vadd.f32 0.0, %v1234
      %v1236 = vpop.f32.mrf.mxu0
      %v1237 = vpop.f32.mrf.mxu0
      %v1238 = vadd.f32 0.0, %v1237
      %v1239 = vpop.f32.mrf.mxu0
      %1240 = vmatprep.mubr.bf16.mxu0 %v406
      %1241 = vmatmul.mubr.bf16.gmra.mxu0 %v326
      %v1242 = vpop.f32.mrf.mxu0
      %v1243 = vadd.f32 0.0, %v1242
      %v1244 = vpop.f32.mrf.mxu0
      %v1245 = vpop.f32.mrf.mxu0
      %v1246 = vadd.f32 0.0, %v1245
      %v1247 = vpop.f32.mrf.mxu0
      %1248 = vmatprep.mubr.bf16.mxu0 %v407
      %1249 = vmatmul.mubr.bf16.gmra.mxu0 %v327
      %v1250 = vpop.f32.mrf.mxu0
      %v1251 = vadd.f32 0.0, %v1250
      %v1252 = vpop.f32.mrf.mxu0
      %v1253 = vpop.f32.mrf.mxu0
      %v1254 = vadd.f32 0.0, %v1253
      %v1255 = vpop.f32.mrf.mxu0
      %1256 = vmatprep.mubr.bf16.mxu0 %v408
      %1257 = vmatmul.mubr.bf16.gmra.mxu0 %v328
      %v1258 = vpop.f32.mrf.mxu0
      %v1259 = vadd.f32 0.0, %v1258
      %v1260 = vpop.f32.mrf.mxu0
      %v1261 = vpop.f32.mrf.mxu0
      %v1262 = vadd.f32 0.0, %v1261
      %v1263 = vpop.f32.mrf.mxu0
      %1264 = vmatprep.mubr.bf16.mxu0 %v409
      %1265 = vmatmul.mubr.bf16.gmra.mxu0 %v329
      %v1266 = vpop.f32.mrf.mxu0
      %v1267 = vadd.f32 0.0, %v1266
      %v1268 = vpop.f32.mrf.mxu0
      %v1269 = vpop.f32.mrf.mxu0
      %v1270 = vadd.f32 0.0, %v1269
      %v1271 = vpop.f32.mrf.mxu0
      %1272 = vmatprep.mubr.bf16.mxu0 %v410
      %1273 = vmatmul.mubr.bf16.gmra.mxu0 %v330
      %v1274 = vpop.f32.mrf.mxu0
      %v1275 = vadd.f32 0.0, %v1274
      %v1276 = vpop.f32.mrf.mxu0
      %v1277 = vpop.f32.mrf.mxu0
      %v1278 = vadd.f32 0.0, %v1277
      %v1279 = vpop.f32.mrf.mxu0
      %1280 = vmatprep.mubr.bf16.mxu0 %v411
      %1281 = vmatmul.mubr.bf16.gmra.mxu0 %v331
      %v1282 = vpop.f32.mrf.mxu0
      %v1283 = vadd.f32 0.0, %v1282
      %v1284 = vpop.f32.mrf.mxu0
      %v1285 = vpop.f32.mrf.mxu0
      %v1286 = vadd.f32 0.0, %v1285
      %v1287 = vpop.f32.mrf.mxu0
      %1288 = vmatprep.mubr.bf16.mxu0 %v412
      %1289 = vmatmul.mubr.bf16.gmra.mxu0 %v332
      %v1290 = vpop.f32.mrf.mxu0
      %v1291 = vadd.f32 0.0, %v1290
      %v1292 = vpop.f32.mrf.mxu0
      %v1293 = vpop.f32.mrf.mxu0
      %v1294 = vadd.f32 0.0, %v1293
      %v1295 = vpop.f32.mrf.mxu0
      %1296 = vdwg.mxu0
      %1297 = vmatprep.subr.bf16.mxu0 0
      %1298 = vmatpush1.bf16.msra.mxu0 %v1111
      %1299 = vmatprep.subr.bf16.mxu0 0
      %1300 = vmatpush1.bf16.msra.mxu0 %v1110
      %1301 = vmatprep.subr.bf16.mxu0 0
      %1302 = vmatpush1.bf16.msra.mxu0 %v1109
      %1303 = vmatprep.subr.bf16.mxu0 0
      %1304 = vmatpush1.bf16.msra.mxu0 %v1108
      %1305 = vmatprep.subr.bf16.mxu0 0
      %1306 = vmatpush1.bf16.msra.mxu0 %v1107
      %1307 = vmatprep.subr.bf16.mxu0 0
      %1308 = vmatpush1.bf16.msra.mxu0 %v1106
      %1309 = vmatprep.subr.bf16.mxu0 0
      %1310 = vmatpush1.bf16.msra.mxu0 %v1105
      %1311 = vmatprep.subr.bf16.mxu0 0
      %1312 = vmatpush1.bf16.msra.mxu0 %v1104
      %1313 = vmatprep.subr.bf16.mxu0 0
      %1314 = vmatpush2.bf16.msra.mxu0 0
      %1315 = vmatprep.subr.bf16.mxu0 0
      %1316 = vmatpush2.bf16.msra.mxu0 0
      %1317 = vmatprep.subr.bf16.mxu0 0
      %1318 = vmatpush2.bf16.msra.mxu0 0
      %1319 = vmatprep.subr.bf16.mxu0 0
      %1320 = vmatpush2.bf16.msra.mxu0 0
      %1321 = vmatprep.subr.bf16.mxu0 0
      %1322 = vmatpush2.bf16.msra.mxu0 0
      %1323 = vmatprep.subr.bf16.mxu0 0
      %1324 = vmatpush2.bf16.msra.mxu0 0
      %1325 = vmatprep.subr.bf16.mxu0 0
      %1326 = vmatpush2.bf16.msra.mxu0 0
      %1327 = vmatprep.subr.bf16.mxu0 0
      %1328 = vmatpush2.bf16.msra.mxu0 0
      %1329 = vmatprep.mubr.bf16.mxu0 0
      %1330 = vmatmul.mubr.bf16.gmra.mxu0 %v319
      %v1331 = vpop.f32.mrf.mxu0
      %v1332 = vadd.f32 %v1171, %v1331
      %v1333 = vpop.f32.mrf.mxu0
      %v1334 = vpop.f32.mrf.mxu0
      %v1335 = vadd.f32 %v1174, %v1334
      %v1336 = vpop.f32.mrf.mxu0
      %1337 = vmatprep.mubr.bf16.mxu0 0
      %1338 = vmatmul.mubr.bf16.gmra.mxu0 %v320
      %v1339 = vpop.f32.mrf.mxu0
      %v1340 = vadd.f32 %v1179, %v1339
      %v1341 = vpop.f32.mrf.mxu0
      %v1342 = vpop.f32.mrf.mxu0
      %v1343 = vadd.f32 %v1182, %v1342
      %v1344 = vpop.f32.mrf.mxu0
      %1345 = vmatprep.mubr.bf16.mxu0 0
      %1346 = vmatmul.mubr.bf16.gmra.mxu0 %v321
      %v1347 = vpop.f32.mrf.mxu0
      %v1348 = vadd.f32 %v1187, %v1347
      %v1349 = vpop.f32.mrf.mxu0
      %v1350 = vpop.f32.mrf.mxu0
      %v1351 = vadd.f32 %v1190, %v1350
      %v1352 = vpop.f32.mrf.mxu0
      %1353 = vmatprep.mubr.bf16.mxu0 0
      %1354 = vmatmul.mubr.bf16.gmra.mxu0 %v322
      %v1355 = vpop.f32.mrf.mxu0
      %v1356 = vadd.f32 %v1195, %v1355
      %v1357 = vpop.f32.mrf.mxu0
      %v1358 = vpop.f32.mrf.mxu0
      %v1359 = vadd.f32 %v1198, %v1358
      %v1360 = vpop.f32.mrf.mxu0
      %1361 = vmatprep.mubr.bf16.mxu0 0
      %1362 = vmatmul.mubr.bf16.gmra.mxu0 %v323
      %v1363 = vpop.f32.mrf.mxu0
      %v1364 = vadd.f32 %v1203, %v1363
      %v1365 = vpop.f32.mrf.mxu0
      %v1366 = vpop.f32.mrf.mxu0
      %v1367 = vadd.f32 %v1206, %v1366
      %v1368 = vpop.f32.mrf.mxu0
      %1369 = vmatprep.mubr.bf16.mxu0 0
      %1370 = vmatmul.mubr.bf16.gmra.mxu0 %v324
      %v1371 = vpop.f32.mrf.mxu0
      %v1372 = vadd.f32 %v1211, %v1371
      %v1373 = vpop.f32.mrf.mxu0
      %v1374 = vpop.f32.mrf.mxu0
      %v1375 = vadd.f32 %v1214, %v1374
      %v1376 = vpop.f32.mrf.mxu0
      %1377 = vmatprep.mubr.bf16.mxu0 0
      %1378 = vmatmul.mubr.bf16.gmra.mxu0 %v325
      %v1379 = vpop.f32.mrf.mxu0
      %v1380 = vadd.f32 %v1219, %v1379
      %v1381 = vpop.f32.mrf.mxu0
      %v1382 = vpop.f32.mrf.mxu0
      %v1383 = vadd.f32 %v1222, %v1382
      %v1384 = vpop.f32.mrf.mxu0
      %1385 = vmatprep.mubr.bf16.mxu0 0
      %1386 = vmatmul.mubr.bf16.gmra.mxu0 %v326
      %v1387 = vpop.f32.mrf.mxu0
      %v1388 = vadd.f32 %v1227, %v1387
      %v1389 = vpop.f32.mrf.mxu0
      %v1390 = vpop.f32.mrf.mxu0
      %v1391 = vadd.f32 %v1230, %v1390
      %v1392 = vpop.f32.mrf.mxu0
      %1393 = vmatprep.mubr.bf16.mxu0 0
      %1394 = vmatmul.mubr.bf16.gmra.mxu0 %v327
      %v1395 = vpop.f32.mrf.mxu0
      %v1396 = vadd.f32 %v1235, %v1395
      %v1397 = vpop.f32.mrf.mxu0
      %v1398 = vpop.f32.mrf.mxu0
      %v1399 = vadd.f32 %v1238, %v1398
      %v1400 = vpop.f32.mrf.mxu0
      %1401 = vmatprep.mubr.bf16.mxu0 0
      %1402 = vmatmul.mubr.bf16.gmra.mxu0 %v328
      %v1403 = vpop.f32.mrf.mxu0
      %v1404 = vadd.f32 %v1243, %v1403
      %v1405 = vpop.f32.mrf.mxu0
      %v1406 = vpop.f32.mrf.mxu0
      %v1407 = vadd.f32 %v1246, %v1406
      %v1408 = vpop.f32.mrf.mxu0
      %1409 = vmatprep.mubr.bf16.mxu0 0
      %1410 = vmatmul.mubr.bf16.gmra.mxu0 %v329
      %v1411 = vpop.f32.mrf.mxu0
      %v1412 = vadd.f32 %v1251, %v1411
      %v1413 = vpop.f32.mrf.mxu0
      %v1414 = vpop.f32.mrf.mxu0
      %v1415 = vadd.f32 %v1254, %v1414
      %v1416 = vpop.f32.mrf.mxu0
      %1417 = vmatprep.mubr.bf16.mxu0 0
      %1418 = vmatmul.mubr.bf16.gmra.mxu0 %v330
      %v1419 = vpop.f32.mrf.mxu0
      %v1420 = vadd.f32 %v1259, %v1419
      %v1421 = vpop.f32.mrf.mxu0
      %v1422 = vpop.f32.mrf.mxu0
      %v1423 = vadd.f32 %v1262, %v1422
      %v1424 = vpop.f32.mrf.mxu0
      %1425 = vmatprep.mubr.bf16.mxu0 0
      %1426 = vmatmul.mubr.bf16.gmra.mxu0 %v331
      %v1427 = vpop.f32.mrf.mxu0
      %v1428 = vadd.f32 %v1267, %v1427
      %v1429 = vpop.f32.mrf.mxu0
      %v1430 = vpop.f32.mrf.mxu0
      %v1431 = vadd.f32 %v1270, %v1430
      %v1432 = vpop.f32.mrf.mxu0
      %1433 = vmatprep.mubr.bf16.mxu0 0
      %1434 = vmatmul.mubr.bf16.gmra.mxu0 %v332
      %v1435 = vpop.f32.mrf.mxu0
      %v1436 = vadd.f32 %v1275, %v1435
      %v1437 = vpop.f32.mrf.mxu0
      %v1438 = vpop.f32.mrf.mxu0
      %v1439 = vadd.f32 %v1278, %v1438
      %v1440 = vpop.f32.mrf.mxu0
      %1441 = vmatprep.mubr.bf16.mxu0 0
      %1442 = vmatmul.mubr.bf16.gmra.mxu0 %v317
      %v1443 = vpop.f32.mrf.mxu0
      %v1444 = vadd.f32 %v1283, %v1443
      %v1445 = vpop.f32.mrf.mxu0
      %v1446 = vpop.f32.mrf.mxu0
      %v1447 = vadd.f32 %v1286, %v1446
      %v1448 = vpop.f32.mrf.mxu0
      %1449 = vmatprep.mubr.bf16.mxu0 0
      %1450 = vmatmul.mubr.bf16.gmra.mxu0 %v318
      %v1451 = vpop.f32.mrf.mxu0
      %v1452 = vadd.f32 %v1291, %v1451
      %v1453 = vpop.f32.mrf.mxu0
      %v1454 = vpop.f32.mrf.mxu0
      %v1455 = vadd.f32 %v1294, %v1454
      %v1456 = vpop.f32.mrf.mxu0
      %1457 = vdwg.mxu0
      %s1458 = scalar_lea.vmem %s239, 384
      %v1459 = vld [vmem:[%s1458] sm:$0xf]
      %v1460 = vld [vmem:[%s1458 + $0x4] sm:$0xf]
      %v1461 = vld [vmem:[%s1458 + $0x8] sm:$0xf]
      %v1462 = vld [vmem:[%s1458 + $0xc] sm:$0xf]
      %v1463 = vld [vmem:[%s1458 + $0x10] sm:$0xf]
      %v1464 = vld [vmem:[%s1458 + $0x14] sm:$0xf]
      %v1465 = vld [vmem:[%s1458 + $0x18] sm:$0xf]
      %v1466 = vld [vmem:[%s1458 + $0x1c] sm:$0xf]
      %v1467 = vld [vmem:[%s1458 + $0x20] sm:$0xf]
      %v1468 = vld [vmem:[%s1458 + $0x24] sm:$0xf]
      %v1469 = vld [vmem:[%s1458 + $0x28] sm:$0xf]
      %v1470 = vld [vmem:[%s1458 + $0x2c] sm:$0xf]
      %v1471 = vld [vmem:[%s1458 + $0x30] sm:$0xf]
      %v1472 = vld [vmem:[%s1458 + $0x34] sm:$0xf]
      %v1473 = vld [vmem:[%s1458 + $0x38] sm:$0xf]
      %v1474 = vld [vmem:[%s1458 + $0x3c] sm:$0xf]
      %v1475 = vld [vmem:[%s1458 + $0x40] sm:$0xf]
      %v1476 = vld [vmem:[%s1458 + $0x44] sm:$0xf]
      %v1477 = vld [vmem:[%s1458 + $0x48] sm:$0xf]
      %v1478 = vld [vmem:[%s1458 + $0x4c] sm:$0xf]
      %v1479 = vld [vmem:[%s1458 + $0x50] sm:$0xf]
      %v1480 = vld [vmem:[%s1458 + $0x54] sm:$0xf]
      %v1481 = vld [vmem:[%s1458 + $0x58] sm:$0xf]
      %v1482 = vld [vmem:[%s1458 + $0x5c] sm:$0xf]
      %v1483 = vld [vmem:[%s1458 + $0x60] sm:$0xf]
      %v1484 = vld [vmem:[%s1458 + $0x64] sm:$0xf]
      %v1485 = vld [vmem:[%s1458 + $0x68] sm:$0xf]
      %v1486 = vld [vmem:[%s1458 + $0x6c] sm:$0xf]
      %v1487 = vld [vmem:[%s1458 + $0x70] sm:$0xf]
      %v1488 = vld [vmem:[%s1458 + $0x74] sm:$0xf]
      %v1489 = vld [vmem:[%s1458 + $0x78] sm:$0xf]
      %v1490 = vld [vmem:[%s1458 + $0x7c] sm:$0xf]
      %v1491 = vld [vmem:[%s1458 + $0x80] sm:$0xf]
      %v1492 = vld [vmem:[%s1458 + $0x84] sm:$0xf]
      %v1493 = vld [vmem:[%s1458 + $0x88] sm:$0xf]
      %v1494 = vld [vmem:[%s1458 + $0x8c] sm:$0xf]
      %v1495 = vld [vmem:[%s1458 + $0x90] sm:$0xf]
      %v1496 = vld [vmem:[%s1458 + $0x94] sm:$0xf]
      %v1497 = vld [vmem:[%s1458 + $0x98] sm:$0xf]
      %v1498 = vld [vmem:[%s1458 + $0x9c] sm:$0xf]
      %v1499 = vld [vmem:[%s1458 + $0xa0] sm:$0xf]
      %v1500 = vld [vmem:[%s1458 + $0xa4] sm:$0xf]
      %v1501 = vld [vmem:[%s1458 + $0xa8] sm:$0xf]
      %v1502 = vld [vmem:[%s1458 + $0xac] sm:$0xf]
      %v1503 = vld [vmem:[%s1458 + $0xb0] sm:$0xf]
      %v1504 = vld [vmem:[%s1458 + $0xb4] sm:$0xf]
      %v1505 = vld [vmem:[%s1458 + $0xb8] sm:$0xf]
      %v1506 = vld [vmem:[%s1458 + $0xbc] sm:$0xf]
      %v1555 = vunpack.c.l.b16 %v1459
      %v1556 = vunpack.c.l.b16 %v1460
      %v1557 = vunpack.c.l.b16 %v1461
      %v1558 = vunpack.c.l.b16 %v1462
      %v1559 = vunpack.c.l.b16 %v1463
      %v1560 = vunpack.c.l.b16 %v1464
      %v1561 = vunpack.c.l.b16 %v1465
      %v1562 = vunpack.c.l.b16 %v1466
      %v1563 = vunpack.c.l.b16 %v1467
      %v1564 = vunpack.c.l.b16 %v1468
      %v1565 = vunpack.c.l.b16 %v1469
      %v1566 = vunpack.c.l.b16 %v1470
      %v1567 = vunpack.c.l.b16 %v1471
      %v1568 = vunpack.c.l.b16 %v1472
      %v1569 = vunpack.c.l.b16 %v1473
      %v1570 = vunpack.c.l.b16 %v1474
      %v1571 = vunpack.c.l.b16 %v1475
      %v1572 = vunpack.c.l.b16 %v1476
      %v1573 = vunpack.c.l.b16 %v1477
      %v1574 = vunpack.c.l.b16 %v1478
      %v1575 = vunpack.c.l.b16 %v1479
      %v1576 = vunpack.c.l.b16 %v1480
      %v1577 = vunpack.c.l.b16 %v1481
      %v1578 = vunpack.c.l.b16 %v1482
      %v1579 = vunpack.c.l.b16 %v1483
      %v1580 = vunpack.c.l.b16 %v1484
      %v1581 = vunpack.c.l.b16 %v1485
      %v1582 = vunpack.c.l.b16 %v1486
      %v1583 = vunpack.c.l.b16 %v1487
      %v1584 = vunpack.c.l.b16 %v1488
      %v1585 = vunpack.c.l.b16 %v1489
      %v1586 = vunpack.c.l.b16 %v1490
      %v1587 = vunpack.c.l.b16 %v1491
      %v1588 = vunpack.c.l.b16 %v1492
      %v1589 = vunpack.c.l.b16 %v1493
      %v1590 = vunpack.c.l.b16 %v1494
      %v1591 = vunpack.c.l.b16 %v1495
      %v1592 = vunpack.c.l.b16 %v1496
      %v1593 = vunpack.c.l.b16 %v1497
      %v1594 = vunpack.c.l.b16 %v1498
      %v1595 = vunpack.c.l.b16 %v1499
      %v1596 = vunpack.c.l.b16 %v1500
      %v1597 = vunpack.c.l.b16 %v1501
      %v1598 = vunpack.c.l.b16 %v1502
      %v1599 = vunpack.c.l.b16 %v1503
      %v1600 = vunpack.c.l.b16 %v1504
      %v1601 = vunpack.c.l.b16 %v1505
      %v1602 = vunpack.c.l.b16 %v1506
      %v1603 = vpack.c.b16 %v1556, %v1555
      %v1604 = vpack.c.b16 %v1558, %v1557
      %v1605 = vpack.c.b16 %v1560, %v1559
      %v1606 = vpack.c.b16 %v1562, %v1561
      %v1607 = vpack.c.b16 %v1564, %v1563
      %v1608 = vpack.c.b16 %v1566, %v1565
      %v1609 = vpack.c.b16 %v1568, %v1567
      %v1610 = vpack.c.b16 %v1570, %v1569
      %v1611 = vpack.c.b16 %v1572, %v1571
      %v1612 = vpack.c.b16 %v1574, %v1573
      %v1613 = vpack.c.b16 %v1576, %v1575
      %v1614 = vpack.c.b16 %v1578, %v1577
      %v1615 = vpack.c.b16 %v1580, %v1579
      %v1616 = vpack.c.b16 %v1582, %v1581
      %v1617 = vpack.c.b16 %v1584, %v1583
      %v1618 = vpack.c.b16 %v1586, %v1585
      %v1619 = vpack.c.b16 %v1588, %v1587
      %v1620 = vpack.c.b16 %v1590, %v1589
      %v1621 = vpack.c.b16 %v1592, %v1591
      %v1622 = vpack.c.b16 %v1594, %v1593
      %v1623 = vpack.c.b16 %v1596, %v1595
      %v1624 = vpack.c.b16 %v1598, %v1597
      %v1625 = vpack.c.b16 %v1600, %v1599
      %v1626 = vpack.c.b16 %v1602, %v1601
      %1651 = vmatprep.subr.bf16.mxu0 0
      %1652 = vmatpush1.bf16.msra.mxu0 %v1610
      %1653 = vmatprep.subr.bf16.mxu0 0
      %1654 = vmatpush1.bf16.msra.mxu0 %v1609
      %1655 = vmatprep.subr.bf16.mxu0 0
      %1656 = vmatpush1.bf16.msra.mxu0 %v1608
      %1657 = vmatprep.subr.bf16.mxu0 0
      %1658 = vmatpush1.bf16.msra.mxu0 %v1607
      %1659 = vmatprep.subr.bf16.mxu0 0
      %1660 = vmatpush1.bf16.msra.mxu0 %v1606
      %1661 = vmatprep.subr.bf16.mxu0 0
      %1662 = vmatpush1.bf16.msra.mxu0 %v1605
      %1663 = vmatprep.subr.bf16.mxu0 0
      %1664 = vmatpush1.bf16.msra.mxu0 %v1604
      %1665 = vmatprep.subr.bf16.mxu0 0
      %1666 = vmatpush1.bf16.msra.mxu0 %v1603
      %1667 = vmatprep.subr.bf16.mxu0 0
      %1668 = vmatpush2.bf16.msra.mxu0 %v1618
      %1669 = vmatprep.subr.bf16.mxu0 0
      %1670 = vmatpush2.bf16.msra.mxu0 %v1617
      %1671 = vmatprep.subr.bf16.mxu0 0
      %1672 = vmatpush2.bf16.msra.mxu0 %v1616
      %1673 = vmatprep.subr.bf16.mxu0 0
      %1674 = vmatpush2.bf16.msra.mxu0 %v1615
      %1675 = vmatprep.subr.bf16.mxu0 0
      %1676 = vmatpush2.bf16.msra.mxu0 %v1614
      %1677 = vmatprep.subr.bf16.mxu0 0
      %1678 = vmatpush2.bf16.msra.mxu0 %v1613
      %1679 = vmatprep.subr.bf16.mxu0 0
      %1680 = vmatpush2.bf16.msra.mxu0 %v1612
      %1681 = vmatprep.subr.bf16.mxu0 0
      %1682 = vmatpush2.bf16.msra.mxu0 %v1611
      %1683 = vmatprep.mubr.bf16.mxu0 %v397
      %1684 = vmatmul.mubr.bf16.gmra.mxu0 %v317
      %v1685 = vpop.f32.mrf.mxu0
      %v1686 = vadd.f32 0.0, %v1685
      %v1687 = vpop.f32.mrf.mxu0
      %v1688 = vpop.f32.mrf.mxu0
      %v1689 = vadd.f32 0.0, %v1688
      %v1690 = vpop.f32.mrf.mxu0
      %1691 = vmatprep.mubr.bf16.mxu0 %v398
      %1692 = vmatmul.mubr.bf16.gmra.mxu0 %v318
      %v1693 = vpop.f32.mrf.mxu0
      %v1694 = vadd.f32 0.0, %v1693
      %v1695 = vpop.f32.mrf.mxu0
      %v1696 = vpop.f32.mrf.mxu0
      %v1697 = vadd.f32 0.0, %v1696
      %v1698 = vpop.f32.mrf.mxu0
      %1699 = vmatprep.mubr.bf16.mxu0 %v399
      %1700 = vmatmul.mubr.bf16.gmra.mxu0 %v319
      %v1701 = vpop.f32.mrf.mxu0
      %v1702 = vadd.f32 0.0, %v1701
      %v1703 = vpop.f32.mrf.mxu0
      %v1704 = vpop.f32.mrf.mxu0
      %v1705 = vadd.f32 0.0, %v1704
      %v1706 = vpop.f32.mrf.mxu0
      %1707 = vmatprep.mubr.bf16.mxu0 %v400
      %1708 = vmatmul.mubr.bf16.gmra.mxu0 %v320
      %v1709 = vpop.f32.mrf.mxu0
      %v1710 = vadd.f32 0.0, %v1709
      %v1711 = vpop.f32.mrf.mxu0
      %v1712 = vpop.f32.mrf.mxu0
      %v1713 = vadd.f32 0.0, %v1712
      %v1714 = vpop.f32.mrf.mxu0
      %1715 = vmatprep.mubr.bf16.mxu0 %v401
      %1716 = vmatmul.mubr.bf16.gmra.mxu0 %v321
      %v1717 = vpop.f32.mrf.mxu0
      %v1718 = vadd.f32 0.0, %v1717
      %v1719 = vpop.f32.mrf.mxu0
      %v1720 = vpop.f32.mrf.mxu0
      %v1721 = vadd.f32 0.0, %v1720
      %v1722 = vpop.f32.mrf.mxu0
      %1723 = vmatprep.mubr.bf16.mxu0 %v402
      %1724 = vmatmul.mubr.bf16.gmra.mxu0 %v322
      %v1725 = vpop.f32.mrf.mxu0
      %v1726 = vadd.f32 0.0, %v1725
      %v1727 = vpop.f32.mrf.mxu0
      %v1728 = vpop.f32.mrf.mxu0
      %v1729 = vadd.f32 0.0, %v1728
      %v1730 = vpop.f32.mrf.mxu0
      %1731 = vmatprep.mubr.bf16.mxu0 %v403
      %1732 = vmatmul.mubr.bf16.gmra.mxu0 %v323
      %v1733 = vpop.f32.mrf.mxu0
      %v1734 = vadd.f32 0.0, %v1733
      %v1735 = vpop.f32.mrf.mxu0
      %v1736 = vpop.f32.mrf.mxu0
      %v1737 = vadd.f32 0.0, %v1736
      %v1738 = vpop.f32.mrf.mxu0
      %1739 = vmatprep.mubr.bf16.mxu0 %v404
      %1740 = vmatmul.mubr.bf16.gmra.mxu0 %v324
      %v1741 = vpop.f32.mrf.mxu0
      %v1742 = vadd.f32 0.0, %v1741
      %v1743 = vpop.f32.mrf.mxu0
      %v1744 = vpop.f32.mrf.mxu0
      %v1745 = vadd.f32 0.0, %v1744
      %v1746 = vpop.f32.mrf.mxu0
      %1747 = vmatprep.mubr.bf16.mxu0 %v405
      %1748 = vmatmul.mubr.bf16.gmra.mxu0 %v325
      %v1749 = vpop.f32.mrf.mxu0
      %v1750 = vadd.f32 0.0, %v1749
      %v1751 = vpop.f32.mrf.mxu0
      %v1752 = vpop.f32.mrf.mxu0
      %v1753 = vadd.f32 0.0, %v1752
      %v1754 = vpop.f32.mrf.mxu0
      %1755 = vmatprep.mubr.bf16.mxu0 %v406
      %1756 = vmatmul.mubr.bf16.gmra.mxu0 %v326
      %v1757 = vpop.f32.mrf.mxu0
      %v1758 = vadd.f32 0.0, %v1757
      %v1759 = vpop.f32.mrf.mxu0
      %v1760 = vpop.f32.mrf.mxu0
      %v1761 = vadd.f32 0.0, %v1760
      %v1762 = vpop.f32.mrf.mxu0
      %1763 = vmatprep.mubr.bf16.mxu0 %v407
      %1764 = vmatmul.mubr.bf16.gmra.mxu0 %v327
      %v1765 = vpop.f32.mrf.mxu0
      %v1766 = vadd.f32 0.0, %v1765
      %v1767 = vpop.f32.mrf.mxu0
      %v1768 = vpop.f32.mrf.mxu0
      %v1769 = vadd.f32 0.0, %v1768
      %v1770 = vpop.f32.mrf.mxu0
      %1771 = vmatprep.mubr.bf16.mxu0 %v408
      %1772 = vmatmul.mubr.bf16.gmra.mxu0 %v328
      %v1773 = vpop.f32.mrf.mxu0
      %v1774 = vadd.f32 0.0, %v1773
      %v1775 = vpop.f32.mrf.mxu0
      %v1776 = vpop.f32.mrf.mxu0
      %v1777 = vadd.f32 0.0, %v1776
      %v1778 = vpop.f32.mrf.mxu0
      %1779 = vmatprep.mubr.bf16.mxu0 %v409
      %1780 = vmatmul.mubr.bf16.gmra.mxu0 %v329
      %v1781 = vpop.f32.mrf.mxu0
      %v1782 = vadd.f32 0.0, %v1781
      %v1783 = vpop.f32.mrf.mxu0
      %v1784 = vpop.f32.mrf.mxu0
      %v1785 = vadd.f32 0.0, %v1784
      %v1786 = vpop.f32.mrf.mxu0
      %1787 = vmatprep.mubr.bf16.mxu0 %v410
      %1788 = vmatmul.mubr.bf16.gmra.mxu0 %v330
      %v1789 = vpop.f32.mrf.mxu0
      %v1790 = vadd.f32 0.0, %v1789
      %v1791 = vpop.f32.mrf.mxu0
      %v1792 = vpop.f32.mrf.mxu0
      %v1793 = vadd.f32 0.0, %v1792
      %v1794 = vpop.f32.mrf.mxu0
      %1795 = vmatprep.mubr.bf16.mxu0 %v411
      %1796 = vmatmul.mubr.bf16.gmra.mxu0 %v331
      %v1797 = vpop.f32.mrf.mxu0
      %v1798 = vadd.f32 0.0, %v1797
      %v1799 = vpop.f32.mrf.mxu0
      %v1800 = vpop.f32.mrf.mxu0
      %v1801 = vadd.f32 0.0, %v1800
      %v1802 = vpop.f32.mrf.mxu0
      %1803 = vmatprep.mubr.bf16.mxu0 %v412
      %1804 = vmatmul.mubr.bf16.gmra.mxu0 %v332
      %v1805 = vpop.f32.mrf.mxu0
      %v1806 = vadd.f32 0.0, %v1805
      %v1807 = vpop.f32.mrf.mxu0
      %v1808 = vpop.f32.mrf.mxu0
      %v1809 = vadd.f32 0.0, %v1808
      %v1810 = vpop.f32.mrf.mxu0
      %1811 = vdwg.mxu0
      %1812 = vmatprep.subr.bf16.mxu0 0
      %1813 = vmatpush1.bf16.msra.mxu0 %v1626
      %1814 = vmatprep.subr.bf16.mxu0 0
      %1815 = vmatpush1.bf16.msra.mxu0 %v1625
      %1816 = vmatprep.subr.bf16.mxu0 0
      %1817 = vmatpush1.bf16.msra.mxu0 %v1624
      %1818 = vmatprep.subr.bf16.mxu0 0
      %1819 = vmatpush1.bf16.msra.mxu0 %v1623
      %1820 = vmatprep.subr.bf16.mxu0 0
      %1821 = vmatpush1.bf16.msra.mxu0 %v1622
      %1822 = vmatprep.subr.bf16.mxu0 0
      %1823 = vmatpush1.bf16.msra.mxu0 %v1621
      %1824 = vmatprep.subr.bf16.mxu0 0
      %1825 = vmatpush1.bf16.msra.mxu0 %v1620
      %1826 = vmatprep.subr.bf16.mxu0 0
      %1827 = vmatpush1.bf16.msra.mxu0 %v1619
      %1828 = vmatprep.subr.bf16.mxu0 0
      %1829 = vmatpush2.bf16.msra.mxu0 0
      %1830 = vmatprep.subr.bf16.mxu0 0
      %1831 = vmatpush2.bf16.msra.mxu0 0
      %1832 = vmatprep.subr.bf16.mxu0 0
      %1833 = vmatpush2.bf16.msra.mxu0 0
      %1834 = vmatprep.subr.bf16.mxu0 0
      %1835 = vmatpush2.bf16.msra.mxu0 0
      %1836 = vmatprep.subr.bf16.mxu0 0
      %1837 = vmatpush2.bf16.msra.mxu0 0
      %1838 = vmatprep.subr.bf16.mxu0 0
      %1839 = vmatpush2.bf16.msra.mxu0 0
      %1840 = vmatprep.subr.bf16.mxu0 0
      %1841 = vmatpush2.bf16.msra.mxu0 0
      %1842 = vmatprep.subr.bf16.mxu0 0
      %1843 = vmatpush2.bf16.msra.mxu0 0
      %1844 = vmatprep.mubr.bf16.mxu0 0
      %1845 = vmatmul.mubr.bf16.gmra.mxu0 %v319
      %v1846 = vpop.f32.mrf.mxu0
      %v1847 = vadd.f32 %v1686, %v1846
      %v1848 = vpop.f32.mrf.mxu0
      %v1849 = vpop.f32.mrf.mxu0
      %v1850 = vadd.f32 %v1689, %v1849
      %v1851 = vpop.f32.mrf.mxu0
      %1852 = vmatprep.mubr.bf16.mxu0 0
      %1853 = vmatmul.mubr.bf16.gmra.mxu0 %v320
      %v1854 = vpop.f32.mrf.mxu0
      %v1855 = vadd.f32 %v1694, %v1854
      %v1856 = vpop.f32.mrf.mxu0
      %v1857 = vpop.f32.mrf.mxu0
      %v1858 = vadd.f32 %v1697, %v1857
      %v1859 = vpop.f32.mrf.mxu0
      %1860 = vmatprep.mubr.bf16.mxu0 0
      %1861 = vmatmul.mubr.bf16.gmra.mxu0 %v321
      %v1862 = vpop.f32.mrf.mxu0
      %v1863 = vadd.f32 %v1702, %v1862
      %v1864 = vpop.f32.mrf.mxu0
      %v1865 = vpop.f32.mrf.mxu0
      %v1866 = vadd.f32 %v1705, %v1865
      %v1867 = vpop.f32.mrf.mxu0
      %1868 = vmatprep.mubr.bf16.mxu0 0
      %1869 = vmatmul.mubr.bf16.gmra.mxu0 %v322
      %v1870 = vpop.f32.mrf.mxu0
      %v1871 = vadd.f32 %v1710, %v1870
      %v1872 = vpop.f32.mrf.mxu0
      %v1873 = vpop.f32.mrf.mxu0
      %v1874 = vadd.f32 %v1713, %v1873
      %v1875 = vpop.f32.mrf.mxu0
      %1876 = vmatprep.mubr.bf16.mxu0 0
      %1877 = vmatmul.mubr.bf16.gmra.mxu0 %v323
      %v1878 = vpop.f32.mrf.mxu0
      %v1879 = vadd.f32 %v1718, %v1878
      %v1880 = vpop.f32.mrf.mxu0
      %v1881 = vpop.f32.mrf.mxu0
      %v1882 = vadd.f32 %v1721, %v1881
      %v1883 = vpop.f32.mrf.mxu0
      %1884 = vmatprep.mubr.bf16.mxu0 0
      %1885 = vmatmul.mubr.bf16.gmra.mxu0 %v324
      %v1886 = vpop.f32.mrf.mxu0
      %v1887 = vadd.f32 %v1726, %v1886
      %v1888 = vpop.f32.mrf.mxu0
      %v1889 = vpop.f32.mrf.mxu0
      %v1890 = vadd.f32 %v1729, %v1889
      %v1891 = vpop.f32.mrf.mxu0
      %1892 = vmatprep.mubr.bf16.mxu0 0
      %1893 = vmatmul.mubr.bf16.gmra.mxu0 %v325
      %v1894 = vpop.f32.mrf.mxu0
      %v1895 = vadd.f32 %v1734, %v1894
      %v1896 = vpop.f32.mrf.mxu0
      %v1897 = vpop.f32.mrf.mxu0
      %v1898 = vadd.f32 %v1737, %v1897
      %v1899 = vpop.f32.mrf.mxu0
      %1900 = vmatprep.mubr.bf16.mxu0 0
      %1901 = vmatmul.mubr.bf16.gmra.mxu0 %v326
      %v1902 = vpop.f32.mrf.mxu0
      %v1903 = vadd.f32 %v1742, %v1902
      %v1904 = vpop.f32.mrf.mxu0
      %v1905 = vpop.f32.mrf.mxu0
      %v1906 = vadd.f32 %v1745, %v1905
      %v1907 = vpop.f32.mrf.mxu0
      %1908 = vmatprep.mubr.bf16.mxu0 0
      %1909 = vmatmul.mubr.bf16.gmra.mxu0 %v327
      %v1910 = vpop.f32.mrf.mxu0
      %v1911 = vadd.f32 %v1750, %v1910
      %v1912 = vpop.f32.mrf.mxu0
      %v1913 = vpop.f32.mrf.mxu0
      %v1914 = vadd.f32 %v1753, %v1913
      %v1915 = vpop.f32.mrf.mxu0
      %1916 = vmatprep.mubr.bf16.mxu0 0
      %1917 = vmatmul.mubr.bf16.gmra.mxu0 %v328
      %v1918 = vpop.f32.mrf.mxu0
      %v1919 = vadd.f32 %v1758, %v1918
      %v1920 = vpop.f32.mrf.mxu0
      %v1921 = vpop.f32.mrf.mxu0
      %v1922 = vadd.f32 %v1761, %v1921
      %v1923 = vpop.f32.mrf.mxu0
      %1924 = vmatprep.mubr.bf16.mxu0 0
      %1925 = vmatmul.mubr.bf16.gmra.mxu0 %v329
      %v1926 = vpop.f32.mrf.mxu0
      %v1927 = vadd.f32 %v1766, %v1926
      %v1928 = vpop.f32.mrf.mxu0
      %v1929 = vpop.f32.mrf.mxu0
      %v1930 = vadd.f32 %v1769, %v1929
      %v1931 = vpop.f32.mrf.mxu0
      %1932 = vmatprep.mubr.bf16.mxu0 0
      %1933 = vmatmul.mubr.bf16.gmra.mxu0 %v330
      %v1934 = vpop.f32.mrf.mxu0
      %v1935 = vadd.f32 %v1774, %v1934
      %v1936 = vpop.f32.mrf.mxu0
      %v1937 = vpop.f32.mrf.mxu0
      %v1938 = vadd.f32 %v1777, %v1937
      %v1939 = vpop.f32.mrf.mxu0
      %1940 = vmatprep.mubr.bf16.mxu0 0
      %1941 = vmatmul.mubr.bf16.gmra.mxu0 %v331
      %v1942 = vpop.f32.mrf.mxu0
      %v1943 = vadd.f32 %v1782, %v1942
      %v1944 = vpop.f32.mrf.mxu0
      %v1945 = vpop.f32.mrf.mxu0
      %v1946 = vadd.f32 %v1785, %v1945
      %v1947 = vpop.f32.mrf.mxu0
      %1948 = vmatprep.mubr.bf16.mxu0 0
      %1949 = vmatmul.mubr.bf16.gmra.mxu0 %v332
      %v1950 = vpop.f32.mrf.mxu0
      %v1951 = vadd.f32 %v1790, %v1950
      %v1952 = vpop.f32.mrf.mxu0
      %v1953 = vpop.f32.mrf.mxu0
      %v1954 = vadd.f32 %v1793, %v1953
      %v1955 = vpop.f32.mrf.mxu0
      %1956 = vmatprep.mubr.bf16.mxu0 0
      %1957 = vmatmul.mubr.bf16.gmra.mxu0 %v317
      %v1958 = vpop.f32.mrf.mxu0
      %v1959 = vadd.f32 %v1798, %v1958
      %v1960 = vpop.f32.mrf.mxu0
      %v1961 = vpop.f32.mrf.mxu0
      %v1962 = vadd.f32 %v1801, %v1961
      %v1963 = vpop.f32.mrf.mxu0
      %1964 = vmatprep.mubr.bf16.mxu0 0
      %1965 = vmatmul.mubr.bf16.gmra.mxu0 %v318
      %v1966 = vpop.f32.mrf.mxu0
      %v1967 = vadd.f32 %v1806, %v1966
      %v1968 = vpop.f32.mrf.mxu0
      %v1969 = vpop.f32.mrf.mxu0
      %v1970 = vadd.f32 %v1809, %v1969
      %v1971 = vpop.f32.mrf.mxu0
      %1972 = vdwg.mxu0
      %v1973 = vrot.slane %v817, 7
      %v1974 = vrot.slane %v820, 7
      %v1975 = vrot.slane %v825, 7
      %v1976 = vrot.slane %v828, 7
      %v1977 = vrot.slane %v833, 7
      %v1978 = vrot.slane %v836, 7
      %v1979 = vrot.slane %v841, 7
      %v1980 = vrot.slane %v844, 7
      %v1981 = vrot.slane %v849, 7
      %v1982 = vrot.slane %v852, 7
      %v1983 = vrot.slane %v857, 7
      %v1984 = vrot.slane %v860, 7
      %v1985 = vrot.slane %v865, 7
      %v1986 = vrot.slane %v868, 7
      %v1987 = vrot.slane %v873, 7
      %v1988 = vrot.slane %v876, 7
      %v1989 = vrot.slane %v881, 7
      %v1990 = vrot.slane %v884, 7
      %v1991 = vrot.slane %v889, 7
      %v1992 = vrot.slane %v892, 7
      %v1993 = vrot.slane %v897, 7
      %v1994 = vrot.slane %v900, 7
      %v1995 = vrot.slane %v905, 7
      %v1996 = vrot.slane %v908, 7
      %v1997 = vrot.slane %v913, 7
      %v1998 = vrot.slane %v916, 7
      %v1999 = vrot.slane %v921, 7
      %v2000 = vrot.slane %v924, 7
      %v2001 = vrot.slane %v929, 7
      %v2002 = vrot.slane %v932, 7
      %v2003 = vrot.slane %v937, 7
      %v2004 = vrot.slane %v940, 7
      %v2005 = vlaneseq
      %v2006 = vshrl.u32 %v2005, 7
      %vm2007 = vcmp.lt.s32.totalorder %v2006, 1
      %v2008 = vsel %vm2007, %v2003, %v2004
      %v2009 = vsel %vm2007, %v2002, %v2003
      %v2010 = vsel %vm2007, %v2001, %v2002
      %v2011 = vsel %vm2007, %v2000, %v2001
      %v2012 = vsel %vm2007, %v1999, %v2000
      %v2013 = vsel %vm2007, %v1998, %v1999
      %v2014 = vsel %vm2007, %v1997, %v1998
      %v2015 = vsel %vm2007, %v1996, %v1997
      %v2016 = vsel %vm2007, %v1995, %v1996
      %v2017 = vsel %vm2007, %v1994, %v1995
      %v2018 = vsel %vm2007, %v1993, %v1994
      %v2019 = vsel %vm2007, %v1992, %v1993
      %v2020 = vsel %vm2007, %v1991, %v1992
      %v2021 = vsel %vm2007, %v1990, %v1991
      %v2022 = vsel %vm2007, %v1989, %v1990
      %v2023 = vsel %vm2007, %v1988, %v1989
      %v2024 = vsel %vm2007, %v1987, %v1988
      %v2025 = vsel %vm2007, %v1986, %v1987
      %v2026 = vsel %vm2007, %v1985, %v1986
      %v2027 = vsel %vm2007, %v1984, %v1985
      %v2028 = vsel %vm2007, %v1983, %v1984
      %v2029 = vsel %vm2007, %v1982, %v1983
      %v2030 = vsel %vm2007, %v1981, %v1982
      %v2031 = vsel %vm2007, %v1980, %v1981
      %v2032 = vsel %vm2007, %v1979, %v1980
      %v2033 = vsel %vm2007, %v1978, %v1979
      %v2034 = vsel %vm2007, %v1977, %v1978
      %v2035 = vsel %vm2007, %v1976, %v1977
      %v2036 = vsel %vm2007, %v1975, %v1976
      %v2037 = vsel %vm2007, %v1974, %v1975
      %v2038 = vsel %vm2007, %v1973, %v1974
      %v2039 = vsel %vm2007, %v2004, %v1973
      %v2040 = vadd.f32 %v2039, %v1332
      %v2041 = vadd.f32 %v2038, %v1335
      %v2042 = vadd.f32 %v2037, %v1340
      %v2043 = vadd.f32 %v2036, %v1343
      %v2044 = vadd.f32 %v2035, %v1348
      %v2045 = vadd.f32 %v2034, %v1351
      %v2046 = vadd.f32 %v2033, %v1356
      %v2047 = vadd.f32 %v2032, %v1359
      %v2048 = vadd.f32 %v2031, %v1364
      %v2049 = vadd.f32 %v2030, %v1367
      %v2050 = vadd.f32 %v2029, %v1372
      %v2051 = vadd.f32 %v2028, %v1375
      %v2052 = vadd.f32 %v2027, %v1380
      %v2053 = vadd.f32 %v2026, %v1383
      %v2054 = vadd.f32 %v2025, %v1388
      %v2055 = vadd.f32 %v2024, %v1391
      %v2056 = vadd.f32 %v2023, %v1396
      %v2057 = vadd.f32 %v2022, %v1399
      %v2058 = vadd.f32 %v2021, %v1404
      %v2059 = vadd.f32 %v2020, %v1407
      %v2060 = vadd.f32 %v2019, %v1412
      %v2061 = vadd.f32 %v2018, %v1415
      %v2062 = vadd.f32 %v2017, %v1420
      %v2063 = vadd.f32 %v2016, %v1423
      %v2064 = vadd.f32 %v2015, %v1428
      %v2065 = vadd.f32 %v2014, %v1431
      %v2066 = vadd.f32 %v2013, %v1436
      %v2067 = vadd.f32 %v2012, %v1439
      %v2068 = vadd.f32 %v2011, %v1444
      %v2069 = vadd.f32 %v2010, %v1447
      %v2070 = vadd.f32 %v2009, %v1452
      %v2071 = vadd.f32 %v2008, %v1455
      %v2072 = vrot.slane %v1847, 1
      %v2073 = vrot.slane %v1850, 1
      %v2074 = vrot.slane %v1855, 1
      %v2075 = vrot.slane %v1858, 1
      %v2076 = vrot.slane %v1863, 1
      %v2077 = vrot.slane %v1866, 1
      %v2078 = vrot.slane %v1871, 1
      %v2079 = vrot.slane %v1874, 1
      %v2080 = vrot.slane %v1879, 1
      %v2081 = vrot.slane %v1882, 1
      %v2082 = vrot.slane %v1887, 1
      %v2083 = vrot.slane %v1890, 1
      %v2084 = vrot.slane %v1895, 1
      %v2085 = vrot.slane %v1898, 1
      %v2086 = vrot.slane %v1903, 1
      %v2087 = vrot.slane %v1906, 1
      %v2088 = vrot.slane %v1911, 1
      %v2089 = vrot.slane %v1914, 1
      %v2090 = vrot.slane %v1919, 1
      %v2091 = vrot.slane %v1922, 1
      %v2092 = vrot.slane %v1927, 1
      %v2093 = vrot.slane %v1930, 1
      %v2094 = vrot.slane %v1935, 1
      %v2095 = vrot.slane %v1938, 1
      %v2096 = vrot.slane %v1943, 1
      %v2097 = vrot.slane %v1946, 1
      %v2098 = vrot.slane %v1951, 1
      %v2099 = vrot.slane %v1954, 1
      %v2100 = vrot.slane %v1959, 1
      %v2101 = vrot.slane %v1962, 1
      %v2102 = vrot.slane %v1967, 1
      %v2103 = vrot.slane %v1970, 1
      %vm2104 = vcmp.lt.s32.totalorder %v2006, 7
      %v2105 = vsel %vm2104, %v2102, %v2103
      %v2106 = vsel %vm2104, %v2101, %v2102
      %v2107 = vsel %vm2104, %v2100, %v2101
      %v2108 = vsel %vm2104, %v2099, %v2100
      %v2109 = vsel %vm2104, %v2098, %v2099
      %v2110 = vsel %vm2104, %v2097, %v2098
      %v2111 = vsel %vm2104, %v2096, %v2097
      %v2112 = vsel %vm2104, %v2095, %v2096
      %v2113 = vsel %vm2104, %v2094, %v2095
      %v2114 = vsel %vm2104, %v2093, %v2094
      %v2115 = vsel %vm2104, %v2092, %v2093
      %v2116 = vsel %vm2104, %v2091, %v2092
      %v2117 = vsel %vm2104, %v2090, %v2091
      %v2118 = vsel %vm2104, %v2089, %v2090
      %v2119 = vsel %vm2104, %v2088, %v2089
      %v2120 = vsel %vm2104, %v2087, %v2088
      %v2121 = vsel %vm2104, %v2086, %v2087
      %v2122 = vsel %vm2104, %v2085, %v2086
      %v2123 = vsel %vm2104, %v2084, %v2085
      %v2124 = vsel %vm2104, %v2083, %v2084
      %v2125 = vsel %vm2104, %v2082, %v2083
      %v2126 = vsel %vm2104, %v2081, %v2082
      %v2127 = vsel %vm2104, %v2080, %v2081
      %v2128 = vsel %vm2104, %v2079, %v2080
      %v2129 = vsel %vm2104, %v2078, %v2079
      %v2130 = vsel %vm2104, %v2077, %v2078
      %v2131 = vsel %vm2104, %v2076, %v2077
      %v2132 = vsel %vm2104, %v2075, %v2076
      %v2133 = vsel %vm2104, %v2074, %v2075
      %v2134 = vsel %vm2104, %v2073, %v2074
      %v2135 = vsel %vm2104, %v2072, %v2073
      %v2136 = vsel %vm2104, %v2103, %v2072
      %v2137 = vadd.f32 %v2040, %v2135
      %v2138 = vadd.f32 %v2041, %v2134
      %v2139 = vadd.f32 %v2042, %v2133
      %v2140 = vadd.f32 %v2043, %v2132
      %v2141 = vadd.f32 %v2044, %v2131
      %v2142 = vadd.f32 %v2045, %v2130
      %v2143 = vadd.f32 %v2046, %v2129
      %v2144 = vadd.f32 %v2047, %v2128
      %v2145 = vadd.f32 %v2048, %v2127
      %v2146 = vadd.f32 %v2049, %v2126
      %v2147 = vadd.f32 %v2050, %v2125
      %v2148 = vadd.f32 %v2051, %v2124
      %v2149 = vadd.f32 %v2052, %v2123
      %v2150 = vadd.f32 %v2053, %v2122
      %v2151 = vadd.f32 %v2054, %v2121
      %v2152 = vadd.f32 %v2055, %v2120
      %v2153 = vadd.f32 %v2056, %v2119
      %v2154 = vadd.f32 %v2057, %v2118
      %v2155 = vadd.f32 %v2058, %v2117
      %v2156 = vadd.f32 %v2059, %v2116
      %v2157 = vadd.f32 %v2060, %v2115
      %v2158 = vadd.f32 %v2061, %v2114
      %v2159 = vadd.f32 %v2062, %v2113
      %v2160 = vadd.f32 %v2063, %v2112
      %v2161 = vadd.f32 %v2064, %v2111
      %v2162 = vadd.f32 %v2065, %v2110
      %v2163 = vadd.f32 %v2066, %v2109
      %v2164 = vadd.f32 %v2067, %v2108
      %v2165 = vadd.f32 %v2068, %v2107
      %v2166 = vadd.f32 %v2069, %v2106
      %v2167 = vadd.f32 %v2070, %v2105
      %v2168 = vadd.f32 %v2071, %v2136
      %v2169 = vld [vmem:[%s242] sm:$0x1]
      %v2171 = vlaneseq
      %v2172 = vshrl.u32 %v2171, 7
      %v2173 = vsub.s32 0, %v2172
      %v2174 = vrot.slane %v2169, %v2173
      %v2176 = vadd.f32 %v2137, %v2174
      %v2177 = vadd.f32 %v2138, %v2174
      %v2178 = vadd.f32 %v2139, %v2174
      %v2179 = vadd.f32 %v2140, %v2174
      %v2180 = vadd.f32 %v2141, %v2174
      %v2181 = vadd.f32 %v2142, %v2174
      %v2182 = vadd.f32 %v2143, %v2174
      %v2183 = vadd.f32 %v2144, %v2174
      %v2184 = vadd.f32 %v2145, %v2174
      %v2185 = vadd.f32 %v2146, %v2174
      %v2186 = vadd.f32 %v2147, %v2174
      %v2187 = vadd.f32 %v2148, %v2174
      %v2188 = vadd.f32 %v2149, %v2174
      %v2189 = vadd.f32 %v2150, %v2174
      %v2190 = vadd.f32 %v2151, %v2174
      %v2191 = vadd.f32 %v2152, %v2174
      %v2192 = vadd.f32 %v2153, %v2174
      %v2193 = vadd.f32 %v2154, %v2174
      %v2194 = vadd.f32 %v2155, %v2174
      %v2195 = vadd.f32 %v2156, %v2174
      %v2196 = vadd.f32 %v2157, %v2174
      %v2197 = vadd.f32 %v2158, %v2174
      %v2198 = vadd.f32 %v2159, %v2174
      %v2199 = vadd.f32 %v2160, %v2174
      %v2200 = vadd.f32 %v2161, %v2174
      %v2201 = vadd.f32 %v2162, %v2174
      %v2202 = vadd.f32 %v2163, %v2174
      %v2203 = vadd.f32 %v2164, %v2174
      %v2204 = vadd.f32 %v2165, %v2174
      %v2205 = vadd.f32 %v2166, %v2174
      %v2206 = vadd.f32 %v2167, %v2174
      %v2207 = vadd.f32 %v2168, %v2174
      %v2208 = vmax.f32 %v2176, 0.0
      %v2209 = vmax.f32 %v2177, 0.0
      %v2210 = vmax.f32 %v2178, 0.0
      %v2211 = vmax.f32 %v2179, 0.0
      %v2212 = vmax.f32 %v2180, 0.0
      %v2213 = vmax.f32 %v2181, 0.0
      %v2214 = vmax.f32 %v2182, 0.0
      %v2215 = vmax.f32 %v2183, 0.0
      %v2216 = vmax.f32 %v2184, 0.0
      %v2217 = vmax.f32 %v2185, 0.0
      %v2218 = vmax.f32 %v2186, 0.0
      %v2219 = vmax.f32 %v2187, 0.0
      %v2220 = vmax.f32 %v2188, 0.0
      %v2221 = vmax.f32 %v2189, 0.0
      %v2222 = vmax.f32 %v2190, 0.0
      %v2223 = vmax.f32 %v2191, 0.0
      %v2224 = vmax.f32 %v2192, 0.0
      %v2225 = vmax.f32 %v2193, 0.0
      %v2226 = vmax.f32 %v2194, 0.0
      %v2227 = vmax.f32 %v2195, 0.0
      %v2228 = vmax.f32 %v2196, 0.0
      %v2229 = vmax.f32 %v2197, 0.0
      %v2230 = vmax.f32 %v2198, 0.0
      %v2231 = vmax.f32 %v2199, 0.0
      %v2232 = vmax.f32 %v2200, 0.0
      %v2233 = vmax.f32 %v2201, 0.0
      %v2234 = vmax.f32 %v2202, 0.0
      %v2235 = vmax.f32 %v2203, 0.0
      %v2236 = vmax.f32 %v2204, 0.0
      %v2237 = vmax.f32 %v2205, 0.0
      %v2238 = vmax.f32 %v2206, 0.0
      %v2239 = vmax.f32 %v2207, 0.0
      %v2240 = vld [vmem:[%s3] sm:$0xff]
      %v2241 = vld [vmem:[%s3 + $0x8] sm:$0xff]
      %v2242 = vld [vmem:[%s3 + $0x10] sm:$0xff]
      %v2243 = vld [vmem:[%s3 + $0x18] sm:$0xff]
      %v2244 = vld [vmem:[%s3 + $0x20] sm:$0xff]
      %v2245 = vld [vmem:[%s3 + $0x28] sm:$0xff]
      %v2246 = vld [vmem:[%s3 + $0x30] sm:$0xff]
      %v2247 = vld [vmem:[%s3 + $0x38] sm:$0xff]
      %v2248 = vld [vmem:[%s3 + $0x40] sm:$0xff]
      %v2249 = vld [vmem:[%s3 + $0x48] sm:$0xff]
      %v2250 = vld [vmem:[%s3 + $0x50] sm:$0xff]
      %v2251 = vld [vmem:[%s3 + $0x58] sm:$0xff]
      %v2252 = vld [vmem:[%s3 + $0x60] sm:$0xff]
      %v2253 = vld [vmem:[%s3 + $0x68] sm:$0xff]
      %v2254 = vld [vmem:[%s3 + $0x70] sm:$0xff]
      %v2255 = vld [vmem:[%s3 + $0x78] sm:$0xff]
      %v2256 = vld [vmem:[%s3 + $0x80] sm:$0xff]
      %v2257 = vld [vmem:[%s3 + $0x88] sm:$0xff]
      %v2258 = vld [vmem:[%s3 + $0x90] sm:$0xff]
      %v2259 = vld [vmem:[%s3 + $0x98] sm:$0xff]
      %v2260 = vld [vmem:[%s3 + $0xa0] sm:$0xff]
      %v2261 = vld [vmem:[%s3 + $0xa8] sm:$0xff]
      %v2262 = vld [vmem:[%s3 + $0xb0] sm:$0xff]
      %v2263 = vld [vmem:[%s3 + $0xb8] sm:$0xff]
      %v2264 = vld [vmem:[%s3 + $0xc0] sm:$0xff]
      %v2265 = vld [vmem:[%s3 + $0xc8] sm:$0xff]
      %v2266 = vld [vmem:[%s3 + $0xd0] sm:$0xff]
      %v2267 = vld [vmem:[%s3 + $0xd8] sm:$0xff]
      %v2268 = vld [vmem:[%s3 + $0xe0] sm:$0xff]
      %v2269 = vld [vmem:[%s3 + $0xe8] sm:$0xff]
      %v2270 = vld [vmem:[%s3 + $0xf0] sm:$0xff]
      %v2271 = vld [vmem:[%s3 + $0xf8] sm:$0xff]
      %2273 = vset.pattern.permute.xlu0 0
      %2274 = vperm.xlu0 %2273, %v2240
      %v2275 = vpop.permute.xlu0 %2274
      %2278 = vset.pattern.permute.xlu0 0
      %2279 = vperm.xlu0 %2278, %v2241
      %v2280 = vpop.permute.xlu0 %2279
      %2283 = vset.pattern.permute.xlu0 0
      %2284 = vperm.xlu0 %2283, %v2242
      %v2285 = vpop.permute.xlu0 %2284
      %2288 = vset.pattern.permute.xlu0 0
      %2289 = vperm.xlu0 %2288, %v2243
      %v2290 = vpop.permute.xlu0 %2289
      %2293 = vset.pattern.permute.xlu0 0
      %2294 = vperm.xlu0 %2293, %v2244
      %v2295 = vpop.permute.xlu0 %2294
      %2298 = vset.pattern.permute.xlu0 0
      %2299 = vperm.xlu0 %2298, %v2245
      %v2300 = vpop.permute.xlu0 %2299
      %2303 = vset.pattern.permute.xlu0 0
      %2304 = vperm.xlu0 %2303, %v2246
      %v2305 = vpop.permute.xlu0 %2304
      %2308 = vset.pattern.permute.xlu0 0
      %2309 = vperm.xlu0 %2308, %v2247
      %v2310 = vpop.permute.xlu0 %2309
      %2313 = vset.pattern.permute.xlu0 0
      %2314 = vperm.xlu0 %2313, %v2248
      %v2315 = vpop.permute.xlu0 %2314
      %2318 = vset.pattern.permute.xlu0 0
      %2319 = vperm.xlu0 %2318, %v2249
      %v2320 = vpop.permute.xlu0 %2319
      %2323 = vset.pattern.permute.xlu0 0
      %2324 = vperm.xlu0 %2323, %v2250
      %v2325 = vpop.permute.xlu0 %2324
      %2328 = vset.pattern.permute.xlu0 0
      %2329 = vperm.xlu0 %2328, %v2251
      %v2330 = vpop.permute.xlu0 %2329
      %2333 = vset.pattern.permute.xlu0 0
      %2334 = vperm.xlu0 %2333, %v2252
      %v2335 = vpop.permute.xlu0 %2334
      %2338 = vset.pattern.permute.xlu0 0
      %2339 = vperm.xlu0 %2338, %v2253
      %v2340 = vpop.permute.xlu0 %2339
      %2343 = vset.pattern.permute.xlu0 0
      %2344 = vperm.xlu0 %2343, %v2254
      %v2345 = vpop.permute.xlu0 %2344
      %2348 = vset.pattern.permute.xlu0 0
      %2349 = vperm.xlu0 %2348, %v2255
      %v2350 = vpop.permute.xlu0 %2349
      %2353 = vset.pattern.permute.xlu0 0
      %2354 = vperm.xlu0 %2353, %v2256
      %v2355 = vpop.permute.xlu0 %2354
      %2358 = vset.pattern.permute.xlu0 0
      %2359 = vperm.xlu0 %2358, %v2257
      %v2360 = vpop.permute.xlu0 %2359
      %2363 = vset.pattern.permute.xlu0 0
      %2364 = vperm.xlu0 %2363, %v2258
      %v2365 = vpop.permute.xlu0 %2364
      %2368 = vset.pattern.permute.xlu0 0
      %2369 = vperm.xlu0 %2368, %v2259
      %v2370 = vpop.permute.xlu0 %2369
      %2373 = vset.pattern.permute.xlu0 0
      %2374 = vperm.xlu0 %2373, %v2260
      %v2375 = vpop.permute.xlu0 %2374
      %2378 = vset.pattern.permute.xlu0 0
      %2379 = vperm.xlu0 %2378, %v2261
      %v2380 = vpop.permute.xlu0 %2379
      %2383 = vset.pattern.permute.xlu0 0
      %2384 = vperm.xlu0 %2383, %v2262
      %v2385 = vpop.permute.xlu0 %2384
      %2388 = vset.pattern.permute.xlu0 0
      %2389 = vperm.xlu0 %2388, %v2263
      %v2390 = vpop.permute.xlu0 %2389
      %2393 = vset.pattern.permute.xlu0 0
      %2394 = vperm.xlu0 %2393, %v2264
      %v2395 = vpop.permute.xlu0 %2394
      %2398 = vset.pattern.permute.xlu0 0
      %2399 = vperm.xlu0 %2398, %v2265
      %v2400 = vpop.permute.xlu0 %2399
      %2403 = vset.pattern.permute.xlu0 0
      %2404 = vperm.xlu0 %2403, %v2266
      %v2405 = vpop.permute.xlu0 %2404
      %2408 = vset.pattern.permute.xlu0 0
      %2409 = vperm.xlu0 %2408, %v2267
      %v2410 = vpop.permute.xlu0 %2409
      %2413 = vset.pattern.permute.xlu0 0
      %2414 = vperm.xlu0 %2413, %v2268
      %v2415 = vpop.permute.xlu0 %2414
      %2418 = vset.pattern.permute.xlu0 0
      %2419 = vperm.xlu0 %2418, %v2269
      %v2420 = vpop.permute.xlu0 %2419
      %2423 = vset.pattern.permute.xlu0 0
      %2424 = vperm.xlu0 %2423, %v2270
      %v2425 = vpop.permute.xlu0 %2424
      %2428 = vset.pattern.permute.xlu0 0
      %2429 = vperm.xlu0 %2428, %v2271
      %v2430 = vpop.permute.xlu0 %2429
      %v2432 = vmul.f32 %v2208, %v2275
      %v2433 = vmul.f32 %v2209, %v2280
      %v2434 = vmul.f32 %v2210, %v2285
      %v2435 = vmul.f32 %v2211, %v2290
      %v2436 = vmul.f32 %v2212, %v2295
      %v2437 = vmul.f32 %v2213, %v2300
      %v2438 = vmul.f32 %v2214, %v2305
      %v2439 = vmul.f32 %v2215, %v2310
      %v2440 = vmul.f32 %v2216, %v2315
      %v2441 = vmul.f32 %v2217, %v2320
      %v2442 = vmul.f32 %v2218, %v2325
      %v2443 = vmul.f32 %v2219, %v2330
      %v2444 = vmul.f32 %v2220, %v2335
      %v2445 = vmul.f32 %v2221, %v2340
      %v2446 = vmul.f32 %v2222, %v2345
      %v2447 = vmul.f32 %v2223, %v2350
      %v2448 = vmul.f32 %v2224, %v2355
      %v2449 = vmul.f32 %v2225, %v2360
      %v2450 = vmul.f32 %v2226, %v2365
      %v2451 = vmul.f32 %v2227, %v2370
      %v2452 = vmul.f32 %v2228, %v2375
      %v2453 = vmul.f32 %v2229, %v2380
      %v2454 = vmul.f32 %v2230, %v2385
      %v2455 = vmul.f32 %v2231, %v2390
      %v2456 = vmul.f32 %v2232, %v2395
      %v2457 = vmul.f32 %v2233, %v2400
      %v2458 = vmul.f32 %v2234, %v2405
      %v2459 = vmul.f32 %v2235, %v2410
      %v2460 = vmul.f32 %v2236, %v2415
      %v2461 = vmul.f32 %v2237, %v2420
      %v2462 = vmul.f32 %v2238, %v2425
      %v2463 = vmul.f32 %v2239, %v2430
      %v2464 = vpack.c.bf16 %v2433, %v2432
      %v2465 = vpack.c.bf16 %v2435, %v2434
      %v2466 = vpack.c.bf16 %v2437, %v2436
      %v2467 = vpack.c.bf16 %v2439, %v2438
      %v2468 = vpack.c.bf16 %v2441, %v2440
      %v2469 = vpack.c.bf16 %v2443, %v2442
      %v2470 = vpack.c.bf16 %v2445, %v2444
      %v2471 = vpack.c.bf16 %v2447, %v2446
      %v2472 = vpack.c.bf16 %v2449, %v2448
      %v2473 = vpack.c.bf16 %v2451, %v2450
      %v2474 = vpack.c.bf16 %v2453, %v2452
      %v2475 = vpack.c.bf16 %v2455, %v2454
      %v2476 = vpack.c.bf16 %v2457, %v2456
      %v2477 = vpack.c.bf16 %v2459, %v2458
      %v2478 = vpack.c.bf16 %v2461, %v2460
      %v2479 = vpack.c.bf16 %v2463, %v2462
      %v2496 = vunpack.c.l.b16 %v2464
      %v2497 = vunpack.c.h.b16 %v2464
      %v2498 = vunpack.c.l.b16 %v2465
      %v2499 = vunpack.c.h.b16 %v2465
      %v2500 = vunpack.c.l.b16 %v2466
      %v2501 = vunpack.c.h.b16 %v2466
      %v2502 = vunpack.c.l.b16 %v2467
      %v2503 = vunpack.c.h.b16 %v2467
      %v2504 = vunpack.c.l.b16 %v2468
      %v2505 = vunpack.c.h.b16 %v2468
      %v2506 = vunpack.c.l.b16 %v2469
      %v2507 = vunpack.c.h.b16 %v2469
      %v2508 = vunpack.c.l.b16 %v2470
      %v2509 = vunpack.c.h.b16 %v2470
      %v2510 = vunpack.c.l.b16 %v2471
      %v2511 = vunpack.c.h.b16 %v2471
      %v2512 = vunpack.c.l.b16 %v2472
      %v2513 = vunpack.c.h.b16 %v2472
      %v2514 = vunpack.c.l.b16 %v2473
      %v2515 = vunpack.c.h.b16 %v2473
      %v2516 = vunpack.c.l.b16 %v2474
      %v2517 = vunpack.c.h.b16 %v2474
      %v2518 = vunpack.c.l.b16 %v2475
      %v2519 = vunpack.c.h.b16 %v2475
      %v2520 = vunpack.c.l.b16 %v2476
      %v2521 = vunpack.c.h.b16 %v2476
      %v2522 = vunpack.c.l.b16 %v2477
      %v2523 = vunpack.c.h.b16 %v2477
      %v2524 = vunpack.c.l.b16 %v2478
      %v2525 = vunpack.c.h.b16 %v2478
      %v2526 = vunpack.c.l.b16 %v2479
      %v2527 = vunpack.c.h.b16 %v2479
      %v2528 = vpack.c.b16 %v2496, %v2496
      %v2529 = vpack.c.b16 %v2497, %v2497
      %v2530 = vpack.c.b16 %v2498, %v2498
      %v2531 = vpack.c.b16 %v2499, %v2499
      %v2532 = vpack.c.b16 %v2500, %v2500
      %v2533 = vpack.c.b16 %v2501, %v2501
      %v2534 = vpack.c.b16 %v2502, %v2502
      %v2535 = vpack.c.b16 %v2503, %v2503
      %v2536 = vpack.c.b16 %v2504, %v2504
      %v2537 = vpack.c.b16 %v2505, %v2505
      %v2538 = vpack.c.b16 %v2506, %v2506
      %v2539 = vpack.c.b16 %v2507, %v2507
      %v2540 = vpack.c.b16 %v2508, %v2508
      %v2541 = vpack.c.b16 %v2509, %v2509
      %v2542 = vpack.c.b16 %v2510, %v2510
      %v2543 = vpack.c.b16 %v2511, %v2511
      %v2544 = vpack.c.b16 %v2512, %v2512
      %v2545 = vpack.c.b16 %v2513, %v2513
      %v2546 = vpack.c.b16 %v2514, %v2514
      %v2547 = vpack.c.b16 %v2515, %v2515
      %v2548 = vpack.c.b16 %v2516, %v2516
      %v2549 = vpack.c.b16 %v2517, %v2517
      %v2550 = vpack.c.b16 %v2518, %v2518
      %v2551 = vpack.c.b16 %v2519, %v2519
      %v2552 = vpack.c.b16 %v2520, %v2520
      %v2553 = vpack.c.b16 %v2521, %v2521
      %v2554 = vpack.c.b16 %v2522, %v2522
      %v2555 = vpack.c.b16 %v2523, %v2523
      %v2556 = vpack.c.b16 %v2524, %v2524
      %v2557 = vpack.c.b16 %v2525, %v2525
      %v2558 = vpack.c.b16 %v2526, %v2526
      %v2559 = vpack.c.b16 %v2527, %v2527
      %2592 = vst [vmem:[%s250] sm:$0xf] %v2528
      %2593 = vst [vmem:[%s250 + $0x4] sm:$0xf] %v2529
      %2594 = vst [vmem:[%s250 + $0x8] sm:$0xf] %v2530
      %2595 = vst [vmem:[%s250 + $0xc] sm:$0xf] %v2531
      %2596 = vst [vmem:[%s250 + $0x10] sm:$0xf] %v2532
      %2597 = vst [vmem:[%s250 + $0x14] sm:$0xf] %v2533
      %2598 = vst [vmem:[%s250 + $0x18] sm:$0xf] %v2534
      %2599 = vst [vmem:[%s250 + $0x1c] sm:$0xf] %v2535
      %2600 = vst [vmem:[%s250 + $0x20] sm:$0xf] %v2536
      %2601 = vst [vmem:[%s250 + $0x24] sm:$0xf] %v2537
      %2602 = vst [vmem:[%s250 + $0x28] sm:$0xf] %v2538
      %2603 = vst [vmem:[%s250 + $0x2c] sm:$0xf] %v2539
      %2604 = vst [vmem:[%s250 + $0x30] sm:$0xf] %v2540
      %2605 = vst [vmem:[%s250 + $0x34] sm:$0xf] %v2541
      %2606 = vst [vmem:[%s250 + $0x38] sm:$0xf] %v2542
      %2607 = vst [vmem:[%s250 + $0x3c] sm:$0xf] %v2543
      %2608 = vst [vmem:[%s250 + $0x40] sm:$0xf] %v2544
      %2609 = vst [vmem:[%s250 + $0x44] sm:$0xf] %v2545
      %2610 = vst [vmem:[%s250 + $0x48] sm:$0xf] %v2546
      %2611 = vst [vmem:[%s250 + $0x4c] sm:$0xf] %v2547
      %2612 = vst [vmem:[%s250 + $0x50] sm:$0xf] %v2548
      %2613 = vst [vmem:[%s250 + $0x54] sm:$0xf] %v2549
      %2614 = vst [vmem:[%s250 + $0x58] sm:$0xf] %v2550
      %2615 = vst [vmem:[%s250 + $0x5c] sm:$0xf] %v2551
      %2616 = vst [vmem:[%s250 + $0x60] sm:$0xf] %v2552
      %2617 = vst [vmem:[%s250 + $0x64] sm:$0xf] %v2553
      %2618 = vst [vmem:[%s250 + $0x68] sm:$0xf] %v2554
      %2619 = vst [vmem:[%s250 + $0x6c] sm:$0xf] %v2555
      %2620 = vst [vmem:[%s250 + $0x70] sm:$0xf] %v2556
      %2621 = vst [vmem:[%s250 + $0x74] sm:$0xf] %v2557
      %2622 = vst [vmem:[%s250 + $0x78] sm:$0xf] %v2558
      %2623 = vst [vmem:[%s250 + $0x7c] sm:$0xf] %v2559
      %s2624 = smul.u32 32, %s19
      %p2625 = scmp.lt.s32.totalorder %s2624, 63
      %s2626 = scalar_select %p2625, %s2624, 63
      %p2627 = scmp.lt.s32.totalorder %s20, 0
      %s2628 = scalar_select %p2627, %s20, 0
      %s2629 = sadd.s32 %s2628, %s2626
      %s2630 = smul.addr %s2629, 4
      %s2631 = scalar_lea.vmem %s4, %s2630
      // Predicated region
      $region37: #{vgg_backbone_forward.13} parent=35 // pred_check
        %p2632 = pneg %p146
      $region38: #{vgg_backbone_forward.13} parent=35 // pred_check_branch
        %2634 = sbr.rel (%p2632) target = $region40
      $region39: #{vgg_backbone_forward.13} parent=35 // pred_region
        %s2635 = smul.u32 32, %s19
      $region40: #{vgg_backbone_forward.13} parent=35 // pred_fallthru
        _
    $region36: #{vgg_backbone_forward.13} parent=5 // pred_fallthru
      _
    %p2636 = scmp.le.s32.totalorder 2, %s10
    // Predicated region
    $region41: #{vgg_backbone_forward.13} parent=5 // pred_check
      %p2637 = pneg %p2636
    $region42: #{vgg_backbone_forward.13} parent=5 // pred_check_branch
      %2639 = sbr.rel (%p2637) target = $region44
    $region43: #{vgg_backbone_forward.13} parent=5 // pred_region
      %s2640 = ssub.s32 %s10, 2
      // Predicated region
      $region45: #{vgg_backbone_forward.13} parent=43 // pred_check
        %p2641 = pneg %p152
      $region46: #{vgg_backbone_forward.13} parent=43 // pred_check_branch
        %2643 = sbr.rel (%p2641) target = $region48
      $region47: #{vgg_backbone_forward.13} parent=43 // pred_region
        %s2644 = smul.u32 32, %s21
        %p2645 = scmp.lt.s32.totalorder %s2644, 63
        %s2646 = scalar_select %p2645, %s2644, 63
        %p2647 = scmp.lt.s32.totalorder %s22, 0
        %s2648 = scalar_select %p2647, %s22, 0
        %s2649 = sadd.s32 %s2648, %s2646
        %s2650 = smul.addr %s2649, 4
        %s2651 = scalar_lea.vmem %s4, %s2650
      $region48: #{vgg_backbone_forward.13} parent=43 // pred_fallthru
        _
    $region44: #{vgg_backbone_forward.13} parent=5 // pred_fallthru
      _
  $region6: #{vgg_backbone_forward.13} parent=0 // loop_footer
    %s14 = sadd.s32 1, %s10
  $region7: #{vgg_backbone_forward.13} parent=0 // loop_footer_branch
    %9 = sbr.rel target = $region3
  $region8: #{vgg_backbone_forward.13} parent=0 // loop_exit
    _

// kernel: vgg_backbone_forward.15
$region0: #{vgg_backbone_forward.15}
  #allocation0 [shape = 'u32[]', space=smem, size = 0x4, offset = 0x4, fixed_abs, tag = 'smem constant byte address 0x4 - core index']
  #allocation1 [shape = 'u32[144,128]{1,0:T(1,128)}', space=vmem, size = 0x12000, scoped, tag = 'internal scratch']
  %s0 = inlined_call_operand.vmem [shape: bf16[128,128], index: 0, kind: input, shape index: {}]
  %s1 = inlined_call_operand.vmem [shape: bf16[3,384,128], index: 1, kind: input, shape index: {}]
  %s2 = inlined_call_operand.vmem [shape: f32[1,128], index: 2, kind: input, shape index: {}]
  %s3 = inlined_call_operand.vmem [shape: f32[64,1], index: 3, kind: input, shape index: {}]
  %s4 = inlined_call_operand.vmem [shape: bf16[128,128], index: 4, kind: output, shape index: {}]
  %s5 = sld [smem:[#allocation0]]
  $region49: #{vgg_backbone_forward.15} parent=0
    _
  %s7 = ssub.s32 1, %s5
  %s8 = scalar_select 0, %s7, %s5
  loop: start=0, step=1, limit=4
  $region2: #{vgg_backbone_forward.15} parent=0 // loop_pre_header
    _
  $region3: #{vgg_backbone_forward.15} parent=0 // loop_header
    %s10 = sphi 0, %s14
    %p11 = scmp.ge.s32.totalorder %s10, 4
    %s17 = sphi 0, %s29
    %s18 = sphi 0, %s25
    %s19 = sphi 0, %s17
    %s20 = sphi 0, %s18
    %s21 = sphi 0, %s19
    %s22 = sphi 0, %s20
    %s32 = sphi 0, %s34
    %s35 = sphi 0, %s32
    %s36 = sphi 0, %s35
    %s52 = sphi 0, %s36
    %s58 = sphi 0, %s60
    %s61 = sphi 0, %s58
    %s62 = sphi 0, %s61
    %s78 = sphi 0, %s62
    %s84 = sphi 0, %s86
    %s87 = sphi 0, %s84
    %s88 = sphi 0, %s87
    %s104 = sphi 0, %s88
    %s108 = sphi 0, %s108
    %s110 = sphi 0, %s108
    %s111 = sphi 0, %s110
    %s125 = sphi 0, %s111
    %s133 = sphi 0, %s135
    %s136 = sphi 0, %s133
    %s137 = sphi 0, %s136
    %s153 = sphi 0, %s137
  $region4: #{vgg_backbone_forward.15} parent=0 // loop_header_branch
    %13 = sbr.rel (%p11) target = $region8
  $region5: #{vgg_backbone_forward.15} parent=0 // loop_body
    %s15 = ssub.s32 %s10, 1
    %s16 = ssub.s32 %s10, 2
    %s23 = sadd.s32 1, %s18
    %p24 = scmp.ge.s32.totalorder %s23, 1
    %s25 = scalar_select %p24, 0, %s23
    %s26 = sadd.s32 1, %s17
    %s27 = scalar_select %p24, %s26, %s17
    %p28 = scmp.ge.s32.totalorder %s27, 2
    %s29 = scalar_select %p28, 0, %s27
    %s30 = ssub.s32 %s17, %s29
    %p31 = scmp.eq.s32.totalorder %s30, 0
    %s33 = sadd.s32 %s32, 1
    %s34 = scalar_select %p31, %s32, %s33
    %p37 = pneg %p31
    %p38 = scmp.eq.s32.totalorder %s10, 1
    %p39 = por %p37, %p38
    %p40 = scmp.ne.s32.totalorder %s32, %s35
    %p41 = scmp.eq.s32.totalorder %s10, 0
    %p42 = por %p40, %p41
    %p43 = scmp.ne.s32.totalorder %s32, %s35
    %p44 = scmp.eq.s32.totalorder %s15, 1
    %p45 = por %p43, %p44
    %p46 = scmp.ne.s32.totalorder %s35, %s36
    %p47 = scmp.eq.s32.totalorder %s15, 0
    %p48 = por %p46, %p47
    %p49 = scmp.ne.s32.totalorder %s35, %s36
    %p50 = scmp.eq.s32.totalorder %s16, 1
    %p51 = por %p49, %p50
    %p53 = scmp.ne.s32.totalorder %s36, %s52
    %p54 = scmp.eq.s32.totalorder %s16, 0
    %p55 = por %p53, %p54
    %s56 = ssub.s32 %s18, %s25
    %p57 = scmp.eq.s32.totalorder %s56, 0
    %s59 = sadd.s32 %s58, 1
    %s60 = scalar_select %p57, %s58, %s59
    %p63 = pneg %p57
    %p64 = scmp.eq.s32.totalorder %s10, 1
    %p65 = por %p63, %p64
    %p66 = scmp.ne.s32.totalorder %s58, %s61
    %p67 = scmp.eq.s32.totalorder %s10, 0
    %p68 = por %p66, %p67
    %p69 = scmp.ne.s32.totalorder %s58, %s61
    %p70 = scmp.eq.s32.totalorder %s15, 1
    %p71 = por %p69, %p70
    %p72 = scmp.ne.s32.totalorder %s61, %s62
    %p73 = scmp.eq.s32.totalorder %s15, 0
    %p74 = por %p72, %p73
    %p75 = scmp.ne.s32.totalorder %s61, %s62
    %p76 = scmp.eq.s32.totalorder %s16, 1
    %p77 = por %p75, %p76
    %p79 = scmp.ne.s32.totalorder %s62, %s78
    %p80 = scmp.eq.s32.totalorder %s16, 0
    %p81 = por %p79, %p80
    %s82 = ssub.s32 %s18, %s25
    %p83 = scmp.eq.s32.totalorder %s82, 0
    %s85 = sadd.s32 %s84, 1
    %s86 = scalar_select %p83, %s84, %s85
    %p89 = pneg %p83
    %p90 = scmp.eq.s32.totalorder %s10, 1
    %p91 = por %p89, %p90
    %p92 = scmp.ne.s32.totalorder %s84, %s87
    %p93 = scmp.eq.s32.totalorder %s10, 0
    %p94 = por %p92, %p93
    %p95 = scmp.ne.s32.totalorder %s84, %s87
    %p96 = scmp.eq.s32.totalorder %s15, 1
    %p97 = por %p95, %p96
    %p98 = scmp.ne.s32.totalorder %s87, %s88
    %p99 = scmp.eq.s32.totalorder %s15, 0
    %p100 = por %p98, %p99
    %p101 = scmp.ne.s32.totalorder %s87, %s88
    %p102 = scmp.eq.s32.totalorder %s16, 1
    %p103 = por %p101, %p102
    %p105 = scmp.ne.s32.totalorder %s88, %s104
    %p106 = scmp.eq.s32.totalorder %s16, 0
    %p107 = por %p105, %p106
    %s109 = sadd.s32 %s108, 1
    %p112 = scmp.eq.s32.totalorder %s10, 1
    %p113 = scmp.ne.s32.totalorder %s108, %s110
    %p114 = scmp.eq.s32.totalorder %s10, 0
    %p115 = por %p113, %p114
    %p116 = scmp.ne.s32.totalorder %s108, %s110
    %p117 = scmp.eq.s32.totalorder %s15, 1
    %p118 = por %p116, %p117
    %p119 = scmp.ne.s32.totalorder %s110, %s111
    %p120 = scmp.eq.s32.totalorder %s15, 0
    %p121 = por %p119, %p120
    %p122 = scmp.ne.s32.totalorder %s110, %s111
    %p123 = scmp.eq.s32.totalorder %s16, 1
    %p124 = por %p122, %p123
    %p126 = scmp.ne.s32.totalorder %s111, %s125
    %p127 = scmp.eq.s32.totalorder %s16, 0
    %p128 = por %p126, %p127
    %s129 = ssub.s32 %s17, %s29
    %s130 = ssub.s32 %s18, %s25
    %s131 = sor.u32 %s129, %s130
    %p132 = scmp.eq.s32.totalorder %s131, 0
    %s134 = sadd.s32 %s133, 1
    %s135 = scalar_select %p132, %s133, %s134
    %p138 = pneg %p132
    %p139 = scmp.eq.s32.totalorder %s10, 1
    %p140 = por %p138, %p139
    %p141 = scmp.ne.s32.totalorder %s133, %s136
    %p142 = scmp.eq.s32.totalorder %s10, 0
    %p143 = por %p141, %p142
    %p144 = scmp.ne.s32.totalorder %s133, %s136
    %p145 = scmp.eq.s32.totalorder %s15, 1
    %p146 = por %p144, %p145
    %p147 = scmp.ne.s32.totalorder %s136, %s137
    %p148 = scmp.eq.s32.totalorder %s15, 0
    %p149 = por %p147, %p148
    %p150 = scmp.ne.s32.totalorder %s136, %s137
    %p151 = scmp.eq.s32.totalorder %s16, 1
    %p152 = por %p150, %p151
    %p154 = scmp.ne.s32.totalorder %s137, %s153
    %p155 = scmp.eq.s32.totalorder %s16, 0
    %p156 = por %p154, %p155
    %p157 = scmp.le.s32.totalorder 1, %s10
    %p158 = scmp.lt.s32.totalorder %s10, 3
    %p159 = pnand %p157, %p158
    %p160 = pneg %p159
    // Predicated region
    $region9: #{vgg_backbone_forward.15} parent=5 // pred_check
      _
    $region10: #{vgg_backbone_forward.15} parent=5 // pred_check_branch
      %162 = sbr.rel (%p159) target = $region12
    $region11: #{vgg_backbone_forward.15} parent=5 // pred_region
      %s163 = ssub.s32 %s10, 1
      // Predicated region
      $region13: #{vgg_backbone_forward.15} parent=11 // pred_check
        %p164 = pneg %p74
      $region14: #{vgg_backbone_forward.15} parent=11 // pred_check_branch
        %166 = sbr.rel (%p164) target = $region16
      $region15: #{vgg_backbone_forward.15} parent=11 // pred_region
        %p167 = scmp.lt.s32.totalorder %s20, 0
        %s168 = scalar_select %p167, %s20, 0
        %s169 = smul.addr %s168, 4
        %s170 = scalar_lea.vmem %s1, %s169
      $region16: #{vgg_backbone_forward.15} parent=11 // pred_fallthru
        _
      // Predicated region
      $region17: #{vgg_backbone_forward.15} parent=11 // pred_check
        %p171 = pneg %p100
      $region18: #{vgg_backbone_forward.15} parent=11 // pred_check_branch
        %173 = sbr.rel (%p171) target = $region20
      $region19: #{vgg_backbone_forward.15} parent=11 // pred_region
        %p174 = scmp.lt.s32.totalorder %s20, 0
        %s175 = scalar_select %p174, %s20, 0
        %s176 = scalar_lea.vmem %s2, %s175
      $region20: #{vgg_backbone_forward.15} parent=11 // pred_fallthru
        _
      // Predicated region
      $region21: #{vgg_backbone_forward.15} parent=11 // pred_check
        %p177 = pneg %p121
      $region22: #{vgg_backbone_forward.15} parent=11 // pred_check_branch
        %179 = sbr.rel (%p177) target = $region24
      $region23: #{vgg_backbone_forward.15} parent=11 // pred_region
        _
      $region24: #{vgg_backbone_forward.15} parent=11 // pred_fallthru
        _
    $region12: #{vgg_backbone_forward.15} parent=5 // pred_fallthru
      _
    %p180 = scmp.lt.s32.totalorder %s10, 2
    // Predicated region
    $region25: #{vgg_backbone_forward.15} parent=5 // pred_check
      %p181 = pneg %p180
    $region26: #{vgg_backbone_forward.15} parent=5 // pred_check_branch
      %183 = sbr.rel (%p181) target = $region28
    $region27: #{vgg_backbone_forward.15} parent=5 // pred_region
      // Predicated region
      $region29: #{vgg_backbone_forward.15} parent=27 // pred_check
        %p184 = pneg %p42
      $region30: #{vgg_backbone_forward.15} parent=27 // pred_check_branch
        %186 = sbr.rel (%p184) target = $region32
      $region31: #{vgg_backbone_forward.15} parent=27 // pred_region
        %s187 = smul.u32 8, %s17
        %p188 = scmp.lt.s32.totalorder %s187, 15
        %s189 = scalar_select %p188, %s187, 15
        %s190 = smul.addr %s189, 4
        %s191 = scalar_lea.vmem %s0, %s190
        %s192 = smul.u32 8, %s17
      $region32: #{vgg_backbone_forward.15} parent=27 // pred_fallthru
        _
    $region28: #{vgg_backbone_forward.15} parent=5 // pred_fallthru
      _
    %p193 = scmp.le.s32.totalorder 1, %s10
    %p194 = scmp.lt.s32.totalorder %s10, 3
    %p195 = pnand %p193, %p194
    %p196 = pneg %p195
    // Predicated region
    $region33: #{vgg_backbone_forward.15} parent=5 // pred_check
      _
    $region34: #{vgg_backbone_forward.15} parent=5 // pred_check_branch
      %198 = sbr.rel (%p195) target = $region36
    $region35: #{vgg_backbone_forward.15} parent=5 // pred_region
      %s199 = ssub.s32 %s10, 1
      %s200 = smul.u32 8, %s19
      %p201 = scmp.lt.s32.totalorder %s200, 15
      %s202 = scalar_select %p201, %s200, 15
      %s203 = smul.addr %s202, 4
      %s204 = scalar_lea.vmem %s0, %s203
      %p205 = pneg %p48
      %p206 = pneg %p45
      %p207 = scmp.lt.s32.totalorder %s20, 0
      %s208 = scalar_select %p207, %s20, 0
      %s209 = smul.addr %s208, 4
      %s210 = scalar_lea.vmem %s1, %s209
      %p211 = pneg %p74
      %p212 = pneg %p71
      %p213 = scmp.lt.s32.totalorder %s20, 0
      %s214 = scalar_select %p213, %s20, 0
      %s215 = scalar_lea.vmem %s2, %s214
      %p216 = pneg %p100
      %p217 = pneg %p97
      %p218 = pneg %p121
      %p219 = pneg %p118
      %p220 = pneg %p149
      %p221 = pneg %p146
      %s222 = smul.u32 8, %s19
      %p223 = scmp.lt.s32.totalorder %s222, 15
      %s224 = scalar_select %p223, %s222, 15
      %p225 = scmp.lt.s32.totalorder %s20, 0
      %s226 = scalar_select %p225, %s20, 0
      %s227 = sadd.s32 %s226, %s224
      %s228 = smul.addr %s227, 4
      %s229 = scalar_lea.vmem %s4, %s228
      %s230 = smul.u32 8, %s19
      %p231 = scmp.lt.s32.totalorder %s230, 15
      %s232 = scalar_select %p231, %s230, 15
      %s233 = smul.addr %s232, 4
      %s234 = scalar_lea.vmem %s0, %s233
      %s235 = smul.u32 8, %s19
      %p236 = scmp.lt.s32.totalorder %s20, 0
      %s237 = scalar_select %p236, %s20, 0
      %s238 = smul.addr %s237, 4
      %s239 = scalar_lea.vmem %s1, %s238
      %p240 = scmp.lt.s32.totalorder %s20, 0
      %s241 = scalar_select %p240, %s20, 0
      %s242 = scalar_lea.vmem %s2, %s241
      %s243 = smul.u32 8, %s19
      %p244 = scmp.lt.s32.totalorder %s243, 15
      %s245 = scalar_select %p244, %s243, 15
      %p246 = scmp.lt.s32.totalorder %s20, 0
      %s247 = scalar_select %p246, %s20, 0
      %s248 = sadd.s32 %s247, %s245
      %s249 = smul.addr %s248, 4
      %s250 = scalar_lea.vmem %s4, %s249
      %s251 = smul.u32 8, %s19
      %v253 = vld [vmem:[%s234] sm:$0xf]
      %v254 = vld [vmem:[%s234 + $0x4] sm:$0xf]
      %v255 = vld [vmem:[%s234 + $0x8] sm:$0xf]
      %v256 = vld [vmem:[%s234 + $0xc] sm:$0xf]
      %v257 = vld [vmem:[%s234 + $0x10] sm:$0xf]
      %v258 = vld [vmem:[%s234 + $0x14] sm:$0xf]
      %v259 = vld [vmem:[%s234 + $0x18] sm:$0xf]
      %v260 = vld [vmem:[%s234 + $0x1c] sm:$0xf]
      %v261 = vunpack.c.l.bf16 %v253
      %v262 = vunpack.c.l.bf16 %v254
      %v263 = vunpack.c.l.bf16 %v255
      %v264 = vunpack.c.l.bf16 %v256
      %v265 = vunpack.c.l.bf16 %v257
      %v266 = vunpack.c.l.bf16 %v258
      %v267 = vunpack.c.l.bf16 %v259
      %v268 = vunpack.c.l.bf16 %v260
      %v269 = vpack.c.bf16 %v261, %v268
      %v270 = vpack.c.bf16 %v263, %v262
      %v271 = vpack.c.bf16 %v265, %v264
      %v272 = vpack.c.bf16 %v267, %v266
      %v281 = vunpack.c.l.b16 %v253
      %v282 = vunpack.c.l.b16 %v254
      %v283 = vunpack.c.l.b16 %v255
      %v284 = vunpack.c.l.b16 %v256
      %v285 = vunpack.c.l.b16 %v257
      %v286 = vunpack.c.l.b16 %v258
      %v287 = vunpack.c.l.b16 %v259
      %v288 = vunpack.c.l.b16 %v260
      %v289 = vpack.c.b16 %v282, %v281
      %v290 = vpack.c.b16 %v284, %v283
      %v291 = vpack.c.b16 %v286, %v285
      %v292 = vpack.c.b16 %v288, %v287
      %v297 = vld [vmem:[%s239] sm:$0xf]
      %v298 = vld [vmem:[%s239 + $0x4] sm:$0xf]
      %v299 = vld [vmem:[%s239 + $0x8] sm:$0xf]
      %v300 = vld [vmem:[%s239 + $0xc] sm:$0xf]
      %v301 = vld [vmem:[%s239 + $0x10] sm:$0xf]
      %v302 = vld [vmem:[%s239 + $0x14] sm:$0xf]
      %v303 = vld [vmem:[%s239 + $0x18] sm:$0xf]
      %v304 = vld [vmem:[%s239 + $0x1c] sm:$0xf]
      %v305 = vld [vmem:[%s239 + $0x20] sm:$0xf]
      %v306 = vld [vmem:[%s239 + $0x24] sm:$0xf]
      %v307 = vld [vmem:[%s239 + $0x28] sm:$0xf]
      %v308 = vld [vmem:[%s239 + $0x2c] sm:$0xf]
      %v309 = vld [vmem:[%s239 + $0x30] sm:$0xf]
      %v310 = vld [vmem:[%s239 + $0x34] sm:$0xf]
      %v311 = vld [vmem:[%s239 + $0x38] sm:$0xf]
      %v312 = vld [vmem:[%s239 + $0x3c] sm:$0xf]
      %v313 = vld [vmem:[%s239 + $0x40] sm:$0xf]
      %v314 = vld [vmem:[%s239 + $0x44] sm:$0xf]
      %v315 = vld [vmem:[%s239 + $0x48] sm:$0xf]
      %v316 = vld [vmem:[%s239 + $0x4c] sm:$0xf]
      %v317 = vld [vmem:[%s239 + $0x50] sm:$0xf]
      %v318 = vld [vmem:[%s239 + $0x54] sm:$0xf]
      %v319 = vld [vmem:[%s239 + $0x58] sm:$0xf]
      %v320 = vld [vmem:[%s239 + $0x5c] sm:$0xf]
      %v321 = vld [vmem:[%s239 + $0x60] sm:$0xf]
      %v322 = vld [vmem:[%s239 + $0x64] sm:$0xf]
      %v323 = vld [vmem:[%s239 + $0x68] sm:$0xf]
      %v324 = vld [vmem:[%s239 + $0x6c] sm:$0xf]
      %v325 = vld [vmem:[%s239 + $0x70] sm:$0xf]
      %v326 = vld [vmem:[%s239 + $0x74] sm:$0xf]
      %v327 = vld [vmem:[%s239 + $0x78] sm:$0xf]
      %v328 = vld [vmem:[%s239 + $0x7c] sm:$0xf]
      %v329 = vld [vmem:[%s239 + $0x80] sm:$0xf]
      %v330 = vld [vmem:[%s239 + $0x84] sm:$0xf]
      %v331 = vld [vmem:[%s239 + $0x88] sm:$0xf]
      %v332 = vld [vmem:[%s239 + $0x8c] sm:$0xf]
      %v333 = vld [vmem:[%s239 + $0x90] sm:$0xf]
      %v334 = vld [vmem:[%s239 + $0x94] sm:$0xf]
      %v335 = vld [vmem:[%s239 + $0x98] sm:$0xf]
      %v336 = vld [vmem:[%s239 + $0x9c] sm:$0xf]
      %v337 = vld [vmem:[%s239 + $0xa0] sm:$0xf]
      %v338 = vld [vmem:[%s239 + $0xa4] sm:$0xf]
      %v339 = vld [vmem:[%s239 + $0xa8] sm:$0xf]
      %v340 = vld [vmem:[%s239 + $0xac] sm:$0xf]
      %v341 = vld [vmem:[%s239 + $0xb0] sm:$0xf]
      %v342 = vld [vmem:[%s239 + $0xb4] sm:$0xf]
      %v343 = vld [vmem:[%s239 + $0xb8] sm:$0xf]
      %v344 = vld [vmem:[%s239 + $0xbc] sm:$0xf]
      %v393 = vunpack.c.l.b16 %v297
      %v394 = vunpack.c.l.b16 %v298
      %v395 = vunpack.c.l.b16 %v299
      %v396 = vunpack.c.l.b16 %v300
      %v397 = vunpack.c.l.b16 %v301
      %v398 = vunpack.c.l.b16 %v302
      %v399 = vunpack.c.l.b16 %v303
      %v400 = vunpack.c.l.b16 %v304
      %v401 = vunpack.c.l.b16 %v305
      %v402 = vunpack.c.l.b16 %v306
      %v403 = vunpack.c.l.b16 %v307
      %v404 = vunpack.c.l.b16 %v308
      %v405 = vunpack.c.l.b16 %v309
      %v406 = vunpack.c.l.b16 %v310
      %v407 = vunpack.c.l.b16 %v311
      %v408 = vunpack.c.l.b16 %v312
      %v409 = vunpack.c.l.b16 %v313
      %v410 = vunpack.c.l.b16 %v314
      %v411 = vunpack.c.l.b16 %v315
      %v412 = vunpack.c.l.b16 %v316
      %v413 = vunpack.c.l.b16 %v317
      %v414 = vunpack.c.l.b16 %v318
      %v415 = vunpack.c.l.b16 %v319
      %v416 = vunpack.c.l.b16 %v320
      %v417 = vunpack.c.l.b16 %v321
      %v418 = vunpack.c.l.b16 %v322
      %v419 = vunpack.c.l.b16 %v323
      %v420 = vunpack.c.l.b16 %v324
      %v421 = vunpack.c.l.b16 %v325
      %v422 = vunpack.c.l.b16 %v326
      %v423 = vunpack.c.l.b16 %v327
      %v424 = vunpack.c.l.b16 %v328
      %v425 = vunpack.c.l.b16 %v329
      %v426 = vunpack.c.l.b16 %v330
      %v427 = vunpack.c.l.b16 %v331
      %v428 = vunpack.c.l.b16 %v332
      %v429 = vunpack.c.l.b16 %v333
      %v430 = vunpack.c.l.b16 %v334
      %v431 = vunpack.c.l.b16 %v335
      %v432 = vunpack.c.l.b16 %v336
      %v433 = vunpack.c.l.b16 %v337
      %v434 = vunpack.c.l.b16 %v338
      %v435 = vunpack.c.l.b16 %v339
      %v436 = vunpack.c.l.b16 %v340
      %v437 = vunpack.c.l.b16 %v341
      %v438 = vunpack.c.l.b16 %v342
      %v439 = vunpack.c.l.b16 %v343
      %v440 = vunpack.c.l.b16 %v344
      %v441 = vpack.c.b16 %v394, %v393
      %v442 = vpack.c.b16 %v396, %v395
      %v443 = vpack.c.b16 %v398, %v397
      %v444 = vpack.c.b16 %v400, %v399
      %v445 = vpack.c.b16 %v402, %v401
      %v446 = vpack.c.b16 %v404, %v403
      %v447 = vpack.c.b16 %v406, %v405
      %v448 = vpack.c.b16 %v408, %v407
      %v449 = vpack.c.b16 %v410, %v409
      %v450 = vpack.c.b16 %v412, %v411
      %v451 = vpack.c.b16 %v414, %v413
      %v452 = vpack.c.b16 %v416, %v415
      %v453 = vpack.c.b16 %v418, %v417
      %v454 = vpack.c.b16 %v420, %v419
      %v455 = vpack.c.b16 %v422, %v421
      %v456 = vpack.c.b16 %v424, %v423
      %v457 = vpack.c.b16 %v426, %v425
      %v458 = vpack.c.b16 %v428, %v427
      %v459 = vpack.c.b16 %v430, %v429
      %v460 = vpack.c.b16 %v432, %v431
      %v461 = vpack.c.b16 %v434, %v433
      %v462 = vpack.c.b16 %v436, %v435
      %v463 = vpack.c.b16 %v438, %v437
      %v464 = vpack.c.b16 %v440, %v439
      %489 = vmatprep.subr.bf16.mxu0 0
      %490 = vmatpush1.bf16.msra.mxu0 %v448
      %491 = vmatprep.subr.bf16.mxu0 0
      %492 = vmatpush1.bf16.msra.mxu0 %v447
      %493 = vmatprep.subr.bf16.mxu0 0
      %494 = vmatpush1.bf16.msra.mxu0 %v446
      %495 = vmatprep.subr.bf16.mxu0 0
      %496 = vmatpush1.bf16.msra.mxu0 %v445
      %497 = vmatprep.subr.bf16.mxu0 0
      %498 = vmatpush1.bf16.msra.mxu0 %v444
      %499 = vmatprep.subr.bf16.mxu0 0
      %500 = vmatpush1.bf16.msra.mxu0 %v443
      %501 = vmatprep.subr.bf16.mxu0 0
      %502 = vmatpush1.bf16.msra.mxu0 %v442
      %503 = vmatprep.subr.bf16.mxu0 0
      %504 = vmatpush1.bf16.msra.mxu0 %v441
      %505 = vmatprep.subr.bf16.mxu0 0
      %506 = vmatpush2.bf16.msra.mxu0 %v456
      %507 = vmatprep.subr.bf16.mxu0 0
      %508 = vmatpush2.bf16.msra.mxu0 %v455
      %509 = vmatprep.subr.bf16.mxu0 0
      %510 = vmatpush2.bf16.msra.mxu0 %v454
      %511 = vmatprep.subr.bf16.mxu0 0
      %512 = vmatpush2.bf16.msra.mxu0 %v453
      %513 = vmatprep.subr.bf16.mxu0 0
      %514 = vmatpush2.bf16.msra.mxu0 %v452
      %515 = vmatprep.subr.bf16.mxu0 0
      %516 = vmatpush2.bf16.msra.mxu0 %v451
      %517 = vmatprep.subr.bf16.mxu0 0
      %518 = vmatpush2.bf16.msra.mxu0 %v450
      %519 = vmatprep.subr.bf16.mxu0 0
      %520 = vmatpush2.bf16.msra.mxu0 %v449
      %521 = vmatprep.mubr.bf16.mxu0 %v289
      %522 = vmatmul.mubr.bf16.gmra.mxu0 %v269
      %v523 = vpop.f32.mrf.mxu0
      %v524 = vadd.f32 0.0, %v523
      %v525 = vpop.f32.mrf.mxu0
      %v526 = vpop.f32.mrf.mxu0
      %v527 = vadd.f32 0.0, %v526
      %v528 = vpop.f32.mrf.mxu0
      %529 = vmatprep.mubr.bf16.mxu0 %v290
      %530 = vmatmul.mubr.bf16.gmra.mxu0 %v270
      %v531 = vpop.f32.mrf.mxu0
      %v532 = vadd.f32 0.0, %v531
      %v533 = vpop.f32.mrf.mxu0
      %v534 = vpop.f32.mrf.mxu0
      %v535 = vadd.f32 0.0, %v534
      %v536 = vpop.f32.mrf.mxu0
      %537 = vmatprep.mubr.bf16.mxu0 %v291
      %538 = vmatmul.mubr.bf16.gmra.mxu0 %v271
      %v539 = vpop.f32.mrf.mxu0
      %v540 = vadd.f32 0.0, %v539
      %v541 = vpop.f32.mrf.mxu0
      %v542 = vpop.f32.mrf.mxu0
      %v543 = vadd.f32 0.0, %v542
      %v544 = vpop.f32.mrf.mxu0
      %545 = vmatprep.mubr.bf16.mxu0 %v292
      %546 = vmatmul.mubr.bf16.gmra.mxu0 %v272
      %v547 = vpop.f32.mrf.mxu0
      %v548 = vadd.f32 0.0, %v547
      %v549 = vpop.f32.mrf.mxu0
      %v550 = vpop.f32.mrf.mxu0
      %v551 = vadd.f32 0.0, %v550
      %v552 = vpop.f32.mrf.mxu0
      %553 = vdwg.mxu0
      %554 = vmatprep.subr.bf16.mxu0 0
      %555 = vmatpush1.bf16.msra.mxu0 %v464
      %556 = vmatprep.subr.bf16.mxu0 0
      %557 = vmatpush1.bf16.msra.mxu0 %v463
      %558 = vmatprep.subr.bf16.mxu0 0
      %559 = vmatpush1.bf16.msra.mxu0 %v462
      %560 = vmatprep.subr.bf16.mxu0 0
      %561 = vmatpush1.bf16.msra.mxu0 %v461
      %562 = vmatprep.subr.bf16.mxu0 0
      %563 = vmatpush1.bf16.msra.mxu0 %v460
      %564 = vmatprep.subr.bf16.mxu0 0
      %565 = vmatpush1.bf16.msra.mxu0 %v459
      %566 = vmatprep.subr.bf16.mxu0 0
      %567 = vmatpush1.bf16.msra.mxu0 %v458
      %568 = vmatprep.subr.bf16.mxu0 0
      %569 = vmatpush1.bf16.msra.mxu0 %v457
      %570 = vmatprep.subr.bf16.mxu0 0
      %571 = vmatpush2.bf16.msra.mxu0 0
      %572 = vmatprep.subr.bf16.mxu0 0
      %573 = vmatpush2.bf16.msra.mxu0 0
      %574 = vmatprep.subr.bf16.mxu0 0
      %575 = vmatpush2.bf16.msra.mxu0 0
      %576 = vmatprep.subr.bf16.mxu0 0
      %577 = vmatpush2.bf16.msra.mxu0 0
      %578 = vmatprep.subr.bf16.mxu0 0
      %579 = vmatpush2.bf16.msra.mxu0 0
      %580 = vmatprep.subr.bf16.mxu0 0
      %581 = vmatpush2.bf16.msra.mxu0 0
      %582 = vmatprep.subr.bf16.mxu0 0
      %583 = vmatpush2.bf16.msra.mxu0 0
      %584 = vmatprep.subr.bf16.mxu0 0
      %585 = vmatpush2.bf16.msra.mxu0 0
      %586 = vmatprep.mubr.bf16.mxu0 0
      %587 = vmatmul.mubr.bf16.gmra.mxu0 %v270
      %v588 = vpop.f32.mrf.mxu0
      %v589 = vadd.f32 %v524, %v588
      %v590 = vpop.f32.mrf.mxu0
      %v591 = vpop.f32.mrf.mxu0
      %v592 = vadd.f32 %v527, %v591
      %v593 = vpop.f32.mrf.mxu0
      %594 = vmatprep.mubr.bf16.mxu0 0
      %595 = vmatmul.mubr.bf16.gmra.mxu0 %v271
      %v596 = vpop.f32.mrf.mxu0
      %v597 = vadd.f32 %v532, %v596
      %v598 = vpop.f32.mrf.mxu0
      %v599 = vpop.f32.mrf.mxu0
      %v600 = vadd.f32 %v535, %v599
      %v601 = vpop.f32.mrf.mxu0
      %602 = vmatprep.mubr.bf16.mxu0 0
      %603 = vmatmul.mubr.bf16.gmra.mxu0 %v272
      %v604 = vpop.f32.mrf.mxu0
      %v605 = vadd.f32 %v540, %v604
      %v606 = vpop.f32.mrf.mxu0
      %v607 = vpop.f32.mrf.mxu0
      %v608 = vadd.f32 %v543, %v607
      %v609 = vpop.f32.mrf.mxu0
      %610 = vmatprep.mubr.bf16.mxu0 0
      %611 = vmatmul.mubr.bf16.gmra.mxu0 %v269
      %v612 = vpop.f32.mrf.mxu0
      %v613 = vadd.f32 %v548, %v612
      %v614 = vpop.f32.mrf.mxu0
      %v615 = vpop.f32.mrf.mxu0
      %v616 = vadd.f32 %v551, %v615
      %v617 = vpop.f32.mrf.mxu0
      %618 = vdwg.mxu0
      %s619 = scalar_lea.vmem %s239, 192
      %v620 = vld [vmem:[%s619] sm:$0xf]
      %v621 = vld [vmem:[%s619 + $0x4] sm:$0xf]
      %v622 = vld [vmem:[%s619 + $0x8] sm:$0xf]
      %v623 = vld [vmem:[%s619 + $0xc] sm:$0xf]
      %v624 = vld [vmem:[%s619 + $0x10] sm:$0xf]
      %v625 = vld [vmem:[%s619 + $0x14] sm:$0xf]
      %v626 = vld [vmem:[%s619 + $0x18] sm:$0xf]
      %v627 = vld [vmem:[%s619 + $0x1c] sm:$0xf]
      %v628 = vld [vmem:[%s619 + $0x20] sm:$0xf]
      %v629 = vld [vmem:[%s619 + $0x24] sm:$0xf]
      %v630 = vld [vmem:[%s619 + $0x28] sm:$0xf]
      %v631 = vld [vmem:[%s619 + $0x2c] sm:$0xf]
      %v632 = vld [vmem:[%s619 + $0x30] sm:$0xf]
      %v633 = vld [vmem:[%s619 + $0x34] sm:$0xf]
      %v634 = vld [vmem:[%s619 + $0x38] sm:$0xf]
      %v635 = vld [vmem:[%s619 + $0x3c] sm:$0xf]
      %v636 = vld [vmem:[%s619 + $0x40] sm:$0xf]
      %v637 = vld [vmem:[%s619 + $0x44] sm:$0xf]
      %v638 = vld [vmem:[%s619 + $0x48] sm:$0xf]
      %v639 = vld [vmem:[%s619 + $0x4c] sm:$0xf]
      %v640 = vld [vmem:[%s619 + $0x50] sm:$0xf]
      %v641 = vld [vmem:[%s619 + $0x54] sm:$0xf]
      %v642 = vld [vmem:[%s619 + $0x58] sm:$0xf]
      %v643 = vld [vmem:[%s619 + $0x5c] sm:$0xf]
      %v644 = vld [vmem:[%s619 + $0x60] sm:$0xf]
      %v645 = vld [vmem:[%s619 + $0x64] sm:$0xf]
      %v646 = vld [vmem:[%s619 + $0x68] sm:$0xf]
      %v647 = vld [vmem:[%s619 + $0x6c] sm:$0xf]
      %v648 = vld [vmem:[%s619 + $0x70] sm:$0xf]
      %v649 = vld [vmem:[%s619 + $0x74] sm:$0xf]
      %v650 = vld [vmem:[%s619 + $0x78] sm:$0xf]
      %v651 = vld [vmem:[%s619 + $0x7c] sm:$0xf]
      %v652 = vld [vmem:[%s619 + $0x80] sm:$0xf]
      %v653 = vld [vmem:[%s619 + $0x84] sm:$0xf]
      %v654 = vld [vmem:[%s619 + $0x88] sm:$0xf]
      %v655 = vld [vmem:[%s619 + $0x8c] sm:$0xf]
      %v656 = vld [vmem:[%s619 + $0x90] sm:$0xf]
      %v657 = vld [vmem:[%s619 + $0x94] sm:$0xf]
      %v658 = vld [vmem:[%s619 + $0x98] sm:$0xf]
      %v659 = vld [vmem:[%s619 + $0x9c] sm:$0xf]
      %v660 = vld [vmem:[%s619 + $0xa0] sm:$0xf]
      %v661 = vld [vmem:[%s619 + $0xa4] sm:$0xf]
      %v662 = vld [vmem:[%s619 + $0xa8] sm:$0xf]
      %v663 = vld [vmem:[%s619 + $0xac] sm:$0xf]
      %v664 = vld [vmem:[%s619 + $0xb0] sm:$0xf]
      %v665 = vld [vmem:[%s619 + $0xb4] sm:$0xf]
      %v666 = vld [vmem:[%s619 + $0xb8] sm:$0xf]
      %v667 = vld [vmem:[%s619 + $0xbc] sm:$0xf]
      %v716 = vunpack.c.l.b16 %v620
      %v717 = vunpack.c.l.b16 %v621
      %v718 = vunpack.c.l.b16 %v622
      %v719 = vunpack.c.l.b16 %v623
      %v720 = vunpack.c.l.b16 %v624
      %v721 = vunpack.c.l.b16 %v625
      %v722 = vunpack.c.l.b16 %v626
      %v723 = vunpack.c.l.b16 %v627
      %v724 = vunpack.c.l.b16 %v628
      %v725 = vunpack.c.l.b16 %v629
      %v726 = vunpack.c.l.b16 %v630
      %v727 = vunpack.c.l.b16 %v631
      %v728 = vunpack.c.l.b16 %v632
      %v729 = vunpack.c.l.b16 %v633
      %v730 = vunpack.c.l.b16 %v634
      %v731 = vunpack.c.l.b16 %v635
      %v732 = vunpack.c.l.b16 %v636
      %v733 = vunpack.c.l.b16 %v637
      %v734 = vunpack.c.l.b16 %v638
      %v735 = vunpack.c.l.b16 %v639
      %v736 = vunpack.c.l.b16 %v640
      %v737 = vunpack.c.l.b16 %v641
      %v738 = vunpack.c.l.b16 %v642
      %v739 = vunpack.c.l.b16 %v643
      %v740 = vunpack.c.l.b16 %v644
      %v741 = vunpack.c.l.b16 %v645
      %v742 = vunpack.c.l.b16 %v646
      %v743 = vunpack.c.l.b16 %v647
      %v744 = vunpack.c.l.b16 %v648
      %v745 = vunpack.c.l.b16 %v649
      %v746 = vunpack.c.l.b16 %v650
      %v747 = vunpack.c.l.b16 %v651
      %v748 = vunpack.c.l.b16 %v652
      %v749 = vunpack.c.l.b16 %v653
      %v750 = vunpack.c.l.b16 %v654
      %v751 = vunpack.c.l.b16 %v655
      %v752 = vunpack.c.l.b16 %v656
      %v753 = vunpack.c.l.b16 %v657
      %v754 = vunpack.c.l.b16 %v658
      %v755 = vunpack.c.l.b16 %v659
      %v756 = vunpack.c.l.b16 %v660
      %v757 = vunpack.c.l.b16 %v661
      %v758 = vunpack.c.l.b16 %v662
      %v759 = vunpack.c.l.b16 %v663
      %v760 = vunpack.c.l.b16 %v664
      %v761 = vunpack.c.l.b16 %v665
      %v762 = vunpack.c.l.b16 %v666
      %v763 = vunpack.c.l.b16 %v667
      %v764 = vpack.c.b16 %v717, %v716
      %v765 = vpack.c.b16 %v719, %v718
      %v766 = vpack.c.b16 %v721, %v720
      %v767 = vpack.c.b16 %v723, %v722
      %v768 = vpack.c.b16 %v725, %v724
      %v769 = vpack.c.b16 %v727, %v726
      %v770 = vpack.c.b16 %v729, %v728
      %v771 = vpack.c.b16 %v731, %v730
      %v772 = vpack.c.b16 %v733, %v732
      %v773 = vpack.c.b16 %v735, %v734
      %v774 = vpack.c.b16 %v737, %v736
      %v775 = vpack.c.b16 %v739, %v738
      %v776 = vpack.c.b16 %v741, %v740
      %v777 = vpack.c.b16 %v743, %v742
      %v778 = vpack.c.b16 %v745, %v744
      %v779 = vpack.c.b16 %v747, %v746
      %v780 = vpack.c.b16 %v749, %v748
      %v781 = vpack.c.b16 %v751, %v750
      %v782 = vpack.c.b16 %v753, %v752
      %v783 = vpack.c.b16 %v755, %v754
      %v784 = vpack.c.b16 %v757, %v756
      %v785 = vpack.c.b16 %v759, %v758
      %v786 = vpack.c.b16 %v761, %v760
      %v787 = vpack.c.b16 %v763, %v762
      %812 = vmatprep.subr.bf16.mxu0 0
      %813 = vmatpush1.bf16.msra.mxu0 %v771
      %814 = vmatprep.subr.bf16.mxu0 0
      %815 = vmatpush1.bf16.msra.mxu0 %v770
      %816 = vmatprep.subr.bf16.mxu0 0
      %817 = vmatpush1.bf16.msra.mxu0 %v769
      %818 = vmatprep.subr.bf16.mxu0 0
      %819 = vmatpush1.bf16.msra.mxu0 %v768
      %820 = vmatprep.subr.bf16.mxu0 0
      %821 = vmatpush1.bf16.msra.mxu0 %v767
      %822 = vmatprep.subr.bf16.mxu0 0
      %823 = vmatpush1.bf16.msra.mxu0 %v766
      %824 = vmatprep.subr.bf16.mxu0 0
      %825 = vmatpush1.bf16.msra.mxu0 %v765
      %826 = vmatprep.subr.bf16.mxu0 0
      %827 = vmatpush1.bf16.msra.mxu0 %v764
      %828 = vmatprep.subr.bf16.mxu0 0
      %829 = vmatpush2.bf16.msra.mxu0 %v779
      %830 = vmatprep.subr.bf16.mxu0 0
      %831 = vmatpush2.bf16.msra.mxu0 %v778
      %832 = vmatprep.subr.bf16.mxu0 0
      %833 = vmatpush2.bf16.msra.mxu0 %v777
      %834 = vmatprep.subr.bf16.mxu0 0
      %835 = vmatpush2.bf16.msra.mxu0 %v776
      %836 = vmatprep.subr.bf16.mxu0 0
      %837 = vmatpush2.bf16.msra.mxu0 %v775
      %838 = vmatprep.subr.bf16.mxu0 0
      %839 = vmatpush2.bf16.msra.mxu0 %v774
      %840 = vmatprep.subr.bf16.mxu0 0
      %841 = vmatpush2.bf16.msra.mxu0 %v773
      %842 = vmatprep.subr.bf16.mxu0 0
      %843 = vmatpush2.bf16.msra.mxu0 %v772
      %844 = vmatprep.mubr.bf16.mxu0 %v289
      %845 = vmatmul.mubr.bf16.gmra.mxu0 %v269
      %v846 = vpop.f32.mrf.mxu0
      %v847 = vadd.f32 0.0, %v846
      %v848 = vpop.f32.mrf.mxu0
      %v849 = vpop.f32.mrf.mxu0
      %v850 = vadd.f32 0.0, %v849
      %v851 = vpop.f32.mrf.mxu0
      %852 = vmatprep.mubr.bf16.mxu0 %v290
      %853 = vmatmul.mubr.bf16.gmra.mxu0 %v270
      %v854 = vpop.f32.mrf.mxu0
      %v855 = vadd.f32 0.0, %v854
      %v856 = vpop.f32.mrf.mxu0
      %v857 = vpop.f32.mrf.mxu0
      %v858 = vadd.f32 0.0, %v857
      %v859 = vpop.f32.mrf.mxu0
      %860 = vmatprep.mubr.bf16.mxu0 %v291
      %861 = vmatmul.mubr.bf16.gmra.mxu0 %v271
      %v862 = vpop.f32.mrf.mxu0
      %v863 = vadd.f32 0.0, %v862
      %v864 = vpop.f32.mrf.mxu0
      %v865 = vpop.f32.mrf.mxu0
      %v866 = vadd.f32 0.0, %v865
      %v867 = vpop.f32.mrf.mxu0
      %868 = vmatprep.mubr.bf16.mxu0 %v292
      %869 = vmatmul.mubr.bf16.gmra.mxu0 %v272
      %v870 = vpop.f32.mrf.mxu0
      %v871 = vadd.f32 0.0, %v870
      %v872 = vpop.f32.mrf.mxu0
      %v873 = vpop.f32.mrf.mxu0
      %v874 = vadd.f32 0.0, %v873
      %v875 = vpop.f32.mrf.mxu0
      %876 = vdwg.mxu0
      %877 = vmatprep.subr.bf16.mxu0 0
      %878 = vmatpush1.bf16.msra.mxu0 %v787
      %879 = vmatprep.subr.bf16.mxu0 0
      %880 = vmatpush1.bf16.msra.mxu0 %v786
      %881 = vmatprep.subr.bf16.mxu0 0
      %882 = vmatpush1.bf16.msra.mxu0 %v785
      %883 = vmatprep.subr.bf16.mxu0 0
      %884 = vmatpush1.bf16.msra.mxu0 %v784
      %885 = vmatprep.subr.bf16.mxu0 0
      %886 = vmatpush1.bf16.msra.mxu0 %v783
      %887 = vmatprep.subr.bf16.mxu0 0
      %888 = vmatpush1.bf16.msra.mxu0 %v782
      %889 = vmatprep.subr.bf16.mxu0 0
      %890 = vmatpush1.bf16.msra.mxu0 %v781
      %891 = vmatprep.subr.bf16.mxu0 0
      %892 = vmatpush1.bf16.msra.mxu0 %v780
      %893 = vmatprep.subr.bf16.mxu0 0
      %894 = vmatpush2.bf16.msra.mxu0 0
      %895 = vmatprep.subr.bf16.mxu0 0
      %896 = vmatpush2.bf16.msra.mxu0 0
      %897 = vmatprep.subr.bf16.mxu0 0
      %898 = vmatpush2.bf16.msra.mxu0 0
      %899 = vmatprep.subr.bf16.mxu0 0
      %900 = vmatpush2.bf16.msra.mxu0 0
      %901 = vmatprep.subr.bf16.mxu0 0
      %902 = vmatpush2.bf16.msra.mxu0 0
      %903 = vmatprep.subr.bf16.mxu0 0
      %904 = vmatpush2.bf16.msra.mxu0 0
      %905 = vmatprep.subr.bf16.mxu0 0
      %906 = vmatpush2.bf16.msra.mxu0 0
      %907 = vmatprep.subr.bf16.mxu0 0
      %908 = vmatpush2.bf16.msra.mxu0 0
      %909 = vmatprep.mubr.bf16.mxu0 0
      %910 = vmatmul.mubr.bf16.gmra.mxu0 %v270
      %v911 = vpop.f32.mrf.mxu0
      %v912 = vadd.f32 %v847, %v911
      %v913 = vpop.f32.mrf.mxu0
      %v914 = vpop.f32.mrf.mxu0
      %v915 = vadd.f32 %v850, %v914
      %v916 = vpop.f32.mrf.mxu0
      %917 = vmatprep.mubr.bf16.mxu0 0
      %918 = vmatmul.mubr.bf16.gmra.mxu0 %v271
      %v919 = vpop.f32.mrf.mxu0
      %v920 = vadd.f32 %v855, %v919
      %v921 = vpop.f32.mrf.mxu0
      %v922 = vpop.f32.mrf.mxu0
      %v923 = vadd.f32 %v858, %v922
      %v924 = vpop.f32.mrf.mxu0
      %925 = vmatprep.mubr.bf16.mxu0 0
      %926 = vmatmul.mubr.bf16.gmra.mxu0 %v272
      %v927 = vpop.f32.mrf.mxu0
      %v928 = vadd.f32 %v863, %v927
      %v929 = vpop.f32.mrf.mxu0
      %v930 = vpop.f32.mrf.mxu0
      %v931 = vadd.f32 %v866, %v930
      %v932 = vpop.f32.mrf.mxu0
      %933 = vmatprep.mubr.bf16.mxu0 0
      %934 = vmatmul.mubr.bf16.gmra.mxu0 %v269
      %v935 = vpop.f32.mrf.mxu0
      %v936 = vadd.f32 %v871, %v935
      %v937 = vpop.f32.mrf.mxu0
      %v938 = vpop.f32.mrf.mxu0
      %v939 = vadd.f32 %v874, %v938
      %v940 = vpop.f32.mrf.mxu0
      %941 = vdwg.mxu0
      %s942 = scalar_lea.vmem %s239, 384
      %v943 = vld [vmem:[%s942] sm:$0xf]
      %v944 = vld [vmem:[%s942 + $0x4] sm:$0xf]
      %v945 = vld [vmem:[%s942 + $0x8] sm:$0xf]
      %v946 = vld [vmem:[%s942 + $0xc] sm:$0xf]
      %v947 = vld [vmem:[%s942 + $0x10] sm:$0xf]
      %v948 = vld [vmem:[%s942 + $0x14] sm:$0xf]
      %v949 = vld [vmem:[%s942 + $0x18] sm:$0xf]
      %v950 = vld [vmem:[%s942 + $0x1c] sm:$0xf]
      %v951 = vld [vmem:[%s942 + $0x20] sm:$0xf]
      %v952 = vld [vmem:[%s942 + $0x24] sm:$0xf]
      %v953 = vld [vmem:[%s942 + $0x28] sm:$0xf]
      %v954 = vld [vmem:[%s942 + $0x2c] sm:$0xf]
      %v955 = vld [vmem:[%s942 + $0x30] sm:$0xf]
      %v956 = vld [vmem:[%s942 + $0x34] sm:$0xf]
      %v957 = vld [vmem:[%s942 + $0x38] sm:$0xf]
      %v958 = vld [vmem:[%s942 + $0x3c] sm:$0xf]
      %v959 = vld [vmem:[%s942 + $0x40] sm:$0xf]
      %v960 = vld [vmem:[%s942 + $0x44] sm:$0xf]
      %v961 = vld [vmem:[%s942 + $0x48] sm:$0xf]
      %v962 = vld [vmem:[%s942 + $0x4c] sm:$0xf]
      %v963 = vld [vmem:[%s942 + $0x50] sm:$0xf]
      %v964 = vld [vmem:[%s942 + $0x54] sm:$0xf]
      %v965 = vld [vmem:[%s942 + $0x58] sm:$0xf]
      %v966 = vld [vmem:[%s942 + $0x5c] sm:$0xf]
      %v967 = vld [vmem:[%s942 + $0x60] sm:$0xf]
      %v968 = vld [vmem:[%s942 + $0x64] sm:$0xf]
      %v969 = vld [vmem:[%s942 + $0x68] sm:$0xf]
      %v970 = vld [vmem:[%s942 + $0x6c] sm:$0xf]
      %v971 = vld [vmem:[%s942 + $0x70] sm:$0xf]
      %v972 = vld [vmem:[%s942 + $0x74] sm:$0xf]
      %v973 = vld [vmem:[%s942 + $0x78] sm:$0xf]
      %v974 = vld [vmem:[%s942 + $0x7c] sm:$0xf]
      %v975 = vld [vmem:[%s942 + $0x80] sm:$0xf]
      %v976 = vld [vmem:[%s942 + $0x84] sm:$0xf]
      %v977 = vld [vmem:[%s942 + $0x88] sm:$0xf]
      %v978 = vld [vmem:[%s942 + $0x8c] sm:$0xf]
      %v979 = vld [vmem:[%s942 + $0x90] sm:$0xf]
      %v980 = vld [vmem:[%s942 + $0x94] sm:$0xf]
      %v981 = vld [vmem:[%s942 + $0x98] sm:$0xf]
      %v982 = vld [vmem:[%s942 + $0x9c] sm:$0xf]
      %v983 = vld [vmem:[%s942 + $0xa0] sm:$0xf]
      %v984 = vld [vmem:[%s942 + $0xa4] sm:$0xf]
      %v985 = vld [vmem:[%s942 + $0xa8] sm:$0xf]
      %v986 = vld [vmem:[%s942 + $0xac] sm:$0xf]
      %v987 = vld [vmem:[%s942 + $0xb0] sm:$0xf]
      %v988 = vld [vmem:[%s942 + $0xb4] sm:$0xf]
      %v989 = vld [vmem:[%s942 + $0xb8] sm:$0xf]
      %v990 = vld [vmem:[%s942 + $0xbc] sm:$0xf]
      %v1039 = vunpack.c.l.b16 %v943
      %v1040 = vunpack.c.l.b16 %v944
      %v1041 = vunpack.c.l.b16 %v945
      %v1042 = vunpack.c.l.b16 %v946
      %v1043 = vunpack.c.l.b16 %v947
      %v1044 = vunpack.c.l.b16 %v948
      %v1045 = vunpack.c.l.b16 %v949
      %v1046 = vunpack.c.l.b16 %v950
      %v1047 = vunpack.c.l.b16 %v951
      %v1048 = vunpack.c.l.b16 %v952
      %v1049 = vunpack.c.l.b16 %v953
      %v1050 = vunpack.c.l.b16 %v954
      %v1051 = vunpack.c.l.b16 %v955
      %v1052 = vunpack.c.l.b16 %v956
      %v1053 = vunpack.c.l.b16 %v957
      %v1054 = vunpack.c.l.b16 %v958
      %v1055 = vunpack.c.l.b16 %v959
      %v1056 = vunpack.c.l.b16 %v960
      %v1057 = vunpack.c.l.b16 %v961
      %v1058 = vunpack.c.l.b16 %v962
      %v1059 = vunpack.c.l.b16 %v963
      %v1060 = vunpack.c.l.b16 %v964
      %v1061 = vunpack.c.l.b16 %v965
      %v1062 = vunpack.c.l.b16 %v966
      %v1063 = vunpack.c.l.b16 %v967
      %v1064 = vunpack.c.l.b16 %v968
      %v1065 = vunpack.c.l.b16 %v969
      %v1066 = vunpack.c.l.b16 %v970
      %v1067 = vunpack.c.l.b16 %v971
      %v1068 = vunpack.c.l.b16 %v972
      %v1069 = vunpack.c.l.b16 %v973
      %v1070 = vunpack.c.l.b16 %v974
      %v1071 = vunpack.c.l.b16 %v975
      %v1072 = vunpack.c.l.b16 %v976
      %v1073 = vunpack.c.l.b16 %v977
      %v1074 = vunpack.c.l.b16 %v978
      %v1075 = vunpack.c.l.b16 %v979
      %v1076 = vunpack.c.l.b16 %v980
      %v1077 = vunpack.c.l.b16 %v981
      %v1078 = vunpack.c.l.b16 %v982
      %v1079 = vunpack.c.l.b16 %v983
      %v1080 = vunpack.c.l.b16 %v984
      %v1081 = vunpack.c.l.b16 %v985
      %v1082 = vunpack.c.l.b16 %v986
      %v1083 = vunpack.c.l.b16 %v987
      %v1084 = vunpack.c.l.b16 %v988
      %v1085 = vunpack.c.l.b16 %v989
      %v1086 = vunpack.c.l.b16 %v990
      %v1087 = vpack.c.b16 %v1040, %v1039
      %v1088 = vpack.c.b16 %v1042, %v1041
      %v1089 = vpack.c.b16 %v1044, %v1043
      %v1090 = vpack.c.b16 %v1046, %v1045
      %v1091 = vpack.c.b16 %v1048, %v1047
      %v1092 = vpack.c.b16 %v1050, %v1049
      %v1093 = vpack.c.b16 %v1052, %v1051
      %v1094 = vpack.c.b16 %v1054, %v1053
      %v1095 = vpack.c.b16 %v1056, %v1055
      %v1096 = vpack.c.b16 %v1058, %v1057
      %v1097 = vpack.c.b16 %v1060, %v1059
      %v1098 = vpack.c.b16 %v1062, %v1061
      %v1099 = vpack.c.b16 %v1064, %v1063
      %v1100 = vpack.c.b16 %v1066, %v1065
      %v1101 = vpack.c.b16 %v1068, %v1067
      %v1102 = vpack.c.b16 %v1070, %v1069
      %v1103 = vpack.c.b16 %v1072, %v1071
      %v1104 = vpack.c.b16 %v1074, %v1073
      %v1105 = vpack.c.b16 %v1076, %v1075
      %v1106 = vpack.c.b16 %v1078, %v1077
      %v1107 = vpack.c.b16 %v1080, %v1079
      %v1108 = vpack.c.b16 %v1082, %v1081
      %v1109 = vpack.c.b16 %v1084, %v1083
      %v1110 = vpack.c.b16 %v1086, %v1085
      %1135 = vmatprep.subr.bf16.mxu0 0
      %1136 = vmatpush1.bf16.msra.mxu0 %v1094
      %1137 = vmatprep.subr.bf16.mxu0 0
      %1138 = vmatpush1.bf16.msra.mxu0 %v1093
      %1139 = vmatprep.subr.bf16.mxu0 0
      %1140 = vmatpush1.bf16.msra.mxu0 %v1092
      %1141 = vmatprep.subr.bf16.mxu0 0
      %1142 = vmatpush1.bf16.msra.mxu0 %v1091
      %1143 = vmatprep.subr.bf16.mxu0 0
      %1144 = vmatpush1.bf16.msra.mxu0 %v1090
      %1145 = vmatprep.subr.bf16.mxu0 0
      %1146 = vmatpush1.bf16.msra.mxu0 %v1089
      %1147 = vmatprep.subr.bf16.mxu0 0
      %1148 = vmatpush1.bf16.msra.mxu0 %v1088
      %1149 = vmatprep.subr.bf16.mxu0 0
      %1150 = vmatpush1.bf16.msra.mxu0 %v1087
      %1151 = vmatprep.subr.bf16.mxu0 0
      %1152 = vmatpush2.bf16.msra.mxu0 %v1102
      %1153 = vmatprep.subr.bf16.mxu0 0
      %1154 = vmatpush2.bf16.msra.mxu0 %v1101
      %1155 = vmatprep.subr.bf16.mxu0 0
      %1156 = vmatpush2.bf16.msra.mxu0 %v1100
      %1157 = vmatprep.subr.bf16.mxu0 0
      %1158 = vmatpush2.bf16.msra.mxu0 %v1099
      %1159 = vmatprep.subr.bf16.mxu0 0
      %1160 = vmatpush2.bf16.msra.mxu0 %v1098
      %1161 = vmatprep.subr.bf16.mxu0 0
      %1162 = vmatpush2.bf16.msra.mxu0 %v1097
      %1163 = vmatprep.subr.bf16.mxu0 0
      %1164 = vmatpush2.bf16.msra.mxu0 %v1096
      %1165 = vmatprep.subr.bf16.mxu0 0
      %1166 = vmatpush2.bf16.msra.mxu0 %v1095
      %1167 = vmatprep.mubr.bf16.mxu0 %v289
      %1168 = vmatmul.mubr.bf16.gmra.mxu0 %v269
      %v1169 = vpop.f32.mrf.mxu0
      %v1170 = vadd.f32 0.0, %v1169
      %v1171 = vpop.f32.mrf.mxu0
      %v1172 = vpop.f32.mrf.mxu0
      %v1173 = vadd.f32 0.0, %v1172
      %v1174 = vpop.f32.mrf.mxu0
      %1175 = vmatprep.mubr.bf16.mxu0 %v290
      %1176 = vmatmul.mubr.bf16.gmra.mxu0 %v270
      %v1177 = vpop.f32.mrf.mxu0
      %v1178 = vadd.f32 0.0, %v1177
      %v1179 = vpop.f32.mrf.mxu0
      %v1180 = vpop.f32.mrf.mxu0
      %v1181 = vadd.f32 0.0, %v1180
      %v1182 = vpop.f32.mrf.mxu0
      %1183 = vmatprep.mubr.bf16.mxu0 %v291
      %1184 = vmatmul.mubr.bf16.gmra.mxu0 %v271
      %v1185 = vpop.f32.mrf.mxu0
      %v1186 = vadd.f32 0.0, %v1185
      %v1187 = vpop.f32.mrf.mxu0
      %v1188 = vpop.f32.mrf.mxu0
      %v1189 = vadd.f32 0.0, %v1188
      %v1190 = vpop.f32.mrf.mxu0
      %1191 = vmatprep.mubr.bf16.mxu0 %v292
      %1192 = vmatmul.mubr.bf16.gmra.mxu0 %v272
      %v1193 = vpop.f32.mrf.mxu0
      %v1194 = vadd.f32 0.0, %v1193
      %v1195 = vpop.f32.mrf.mxu0
      %v1196 = vpop.f32.mrf.mxu0
      %v1197 = vadd.f32 0.0, %v1196
      %v1198 = vpop.f32.mrf.mxu0
      %1199 = vdwg.mxu0
      %1200 = vmatprep.subr.bf16.mxu0 0
      %1201 = vmatpush1.bf16.msra.mxu0 %v1110
      %1202 = vmatprep.subr.bf16.mxu0 0
      %1203 = vmatpush1.bf16.msra.mxu0 %v1109
      %1204 = vmatprep.subr.bf16.mxu0 0
      %1205 = vmatpush1.bf16.msra.mxu0 %v1108
      %1206 = vmatprep.subr.bf16.mxu0 0
      %1207 = vmatpush1.bf16.msra.mxu0 %v1107
      %1208 = vmatprep.subr.bf16.mxu0 0
      %1209 = vmatpush1.bf16.msra.mxu0 %v1106
      %1210 = vmatprep.subr.bf16.mxu0 0
      %1211 = vmatpush1.bf16.msra.mxu0 %v1105
      %1212 = vmatprep.subr.bf16.mxu0 0
      %1213 = vmatpush1.bf16.msra.mxu0 %v1104
      %1214 = vmatprep.subr.bf16.mxu0 0
      %1215 = vmatpush1.bf16.msra.mxu0 %v1103
      %1216 = vmatprep.subr.bf16.mxu0 0
      %1217 = vmatpush2.bf16.msra.mxu0 0
      %1218 = vmatprep.subr.bf16.mxu0 0
      %1219 = vmatpush2.bf16.msra.mxu0 0
      %1220 = vmatprep.subr.bf16.mxu0 0
      %1221 = vmatpush2.bf16.msra.mxu0 0
      %1222 = vmatprep.subr.bf16.mxu0 0
      %1223 = vmatpush2.bf16.msra.mxu0 0
      %1224 = vmatprep.subr.bf16.mxu0 0
      %1225 = vmatpush2.bf16.msra.mxu0 0
      %1226 = vmatprep.subr.bf16.mxu0 0
      %1227 = vmatpush2.bf16.msra.mxu0 0
      %1228 = vmatprep.subr.bf16.mxu0 0
      %1229 = vmatpush2.bf16.msra.mxu0 0
      %1230 = vmatprep.subr.bf16.mxu0 0
      %1231 = vmatpush2.bf16.msra.mxu0 0
      %1232 = vmatprep.mubr.bf16.mxu0 0
      %1233 = vmatmul.mubr.bf16.gmra.mxu0 %v270
      %v1234 = vpop.f32.mrf.mxu0
      %v1235 = vadd.f32 %v1170, %v1234
      %v1236 = vpop.f32.mrf.mxu0
      %v1237 = vpop.f32.mrf.mxu0
      %v1238 = vadd.f32 %v1173, %v1237
      %v1239 = vpop.f32.mrf.mxu0
      %1240 = vmatprep.mubr.bf16.mxu0 0
      %1241 = vmatmul.mubr.bf16.gmra.mxu0 %v271
      %v1242 = vpop.f32.mrf.mxu0
      %v1243 = vadd.f32 %v1178, %v1242
      %v1244 = vpop.f32.mrf.mxu0
      %v1245 = vpop.f32.mrf.mxu0
      %v1246 = vadd.f32 %v1181, %v1245
      %v1247 = vpop.f32.mrf.mxu0
      %1248 = vmatprep.mubr.bf16.mxu0 0
      %1249 = vmatmul.mubr.bf16.gmra.mxu0 %v272
      %v1250 = vpop.f32.mrf.mxu0
      %v1251 = vadd.f32 %v1186, %v1250
      %v1252 = vpop.f32.mrf.mxu0
      %v1253 = vpop.f32.mrf.mxu0
      %v1254 = vadd.f32 %v1189, %v1253
      %v1255 = vpop.f32.mrf.mxu0
      %1256 = vmatprep.mubr.bf16.mxu0 0
      %1257 = vmatmul.mubr.bf16.gmra.mxu0 %v269
      %v1258 = vpop.f32.mrf.mxu0
      %v1259 = vadd.f32 %v1194, %v1258
      %v1260 = vpop.f32.mrf.mxu0
      %v1261 = vpop.f32.mrf.mxu0
      %v1262 = vadd.f32 %v1197, %v1261
      %v1263 = vpop.f32.mrf.mxu0
      %1264 = vdwg.mxu0
      %v1265 = vrot.slane %v589, 7
      %v1266 = vrot.slane %v592, 7
      %v1267 = vrot.slane %v597, 7
      %v1268 = vrot.slane %v600, 7
      %v1269 = vrot.slane %v605, 7
      %v1270 = vrot.slane %v608, 7
      %v1271 = vrot.slane %v613, 7
      %v1272 = vrot.slane %v616, 7
      %v1273 = vlaneseq
      %v1274 = vshrl.u32 %v1273, 7
      %vm1275 = vcmp.lt.s32.totalorder %v1274, 1
      %v1276 = vsel %vm1275, %v1271, %v1272
      %v1277 = vsel %vm1275, %v1270, %v1271
      %v1278 = vsel %vm1275, %v1269, %v1270
      %v1279 = vsel %vm1275, %v1268, %v1269
      %v1280 = vsel %vm1275, %v1267, %v1268
      %v1281 = vsel %vm1275, %v1266, %v1267
      %v1282 = vsel %vm1275, %v1265, %v1266
      %v1283 = vsel %vm1275, %v1272, %v1265
      %v1284 = vadd.f32 %v1283, %v912
      %v1285 = vadd.f32 %v1282, %v915
      %v1286 = vadd.f32 %v1281, %v920
      %v1287 = vadd.f32 %v1280, %v923
      %v1288 = vadd.f32 %v1279, %v928
      %v1289 = vadd.f32 %v1278, %v931
      %v1290 = vadd.f32 %v1277, %v936
      %v1291 = vadd.f32 %v1276, %v939
      %v1292 = vrot.slane %v1235, 1
      %v1293 = vrot.slane %v1238, 1
      %v1294 = vrot.slane %v1243, 1
      %v1295 = vrot.slane %v1246, 1
      %v1296 = vrot.slane %v1251, 1
      %v1297 = vrot.slane %v1254, 1
      %v1298 = vrot.slane %v1259, 1
      %v1299 = vrot.slane %v1262, 1
      %vm1300 = vcmp.lt.s32.totalorder %v1274, 7
      %v1301 = vsel %vm1300, %v1298, %v1299
      %v1302 = vsel %vm1300, %v1297, %v1298
      %v1303 = vsel %vm1300, %v1296, %v1297
      %v1304 = vsel %vm1300, %v1295, %v1296
      %v1305 = vsel %vm1300, %v1294, %v1295
      %v1306 = vsel %vm1300, %v1293, %v1294
      %v1307 = vsel %vm1300, %v1292, %v1293
      %v1308 = vsel %vm1300, %v1299, %v1292
      %v1309 = vadd.f32 %v1284, %v1307
      %v1310 = vadd.f32 %v1285, %v1306
      %v1311 = vadd.f32 %v1286, %v1305
      %v1312 = vadd.f32 %v1287, %v1304
      %v1313 = vadd.f32 %v1288, %v1303
      %v1314 = vadd.f32 %v1289, %v1302
      %v1315 = vadd.f32 %v1290, %v1301
      %v1316 = vadd.f32 %v1291, %v1308
      %v1317 = vld [vmem:[%s242] sm:$0x1]
      %v1319 = vlaneseq
      %v1320 = vshrl.u32 %v1319, 7
      %v1321 = vsub.s32 0, %v1320
      %v1322 = vrot.slane %v1317, %v1321
      %v1324 = vadd.f32 %v1309, %v1322
      %v1325 = vadd.f32 %v1310, %v1322
      %v1326 = vadd.f32 %v1311, %v1322
      %v1327 = vadd.f32 %v1312, %v1322
      %v1328 = vadd.f32 %v1313, %v1322
      %v1329 = vadd.f32 %v1314, %v1322
      %v1330 = vadd.f32 %v1315, %v1322
      %v1331 = vadd.f32 %v1316, %v1322
      %v1332 = vmax.f32 %v1324, 0.0
      %v1333 = vmax.f32 %v1325, 0.0
      %v1334 = vmax.f32 %v1326, 0.0
      %v1335 = vmax.f32 %v1327, 0.0
      %v1336 = vmax.f32 %v1328, 0.0
      %v1337 = vmax.f32 %v1329, 0.0
      %v1338 = vmax.f32 %v1330, 0.0
      %v1339 = vmax.f32 %v1331, 0.0
      %v1340 = vld [vmem:[%s3] sm:$0xff]
      %v1341 = vld [vmem:[%s3 + $0x8] sm:$0xff]
      %v1342 = vld [vmem:[%s3 + $0x10] sm:$0xff]
      %v1343 = vld [vmem:[%s3 + $0x18] sm:$0xff]
      %v1344 = vld [vmem:[%s3 + $0x20] sm:$0xff]
      %v1345 = vld [vmem:[%s3 + $0x28] sm:$0xff]
      %v1346 = vld [vmem:[%s3 + $0x30] sm:$0xff]
      %v1347 = vld [vmem:[%s3 + $0x38] sm:$0xff]
      %1349 = vset.pattern.permute.xlu0 0
      %1350 = vperm.xlu0 %1349, %v1340
      %v1351 = vpop.permute.xlu0 %1350
      %1354 = vset.pattern.permute.xlu0 0
      %1355 = vperm.xlu0 %1354, %v1341
      %v1356 = vpop.permute.xlu0 %1355
      %1359 = vset.pattern.permute.xlu0 0
      %1360 = vperm.xlu0 %1359, %v1342
      %v1361 = vpop.permute.xlu0 %1360
      %1364 = vset.pattern.permute.xlu0 0
      %1365 = vperm.xlu0 %1364, %v1343
      %v1366 = vpop.permute.xlu0 %1365
      %1369 = vset.pattern.permute.xlu0 0
      %1370 = vperm.xlu0 %1369, %v1344
      %v1371 = vpop.permute.xlu0 %1370
      %1374 = vset.pattern.permute.xlu0 0
      %1375 = vperm.xlu0 %1374, %v1345
      %v1376 = vpop.permute.xlu0 %1375
      %1379 = vset.pattern.permute.xlu0 0
      %1380 = vperm.xlu0 %1379, %v1346
      %v1381 = vpop.permute.xlu0 %1380
      %1384 = vset.pattern.permute.xlu0 0
      %1385 = vperm.xlu0 %1384, %v1347
      %v1386 = vpop.permute.xlu0 %1385
      %v1388 = vmul.f32 %v1332, %v1351
      %v1389 = vmul.f32 %v1333, %v1356
      %v1390 = vmul.f32 %v1334, %v1361
      %v1391 = vmul.f32 %v1335, %v1366
      %v1392 = vmul.f32 %v1336, %v1371
      %v1393 = vmul.f32 %v1337, %v1376
      %v1394 = vmul.f32 %v1338, %v1381
      %v1395 = vmul.f32 %v1339, %v1386
      %v1396 = vpack.c.bf16 %v1389, %v1388
      %v1397 = vpack.c.bf16 %v1391, %v1390
      %v1398 = vpack.c.bf16 %v1393, %v1392
      %v1399 = vpack.c.bf16 %v1395, %v1394
      %v1404 = vunpack.c.l.b16 %v1396
      %v1405 = vunpack.c.h.b16 %v1396
      %v1406 = vunpack.c.l.b16 %v1397
      %v1407 = vunpack.c.h.b16 %v1397
      %v1408 = vunpack.c.l.b16 %v1398
      %v1409 = vunpack.c.h.b16 %v1398
      %v1410 = vunpack.c.l.b16 %v1399
      %v1411 = vunpack.c.h.b16 %v1399
      %v1412 = vpack.c.b16 %v1404, %v1404
      %v1413 = vpack.c.b16 %v1405, %v1405
      %v1414 = vpack.c.b16 %v1406, %v1406
      %v1415 = vpack.c.b16 %v1407, %v1407
      %v1416 = vpack.c.b16 %v1408, %v1408
      %v1417 = vpack.c.b16 %v1409, %v1409
      %v1418 = vpack.c.b16 %v1410, %v1410
      %v1419 = vpack.c.b16 %v1411, %v1411
      %1428 = vst [vmem:[%s250] sm:$0xf] %v1412
      %1429 = vst [vmem:[%s250 + $0x4] sm:$0xf] %v1413
      %1430 = vst [vmem:[%s250 + $0x8] sm:$0xf] %v1414
      %1431 = vst [vmem:[%s250 + $0xc] sm:$0xf] %v1415
      %1432 = vst [vmem:[%s250 + $0x10] sm:$0xf] %v1416
      %1433 = vst [vmem:[%s250 + $0x14] sm:$0xf] %v1417
      %1434 = vst [vmem:[%s250 + $0x18] sm:$0xf] %v1418
      %1435 = vst [vmem:[%s250 + $0x1c] sm:$0xf] %v1419
      %s1436 = smul.u32 8, %s19
      %p1437 = scmp.lt.s32.totalorder %s1436, 15
      %s1438 = scalar_select %p1437, %s1436, 15
      %p1439 = scmp.lt.s32.totalorder %s20, 0
      %s1440 = scalar_select %p1439, %s20, 0
      %s1441 = sadd.s32 %s1440, %s1438
      %s1442 = smul.addr %s1441, 4
      %s1443 = scalar_lea.vmem %s4, %s1442
      // Predicated region
      $region37: #{vgg_backbone_forward.15} parent=35 // pred_check
        %p1444 = pneg %p146
      $region38: #{vgg_backbone_forward.15} parent=35 // pred_check_branch
        %1446 = sbr.rel (%p1444) target = $region40
      $region39: #{vgg_backbone_forward.15} parent=35 // pred_region
        %s1447 = smul.u32 8, %s19
      $region40: #{vgg_backbone_forward.15} parent=35 // pred_fallthru
        _
    $region36: #{vgg_backbone_forward.15} parent=5 // pred_fallthru
      _
    %p1448 = scmp.le.s32.totalorder 2, %s10
    // Predicated region
    $region41: #{vgg_backbone_forward.15} parent=5 // pred_check
      %p1449 = pneg %p1448
    $region42: #{vgg_backbone_forward.15} parent=5 // pred_check_branch
      %1451 = sbr.rel (%p1449) target = $region44
    $region43: #{vgg_backbone_forward.15} parent=5 // pred_region
      %s1452 = ssub.s32 %s10, 2
      // Predicated region
      $region45: #{vgg_backbone_forward.15} parent=43 // pred_check
        %p1453 = pneg %p152
      $region46: #{vgg_backbone_forward.15} parent=43 // pred_check_branch
        %1455 = sbr.rel (%p1453) target = $region48
      $region47: #{vgg_backbone_forward.15} parent=43 // pred_region
        %s1456 = smul.u32 8, %s21
        %p1457 = scmp.lt.s32.totalorder %s1456, 15
        %s1458 = scalar_select %p1457, %s1456, 15
        %p1459 = scmp.lt.s32.totalorder %s22, 0
        %s1460 = scalar_select %p1459, %s22, 0
        %s1461 = sadd.s32 %s1460, %s1458
        %s1462 = smul.addr %s1461, 4
        %s1463 = scalar_lea.vmem %s4, %s1462
      $region48: #{vgg_backbone_forward.15} parent=43 // pred_fallthru
        _
    $region44: #{vgg_backbone_forward.15} parent=5 // pred_fallthru
      _
  $region6: #{vgg_backbone_forward.15} parent=0 // loop_footer
    %s14 = sadd.s32 1, %s10
  $region7: #{vgg_backbone_forward.15} parent=0 // loop_footer_branch
    %9 = sbr.rel target = $region3
  $region8: #{vgg_backbone_forward.15} parent=0 // loop_exit
    _

</llo_original>
